<compile_context>
chip_gen: v7x
topology: tpu7x:2x2x1
jax: 0.10.0
libtpu: 0.0.40
codegen_flags: <defaults>
</compile_context>

<pallas_src>
import jax
import jax.numpy as jnp
from jax.experimental import pallas as pl
from jax.experimental.pallas import tpu as pltpu

_LANE = 128


def _double_conv_kernel(x_top_ref, x_mid_ref, x_bot_ref,
                        w1_ref, b1_ref, w2_ref, b2_ref,
                        out_ref,
                        xp_ref, xcol_ref, hp_ref, hcol_ref):
    """Fused Conv3x3+ReLU -> Conv3x3+ReLU for one (batch, H-tile) grid step.

    Blocks (TH = tile height, Cin = input channels, Cm/Co = 128-padded mid/out):
      x_top_ref/x_bot_ref : (1, 2,  W, Cin) f32   2-row halo above / below the tile
      x_mid_ref           : (1, TH, W, Cin) f32
      w1_ref              : (3, 3*Cin, Cm)  bf16  index = (ky, kx*Cin + cin, cout)
      b1_ref              : (1, Cm)         f32
      w2_ref              : (3, 3*Cm, Co)   bf16
      b2_ref              : (1, Co)         f32
      out_ref             : (1, TH, W, Cout) f32  (only the real channels hit HBM)
    VMEM scratch (all bf16):
      xp_ref   : (TH+4, W+2, Cin)   x tile, zero W-pad + 2-row H halo
      xcol_ref : (TH+4, W,  3*Cin)  kx-folded im2col of xp
      hp_ref   : (TH+2, W+2, Cm)    conv1 output + zero W-pad (never hits HBM)
      hcol_ref : (TH+2, W,  3*Cm)   kx-folded im2col of hp
    """
    i = pl.program_id(1)
    nh = pl.num_programs(1)
    TH, W, Cin = x_mid_ref.shape[1], x_mid_ref.shape[2], x_mid_ref.shape[3]
    Hm = TH + 2                       # conv1 rows = tile + 1-row halo above/below
    Cm = w1_ref.shape[2]
    Co = w2_ref.shape[2]
    Cout = out_ref.shape[3]
    K1 = 3 * Cin
    K2 = 3 * Cm
    f32, bf16 = jnp.float32, jnp.bfloat16

    # ---- stage the x tile into VMEM (bf16): zero W-pad + 2-row H halo --------
    # xp row r holds image row (i*TH - 2 + r); rows/cols outside the image are
    # zero, exactly like PyTorch padding=1.
    xp_ref[:, 0:1, :] = jnp.zeros((TH + 4, 1, Cin), bf16)
    xp_ref[:, W + 1:W + 2, :] = jnp.zeros((TH + 4, 1, Cin), bf16)
    xp_ref[2:TH + 2, 1:W + 1, :] = x_mid_ref[0].astype(bf16)

    @pl.when(i == 0)
    def _():
        xp_ref[0:2, 1:W + 1, :] = jnp.zeros((2, W, Cin), bf16)

    @pl.when(i > 0)
    def _():
        xp_ref[0:2, 1:W + 1, :] = x_top_ref[0].astype(bf16)

    @pl.when(i == nh - 1)
    def _():
        xp_ref[TH + 2:TH + 4, 1:W + 1, :] = jnp.zeros((2, W, Cin), bf16)

    @pl.when(i < nh - 1)
    def _():
        xp_ref[TH + 2:TH + 4, 1:W + 1, :] = x_bot_ref[0].astype(bf16)

    # ---- im2col: fold the 3 kx taps onto the contraction axis ----------------
    # (For tiny Cin these lane writes are masked; folding ky as well (K=9*Cin)
    #  would remove two MXU pushes but conv1 FLOPs are negligible here.)
    for k in range(3):
        xcol_ref[:, :, k * Cin:(k + 1) * Cin] = xp_ref[:, k:k + W, :]

    # ---- conv1: 3 MXU matmuls summed as ONE expression (no Ref RMW) ----------
    def xtap(j):
        return xcol_ref[j:j + Hm].reshape(Hm * W, K1)

    h = (jnp.dot(xtap(0), w1_ref[0], preferred_element_type=f32)
         + jnp.dot(xtap(1), w1_ref[1], preferred_element_type=f32)
         + jnp.dot(xtap(2), w1_ref[2], preferred_element_type=f32))
    h = jnp.maximum(h + b1_ref[...], 0.0).astype(bf16)        # bias + ReLU in f32

    # single store of the conv1 tile into the zero-W-padded VMEM intermediate
    hp_ref[:, 0:1, :] = jnp.zeros((Hm, 1, Cm), bf16)
    hp_ref[:, W + 1:W + 2, :] = jnp.zeros((Hm, 1, Cm), bf16)
    hp_ref[:, 1:W + 1, :] = h.reshape(Hm, W, Cm)

    # conv2 must see zero padding (not conv1-of-padding) above/below the image
    @pl.when(i == 0)
    def _():
        hp_ref[0:1, :, :] = jnp.zeros((1, W + 2, Cm), bf16)

    @pl.when(i == nh - 1)
    def _():
        hp_ref[Hm - 1:Hm, :, :] = jnp.zeros((1, W + 2, Cm), bf16)

    # ---- conv2: same structure, K = 3*Cm --------------------------------------
    for k in range(3):
        hcol_ref[:, :, k * Cm:(k + 1) * Cm] = hp_ref[:, k:k + W, :]

    def htap(j):
        return hcol_ref[j:j + TH].reshape(TH * W, K2)

    acc = (jnp.dot(htap(0), w2_ref[0], preferred_element_type=f32)
           + jnp.dot(htap(1), w2_ref[1], preferred_element_type=f32)
           + jnp.dot(htap(2), w2_ref[2], preferred_element_type=f32))
    acc = jnp.maximum(acc + b2_ref[...], 0.0)                  # bias + ReLU (f32)
    # Only the real output channels are written back to HBM.
    out_ref[0] = acc[:, :Cout].reshape(TH, W, Cout)


def _round_up(v, m):
    return ((v + m - 1) // m) * m


def _vmem_budget_bytes():
    """Per-generation VMEM budget for one grid step's working set."""
    kind = ""
    try:
        kind = jax.devices()[0].device_kind.lower()
    except Exception:
        pass
    if any(t in kind for t in ("v4", "v5", "v6")):
        return 80 * 1024 * 1024      # 128 MiB physical VMEM: allow big tiles
    return 28 * 1024 * 1024          # v7x (64 MiB / TC) or unknown: conservative


def _footprint_bytes(th, w, cin, cm, co, cout):
    """Approximate per-step VMEM footprint for tile height `th`."""
    bf, f4 = 2, 4
    xp = (th + 4) * (w + 2) * cin * bf
    xcol = (th + 4) * w * 3 * cin * bf
    hp = (th + 2) * (w + 2) * cm * bf
    hcol = (th + 2) * w * 3 * cm * bf
    xin = 2 * (th + 4) * w * cin * f4          # double-buffered input blocks
    outb = 2 * th * w * cout * f4              # double-buffered output block
    wts = 9 * cin * cm * bf + 9 * cm * co * bf + (cm + co) * f4   # single-buffered
    return xp + xcol + hp + hcol + xin + outb + wts


def double_conv_nhwc(x, w1_oihw, b1, w2_oihw, b2, *, tile_h=None):
    """DoubleConv on NHWC activations.  x: (N, H, W, Cin) -> (N, H, W, Cout)."""
    N, H, W, Cin = x.shape
    Cmid = w1_oihw.shape[0]
    Cout = w2_oihw.shape[0]
    assert w1_oihw.shape == (Cmid, Cin, 3, 3)
    assert w2_oihw.shape == (Cout, Cmid, 3, 3)

    Cm = _round_up(Cmid, _LANE)       # lane-dense intermediate channels (VMEM only)
    Co = _round_up(Cout, _LANE)       # lane-dense matmul N dim (VMEM only)

    if tile_h is None:
        budget = _vmem_budget_bytes()
        cands = [t for t in range(2, H + 1, 2) if H % t == 0]
        assert cands, "H must have an even divisor >= 2"
        fits = [t for t in cands
                if _footprint_bytes(t, W, Cin, Cm, Co, Cout) <= budget] or cands[:1]
        tile_h = max(fits)
        # Megacore: keep >= 4 grid steps when possible so both v7x TCs stay busy.
        enough = [t for t in fits if N * (H // t) >= 4]
        if N * (H // tile_h) < 4 and enough:
            tile_h = max(enough)
    # TODO(synk): support odd H / ragged H tiles (pad H or emit a remainder tile).
    assert tile_h >= 2 and tile_h % 2 == 0 and H % tile_h == 0, (
        "tile_h must be an even divisor of H")
    TH = tile_h
    nh = H // TH
    half = TH // 2                    # halo blocks are 2 rows tall (H blocked by 2)

    fp = _footprint_bytes(TH, W, Cin, Cm, Co, Cout)
    vmem_limit = max(min(int(fp * 1.25) + (4 << 20), 100 << 20), 16 << 20)

    def pack_w(w_oihw, cin_pad, cout_pad):
        cout_, cin_ = w_oihw.shape[0], w_oihw.shape[1]
        w = jnp.transpose(w_oihw, (2, 3, 1, 0))                # (ky, kx, cin, cout)
        w = jnp.pad(w, ((0, 0), (0, 0), (0, cin_pad - cin_), (0, cout_pad - cout_)))
        # fold (kx, cin) into one contraction axis: index = kx * cin_pad + cin
        return w.reshape(3, 3 * cin_pad, cout_pad).astype(jnp.bfloat16)

    w1p = pack_w(w1_oihw, Cin, Cm)    # K1 = 3*Cin
    w2p = pack_w(w2_oihw, Cm, Co)     # K2 = 3*Cm (matches the VMEM intermediate)
    b1p = jnp.pad(b1.astype(jnp.float32), (0, Cm - Cmid)).reshape(1, Cm)
    b2p = jnp.pad(b2.astype(jnp.float32), (0, Co - Cout)).reshape(1, Co)

    def build_call(weight_mode):
        wkw = {} if weight_mode is None else {"pipeline_mode": weight_mode}
        grid_spec = pltpu.PrefetchScalarGridSpec(
            num_scalar_prefetch=0,
            grid=(N, nh),
            in_specs=[
                # 2-row halo above the tile (clamped at the top; zeroed in-kernel)
                pl.BlockSpec((1, 2, W, Cin),
                             lambda n, i: (n, jnp.maximum(i * half - 1, 0), 0, 0)),
                # the TH-row tile itself
                pl.BlockSpec((1, TH, W, Cin), lambda n, i: (n, i, 0, 0)),
                # 2-row halo below the tile (clamped at the bottom; zeroed in-kernel)
                pl.BlockSpec((1, 2, W, Cin),
                             lambda n, i: (n, jnp.minimum((i + 1) * half,
                                                          H // 2 - 1), 0, 0)),
                pl.BlockSpec((3, 3 * Cin, Cm), lambda n, i: (0, 0, 0), **wkw),
                pl.BlockSpec((1, Cm), lambda n, i: (0, 0), **wkw),
                pl.BlockSpec((3, 3 * Cm, Co), lambda n, i: (0, 0, 0), **wkw),
                pl.BlockSpec((1, Co), lambda n, i: (0, 0), **wkw),
            ],
            out_specs=pl.BlockSpec((1, TH, W, Cout), lambda n, i: (n, i, 0, 0)),
            scratch_shapes=[
                pltpu.VMEM((TH + 4, W + 2, Cin), jnp.bfloat16),
                pltpu.VMEM((TH + 4, W, 3 * Cin), jnp.bfloat16),
                pltpu.VMEM((TH + 2, W + 2, Cm), jnp.bfloat16),
                pltpu.VMEM((TH + 2, W, 3 * Cm), jnp.bfloat16),
            ],
        )
        return pl.pallas_call(
            _double_conv_kernel,
            out_shape=jax.ShapeDtypeStruct((N, H, W, Cout), jnp.float32),
            grid_spec=grid_spec,
            compiler_params=pltpu.CompilerParams(
                dimension_semantics=("parallel", "parallel"),
                vmem_limit_bytes=vmem_limit),
        )

    try:
        # Weights/biases never change across the grid: single-buffer them so the
        # freed VMEM can go to larger H tiles (biggest win on v7x's 64 MiB VMEM).
        out = build_call(pl.Buffered(1))(x, x, x, w1p, b1p, w2p, b2p)
    except Exception:
        # Fall back to default (double) buffering if single-buffering is not
        # supported by this JAX version.
        out = build_call(None)(x, x, x, w1p, b1p, w2p, b2p)
    return out


def double_conv(x_nchw, w1_oihw, b1, w2_oihw, b2, *, tile_h=None):
    """PyTorch-layout wrapper: x (N, Cin, H, W) -> (N, Cout, H, W).

    The transposes are model-boundary plumbing only; a full UNet should keep
    activations NHWC and call double_conv_nhwc directly.
    """
    x = jnp.transpose(x_nchw, (0, 2, 3, 1))
    y = double_conv_nhwc(x, w1_oihw, b1, w2_oihw, b2, tile_h=tile_h)
    return jnp.transpose(y, (0, 3, 1, 2))


if __name__ == "__main__":
    # Small shapes consistent with DoubleConv(in_ch=4, out_ch=8).
    N, Cin, Cout, H, W = 2, 4, 8, 16, 16

    key = jax.random.PRNGKey(0)
    kx, kw1, kb1, kw2, kb2 = jax.random.split(key, 5)

    x = jax.random.normal(kx, (N, Cin, H, W), dtype=jnp.float32)
    w1 = 0.1 * jax.random.normal(kw1, (Cout, Cin, 3, 3), dtype=jnp.float32)
    b1 = 0.1 * jax.random.normal(kb1, (Cout,), dtype=jnp.float32)
    w2 = 0.1 * jax.random.normal(kw2, (Cout, Cout, 3, 3), dtype=jnp.float32)
    b2 = 0.1 * jax.random.normal(kb2, (Cout,), dtype=jnp.float32)

    # Pure-JAX f32 reference (lax conv, NCHW/OIHW).
    def ref(x, w, b):
        out = jax.lax.conv_general_dilated(
            x, w, window_strides=(1, 1), padding="SAME",
            dimension_numbers=("NCHW", "OIHW", "NCHW"))
        return jnp.maximum(out + b[None, :, None, None], 0.0)

    y_ref = ref(ref(x, w1, b1), w2, b2)

    def check(y, name):
        assert y.shape == (N, Cout, H, W), (name, y.shape)
        err = jnp.abs(y - y_ref)
        # bf16 MXU operands (f32 accumulation) -> slightly looser than pure f32.
        assert jnp.allclose(y, y_ref, atol=5e-2, rtol=5e-2), (name, float(jnp.max(err)))
        assert float(jnp.mean(err)) < 1e-2, (name, float(jnp.mean(err)))

    # tile_h=4 -> 4 H-tiles: exercises first / interior / last halo paths.
    y = jax.block_until_ready(double_conv(x, w1, b1, w2, b2, tile_h=4))
    check(y, "tile_h=4")

    # Auto heuristic (VMEM-budget + megacore-aware tile choice).
    y_auto = jax.block_until_ready(double_conv(x, w1, b1, w2, b2))
    check(y_auto, "auto")

    # Single-tile (no inter-tile halo) path.
    y_full = jax.block_until_ready(double_conv(x, w1, b1, w2, b2, tile_h=H))
    check(y_full, "tile_h=H")

    print("KERNEL_OK")
</pallas_src>

<mosaic_0001>
module attributes {stable_mosaic.version = 11 : i64} {
  func.func @_double_conv_kernel(%arg0: i32, %arg1: i32, %arg2: memref<1x2x16x4xf32, #tpu.memory_space<vmem>>, %arg3: memref<1x4x16x4xf32, #tpu.memory_space<vmem>>, %arg4: memref<1x2x16x4xf32, #tpu.memory_space<vmem>>, %arg5: memref<3x12x128xbf16, #tpu.memory_space<vmem>>, %arg6: memref<1x128xf32, #tpu.memory_space<vmem>>, %arg7: memref<3x384x128xbf16, #tpu.memory_space<vmem>>, %arg8: memref<1x128xf32, #tpu.memory_space<vmem>>, %arg9: memref<1x4x16x8xf32, #tpu.memory_space<vmem>>, %arg10: memref<8x18x4xbf16, #tpu.memory_space<vmem>>, %arg11: memref<8x16x12xbf16, #tpu.memory_space<vmem>>, %arg12: memref<6x18x128xbf16, #tpu.memory_space<vmem>>, %arg13: memref<6x16x384xbf16, #tpu.memory_space<vmem>>) attributes {dimension_semantics = [#tpu.dimension_semantics<parallel>, #tpu.dimension_semantics<parallel>], iteration_bounds = array<i64: 2, 4>, scalar_prefetch = 0 : i64, scratch_operands = 4 : i64, tpu.core_type = #tpu.core_type<tc>, window_params = [{transform_indices = @transform_0, window_bounds = array<i64: 1, 2, 16, 4>}, {transform_indices = @transform_1, window_bounds = array<i64: 1, 4, 16, 4>}, {transform_indices = @transform_2, window_bounds = array<i64: 1, 2, 16, 4>}, {pipeline_mode = #tpu.pipeline_mode<synchronous>, transform_indices = @transform_3, window_bounds = array<i64: 3, 12, 128>}, {pipeline_mode = #tpu.pipeline_mode<synchronous>, transform_indices = @transform_4, window_bounds = array<i64: 1, 128>}, {pipeline_mode = #tpu.pipeline_mode<synchronous>, transform_indices = @transform_5, window_bounds = array<i64: 3, 384, 128>}, {pipeline_mode = #tpu.pipeline_mode<synchronous>, transform_indices = @transform_6, window_bounds = array<i64: 1, 128>}, {transform_indices = @transform_7, window_bounds = array<i64: 1, 4, 16, 8>}]} {
    %cst = arith.constant 0.000000e+00 : bf16
    %0 = vector.broadcast %cst : bf16 to vector<8x1x4xbf16>
    %c0 = arith.constant 0 : index
    %c0_0 = arith.constant 0 : index
    %c0_1 = arith.constant 0 : index
    %1 = vector.load %arg10[%c0, %c0_0, %c0_1] : memref<8x18x4xbf16, #tpu.memory_space<vmem>>, vector<8x1x4xbf16>
    tpu.vector_store %arg10[%c0, %c0_0, %c0_1], %0 {strides = array<i32>} : memref<8x18x4xbf16, #tpu.memory_space<vmem>>, vector<8x1x4xbf16>,
    %cst_2 = arith.constant 0.000000e+00 : bf16
    %2 = vector.broadcast %cst_2 : bf16 to vector<8x1x4xbf16>
    %c0_3 = arith.constant 0 : index
    %c17 = arith.constant 17 : index
    %c0_4 = arith.constant 0 : index
    %3 = vector.load %arg10[%c0_3, %c17, %c0_4] : memref<8x18x4xbf16, #tpu.memory_space<vmem>>, vector<8x1x4xbf16>
    tpu.vector_store %arg10[%c0_3, %c17, %c0_4], %2 {strides = array<i32>} : memref<8x18x4xbf16, #tpu.memory_space<vmem>>, vector<8x1x4xbf16>,
    %c0_5 = arith.constant 0 : index
    %c0_6 = arith.constant 0 : index
    %c0_7 = arith.constant 0 : index
    %c0_8 = arith.constant 0 : index
    %4 = vector.load %arg3[%c0_5, %c0_6, %c0_7, %c0_8] : memref<1x4x16x4xf32, #tpu.memory_space<vmem>>, vector<1x4x16x4xf32>
    %5 = vector.shape_cast %4 : vector<1x4x16x4xf32> to vector<4x16x4xf32>
    %6 = arith.truncf %5 : vector<4x16x4xf32> to vector<4x16x4xbf16>
    %c2 = arith.constant 2 : index
    %c1 = arith.constant 1 : index
    %c0_9 = arith.constant 0 : index
    %7 = vector.load %arg10[%c2, %c1, %c0_9] : memref<8x18x4xbf16, #tpu.memory_space<vmem>>, vector<4x16x4xbf16>
    tpu.vector_store %arg10[%c2, %c1, %c0_9], %6 {strides = array<i32>} : memref<8x18x4xbf16, #tpu.memory_space<vmem>>, vector<4x16x4xbf16>,
    %c0_i32 = arith.constant 0 : i32
    %8 = arith.cmpi eq, %arg1, %c0_i32 : i32
    %9 = arith.extui %8 : i1 to i32
    %c0_i32_10 = arith.constant 0 : i32
    %10 = arith.cmpi ne, %9, %c0_i32_10 : i32
    scf.if %10 {
      %cst_115 = arith.constant 0.000000e+00 : bf16
      %94 = vector.broadcast %cst_115 : bf16 to vector<2x16x4xbf16>
      %c0_116 = arith.constant 0 : index
      %c1_117 = arith.constant 1 : index
      %c0_118 = arith.constant 0 : index
      %95 = vector.load %arg10[%c0_116, %c1_117, %c0_118] : memref<8x18x4xbf16, #tpu.memory_space<vmem>>, vector<2x16x4xbf16>
      tpu.vector_store %arg10[%c0_116, %c1_117, %c0_118], %94 {strides = array<i32>} : memref<8x18x4xbf16, #tpu.memory_space<vmem>>, vector<2x16x4xbf16>,
    } else {
    }
    %c0_i32_11 = arith.constant 0 : i32
    %11 = arith.cmpi sgt, %arg1, %c0_i32_11 : i32
    %12 = arith.extui %11 : i1 to i32
    %c0_i32_12 = arith.constant 0 : i32
    %13 = arith.cmpi ne, %12, %c0_i32_12 : i32
    scf.if %13 {
      %c0_115 = arith.constant 0 : index
      %c0_116 = arith.constant 0 : index
      %c0_117 = arith.constant 0 : index
      %c0_118 = arith.constant 0 : index
      %94 = vector.load %arg2[%c0_115, %c0_116, %c0_117, %c0_118] : memref<1x2x16x4xf32, #tpu.memory_space<vmem>>, vector<1x2x16x4xf32>
      %95 = vector.shape_cast %94 : vector<1x2x16x4xf32> to vector<2x16x4xf32>
      %96 = arith.truncf %95 : vector<2x16x4xf32> to vector<2x16x4xbf16>
      %c0_119 = arith.constant 0 : index
      %c1_120 = arith.constant 1 : index
      %c0_121 = arith.constant 0 : index
      %97 = vector.load %arg10[%c0_119, %c1_120, %c0_121] : memref<8x18x4xbf16, #tpu.memory_space<vmem>>, vector<2x16x4xbf16>
      tpu.vector_store %arg10[%c0_119, %c1_120, %c0_121], %96 {strides = array<i32>} : memref<8x18x4xbf16, #tpu.memory_space<vmem>>, vector<2x16x4xbf16>,
    } else {
    }
    %c3_i32 = arith.constant 3 : i32
    %14 = arith.cmpi eq, %arg1, %c3_i32 : i32
    %15 = arith.extui %14 : i1 to i32
    %c0_i32_13 = arith.constant 0 : i32
    %16 = arith.cmpi ne, %15, %c0_i32_13 : i32
    scf.if %16 {
      %cst_115 = arith.constant 0.000000e+00 : bf16
      %94 = vector.broadcast %cst_115 : bf16 to vector<2x16x4xbf16>
      %c6 = arith.constant 6 : index
      %c1_116 = arith.constant 1 : index
      %c0_117 = arith.constant 0 : index
      %95 = vector.load %arg10[%c6, %c1_116, %c0_117] : memref<8x18x4xbf16, #tpu.memory_space<vmem>>, vector<2x16x4xbf16>
      tpu.vector_store %arg10[%c6, %c1_116, %c0_117], %94 {strides = array<i32>} : memref<8x18x4xbf16, #tpu.memory_space<vmem>>, vector<2x16x4xbf16>,
    } else {
    }
    %c3_i32_14 = arith.constant 3 : i32
    %17 = arith.cmpi slt, %arg1, %c3_i32_14 : i32
    %18 = arith.extui %17 : i1 to i32
    %c0_i32_15 = arith.constant 0 : i32
    %19 = arith.cmpi ne, %18, %c0_i32_15 : i32
    scf.if %19 {
      %c0_115 = arith.constant 0 : index
      %c0_116 = arith.constant 0 : index
      %c0_117 = arith.constant 0 : index
      %c0_118 = arith.constant 0 : index
      %94 = vector.load %arg4[%c0_115, %c0_116, %c0_117, %c0_118] : memref<1x2x16x4xf32, #tpu.memory_space<vmem>>, vector<1x2x16x4xf32>
      %95 = vector.shape_cast %94 : vector<1x2x16x4xf32> to vector<2x16x4xf32>
      %96 = arith.truncf %95 : vector<2x16x4xf32> to vector<2x16x4xbf16>
      %c6 = arith.constant 6 : index
      %c1_119 = arith.constant 1 : index
      %c0_120 = arith.constant 0 : index
      %97 = vector.load %arg10[%c6, %c1_119, %c0_120] : memref<8x18x4xbf16, #tpu.memory_space<vmem>>, vector<2x16x4xbf16>
      tpu.vector_store %arg10[%c6, %c1_119, %c0_120], %96 {strides = array<i32>} : memref<8x18x4xbf16, #tpu.memory_space<vmem>>, vector<2x16x4xbf16>,
    } else {
    }
    %c0_16 = arith.constant 0 : index
    %c0_17 = arith.constant 0 : index
    %c0_18 = arith.constant 0 : index
    %20 = vector.load %arg10[%c0_16, %c0_17, %c0_18] : memref<8x18x4xbf16, #tpu.memory_space<vmem>>, vector<8x16x4xbf16>
    %c0_19 = arith.constant 0 : index
    %c0_20 = arith.constant 0 : index
    %c0_21 = arith.constant 0 : index
    %21 = vector.load %arg11[%c0_19, %c0_20, %c0_21] : memref<8x16x12xbf16, #tpu.memory_space<vmem>>, vector<8x16x4xbf16>
    tpu.vector_store %arg11[%c0_19, %c0_20, %c0_21], %20 {strides = array<i32>} : memref<8x16x12xbf16, #tpu.memory_space<vmem>>, vector<8x16x4xbf16>,
    %c0_22 = arith.constant 0 : index
    %c1_23 = arith.constant 1 : index
    %c0_24 = arith.constant 0 : index
    %22 = vector.load %arg10[%c0_22, %c1_23, %c0_24] : memref<8x18x4xbf16, #tpu.memory_space<vmem>>, vector<8x16x4xbf16>
    %c0_25 = arith.constant 0 : index
    %c0_26 = arith.constant 0 : index
    %c4 = arith.constant 4 : index
    %23 = vector.load %arg11[%c0_25, %c0_26, %c4] : memref<8x16x12xbf16, #tpu.memory_space<vmem>>, vector<8x16x4xbf16>
    tpu.vector_store %arg11[%c0_25, %c0_26, %c4], %22 {strides = array<i32>} : memref<8x16x12xbf16, #tpu.memory_space<vmem>>, vector<8x16x4xbf16>,
    %c0_27 = arith.constant 0 : index
    %c2_28 = arith.constant 2 : index
    %c0_29 = arith.constant 0 : index
    %24 = vector.load %arg10[%c0_27, %c2_28, %c0_29] : memref<8x18x4xbf16, #tpu.memory_space<vmem>>, vector<8x16x4xbf16>
    %c0_30 = arith.constant 0 : index
    %c0_31 = arith.constant 0 : index
    %c8 = arith.constant 8 : index
    %25 = vector.load %arg11[%c0_30, %c0_31, %c8] : memref<8x16x12xbf16, #tpu.memory_space<vmem>>, vector<8x16x4xbf16>
    tpu.vector_store %arg11[%c0_30, %c0_31, %c8], %24 {strides = array<i32>} : memref<8x16x12xbf16, #tpu.memory_space<vmem>>, vector<8x16x4xbf16>,
    %c0_32 = arith.constant 0 : index
    %c0_33 = arith.constant 0 : index
    %c0_34 = arith.constant 0 : index
    %26 = vector.load %arg11[%c0_32, %c0_33, %c0_34] : memref<8x16x12xbf16, #tpu.memory_space<vmem>>, vector<6x16x12xbf16>
    %27 = vector.shape_cast %26 : vector<6x16x12xbf16> to vector<96x12xbf16>
    %c0_35 = arith.constant 0 : index
    %c0_36 = arith.constant 0 : index
    %c0_37 = arith.constant 0 : index
    %28 = vector.load %arg5[%c0_35, %c0_36, %c0_37] : memref<3x12x128xbf16, #tpu.memory_space<vmem>>, vector<1x12x128xbf16>
    %29 = vector.shape_cast %28 : vector<1x12x128xbf16> to vector<12x128xbf16>
    %cst_38 = arith.constant dense<0.000000e+00> : vector<96x128xf32>
    %30 = tpu.matmul %27, %29, %cst_38 {dimension_numbers = #tpu.dot_dimension_numbers<[1], [0], [0], [1], [0, 0, 1, 1], [], []>} : vector<96x12xbf16>, vector<12x128xbf16>, vector<96x128xf32> -> vector<96x128xf32>
    %c1_39 = arith.constant 1 : index
    %c0_40 = arith.constant 0 : index
    %c0_41 = arith.constant 0 : index
    %31 = vector.load %arg11[%c1_39, %c0_40, %c0_41] : memref<8x16x12xbf16, #tpu.memory_space<vmem>>, vector<6x16x12xbf16>
    %32 = vector.shape_cast %31 : vector<6x16x12xbf16> to vector<96x12xbf16>
    %c1_42 = arith.constant 1 : index
    %c0_43 = arith.constant 0 : index
    %c0_44 = arith.constant 0 : index
    %33 = vector.load %arg5[%c1_42, %c0_43, %c0_44] : memref<3x12x128xbf16, #tpu.memory_space<vmem>>, vector<1x12x128xbf16>
    %34 = vector.shape_cast %33 : vector<1x12x128xbf16> to vector<12x128xbf16>
    %cst_45 = arith.constant dense<0.000000e+00> : vector<96x128xf32>
    %35 = tpu.matmul %32, %34, %cst_45 {dimension_numbers = #tpu.dot_dimension_numbers<[1], [0], [0], [1], [0, 0, 1, 1], [], []>} : vector<96x12xbf16>, vector<12x128xbf16>, vector<96x128xf32> -> vector<96x128xf32>
    %36 = arith.addf %30, %35 : vector<96x128xf32>
    %c2_46 = arith.constant 2 : index
    %c0_47 = arith.constant 0 : index
    %c0_48 = arith.constant 0 : index
    %37 = vector.load %arg11[%c2_46, %c0_47, %c0_48] : memref<8x16x12xbf16, #tpu.memory_space<vmem>>, vector<6x16x12xbf16>
    %38 = vector.shape_cast %37 : vector<6x16x12xbf16> to vector<96x12xbf16>
    %c2_49 = arith.constant 2 : index
    %c0_50 = arith.constant 0 : index
    %c0_51 = arith.constant 0 : index
    %39 = vector.load %arg5[%c2_49, %c0_50, %c0_51] : memref<3x12x128xbf16, #tpu.memory_space<vmem>>, vector<1x12x128xbf16>
    %40 = vector.shape_cast %39 : vector<1x12x128xbf16> to vector<12x128xbf16>
    %cst_52 = arith.constant dense<0.000000e+00> : vector<96x128xf32>
    %41 = tpu.matmul %38, %40, %cst_52 {dimension_numbers = #tpu.dot_dimension_numbers<[1], [0], [0], [1], [0, 0, 1, 1], [], []>} : vector<96x12xbf16>, vector<12x128xbf16>, vector<96x128xf32> -> vector<96x128xf32>
    %42 = arith.addf %36, %41 : vector<96x128xf32>
    %c0_53 = arith.constant 0 : index
    %c0_54 = arith.constant 0 : index
    %43 = vector.load %arg6[%c0_53, %c0_54] : memref<1x128xf32, #tpu.memory_space<vmem>>, vector<1x128xf32>
    %44 = vector.broadcast %43 : vector<1x128xf32> to vector<96x128xf32>
    %45 = arith.addf %42, %44 : vector<96x128xf32>
    %cst_55 = arith.constant 0.000000e+00 : f32
    %46 = vector.broadcast %cst_55 : f32 to vector<96x128xf32>
    %47 = arith.maximumf %45, %46 : vector<96x128xf32>
    %48 = arith.truncf %47 : vector<96x128xf32> to vector<96x128xbf16>
    %cst_56 = arith.constant 0.000000e+00 : bf16
    %49 = vector.broadcast %cst_56 : bf16 to vector<6x1x128xbf16>
    %c0_57 = arith.constant 0 : index
    %c0_58 = arith.constant 0 : index
    %c0_59 = arith.constant 0 : index
    %50 = vector.load %arg12[%c0_57, %c0_58, %c0_59] : memref<6x18x128xbf16, #tpu.memory_space<vmem>>, vector<6x1x128xbf16>
    tpu.vector_store %arg12[%c0_57, %c0_58, %c0_59], %49 {strides = array<i32>} : memref<6x18x128xbf16, #tpu.memory_space<vmem>>, vector<6x1x128xbf16>,
    %cst_60 = arith.constant 0.000000e+00 : bf16
    %51 = vector.broadcast %cst_60 : bf16 to vector<6x1x128xbf16>
    %c0_61 = arith.constant 0 : index
    %c17_62 = arith.constant 17 : index
    %c0_63 = arith.constant 0 : index
    %52 = vector.load %arg12[%c0_61, %c17_62, %c0_63] : memref<6x18x128xbf16, #tpu.memory_space<vmem>>, vector<6x1x128xbf16>
    tpu.vector_store %arg12[%c0_61, %c17_62, %c0_63], %51 {strides = array<i32>} : memref<6x18x128xbf16, #tpu.memory_space<vmem>>, vector<6x1x128xbf16>,
    %53 = vector.shape_cast %48 : vector<96x128xbf16> to vector<6x16x128xbf16>
    %c0_64 = arith.constant 0 : index
    %c1_65 = arith.constant 1 : index
    %c0_66 = arith.constant 0 : index
    %54 = vector.load %arg12[%c0_64, %c1_65, %c0_66] : memref<6x18x128xbf16, #tpu.memory_space<vmem>>, vector<6x16x128xbf16>
    tpu.vector_store %arg12[%c0_64, %c1_65, %c0_66], %53 {strides = array<i32>} : memref<6x18x128xbf16, #tpu.memory_space<vmem>>, vector<6x16x128xbf16>,
    %c0_i32_67 = arith.constant 0 : i32
    %55 = arith.cmpi eq, %arg1, %c0_i32_67 : i32
    %56 = arith.extui %55 : i1 to i32
    %c0_i32_68 = arith.constant 0 : i32
    %57 = arith.cmpi ne, %56, %c0_i32_68 : i32
    scf.if %57 {
      %cst_115 = arith.constant 0.000000e+00 : bf16
      %94 = vector.broadcast %cst_115 : bf16 to vector<1x18x128xbf16>
      %c0_116 = arith.constant 0 : index
      %c0_117 = arith.constant 0 : index
      %c0_118 = arith.constant 0 : index
      %95 = vector.load %arg12[%c0_116, %c0_117, %c0_118] : memref<6x18x128xbf16, #tpu.memory_space<vmem>>, vector<1x18x128xbf16>
      tpu.vector_store %arg12[%c0_116, %c0_117, %c0_118], %94 {strides = array<i32>} : memref<6x18x128xbf16, #tpu.memory_space<vmem>>, vector<1x18x128xbf16>,
    } else {
    }
    %c3_i32_69 = arith.constant 3 : i32
    %58 = arith.cmpi eq, %arg1, %c3_i32_69 : i32
    %59 = arith.extui %58 : i1 to i32
    %c0_i32_70 = arith.constant 0 : i32
    %60 = arith.cmpi ne, %59, %c0_i32_70 : i32
    scf.if %60 {
      %cst_115 = arith.constant 0.000000e+00 : bf16
      %94 = vector.broadcast %cst_115 : bf16 to vector<1x18x128xbf16>
      %c5 = arith.constant 5 : index
      %c0_116 = arith.constant 0 : index
      %c0_117 = arith.constant 0 : index
      %95 = vector.load %arg12[%c5, %c0_116, %c0_117] : memref<6x18x128xbf16, #tpu.memory_space<vmem>>, vector<1x18x128xbf16>
      tpu.vector_store %arg12[%c5, %c0_116, %c0_117], %94 {strides = array<i32>} : memref<6x18x128xbf16, #tpu.memory_space<vmem>>, vector<1x18x128xbf16>,
    } else {
    }
    %c0_71 = arith.constant 0 : index
    %c0_72 = arith.constant 0 : index
    %c0_73 = arith.constant 0 : index
    %61 = vector.load %arg12[%c0_71, %c0_72, %c0_73] : memref<6x18x128xbf16, #tpu.memory_space<vmem>>, vector<6x16x128xbf16>
    %c0_74 = arith.constant 0 : index
    %c0_75 = arith.constant 0 : index
    %c0_76 = arith.constant 0 : index
    %62 = vector.load %arg13[%c0_74, %c0_75, %c0_76] : memref<6x16x384xbf16, #tpu.memory_space<vmem>>, vector<6x16x128xbf16>
    tpu.vector_store %arg13[%c0_74, %c0_75, %c0_76], %61 {strides = array<i32>} : memref<6x16x384xbf16, #tpu.memory_space<vmem>>, vector<6x16x128xbf16>,
    %c0_77 = arith.constant 0 : index
    %c1_78 = arith.constant 1 : index
    %c0_79 = arith.constant 0 : index
    %63 = vector.load %arg12[%c0_77, %c1_78, %c0_79] : memref<6x18x128xbf16, #tpu.memory_space<vmem>>, vector<6x16x128xbf16>
    %c0_80 = arith.constant 0 : index
    %c0_81 = arith.constant 0 : index
    %c128 = arith.constant 128 : index
    %64 = vector.load %arg13[%c0_80, %c0_81, %c128] : memref<6x16x384xbf16, #tpu.memory_space<vmem>>, vector<6x16x128xbf16>
    tpu.vector_store %arg13[%c0_80, %c0_81, %c128], %63 {strides = array<i32>} : memref<6x16x384xbf16, #tpu.memory_space<vmem>>, vector<6x16x128xbf16>,
    %c0_82 = arith.constant 0 : index
    %c2_83 = arith.constant 2 : index
    %c0_84 = arith.constant 0 : index
    %65 = vector.load %arg12[%c0_82, %c2_83, %c0_84] : memref<6x18x128xbf16, #tpu.memory_space<vmem>>, vector<6x16x128xbf16>
    %c0_85 = arith.constant 0 : index
    %c0_86 = arith.constant 0 : index
    %c256 = arith.constant 256 : index
    %66 = vector.load %arg13[%c0_85, %c0_86, %c256] : memref<6x16x384xbf16, #tpu.memory_space<vmem>>, vector<6x16x128xbf16>
    tpu.vector_store %arg13[%c0_85, %c0_86, %c256], %65 {strides = array<i32>} : memref<6x16x384xbf16, #tpu.memory_space<vmem>>, vector<6x16x128xbf16>,
    %c0_87 = arith.constant 0 : index
    %c0_88 = arith.constant 0 : index
    %c0_89 = arith.constant 0 : index
    %67 = vector.load %arg13[%c0_87, %c0_88, %c0_89] : memref<6x16x384xbf16, #tpu.memory_space<vmem>>, vector<4x16x384xbf16>
    %68 = vector.shape_cast %67 : vector<4x16x384xbf16> to vector<64x384xbf16>
    %c0_90 = arith.constant 0 : index
    %c0_91 = arith.constant 0 : index
    %c0_92 = arith.constant 0 : index
    %69 = vector.load %arg7[%c0_90, %c0_91, %c0_92] : memref<3x384x128xbf16, #tpu.memory_space<vmem>>, vector<1x384x128xbf16>
    %70 = vector.shape_cast %69 : vector<1x384x128xbf16> to vector<384x128xbf16>
    %cst_93 = arith.constant dense<0.000000e+00> : vector<64x128xf32>
    %71 = tpu.matmul %68, %70, %cst_93 {dimension_numbers = #tpu.dot_dimension_numbers<[1], [0], [0], [1], [0, 0, 1, 1], [], []>} : vector<64x384xbf16>, vector<384x128xbf16>, vector<64x128xf32> -> vector<64x128xf32>
    %c1_94 = arith.constant 1 : index
    %c0_95 = arith.constant 0 : index
    %c0_96 = arith.constant 0 : index
    %72 = vector.load %arg13[%c1_94, %c0_95, %c0_96] : memref<6x16x384xbf16, #tpu.memory_space<vmem>>, vector<4x16x384xbf16>
    %73 = vector.shape_cast %72 : vector<4x16x384xbf16> to vector<64x384xbf16>
    %c1_97 = arith.constant 1 : index
    %c0_98 = arith.constant 0 : index
    %c0_99 = arith.constant 0 : index
    %74 = vector.load %arg7[%c1_97, %c0_98, %c0_99] : memref<3x384x128xbf16, #tpu.memory_space<vmem>>, vector<1x384x128xbf16>
    %75 = vector.shape_cast %74 : vector<1x384x128xbf16> to vector<384x128xbf16>
    %cst_100 = arith.constant dense<0.000000e+00> : vector<64x128xf32>
    %76 = tpu.matmul %73, %75, %cst_100 {dimension_numbers = #tpu.dot_dimension_numbers<[1], [0], [0], [1], [0, 0, 1, 1], [], []>} : vector<64x384xbf16>, vector<384x128xbf16>, vector<64x128xf32> -> vector<64x128xf32>
    %77 = arith.addf %71, %76 : vector<64x128xf32>
    %c2_101 = arith.constant 2 : index
    %c0_102 = arith.constant 0 : index
    %c0_103 = arith.constant 0 : index
    %78 = vector.load %arg13[%c2_101, %c0_102, %c0_103] : memref<6x16x384xbf16, #tpu.memory_space<vmem>>, vector<4x16x384xbf16>
    %79 = vector.shape_cast %78 : vector<4x16x384xbf16> to vector<64x384xbf16>
    %c2_104 = arith.constant 2 : index
    %c0_105 = arith.constant 0 : index
    %c0_106 = arith.constant 0 : index
    %80 = vector.load %arg7[%c2_104, %c0_105, %c0_106] : memref<3x384x128xbf16, #tpu.memory_space<vmem>>, vector<1x384x128xbf16>
    %81 = vector.shape_cast %80 : vector<1x384x128xbf16> to vector<384x128xbf16>
    %cst_107 = arith.constant dense<0.000000e+00> : vector<64x128xf32>
    %82 = tpu.matmul %79, %81, %cst_107 {dimension_numbers = #tpu.dot_dimension_numbers<[1], [0], [0], [1], [0, 0, 1, 1], [], []>} : vector<64x384xbf16>, vector<384x128xbf16>, vector<64x128xf32> -> vector<64x128xf32>
    %83 = arith.addf %77, %82 : vector<64x128xf32>
    %c0_108 = arith.constant 0 : index
    %c0_109 = arith.constant 0 : index
    %84 = vector.load %arg8[%c0_108, %c0_109] : memref<1x128xf32, #tpu.memory_space<vmem>>, vector<1x128xf32>
    %85 = vector.broadcast %84 : vector<1x128xf32> to vector<64x128xf32>
    %86 = arith.addf %83, %85 : vector<64x128xf32>
    %cst_110 = arith.constant 0.000000e+00 : f32
    %87 = vector.broadcast %cst_110 : f32 to vector<64x128xf32>
    %88 = arith.maximumf %86, %87 : vector<64x128xf32>
    %89 = vector.extract_strided_slice %88 {offsets = [0, 0], sizes = [64, 8], strides = [1, 1]} : vector<64x128xf32> to vector<64x8xf32>
    %90 = vector.shape_cast %89 : vector<64x8xf32> to vector<4x16x8xf32>
    %c0_111 = arith.constant 0 : index
    %c0_112 = arith.constant 0 : index
    %c0_113 = arith.constant 0 : index
    %c0_114 = arith.constant 0 : index
    %91 = vector.load %arg9[%c0_111, %c0_112, %c0_113, %c0_114] : memref<1x4x16x8xf32, #tpu.memory_space<vmem>>, vector<1x4x16x8xf32>
    %92 = vector.shape_cast %91 : vector<1x4x16x8xf32> to vector<4x16x8xf32>
    %93 = vector.shape_cast %90 : vector<4x16x8xf32> to vector<1x4x16x8xf32>
    tpu.vector_store %arg9[%c0_111, %c0_112, %c0_113, %c0_114], %93 {strides = array<i32>} : memref<1x4x16x8xf32, #tpu.memory_space<vmem>>, vector<1x4x16x8xf32>,
    return
  }
  func.func @transform_0(%arg0: i32, %arg1: i32) -> (i32, i32, i32, i32) {
    %c2_i32 = arith.constant 2 : i32
    %0 = arith.muli %arg1, %c2_i32 : i32
    %c1_i32 = arith.constant 1 : i32
    %1 = arith.subi %0, %c1_i32 : i32
    %c0_i32 = arith.constant 0 : i32
    %2 = arith.maxsi %1, %c0_i32 : i32
    %c0_i32_0 = arith.constant 0 : i32
    %c0_i32_1 = arith.constant 0 : i32
    %c0_i32_2 = arith.constant 0 : i32
    return %arg0, %2, %c0_i32_0, %c0_i32_1 : i32, i32, i32, i32
  }
  func.func @transform_1(%arg0: i32, %arg1: i32) -> (i32, i32, i32, i32) {
    %c0_i32 = arith.constant 0 : i32
    %c0_i32_0 = arith.constant 0 : i32
    %c0_i32_1 = arith.constant 0 : i32
    return %arg0, %arg1, %c0_i32, %c0_i32_0 : i32, i32, i32, i32
  }
  func.func @transform_2(%arg0: i32, %arg1: i32) -> (i32, i32, i32, i32) {
    %c1_i32 = arith.constant 1 : i32
    %0 = arith.addi %arg1, %c1_i32 : i32
    %c2_i32 = arith.constant 2 : i32
    %1 = arith.muli %0, %c2_i32 : i32
    %c7_i32 = arith.constant 7 : i32
    %2 = arith.minsi %1, %c7_i32 : i32
    %c0_i32 = arith.constant 0 : i32
    %c0_i32_0 = arith.constant 0 : i32
    %c0_i32_1 = arith.constant 0 : i32
    return %arg0, %2, %c0_i32, %c0_i32_0 : i32, i32, i32, i32
  }
  func.func @transform_3(%arg0: i32, %arg1: i32) -> (i32, i32, i32) {
    %c0_i32 = arith.constant 0 : i32
    %c0_i32_0 = arith.constant 0 : i32
    %c0_i32_1 = arith.constant 0 : i32
    %c0_i32_2 = arith.constant 0 : i32
    return %c0_i32, %c0_i32_0, %c0_i32_1 : i32, i32, i32
  }
  func.func @transform_4(%arg0: i32, %arg1: i32) -> (i32, i32) {
    %c0_i32 = arith.constant 0 : i32
    %c0_i32_0 = arith.constant 0 : i32
    %c0_i32_1 = arith.constant 0 : i32
    return %c0_i32, %c0_i32_0 : i32, i32
  }
  func.func @transform_5(%arg0: i32, %arg1: i32) -> (i32, i32, i32) {
    %c0_i32 = arith.constant 0 : i32
    %c0_i32_0 = arith.constant 0 : i32
    %c0_i32_1 = arith.constant 0 : i32
    %c0_i32_2 = arith.constant 0 : i32
    return %c0_i32, %c0_i32_0, %c0_i32_1 : i32, i32, i32
  }
  func.func @transform_6(%arg0: i32, %arg1: i32) -> (i32, i32) {
    %c0_i32 = arith.constant 0 : i32
    %c0_i32_0 = arith.constant 0 : i32
    %c0_i32_1 = arith.constant 0 : i32
    return %c0_i32, %c0_i32_0 : i32, i32
  }
  func.func @transform_7(%arg0: i32, %arg1: i32) -> (i32, i32, i32, i32) {
    %c0_i32 = arith.constant 0 : i32
    %c0_i32_0 = arith.constant 0 : i32
    %c0_i32_1 = arith.constant 0 : i32
    return %arg0, %arg1, %c0_i32, %c0_i32_0 : i32, i32, i32, i32
  }
}

module attributes {stable_mosaic.version = 11 : i64} {
  func.func @_double_conv_kernel(%arg0: i32, %arg1: i32, %arg2: memref<1x2x16x4xf32, #tpu.memory_space<vmem>>, %arg3: memref<1x4x16x4xf32, #tpu.memory_space<vmem>>, %arg4: memref<1x2x16x4xf32, #tpu.memory_space<vmem>>, %arg5: memref<3x12x128xbf16, #tpu.memory_space<vmem>>, %arg6: memref<1x128xf32, #tpu.memory_space<vmem>>, %arg7: memref<3x384x128xbf16, #tpu.memory_space<vmem>>, %arg8: memref<1x128xf32, #tpu.memory_space<vmem>>, %arg9: memref<1x4x16x8xf32, #tpu.memory_space<vmem>>, %arg10: memref<8x18x4xbf16, #tpu.memory_space<vmem>>, %arg11: memref<8x16x12xbf16, #tpu.memory_space<vmem>>, %arg12: memref<6x18x128xbf16, #tpu.memory_space<vmem>>, %arg13: memref<6x16x384xbf16, #tpu.memory_space<vmem>>) attributes {dimension_semantics = [#tpu.dimension_semantics<parallel>, #tpu.dimension_semantics<parallel>], iteration_bounds = array<i64: 2, 4>, scalar_prefetch = 0 : i64, scratch_operands = 4 : i64, tpu.core_type = #tpu.core_type<tc>, window_params = [{transform_indices = @transform_0, window_bounds = array<i64: 1, 2, 16, 4>}, {transform_indices = @transform_1, window_bounds = array<i64: 1, 4, 16, 4>}, {transform_indices = @transform_2, window_bounds = array<i64: 1, 2, 16, 4>}, {pipeline_mode = #tpu.pipeline_mode<synchronous>, transform_indices = @transform_3, window_bounds = array<i64: 3, 12, 128>}, {pipeline_mode = #tpu.pipeline_mode<synchronous>, transform_indices = @transform_4, window_bounds = array<i64: 1, 128>}, {pipeline_mode = #tpu.pipeline_mode<synchronous>, transform_indices = @transform_5, window_bounds = array<i64: 3, 384, 128>}, {pipeline_mode = #tpu.pipeline_mode<synchronous>, transform_indices = @transform_6, window_bounds = array<i64: 1, 128>}, {transform_indices = @transform_7, window_bounds = array<i64: 1, 4, 16, 8>}]} {
    %cst = arith.constant 0.000000e+00 : bf16
    %0 = vector.broadcast %cst : bf16 to vector<8x1x4xbf16>
    %c0 = arith.constant 0 : index
    %c0_0 = arith.constant 0 : index
    %c0_1 = arith.constant 0 : index
    %1 = vector.load %arg10[%c0, %c0_0, %c0_1] : memref<8x18x4xbf16, #tpu.memory_space<vmem>>, vector<8x1x4xbf16>
    tpu.vector_store %arg10[%c0, %c0_0, %c0_1], %0 {strides = array<i32>} : memref<8x18x4xbf16, #tpu.memory_space<vmem>>, vector<8x1x4xbf16>,
    %cst_2 = arith.constant 0.000000e+00 : bf16
    %2 = vector.broadcast %cst_2 : bf16 to vector<8x1x4xbf16>
    %c0_3 = arith.constant 0 : index
    %c17 = arith.constant 17 : index
    %c0_4 = arith.constant 0 : index
    %3 = vector.load %arg10[%c0_3, %c17, %c0_4] : memref<8x18x4xbf16, #tpu.memory_space<vmem>>, vector<8x1x4xbf16>
    tpu.vector_store %arg10[%c0_3, %c17, %c0_4], %2 {strides = array<i32>} : memref<8x18x4xbf16, #tpu.memory_space<vmem>>, vector<8x1x4xbf16>,
    %c0_5 = arith.constant 0 : index
    %c0_6 = arith.constant 0 : index
    %c0_7 = arith.constant 0 : index
    %c0_8 = arith.constant 0 : index
    %4 = vector.load %arg3[%c0_5, %c0_6, %c0_7, %c0_8] : memref<1x4x16x4xf32, #tpu.memory_space<vmem>>, vector<1x4x16x4xf32>
    %5 = vector.shape_cast %4 : vector<1x4x16x4xf32> to vector<4x16x4xf32>
    %6 = arith.truncf %5 : vector<4x16x4xf32> to vector<4x16x4xbf16>
    %c2 = arith.constant 2 : index
    %c1 = arith.constant 1 : index
    %c0_9 = arith.constant 0 : index
    %7 = vector.load %arg10[%c2, %c1, %c0_9] : memref<8x18x4xbf16, #tpu.memory_space<vmem>>, vector<4x16x4xbf16>
    tpu.vector_store %arg10[%c2, %c1, %c0_9], %6 {strides = array<i32>} : memref<8x18x4xbf16, #tpu.memory_space<vmem>>, vector<4x16x4xbf16>,
    %c0_i32 = arith.constant 0 : i32
    %8 = arith.cmpi eq, %arg1, %c0_i32 : i32
    %9 = arith.extui %8 : i1 to i32
    %c0_i32_10 = arith.constant 0 : i32
    %10 = arith.cmpi ne, %9, %c0_i32_10 : i32
    scf.if %10 {
      %cst_115 = arith.constant 0.000000e+00 : bf16
      %94 = vector.broadcast %cst_115 : bf16 to vector<2x16x4xbf16>
      %c0_116 = arith.constant 0 : index
      %c1_117 = arith.constant 1 : index
      %c0_118 = arith.constant 0 : index
      %95 = vector.load %arg10[%c0_116, %c1_117, %c0_118] : memref<8x18x4xbf16, #tpu.memory_space<vmem>>, vector<2x16x4xbf16>
      tpu.vector_store %arg10[%c0_116, %c1_117, %c0_118], %94 {strides = array<i32>} : memref<8x18x4xbf16, #tpu.memory_space<vmem>>, vector<2x16x4xbf16>,
    } else {
    }
    %c0_i32_11 = arith.constant 0 : i32
    %11 = arith.cmpi sgt, %arg1, %c0_i32_11 : i32
    %12 = arith.extui %11 : i1 to i32
    %c0_i32_12 = arith.constant 0 : i32
    %13 = arith.cmpi ne, %12, %c0_i32_12 : i32
    scf.if %13 {
      %c0_115 = arith.constant 0 : index
      %c0_116 = arith.constant 0 : index
      %c0_117 = arith.constant 0 : index
      %c0_118 = arith.constant 0 : index
      %94 = vector.load %arg2[%c0_115, %c0_116, %c0_117, %c0_118] : memref<1x2x16x4xf32, #tpu.memory_space<vmem>>, vector<1x2x16x4xf32>
      %95 = vector.shape_cast %94 : vector<1x2x16x4xf32> to vector<2x16x4xf32>
      %96 = arith.truncf %95 : vector<2x16x4xf32> to vector<2x16x4xbf16>
      %c0_119 = arith.constant 0 : index
      %c1_120 = arith.constant 1 : index
      %c0_121 = arith.constant 0 : index
      %97 = vector.load %arg10[%c0_119, %c1_120, %c0_121] : memref<8x18x4xbf16, #tpu.memory_space<vmem>>, vector<2x16x4xbf16>
      tpu.vector_store %arg10[%c0_119, %c1_120, %c0_121], %96 {strides = array<i32>} : memref<8x18x4xbf16, #tpu.memory_space<vmem>>, vector<2x16x4xbf16>,
    } else {
    }
    %c3_i32 = arith.constant 3 : i32
    %14 = arith.cmpi eq, %arg1, %c3_i32 : i32
    %15 = arith.extui %14 : i1 to i32
    %c0_i32_13 = arith.constant 0 : i32
    %16 = arith.cmpi ne, %15, %c0_i32_13 : i32
    scf.if %16 {
      %cst_115 = arith.constant 0.000000e+00 : bf16
      %94 = vector.broadcast %cst_115 : bf16 to vector<2x16x4xbf16>
      %c6 = arith.constant 6 : index
      %c1_116 = arith.constant 1 : index
      %c0_117 = arith.constant 0 : index
      %95 = vector.load %arg10[%c6, %c1_116, %c0_117] : memref<8x18x4xbf16, #tpu.memory_space<vmem>>, vector<2x16x4xbf16>
      tpu.vector_store %arg10[%c6, %c1_116, %c0_117], %94 {strides = array<i32>} : memref<8x18x4xbf16, #tpu.memory_space<vmem>>, vector<2x16x4xbf16>,
    } else {
    }
    %c3_i32_14 = arith.constant 3 : i32
    %17 = arith.cmpi slt, %arg1, %c3_i32_14 : i32
    %18 = arith.extui %17 : i1 to i32
    %c0_i32_15 = arith.constant 0 : i32
    %19 = arith.cmpi ne, %18, %c0_i32_15 : i32
    scf.if %19 {
      %c0_115 = arith.constant 0 : index
      %c0_116 = arith.constant 0 : index
      %c0_117 = arith.constant 0 : index
      %c0_118 = arith.constant 0 : index
      %94 = vector.load %arg4[%c0_115, %c0_116, %c0_117, %c0_118] : memref<1x2x16x4xf32, #tpu.memory_space<vmem>>, vector<1x2x16x4xf32>
      %95 = vector.shape_cast %94 : vector<1x2x16x4xf32> to vector<2x16x4xf32>
      %96 = arith.truncf %95 : vector<2x16x4xf32> to vector<2x16x4xbf16>
      %c6 = arith.constant 6 : index
      %c1_119 = arith.constant 1 : index
      %c0_120 = arith.constant 0 : index
      %97 = vector.load %arg10[%c6, %c1_119, %c0_120] : memref<8x18x4xbf16, #tpu.memory_space<vmem>>, vector<2x16x4xbf16>
      tpu.vector_store %arg10[%c6, %c1_119, %c0_120], %96 {strides = array<i32>} : memref<8x18x4xbf16, #tpu.memory_space<vmem>>, vector<2x16x4xbf16>,
    } else {
    }
    %c0_16 = arith.constant 0 : index
    %c0_17 = arith.constant 0 : index
    %c0_18 = arith.constant 0 : index
    %20 = vector.load %arg10[%c0_16, %c0_17, %c0_18] : memref<8x18x4xbf16, #tpu.memory_space<vmem>>, vector<8x16x4xbf16>
    %c0_19 = arith.constant 0 : index
    %c0_20 = arith.constant 0 : index
    %c0_21 = arith.constant 0 : index
    %21 = vector.load %arg11[%c0_19, %c0_20, %c0_21] : memref<8x16x12xbf16, #tpu.memory_space<vmem>>, vector<8x16x4xbf16>
    tpu.vector_store %arg11[%c0_19, %c0_20, %c0_21], %20 {strides = array<i32>} : memref<8x16x12xbf16, #tpu.memory_space<vmem>>, vector<8x16x4xbf16>,
    %c0_22 = arith.constant 0 : index
    %c1_23 = arith.constant 1 : index
    %c0_24 = arith.constant 0 : index
    %22 = vector.load %arg10[%c0_22, %c1_23, %c0_24] : memref<8x18x4xbf16, #tpu.memory_space<vmem>>, vector<8x16x4xbf16>
    %c0_25 = arith.constant 0 : index
    %c0_26 = arith.constant 0 : index
    %c4 = arith.constant 4 : index
    %23 = vector.load %arg11[%c0_25, %c0_26, %c4] : memref<8x16x12xbf16, #tpu.memory_space<vmem>>, vector<8x16x4xbf16>
    tpu.vector_store %arg11[%c0_25, %c0_26, %c4], %22 {strides = array<i32>} : memref<8x16x12xbf16, #tpu.memory_space<vmem>>, vector<8x16x4xbf16>,
    %c0_27 = arith.constant 0 : index
    %c2_28 = arith.constant 2 : index
    %c0_29 = arith.constant 0 : index
    %24 = vector.load %arg10[%c0_27, %c2_28, %c0_29] : memref<8x18x4xbf16, #tpu.memory_space<vmem>>, vector<8x16x4xbf16>
    %c0_30 = arith.constant 0 : index
    %c0_31 = arith.constant 0 : index
    %c8 = arith.constant 8 : index
    %25 = vector.load %arg11[%c0_30, %c0_31, %c8] : memref<8x16x12xbf16, #tpu.memory_space<vmem>>, vector<8x16x4xbf16>
    tpu.vector_store %arg11[%c0_30, %c0_31, %c8], %24 {strides = array<i32>} : memref<8x16x12xbf16, #tpu.memory_space<vmem>>, vector<8x16x4xbf16>,
    %c0_32 = arith.constant 0 : index
    %c0_33 = arith.constant 0 : index
    %c0_34 = arith.constant 0 : index
    %26 = vector.load %arg11[%c0_32, %c0_33, %c0_34] : memref<8x16x12xbf16, #tpu.memory_space<vmem>>, vector<6x16x12xbf16>
    %27 = vector.shape_cast %26 : vector<6x16x12xbf16> to vector<96x12xbf16>
    %c0_35 = arith.constant 0 : index
    %c0_36 = arith.constant 0 : index
    %c0_37 = arith.constant 0 : index
    %28 = vector.load %arg5[%c0_35, %c0_36, %c0_37] : memref<3x12x128xbf16, #tpu.memory_space<vmem>>, vector<1x12x128xbf16>
    %29 = vector.shape_cast %28 : vector<1x12x128xbf16> to vector<12x128xbf16>
    %cst_38 = arith.constant dense<0.000000e+00> : vector<96x128xf32>
    %30 = tpu.matmul %27, %29, %cst_38 {dimension_numbers = #tpu.dot_dimension_numbers<[1], [0], [0], [1], [0, 0, 1, 1], [], []>} : vector<96x12xbf16>, vector<12x128xbf16>, vector<96x128xf32> -> vector<96x128xf32>
    %c1_39 = arith.constant 1 : index
    %c0_40 = arith.constant 0 : index
    %c0_41 = arith.constant 0 : index
    %31 = vector.load %arg11[%c1_39, %c0_40, %c0_41] : memref<8x16x12xbf16, #tpu.memory_space<vmem>>, vector<6x16x12xbf16>
    %32 = vector.shape_cast %31 : vector<6x16x12xbf16> to vector<96x12xbf16>
    %c1_42 = arith.constant 1 : index
    %c0_43 = arith.constant 0 : index
    %c0_44 = arith.constant 0 : index
    %33 = vector.load %arg5[%c1_42, %c0_43, %c0_44] : memref<3x12x128xbf16, #tpu.memory_space<vmem>>, vector<1x12x128xbf16>
    %34 = vector.shape_cast %33 : vector<1x12x128xbf16> to vector<12x128xbf16>
    %cst_45 = arith.constant dense<0.000000e+00> : vector<96x128xf32>
    %35 = tpu.matmul %32, %34, %cst_45 {dimension_numbers = #tpu.dot_dimension_numbers<[1], [0], [0], [1], [0, 0, 1, 1], [], []>} : vector<96x12xbf16>, vector<12x128xbf16>, vector<96x128xf32> -> vector<96x128xf32>
    %36 = arith.addf %30, %35 : vector<96x128xf32>
    %c2_46 = arith.constant 2 : index
    %c0_47 = arith.constant 0 : index
    %c0_48 = arith.constant 0 : index
    %37 = vector.load %arg11[%c2_46, %c0_47, %c0_48] : memref<8x16x12xbf16, #tpu.memory_space<vmem>>, vector<6x16x12xbf16>
    %38 = vector.shape_cast %37 : vector<6x16x12xbf16> to vector<96x12xbf16>
    %c2_49 = arith.constant 2 : index
    %c0_50 = arith.constant 0 : index
    %c0_51 = arith.constant 0 : index
    %39 = vector.load %arg5[%c2_49, %c0_50, %c0_51] : memref<3x12x128xbf16, #tpu.memory_space<vmem>>, vector<1x12x128xbf16>
    %40 = vector.shape_cast %39 : vector<1x12x128xbf16> to vector<12x128xbf16>
    %cst_52 = arith.constant dense<0.000000e+00> : vector<96x128xf32>
    %41 = tpu.matmul %38, %40, %cst_52 {dimension_numbers = #tpu.dot_dimension_numbers<[1], [0], [0], [1], [0, 0, 1, 1], [], []>} : vector<96x12xbf16>, vector<12x128xbf16>, vector<96x128xf32> -> vector<96x128xf32>
    %42 = arith.addf %36, %41 : vector<96x128xf32>
    %c0_53 = arith.constant 0 : index
    %c0_54 = arith.constant 0 : index
    %43 = vector.load %arg6[%c0_53, %c0_54] : memref<1x128xf32, #tpu.memory_space<vmem>>, vector<1x128xf32>
    %44 = vector.broadcast %43 : vector<1x128xf32> to vector<96x128xf32>
    %45 = arith.addf %42, %44 : vector<96x128xf32>
    %cst_55 = arith.constant 0.000000e+00 : f32
    %46 = vector.broadcast %cst_55 : f32 to vector<96x128xf32>
    %47 = arith.maximumf %45, %46 : vector<96x128xf32>
    %48 = arith.truncf %47 : vector<96x128xf32> to vector<96x128xbf16>
    %cst_56 = arith.constant 0.000000e+00 : bf16
    %49 = vector.broadcast %cst_56 : bf16 to vector<6x1x128xbf16>
    %c0_57 = arith.constant 0 : index
    %c0_58 = arith.constant 0 : index
    %c0_59 = arith.constant 0 : index
    %50 = vector.load %arg12[%c0_57, %c0_58, %c0_59] : memref<6x18x128xbf16, #tpu.memory_space<vmem>>, vector<6x1x128xbf16>
    tpu.vector_store %arg12[%c0_57, %c0_58, %c0_59], %49 {strides = array<i32>} : memref<6x18x128xbf16, #tpu.memory_space<vmem>>, vector<6x1x128xbf16>,
    %cst_60 = arith.constant 0.000000e+00 : bf16
    %51 = vector.broadcast %cst_60 : bf16 to vector<6x1x128xbf16>
    %c0_61 = arith.constant 0 : index
    %c17_62 = arith.constant 17 : index
    %c0_63 = arith.constant 0 : index
    %52 = vector.load %arg12[%c0_61, %c17_62, %c0_63] : memref<6x18x128xbf16, #tpu.memory_space<vmem>>, vector<6x1x128xbf16>
    tpu.vector_store %arg12[%c0_61, %c17_62, %c0_63], %51 {strides = array<i32>} : memref<6x18x128xbf16, #tpu.memory_space<vmem>>, vector<6x1x128xbf16>,
    %53 = vector.shape_cast %48 : vector<96x128xbf16> to vector<6x16x128xbf16>
    %c0_64 = arith.constant 0 : index
    %c1_65 = arith.constant 1 : index
    %c0_66 = arith.constant 0 : index
    %54 = vector.load %arg12[%c0_64, %c1_65, %c0_66] : memref<6x18x128xbf16, #tpu.memory_space<vmem>>, vector<6x16x128xbf16>
    tpu.vector_store %arg12[%c0_64, %c1_65, %c0_66], %53 {strides = array<i32>} : memref<6x18x128xbf16, #tpu.memory_space<vmem>>, vector<6x16x128xbf16>,
    %c0_i32_67 = arith.constant 0 : i32
    %55 = arith.cmpi eq, %arg1, %c0_i32_67 : i32
    %56 = arith.extui %55 : i1 to i32
    %c0_i32_68 = arith.constant 0 : i32
    %57 = arith.cmpi ne, %56, %c0_i32_68 : i32
    scf.if %57 {
      %cst_115 = arith.constant 0.000000e+00 : bf16
      %94 = vector.broadcast %cst_115 : bf16 to vector<1x18x128xbf16>
      %c0_116 = arith.constant 0 : index
      %c0_117 = arith.constant 0 : index
      %c0_118 = arith.constant 0 : index
      %95 = vector.load %arg12[%c0_116, %c0_117, %c0_118] : memref<6x18x128xbf16, #tpu.memory_space<vmem>>, vector<1x18x128xbf16>
      tpu.vector_store %arg12[%c0_116, %c0_117, %c0_118], %94 {strides = array<i32>} : memref<6x18x128xbf16, #tpu.memory_space<vmem>>, vector<1x18x128xbf16>,
    } else {
    }
    %c3_i32_69 = arith.constant 3 : i32
    %58 = arith.cmpi eq, %arg1, %c3_i32_69 : i32
    %59 = arith.extui %58 : i1 to i32
    %c0_i32_70 = arith.constant 0 : i32
    %60 = arith.cmpi ne, %59, %c0_i32_70 : i32
    scf.if %60 {
      %cst_115 = arith.constant 0.000000e+00 : bf16
      %94 = vector.broadcast %cst_115 : bf16 to vector<1x18x128xbf16>
      %c5 = arith.constant 5 : index
      %c0_116 = arith.constant 0 : index
      %c0_117 = arith.constant 0 : index
      %95 = vector.load %arg12[%c5, %c0_116, %c0_117] : memref<6x18x128xbf16, #tpu.memory_space<vmem>>, vector<1x18x128xbf16>
      tpu.vector_store %arg12[%c5, %c0_116, %c0_117], %94 {strides = array<i32>} : memref<6x18x128xbf16, #tpu.memory_space<vmem>>, vector<1x18x128xbf16>,
    } else {
    }
    %c0_71 = arith.constant 0 : index
    %c0_72 = arith.constant 0 : index
    %c0_73 = arith.constant 0 : index
    %61 = vector.load %arg12[%c0_71, %c0_72, %c0_73] : memref<6x18x128xbf16, #tpu.memory_space<vmem>>, vector<6x16x128xbf16>
    %c0_74 = arith.constant 0 : index
    %c0_75 = arith.constant 0 : index
    %c0_76 = arith.constant 0 : index
    %62 = vector.load %arg13[%c0_74, %c0_75, %c0_76] : memref<6x16x384xbf16, #tpu.memory_space<vmem>>, vector<6x16x128xbf16>
    tpu.vector_store %arg13[%c0_74, %c0_75, %c0_76], %61 {strides = array<i32>} : memref<6x16x384xbf16, #tpu.memory_space<vmem>>, vector<6x16x128xbf16>,
    %c0_77 = arith.constant 0 : index
    %c1_78 = arith.constant 1 : index
    %c0_79 = arith.constant 0 : index
    %63 = vector.load %arg12[%c0_77, %c1_78, %c0_79] : memref<6x18x128xbf16, #tpu.memory_space<vmem>>, vector<6x16x128xbf16>
    %c0_80 = arith.constant 0 : index
    %c0_81 = arith.constant 0 : index
    %c128 = arith.constant 128 : index
    %64 = vector.load %arg13[%c0_80, %c0_81, %c128] : memref<6x16x384xbf16, #tpu.memory_space<vmem>>, vector<6x16x128xbf16>
    tpu.vector_store %arg13[%c0_80, %c0_81, %c128], %63 {strides = array<i32>} : memref<6x16x384xbf16, #tpu.memory_space<vmem>>, vector<6x16x128xbf16>,
    %c0_82 = arith.constant 0 : index
    %c2_83 = arith.constant 2 : index
    %c0_84 = arith.constant 0 : index
    %65 = vector.load %arg12[%c0_82, %c2_83, %c0_84] : memref<6x18x128xbf16, #tpu.memory_space<vmem>>, vector<6x16x128xbf16>
    %c0_85 = arith.constant 0 : index
    %c0_86 = arith.constant 0 : index
    %c256 = arith.constant 256 : index
    %66 = vector.load %arg13[%c0_85, %c0_86, %c256] : memref<6x16x384xbf16, #tpu.memory_space<vmem>>, vector<6x16x128xbf16>
    tpu.vector_store %arg13[%c0_85, %c0_86, %c256], %65 {strides = array<i32>} : memref<6x16x384xbf16, #tpu.memory_space<vmem>>, vector<6x16x128xbf16>,
    %c0_87 = arith.constant 0 : index
    %c0_88 = arith.constant 0 : index
    %c0_89 = arith.constant 0 : index
    %67 = vector.load %arg13[%c0_87, %c0_88, %c0_89] : memref<6x16x384xbf16, #tpu.memory_space<vmem>>, vector<4x16x384xbf16>
    %68 = vector.shape_cast %67 : vector<4x16x384xbf16> to vector<64x384xbf16>
    %c0_90 = arith.constant 0 : index
    %c0_91 = arith.constant 0 : index
    %c0_92 = arith.constant 0 : index
    %69 = vector.load %arg7[%c0_90, %c0_91, %c0_92] : memref<3x384x128xbf16, #tpu.memory_space<vmem>>, vector<1x384x128xbf16>
    %70 = vector.shape_cast %69 : vector<1x384x128xbf16> to vector<384x128xbf16>
    %cst_93 = arith.constant dense<0.000000e+00> : vector<64x128xf32>
    %71 = tpu.matmul %68, %70, %cst_93 {dimension_numbers = #tpu.dot_dimension_numbers<[1], [0], [0], [1], [0, 0, 1, 1], [], []>} : vector<64x384xbf16>, vector<384x128xbf16>, vector<64x128xf32> -> vector<64x128xf32>
    %c1_94 = arith.constant 1 : index
    %c0_95 = arith.constant 0 : index
    %c0_96 = arith.constant 0 : index
    %72 = vector.load %arg13[%c1_94, %c0_95, %c0_96] : memref<6x16x384xbf16, #tpu.memory_space<vmem>>, vector<4x16x384xbf16>
    %73 = vector.shape_cast %72 : vector<4x16x384xbf16> to vector<64x384xbf16>
    %c1_97 = arith.constant 1 : index
    %c0_98 = arith.constant 0 : index
    %c0_99 = arith.constant 0 : index
    %74 = vector.load %arg7[%c1_97, %c0_98, %c0_99] : memref<3x384x128xbf16, #tpu.memory_space<vmem>>, vector<1x384x128xbf16>
    %75 = vector.shape_cast %74 : vector<1x384x128xbf16> to vector<384x128xbf16>
    %cst_100 = arith.constant dense<0.000000e+00> : vector<64x128xf32>
    %76 = tpu.matmul %73, %75, %cst_100 {dimension_numbers = #tpu.dot_dimension_numbers<[1], [0], [0], [1], [0, 0, 1, 1], [], []>} : vector<64x384xbf16>, vector<384x128xbf16>, vector<64x128xf32> -> vector<64x128xf32>
    %77 = arith.addf %71, %76 : vector<64x128xf32>
    %c2_101 = arith.constant 2 : index
    %c0_102 = arith.constant 0 : index
    %c0_103 = arith.constant 0 : index
    %78 = vector.load %arg13[%c2_101, %c0_102, %c0_103] : memref<6x16x384xbf16, #tpu.memory_space<vmem>>, vector<4x16x384xbf16>
    %79 = vector.shape_cast %78 : vector<4x16x384xbf16> to vector<64x384xbf16>
    %c2_104 = arith.constant 2 : index
    %c0_105 = arith.constant 0 : index
    %c0_106 = arith.constant 0 : index
    %80 = vector.load %arg7[%c2_104, %c0_105, %c0_106] : memref<3x384x128xbf16, #tpu.memory_space<vmem>>, vector<1x384x128xbf16>
    %81 = vector.shape_cast %80 : vector<1x384x128xbf16> to vector<384x128xbf16>
    %cst_107 = arith.constant dense<0.000000e+00> : vector<64x128xf32>
    %82 = tpu.matmul %79, %81, %cst_107 {dimension_numbers = #tpu.dot_dimension_numbers<[1], [0], [0], [1], [0, 0, 1, 1], [], []>} : vector<64x384xbf16>, vector<384x128xbf16>, vector<64x128xf32> -> vector<64x128xf32>
    %83 = arith.addf %77, %82 : vector<64x128xf32>
    %c0_108 = arith.constant 0 : index
    %c0_109 = arith.constant 0 : index
    %84 = vector.load %arg8[%c0_108, %c0_109] : memref<1x128xf32, #tpu.memory_space<vmem>>, vector<1x128xf32>
    %85 = vector.broadcast %84 : vector<1x128xf32> to vector<64x128xf32>
    %86 = arith.addf %83, %85 : vector<64x128xf32>
    %cst_110 = arith.constant 0.000000e+00 : f32
    %87 = vector.broadcast %cst_110 : f32 to vector<64x128xf32>
    %88 = arith.maximumf %86, %87 : vector<64x128xf32>
    %89 = vector.extract_strided_slice %88 {offsets = [0, 0], sizes = [64, 8], strides = [1, 1]} : vector<64x128xf32> to vector<64x8xf32>
    %90 = vector.shape_cast %89 : vector<64x8xf32> to vector<4x16x8xf32>
    %c0_111 = arith.constant 0 : index
    %c0_112 = arith.constant 0 : index
    %c0_113 = arith.constant 0 : index
    %c0_114 = arith.constant 0 : index
    %91 = vector.load %arg9[%c0_111, %c0_112, %c0_113, %c0_114] : memref<1x4x16x8xf32, #tpu.memory_space<vmem>>, vector<1x4x16x8xf32>
    %92 = vector.shape_cast %91 : vector<1x4x16x8xf32> to vector<4x16x8xf32>
    %93 = vector.shape_cast %90 : vector<4x16x8xf32> to vector<1x4x16x8xf32>
    tpu.vector_store %arg9[%c0_111, %c0_112, %c0_113, %c0_114], %93 {strides = array<i32>} : memref<1x4x16x8xf32, #tpu.memory_space<vmem>>, vector<1x4x16x8xf32>,
    return
  }
  func.func @transform_0(%arg0: i32, %arg1: i32) -> (i32, i32, i32, i32) {
    %c2_i32 = arith.constant 2 : i32
    %0 = arith.muli %arg1, %c2_i32 : i32
    %c1_i32 = arith.constant 1 : i32
    %1 = arith.subi %0, %c1_i32 : i32
    %c0_i32 = arith.constant 0 : i32
    %2 = arith.maxsi %1, %c0_i32 : i32
    %c0_i32_0 = arith.constant 0 : i32
    %c0_i32_1 = arith.constant 0 : i32
    %c0_i32_2 = arith.constant 0 : i32
    return %arg0, %2, %c0_i32_0, %c0_i32_1 : i32, i32, i32, i32
  }
  func.func @transform_1(%arg0: i32, %arg1: i32) -> (i32, i32, i32, i32) {
    %c0_i32 = arith.constant 0 : i32
    %c0_i32_0 = arith.constant 0 : i32
    %c0_i32_1 = arith.constant 0 : i32
    return %arg0, %arg1, %c0_i32, %c0_i32_0 : i32, i32, i32, i32
  }
  func.func @transform_2(%arg0: i32, %arg1: i32) -> (i32, i32, i32, i32) {
    %c1_i32 = arith.constant 1 : i32
    %0 = arith.addi %arg1, %c1_i32 : i32
    %c2_i32 = arith.constant 2 : i32
    %1 = arith.muli %0, %c2_i32 : i32
    %c7_i32 = arith.constant 7 : i32
    %2 = arith.minsi %1, %c7_i32 : i32
    %c0_i32 = arith.constant 0 : i32
    %c0_i32_0 = arith.constant 0 : i32
    %c0_i32_1 = arith.constant 0 : i32
    return %arg0, %2, %c0_i32, %c0_i32_0 : i32, i32, i32, i32
  }
  func.func @transform_3(%arg0: i32, %arg1: i32) -> (i32, i32, i32) {
    %c0_i32 = arith.constant 0 : i32
    %c0_i32_0 = arith.constant 0 : i32
    %c0_i32_1 = arith.constant 0 : i32
    %c0_i32_2 = arith.constant 0 : i32
    return %c0_i32, %c0_i32_0, %c0_i32_1 : i32, i32, i32
  }
  func.func @transform_4(%arg0: i32, %arg1: i32) -> (i32, i32) {
    %c0_i32 = arith.constant 0 : i32
    %c0_i32_0 = arith.constant 0 : i32
    %c0_i32_1 = arith.constant 0 : i32
    return %c0_i32, %c0_i32_0 : i32, i32
  }
  func.func @transform_5(%arg0: i32, %arg1: i32) -> (i32, i32, i32) {
    %c0_i32 = arith.constant 0 : i32
    %c0_i32_0 = arith.constant 0 : i32
    %c0_i32_1 = arith.constant 0 : i32
    %c0_i32_2 = arith.constant 0 : i32
    return %c0_i32, %c0_i32_0, %c0_i32_1 : i32, i32, i32
  }
  func.func @transform_6(%arg0: i32, %arg1: i32) -> (i32, i32) {
    %c0_i32 = arith.constant 0 : i32
    %c0_i32_0 = arith.constant 0 : i32
    %c0_i32_1 = arith.constant 0 : i32
    return %c0_i32, %c0_i32_0 : i32, i32
  }
  func.func @transform_7(%arg0: i32, %arg1: i32) -> (i32, i32, i32, i32) {
    %c0_i32 = arith.constant 0 : i32
    %c0_i32_0 = arith.constant 0 : i32
    %c0_i32_1 = arith.constant 0 : i32
    return %arg0, %arg1, %c0_i32, %c0_i32_0 : i32, i32, i32, i32
  }
}

</mosaic_0001>

<llo_original>
// kernel: tpu_custom_call.1
$region0: #{tpu_custom_call.1}
  #allocation0 [shape = 'u32[]', space=smem, size = 0x4, offset = 0x4, fixed_abs, tag = 'smem constant byte address 0x4 - core index']
  #allocation1 [shape = 'u32[144,128]{1,0:T(1,128)}', space=vmem, size = 0x12000, scoped, tag = 'internal scratch']
  #allocation2 [shape = 'bf16[8,18,4]{2,1,0:T(8,128)(2,1)}', space=vmem, size = 0xc000, scoped, tag = 'scratch operand']
  #allocation3 [shape = 'bf16[8,16,12]{2,1,0:T(16,128)(2,1)}', space=vmem, size = 0x8000, scoped, tag = 'scratch operand']
  #allocation4 [shape = 'bf16[6,18,128]{2,1,0:T(8,128)(2,1)}', space=vmem, size = 0x9000, scoped, tag = 'scratch operand']
  #allocation5 [shape = 'bf16[6,16,384]{2,1,0:T(16,128)(2,1)}', space=vmem, size = 0x12000, scoped, tag = 'scratch operand']
  %s0 = inlined_call_operand.vmem [shape: f32[2,16,16,4], index: 0, kind: input, shape index: {}]
  %s1 = inlined_call_operand.vmem [shape: f32[2,16,16,4], index: 1, kind: input, shape index: {}]
  %s2 = inlined_call_operand.vmem [shape: f32[2,16,16,4], index: 2, kind: input, shape index: {}]
  %s3 = inlined_call_operand.vmem [shape: bf16[3,12,128], index: 3, kind: input, shape index: {}]
  %s4 = inlined_call_operand.vmem [shape: f32[1,128], index: 4, kind: input, shape index: {}]
  %s5 = inlined_call_operand.vmem [shape: bf16[3,384,128], index: 5, kind: input, shape index: {}]
  %s6 = inlined_call_operand.vmem [shape: f32[1,128], index: 6, kind: input, shape index: {}]
  %s7 = inlined_call_operand.vmem [shape: f32[2,16,16,8], index: 7, kind: output, shape index: {}]
  %s8 = sld [smem:[#allocation0]]
  $region85: #{tpu_custom_call.1} parent=0
    _
  %s10 = ssub.s32 1, %s8
  %s11 = scalar_select 0, %s10, %s8
  loop: start=0, step=1, limit=10
  $region2: #{tpu_custom_call.1} parent=0 // loop_pre_header
    _
  $region3: #{tpu_custom_call.1} parent=0 // loop_header
    %s13 = sphi 0, %s17
    %p14 = scmp.ge.s32.totalorder %s13, 10
    %s20 = sphi 0, %s32
    %s21 = sphi 0, %s28
    %s22 = sphi 0, %s20
    %s23 = sphi 0, %s21
    %s24 = sphi 0, %s22
    %s25 = sphi 0, %s23
    %s45 = sphi 0, %s47
    %s48 = sphi 0, %s45
    %s49 = sphi 0, %s48
    %s65 = sphi 0, %s49
    %s73 = sphi 0, %s75
    %s76 = sphi 0, %s73
    %s77 = sphi 0, %s76
    %s93 = sphi 0, %s77
    %s109 = sphi 0, %s111
    %s112 = sphi 0, %s109
    %s113 = sphi 0, %s112
    %s129 = sphi 0, %s113
    %s133 = sphi 0, %s133
    %s135 = sphi 0, %s133
    %s136 = sphi 0, %s135
    %s150 = sphi 0, %s136
    %s154 = sphi 0, %s154
    %s156 = sphi 0, %s154
    %s157 = sphi 0, %s156
    %s171 = sphi 0, %s157
    %s175 = sphi 0, %s175
    %s177 = sphi 0, %s175
    %s178 = sphi 0, %s177
    %s192 = sphi 0, %s178
    %s196 = sphi 0, %s196
    %s198 = sphi 0, %s196
    %s199 = sphi 0, %s198
    %s213 = sphi 0, %s199
    %s221 = sphi 0, %s223
    %s224 = sphi 0, %s221
    %s225 = sphi 0, %s224
    %s241 = sphi 0, %s225
  $region4: #{tpu_custom_call.1} parent=0 // loop_header_branch
    %16 = sbr.rel (%p14) target = $region8
  $region5: #{tpu_custom_call.1} parent=0 // loop_body
    %s18 = ssub.s32 %s13, 1
    %s19 = ssub.s32 %s13, 2
    %s26 = sadd.s32 1, %s21
    %p27 = scmp.ge.s32.totalorder %s26, 4
    %s28 = scalar_select %p27, 0, %s26
    %s29 = sadd.s32 1, %s20
    %s30 = scalar_select %p27, %s29, %s20
    %p31 = scmp.ge.s32.totalorder %s30, 2
    %s32 = scalar_select %p31, 0, %s30
    %s33 = smul.u32 %s21, 2
    %s34 = ssub.s32 %s33, 1
    %p35 = scmp.gt.s32.totalorder %s34, 0
    %s36 = scalar_select %p35, %s34, 0
    %s37 = smul.u32 %s28, 2
    %s38 = ssub.s32 %s37, 1
    %p39 = scmp.gt.s32.totalorder %s38, 0
    %s40 = scalar_select %p39, %s38, 0
    %s41 = ssub.s32 %s20, %s32
    %s42 = ssub.s32 %s36, %s40
    %s43 = sor.u32 %s41, %s42
    %p44 = scmp.eq.s32.totalorder %s43, 0
    %s46 = sadd.s32 %s45, 1
    %s47 = scalar_select %p44, %s45, %s46
    %p50 = pneg %p44
    %p51 = scmp.eq.s32.totalorder %s13, 7
    %p52 = por %p50, %p51
    %p53 = scmp.ne.s32.totalorder %s45, %s48
    %p54 = scmp.eq.s32.totalorder %s13, 0
    %p55 = por %p53, %p54
    %p56 = scmp.ne.s32.totalorder %s45, %s48
    %p57 = scmp.eq.s32.totalorder %s18, 7
    %p58 = por %p56, %p57
    %p59 = scmp.ne.s32.totalorder %s48, %s49
    %p60 = scmp.eq.s32.totalorder %s18, 0
    %p61 = por %p59, %p60
    %p62 = scmp.ne.s32.totalorder %s48, %s49
    %p63 = scmp.eq.s32.totalorder %s19, 7
    %p64 = por %p62, %p63
    %p66 = scmp.ne.s32.totalorder %s49, %s65
    %p67 = scmp.eq.s32.totalorder %s19, 0
    %p68 = por %p66, %p67
    %s69 = ssub.s32 %s20, %s32
    %s70 = ssub.s32 %s21, %s28
    %s71 = sor.u32 %s69, %s70
    %p72 = scmp.eq.s32.totalorder %s71, 0
    %s74 = sadd.s32 %s73, 1
    %s75 = scalar_select %p72, %s73, %s74
    %p78 = pneg %p72
    %p79 = scmp.eq.s32.totalorder %s13, 7
    %p80 = por %p78, %p79
    %p81 = scmp.ne.s32.totalorder %s73, %s76
    %p82 = scmp.eq.s32.totalorder %s13, 0
    %p83 = por %p81, %p82
    %p84 = scmp.ne.s32.totalorder %s73, %s76
    %p85 = scmp.eq.s32.totalorder %s18, 7
    %p86 = por %p84, %p85
    %p87 = scmp.ne.s32.totalorder %s76, %s77
    %p88 = scmp.eq.s32.totalorder %s18, 0
    %p89 = por %p87, %p88
    %p90 = scmp.ne.s32.totalorder %s76, %s77
    %p91 = scmp.eq.s32.totalorder %s19, 7
    %p92 = por %p90, %p91
    %p94 = scmp.ne.s32.totalorder %s77, %s93
    %p95 = scmp.eq.s32.totalorder %s19, 0
    %p96 = por %p94, %p95
    %s97 = sadd.s32 %s21, 1
    %s98 = smul.u32 %s97, 2
    %p99 = scmp.lt.s32.totalorder %s98, 7
    %s100 = scalar_select %p99, %s98, 7
    %s101 = sadd.s32 %s28, 1
    %s102 = smul.u32 %s101, 2
    %p103 = scmp.lt.s32.totalorder %s102, 7
    %s104 = scalar_select %p103, %s102, 7
    %s105 = ssub.s32 %s20, %s32
    %s106 = ssub.s32 %s100, %s104
    %s107 = sor.u32 %s105, %s106
    %p108 = scmp.eq.s32.totalorder %s107, 0
    %s110 = sadd.s32 %s109, 1
    %s111 = scalar_select %p108, %s109, %s110
    %p114 = pneg %p108
    %p115 = scmp.eq.s32.totalorder %s13, 7
    %p116 = por %p114, %p115
    %p117 = scmp.ne.s32.totalorder %s109, %s112
    %p118 = scmp.eq.s32.totalorder %s13, 0
    %p119 = por %p117, %p118
    %p120 = scmp.ne.s32.totalorder %s109, %s112
    %p121 = scmp.eq.s32.totalorder %s18, 7
    %p122 = por %p120, %p121
    %p123 = scmp.ne.s32.totalorder %s112, %s113
    %p124 = scmp.eq.s32.totalorder %s18, 0
    %p125 = por %p123, %p124
    %p126 = scmp.ne.s32.totalorder %s112, %s113
    %p127 = scmp.eq.s32.totalorder %s19, 7
    %p128 = por %p126, %p127
    %p130 = scmp.ne.s32.totalorder %s113, %s129
    %p131 = scmp.eq.s32.totalorder %s19, 0
    %p132 = por %p130, %p131
    %s134 = sadd.s32 %s133, 1
    %p137 = scmp.eq.s32.totalorder %s13, 7
    %p138 = scmp.ne.s32.totalorder %s133, %s135
    %p139 = scmp.eq.s32.totalorder %s13, 0
    %p140 = por %p138, %p139
    %p141 = scmp.ne.s32.totalorder %s133, %s135
    %p142 = scmp.eq.s32.totalorder %s18, 7
    %p143 = por %p141, %p142
    %p144 = scmp.ne.s32.totalorder %s135, %s136
    %p145 = scmp.eq.s32.totalorder %s18, 0
    %p146 = por %p144, %p145
    %p147 = scmp.ne.s32.totalorder %s135, %s136
    %p148 = scmp.eq.s32.totalorder %s19, 7
    %p149 = por %p147, %p148
    %p151 = scmp.ne.s32.totalorder %s136, %s150
    %p152 = scmp.eq.s32.totalorder %s19, 0
    %p153 = por %p151, %p152
    %s155 = sadd.s32 %s154, 1
    %p158 = scmp.eq.s32.totalorder %s13, 7
    %p159 = scmp.ne.s32.totalorder %s154, %s156
    %p160 = scmp.eq.s32.totalorder %s13, 0
    %p161 = por %p159, %p160
    %p162 = scmp.ne.s32.totalorder %s154, %s156
    %p163 = scmp.eq.s32.totalorder %s18, 7
    %p164 = por %p162, %p163
    %p165 = scmp.ne.s32.totalorder %s156, %s157
    %p166 = scmp.eq.s32.totalorder %s18, 0
    %p167 = por %p165, %p166
    %p168 = scmp.ne.s32.totalorder %s156, %s157
    %p169 = scmp.eq.s32.totalorder %s19, 7
    %p170 = por %p168, %p169
    %p172 = scmp.ne.s32.totalorder %s157, %s171
    %p173 = scmp.eq.s32.totalorder %s19, 0
    %p174 = por %p172, %p173
    %s176 = sadd.s32 %s175, 1
    %p179 = scmp.eq.s32.totalorder %s13, 7
    %p180 = scmp.ne.s32.totalorder %s175, %s177
    %p181 = scmp.eq.s32.totalorder %s13, 0
    %p182 = por %p180, %p181
    %p183 = scmp.ne.s32.totalorder %s175, %s177
    %p184 = scmp.eq.s32.totalorder %s18, 7
    %p185 = por %p183, %p184
    %p186 = scmp.ne.s32.totalorder %s177, %s178
    %p187 = scmp.eq.s32.totalorder %s18, 0
    %p188 = por %p186, %p187
    %p189 = scmp.ne.s32.totalorder %s177, %s178
    %p190 = scmp.eq.s32.totalorder %s19, 7
    %p191 = por %p189, %p190
    %p193 = scmp.ne.s32.totalorder %s178, %s192
    %p194 = scmp.eq.s32.totalorder %s19, 0
    %p195 = por %p193, %p194
    %s197 = sadd.s32 %s196, 1
    %p200 = scmp.eq.s32.totalorder %s13, 7
    %p201 = scmp.ne.s32.totalorder %s196, %s198
    %p202 = scmp.eq.s32.totalorder %s13, 0
    %p203 = por %p201, %p202
    %p204 = scmp.ne.s32.totalorder %s196, %s198
    %p205 = scmp.eq.s32.totalorder %s18, 7
    %p206 = por %p204, %p205
    %p207 = scmp.ne.s32.totalorder %s198, %s199
    %p208 = scmp.eq.s32.totalorder %s18, 0
    %p209 = por %p207, %p208
    %p210 = scmp.ne.s32.totalorder %s198, %s199
    %p211 = scmp.eq.s32.totalorder %s19, 7
    %p212 = por %p210, %p211
    %p214 = scmp.ne.s32.totalorder %s199, %s213
    %p215 = scmp.eq.s32.totalorder %s19, 0
    %p216 = por %p214, %p215
    %s217 = ssub.s32 %s20, %s32
    %s218 = ssub.s32 %s21, %s28
    %s219 = sor.u32 %s217, %s218
    %p220 = scmp.eq.s32.totalorder %s219, 0
    %s222 = sadd.s32 %s221, 1
    %s223 = scalar_select %p220, %s221, %s222
    %p226 = pneg %p220
    %p227 = scmp.eq.s32.totalorder %s13, 7
    %p228 = por %p226, %p227
    %p229 = scmp.ne.s32.totalorder %s221, %s224
    %p230 = scmp.eq.s32.totalorder %s13, 0
    %p231 = por %p229, %p230
    %p232 = scmp.ne.s32.totalorder %s221, %s224
    %p233 = scmp.eq.s32.totalorder %s18, 7
    %p234 = por %p232, %p233
    %p235 = scmp.ne.s32.totalorder %s224, %s225
    %p236 = scmp.eq.s32.totalorder %s18, 0
    %p237 = por %p235, %p236
    %p238 = scmp.ne.s32.totalorder %s224, %s225
    %p239 = scmp.eq.s32.totalorder %s19, 7
    %p240 = por %p238, %p239
    %p242 = scmp.ne.s32.totalorder %s225, %s241
    %p243 = scmp.eq.s32.totalorder %s19, 0
    %p244 = por %p242, %p243
    %p245 = scmp.le.s32.totalorder 1, %s13
    %p246 = scmp.lt.s32.totalorder %s13, 9
    %p247 = pnand %p245, %p246
    %p248 = pneg %p247
    // Predicated region
    $region9: #{tpu_custom_call.1} parent=5 // pred_check
      _
    $region10: #{tpu_custom_call.1} parent=5 // pred_check_branch
      %250 = sbr.rel (%p247) target = $region12
    $region11: #{tpu_custom_call.1} parent=5 // pred_region
      %s251 = ssub.s32 %s13, 1
      // Predicated region
      $region13: #{tpu_custom_call.1} parent=11 // pred_check
        %p252 = pneg %p146
      $region14: #{tpu_custom_call.1} parent=11 // pred_check_branch
        %254 = sbr.rel (%p252) target = $region16
      $region15: #{tpu_custom_call.1} parent=11 // pred_region
        _
      $region16: #{tpu_custom_call.1} parent=11 // pred_fallthru
        _
      // Predicated region
      $region17: #{tpu_custom_call.1} parent=11 // pred_check
        %p255 = pneg %p167
      $region18: #{tpu_custom_call.1} parent=11 // pred_check_branch
        %257 = sbr.rel (%p255) target = $region20
      $region19: #{tpu_custom_call.1} parent=11 // pred_region
        _
      $region20: #{tpu_custom_call.1} parent=11 // pred_fallthru
        _
      // Predicated region
      $region21: #{tpu_custom_call.1} parent=11 // pred_check
        %p258 = pneg %p188
      $region22: #{tpu_custom_call.1} parent=11 // pred_check_branch
        %260 = sbr.rel (%p258) target = $region24
      $region23: #{tpu_custom_call.1} parent=11 // pred_region
        _
      $region24: #{tpu_custom_call.1} parent=11 // pred_fallthru
        _
      // Predicated region
      $region25: #{tpu_custom_call.1} parent=11 // pred_check
        %p261 = pneg %p209
      $region26: #{tpu_custom_call.1} parent=11 // pred_check_branch
        %263 = sbr.rel (%p261) target = $region28
      $region27: #{tpu_custom_call.1} parent=11 // pred_region
        _
      $region28: #{tpu_custom_call.1} parent=11 // pred_fallthru
        _
    $region12: #{tpu_custom_call.1} parent=5 // pred_fallthru
      _
    %p264 = scmp.lt.s32.totalorder %s13, 8
    // Predicated region
    $region29: #{tpu_custom_call.1} parent=5 // pred_check
      %p265 = pneg %p264
    $region30: #{tpu_custom_call.1} parent=5 // pred_check_branch
      %267 = sbr.rel (%p265) target = $region32
    $region31: #{tpu_custom_call.1} parent=5 // pred_region
      // Predicated region
      $region33: #{tpu_custom_call.1} parent=31 // pred_check
        %p268 = pneg %p55
      $region34: #{tpu_custom_call.1} parent=31 // pred_check_branch
        %270 = sbr.rel (%p268) target = $region36
      $region35: #{tpu_custom_call.1} parent=31 // pred_region
        %s271 = smul.u32 %s21, 2
        %s272 = ssub.s32 %s271, 1
        %p273 = scmp.gt.s32.totalorder %s272, 0
        %s274 = scalar_select %p273, %s272, 0
        %s275 = smul.u32 2, %s274
        %p276 = scmp.lt.s32.totalorder %s20, 1
        %s277 = scalar_select %p276, %s20, 1
        %p278 = scmp.lt.s32.totalorder %s275, 15
        %s279 = scalar_select %p278, %s275, 15
        %s280 = smul.addr %s279, 2
        %s281 = smul.addr %s277, 32
        %s282 = sadd.s32 %s280, %s281
        %s283 = smul.addr %s282, 8
        %s284 = scalar_lea.vmem %s0, %s283
        %s285 = smul.u32 %s21, 2
        %s286 = ssub.s32 %s285, 1
        %p287 = scmp.gt.s32.totalorder %s286, 0
        %s288 = scalar_select %p287, %s286, 0
        %s289 = smul.u32 2, %s288
      $region36: #{tpu_custom_call.1} parent=31 // pred_fallthru
        _
      // Predicated region
      $region37: #{tpu_custom_call.1} parent=31 // pred_check
        %p290 = pneg %p83
      $region38: #{tpu_custom_call.1} parent=31 // pred_check_branch
        %292 = sbr.rel (%p290) target = $region40
      $region39: #{tpu_custom_call.1} parent=31 // pred_region
        %s293 = smul.u32 4, %s21
        %p294 = scmp.lt.s32.totalorder %s20, 1
        %s295 = scalar_select %p294, %s20, 1
        %p296 = scmp.lt.s32.totalorder %s293, 15
        %s297 = scalar_select %p296, %s293, 15
        %s298 = smul.addr %s297, 2
        %s299 = smul.addr %s295, 32
        %s300 = sadd.s32 %s298, %s299
        %s301 = smul.addr %s300, 8
        %s302 = scalar_lea.vmem %s1, %s301
        %s303 = smul.u32 4, %s21
      $region40: #{tpu_custom_call.1} parent=31 // pred_fallthru
        _
      // Predicated region
      $region41: #{tpu_custom_call.1} parent=31 // pred_check
        %p304 = pneg %p119
      $region42: #{tpu_custom_call.1} parent=31 // pred_check_branch
        %306 = sbr.rel (%p304) target = $region44
      $region43: #{tpu_custom_call.1} parent=31 // pred_region
        %s307 = sadd.s32 %s21, 1
        %s308 = smul.u32 %s307, 2
        %p309 = scmp.lt.s32.totalorder %s308, 7
        %s310 = scalar_select %p309, %s308, 7
        %s311 = smul.u32 2, %s310
        %p312 = scmp.lt.s32.totalorder %s20, 1
        %s313 = scalar_select %p312, %s20, 1
        %p314 = scmp.lt.s32.totalorder %s311, 15
        %s315 = scalar_select %p314, %s311, 15
        %s316 = smul.addr %s315, 2
        %s317 = smul.addr %s313, 32
        %s318 = sadd.s32 %s316, %s317
        %s319 = smul.addr %s318, 8
        %s320 = scalar_lea.vmem %s2, %s319
        %s321 = sadd.s32 %s21, 1
        %s322 = smul.u32 %s321, 2
        %p323 = scmp.lt.s32.totalorder %s322, 7
        %s324 = scalar_select %p323, %s322, 7
        %s325 = smul.u32 2, %s324
      $region44: #{tpu_custom_call.1} parent=31 // pred_fallthru
        _
    $region32: #{tpu_custom_call.1} parent=5 // pred_fallthru
      _
    %p326 = scmp.le.s32.totalorder 1, %s13
    %p327 = scmp.lt.s32.totalorder %s13, 9
    %p328 = pnand %p326, %p327
    %p329 = pneg %p328
    // Predicated region
    $region45: #{tpu_custom_call.1} parent=5 // pred_check
      _
    $region46: #{tpu_custom_call.1} parent=5 // pred_check_branch
      %331 = sbr.rel (%p328) target = $region48
    $region47: #{tpu_custom_call.1} parent=5 // pred_region
      %s332 = ssub.s32 %s13, 1
      %s333 = smul.u32 %s23, 2
      %s334 = ssub.s32 %s333, 1
      %p335 = scmp.gt.s32.totalorder %s334, 0
      %s336 = scalar_select %p335, %s334, 0
      %s337 = smul.u32 2, %s336
      %p338 = scmp.lt.s32.totalorder %s22, 1
      %s339 = scalar_select %p338, %s22, 1
      %p340 = scmp.lt.s32.totalorder %s337, 15
      %s341 = scalar_select %p340, %s337, 15
      %s342 = smul.addr %s341, 2
      %s343 = smul.addr %s339, 32
      %s344 = sadd.s32 %s342, %s343
      %s345 = smul.addr %s344, 8
      %s346 = scalar_lea.vmem %s0, %s345
      %p347 = pneg %p61
      %p348 = pneg %p58
      %s349 = smul.u32 4, %s23
      %p350 = scmp.lt.s32.totalorder %s22, 1
      %s351 = scalar_select %p350, %s22, 1
      %p352 = scmp.lt.s32.totalorder %s349, 15
      %s353 = scalar_select %p352, %s349, 15
      %s354 = smul.addr %s353, 2
      %s355 = smul.addr %s351, 32
      %s356 = sadd.s32 %s354, %s355
      %s357 = smul.addr %s356, 8
      %s358 = scalar_lea.vmem %s1, %s357
      %p359 = pneg %p89
      %p360 = pneg %p86
      %s361 = sadd.s32 %s23, 1
      %s362 = smul.u32 %s361, 2
      %p363 = scmp.lt.s32.totalorder %s362, 7
      %s364 = scalar_select %p363, %s362, 7
      %s365 = smul.u32 2, %s364
      %p366 = scmp.lt.s32.totalorder %s22, 1
      %s367 = scalar_select %p366, %s22, 1
      %p368 = scmp.lt.s32.totalorder %s365, 15
      %s369 = scalar_select %p368, %s365, 15
      %s370 = smul.addr %s369, 2
      %s371 = smul.addr %s367, 32
      %s372 = sadd.s32 %s370, %s371
      %s373 = smul.addr %s372, 8
      %s374 = scalar_lea.vmem %s2, %s373
      %p375 = pneg %p125
      %p376 = pneg %p122
      %p377 = pneg %p146
      %p378 = pneg %p143
      %p379 = pneg %p167
      %p380 = pneg %p164
      %p381 = pneg %p188
      %p382 = pneg %p185
      %p383 = pneg %p209
      %p384 = pneg %p206
      %p385 = pneg %p237
      %p386 = pneg %p234
      %s387 = smul.u32 4, %s23
      %p388 = scmp.lt.s32.totalorder %s22, 1
      %s389 = scalar_select %p388, %s22, 1
      %p390 = scmp.lt.s32.totalorder %s387, 15
      %s391 = scalar_select %p390, %s387, 15
      %s392 = smul.addr %s391, 2
      %s393 = smul.addr %s389, 32
      %s394 = sadd.s32 %s392, %s393
      %s395 = smul.addr %s394, 8
      %s396 = scalar_lea.vmem %s7, %s395
      %s397 = smul.u32 %s23, 2
      %s398 = ssub.s32 %s397, 1
      %p399 = scmp.gt.s32.totalorder %s398, 0
      %s400 = scalar_select %p399, %s398, 0
      %s401 = smul.u32 2, %s400
      %p402 = scmp.lt.s32.totalorder %s22, 1
      %s403 = scalar_select %p402, %s22, 1
      %p404 = scmp.lt.s32.totalorder %s401, 15
      %s405 = scalar_select %p404, %s401, 15
      %s406 = smul.addr %s405, 2
      %s407 = smul.addr %s403, 32
      %s408 = sadd.s32 %s406, %s407
      %s409 = smul.addr %s408, 8
      %s410 = scalar_lea.vmem %s0, %s409
      %s411 = smul.u32 %s23, 2
      %s412 = ssub.s32 %s411, 1
      %p413 = scmp.gt.s32.totalorder %s412, 0
      %s414 = scalar_select %p413, %s412, 0
      %s415 = smul.u32 2, %s414
      %s416 = smul.u32 4, %s23
      %p417 = scmp.lt.s32.totalorder %s22, 1
      %s418 = scalar_select %p417, %s22, 1
      %p419 = scmp.lt.s32.totalorder %s416, 15
      %s420 = scalar_select %p419, %s416, 15
      %s421 = smul.addr %s420, 2
      %s422 = smul.addr %s418, 32
      %s423 = sadd.s32 %s421, %s422
      %s424 = smul.addr %s423, 8
      %s425 = scalar_lea.vmem %s1, %s424
      %s426 = smul.u32 4, %s23
      %s427 = sadd.s32 %s23, 1
      %s428 = smul.u32 %s427, 2
      %p429 = scmp.lt.s32.totalorder %s428, 7
      %s430 = scalar_select %p429, %s428, 7
      %s431 = smul.u32 2, %s430
      %p432 = scmp.lt.s32.totalorder %s22, 1
      %s433 = scalar_select %p432, %s22, 1
      %p434 = scmp.lt.s32.totalorder %s431, 15
      %s435 = scalar_select %p434, %s431, 15
      %s436 = smul.addr %s435, 2
      %s437 = smul.addr %s433, 32
      %s438 = sadd.s32 %s436, %s437
      %s439 = smul.addr %s438, 8
      %s440 = scalar_lea.vmem %s2, %s439
      %s441 = sadd.s32 %s23, 1
      %s442 = smul.u32 %s441, 2
      %p443 = scmp.lt.s32.totalorder %s442, 7
      %s444 = scalar_select %p443, %s442, 7
      %s445 = smul.u32 2, %s444
      %s446 = smul.u32 4, %s23
      %p447 = scmp.lt.s32.totalorder %s22, 1
      %s448 = scalar_select %p447, %s22, 1
      %p449 = scmp.lt.s32.totalorder %s446, 15
      %s450 = scalar_select %p449, %s446, 15
      %s451 = smul.addr %s450, 2
      %s452 = smul.addr %s448, 32
      %s453 = sadd.s32 %s451, %s452
      %s454 = smul.addr %s453, 8
      %s455 = scalar_lea.vmem %s7, %s454
      %s456 = smul.u32 4, %s23
      %vm458 = vcmask 24576
      %vm459 = vsmask.f32 256
      %vm460 = vmand %vm458, %vm459
      %v461 = vld [vmem:[#allocation2] sm:$0x1]
      %v462 = vsel %vm460, 0, %v461
      %463 = vst [vmem:[#allocation2] sm:$0x1] %v462
      %v464 = vld [vmem:[#allocation2 + $0xc] sm:$0x1]
      %v465 = vsel %vm460, 0, %v464
      %466 = vst [vmem:[#allocation2 + $0xc] sm:$0x1] %v465
      %v467 = vld [vmem:[#allocation2 + $0x18] sm:$0x1]
      %v468 = vsel %vm460, 0, %v467
      %469 = vst [vmem:[#allocation2 + $0x18] sm:$0x1] %v468
      %v470 = vld [vmem:[#allocation2 + $0x24] sm:$0x1]
      %v471 = vsel %vm460, 0, %v470
      %472 = vst [vmem:[#allocation2 + $0x24] sm:$0x1] %v471
      %v473 = vld [vmem:[#allocation2 + $0x30] sm:$0x1]
      %v474 = vsel %vm460, 0, %v473
      %475 = vst [vmem:[#allocation2 + $0x30] sm:$0x1] %v474
      %v476 = vld [vmem:[#allocation2 + $0x3c] sm:$0x1]
      %v477 = vsel %vm460, 0, %v476
      %478 = vst [vmem:[#allocation2 + $0x3c] sm:$0x1] %v477
      %v479 = vld [vmem:[#allocation2 + $0x48] sm:$0x1]
      %v480 = vsel %vm460, 0, %v479
      %481 = vst [vmem:[#allocation2 + $0x48] sm:$0x1] %v480
      %v482 = vld [vmem:[#allocation2 + $0x54] sm:$0x1]
      %v483 = vsel %vm460, 0, %v482
      %484 = vst [vmem:[#allocation2 + $0x54] sm:$0x1] %v483
      %vm485 = vsmask.f32 7938
      %vm486 = vmand %vm458, %vm485
      %v487 = vld [vmem:[#allocation2 + $0x8] sm:$0x1]
      %v488 = vsel %vm486, 0, %v487
      %489 = vst [vmem:[#allocation2 + $0x8] sm:$0x1] %v488
      %v490 = vld [vmem:[#allocation2 + $0x14] sm:$0x1]
      %v491 = vsel %vm486, 0, %v490
      %492 = vst [vmem:[#allocation2 + $0x14] sm:$0x1] %v491
      %v493 = vld [vmem:[#allocation2 + $0x20] sm:$0x1]
      %v494 = vsel %vm486, 0, %v493
      %495 = vst [vmem:[#allocation2 + $0x20] sm:$0x1] %v494
      %v496 = vld [vmem:[#allocation2 + $0x2c] sm:$0x1]
      %v497 = vsel %vm486, 0, %v496
      %498 = vst [vmem:[#allocation2 + $0x2c] sm:$0x1] %v497
      %v499 = vld [vmem:[#allocation2 + $0x38] sm:$0x1]
      %v500 = vsel %vm486, 0, %v499
      %501 = vst [vmem:[#allocation2 + $0x38] sm:$0x1] %v500
      %v502 = vld [vmem:[#allocation2 + $0x44] sm:$0x1]
      %v503 = vsel %vm486, 0, %v502
      %504 = vst [vmem:[#allocation2 + $0x44] sm:$0x1] %v503
      %v505 = vld [vmem:[#allocation2 + $0x50] sm:$0x1]
      %v506 = vsel %vm486, 0, %v505
      %507 = vst [vmem:[#allocation2 + $0x50] sm:$0x1] %v506
      %v508 = vld [vmem:[#allocation2 + $0x5c] sm:$0x1]
      %v509 = vsel %vm486, 0, %v508
      %510 = vst [vmem:[#allocation2 + $0x5c] sm:$0x1] %v509
      %v511 = vld [vmem:[%s425] sm:$0xff]
      %v512 = vld [vmem:[%s425 + $0x8] sm:$0xff]
      %v513 = vld [vmem:[%s425 + $0x10] sm:$0xff]
      %v514 = vld [vmem:[%s425 + $0x18] sm:$0xff]
      %v515 = vld [vmem:[%s425 + $0x20] sm:$0xff]
      %v516 = vld [vmem:[%s425 + $0x28] sm:$0xff]
      %v517 = vld [vmem:[%s425 + $0x30] sm:$0xff]
      %v518 = vld [vmem:[%s425 + $0x38] sm:$0xff]
      %v519 = vpack.c.bf16 %v512, %v511
      %v520 = vpack.c.bf16 %v514, %v513
      %v521 = vpack.c.bf16 %v516, %v515
      %v522 = vpack.c.bf16 %v518, %v517
      %v527 = vunpack.c.l.b16 %v519
      %v528 = vunpack.c.h.b16 %v519
      %v529 = vunpack.c.l.b16 %v520
      %v530 = vunpack.c.h.b16 %v520
      %v531 = vunpack.c.l.b16 %v521
      %v532 = vunpack.c.h.b16 %v521
      %v533 = vunpack.c.l.b16 %v522
      %v534 = vunpack.c.h.b16 %v522
      %v535 = vpack.c.b16 %v527, %v527
      %v536 = vpack.c.b16 %v528, %v528
      %v537 = vpack.c.b16 %v529, %v529
      %v538 = vpack.c.b16 %v530, %v530
      %v539 = vpack.c.b16 %v531, %v531
      %v540 = vpack.c.b16 %v532, %v532
      %v541 = vpack.c.b16 %v533, %v533
      %v542 = vpack.c.b16 %v534, %v534
      %vm543 = vsmask.f32 4368
      %vm544 = vmor %vm459, %vm543
      %v546 = vshrl.u32 %v535, 16
      %v548 = vrot.slane %v546, 7
      %v549 = vshll.u32 %v535, 16
      %v551 = vor.u32 %v548, %v549
      %v552 = vrot.slane %v548, 4
      %v554 = vshrl.u32 %v536, 16
      %v556 = vrot.slane %v554, 7
      %v557 = vshll.u32 %v536, 16
      %v559 = vor.u32 %v556, %v557
      %v560 = vsel %vm544, %v552, %v559
      %v561 = vrot.slane %v556, 4
      %v563 = vshrl.u32 %v537, 16
      %v565 = vrot.slane %v563, 7
      %v566 = vshll.u32 %v537, 16
      %v568 = vor.u32 %v565, %v566
      %v569 = vrot.slane %v565, 4
      %v571 = vshrl.u32 %v538, 16
      %v573 = vrot.slane %v571, 7
      %v574 = vshll.u32 %v538, 16
      %v576 = vor.u32 %v573, %v574
      %v577 = vsel %vm544, %v569, %v576
      %v578 = vrot.slane %v573, 4
      %v580 = vshrl.u32 %v539, 16
      %v582 = vrot.slane %v580, 7
      %v583 = vshll.u32 %v539, 16
      %v585 = vor.u32 %v582, %v583
      %v586 = vrot.slane %v582, 4
      %v588 = vshrl.u32 %v540, 16
      %v590 = vrot.slane %v588, 7
      %v591 = vshll.u32 %v540, 16
      %v593 = vor.u32 %v590, %v591
      %v594 = vsel %vm544, %v586, %v593
      %v595 = vrot.slane %v590, 4
      %v597 = vshrl.u32 %v541, 16
      %v599 = vrot.slane %v597, 7
      %v600 = vshll.u32 %v541, 16
      %v602 = vor.u32 %v599, %v600
      %v603 = vrot.slane %v599, 4
      %v605 = vshrl.u32 %v542, 16
      %v607 = vrot.slane %v605, 7
      %v608 = vshll.u32 %v542, 16
      %v610 = vor.u32 %v607, %v608
      %v611 = vsel %vm544, %v603, %v610
      %v612 = vrot.slane %v607, 4
      %s625 = scalar_lea.vmem [#allocation2], 24
      %vm626 = vcmask 27648
      %vm627 = vmand %vm626, %vm485
      %v628 = vld [vmem:[%s625] sm:$0xf]
      %v629 = vsel %vm627, %v551, %v628
      %630 = vst [vmem:[%s625] sm:$0xf] %v629
      %vm631 = vcmask 27648
      %632 = vst.msk [vmem:[%s625 + $0x4] sm:$0xf] %vm631, %v560
      %v633 = vld [vmem:[%s625 + $0x8] sm:$0x1]
      %v634 = vsel %vm460, %v561, %v633
      %635 = vst [vmem:[%s625 + $0x8] sm:$0x1] %v634
      %v636 = vld [vmem:[%s625 + $0xc] sm:$0xf]
      %v637 = vsel %vm627, %v568, %v636
      %638 = vst [vmem:[%s625 + $0xc] sm:$0xf] %v637
      %639 = vst.msk [vmem:[%s625 + $0x10] sm:$0xf] %vm631, %v577
      %v640 = vld [vmem:[%s625 + $0x14] sm:$0x1]
      %v641 = vsel %vm460, %v578, %v640
      %642 = vst [vmem:[%s625 + $0x14] sm:$0x1] %v641
      %v643 = vld [vmem:[%s625 + $0x18] sm:$0xf]
      %v644 = vsel %vm627, %v585, %v643
      %645 = vst [vmem:[%s625 + $0x18] sm:$0xf] %v644
      %646 = vst.msk [vmem:[%s625 + $0x1c] sm:$0xf] %vm631, %v594
      %v647 = vld [vmem:[%s625 + $0x20] sm:$0x1]
      %v648 = vsel %vm460, %v595, %v647
      %649 = vst [vmem:[%s625 + $0x20] sm:$0x1] %v648
      %v650 = vld [vmem:[%s625 + $0x24] sm:$0xf]
      %v651 = vsel %vm627, %v602, %v650
      %652 = vst [vmem:[%s625 + $0x24] sm:$0xf] %v651
      %653 = vst.msk [vmem:[%s625 + $0x28] sm:$0xf] %vm631, %v611
      %v654 = vld [vmem:[%s625 + $0x2c] sm:$0x1]
      %v655 = vsel %vm460, %v612, %v654
      %656 = vst [vmem:[%s625 + $0x2c] sm:$0x1] %v655
      %p657 = scmp.eq.s32.totalorder %s23, 0
      // Predicated region
      $region49: #{tpu_custom_call.1} parent=47 // pred_check
        %p658 = pneg %p657
      $region50: #{tpu_custom_call.1} parent=47 // pred_check_branch
        %660 = sbr.rel (%p658) target = $region52
      $region51: #{tpu_custom_call.1} parent=47 // pred_region
        %v661 = vld [vmem:[#allocation2] sm:$0xf]
        %v662 = vsel %vm627, 0, %v661
        %663 = vst [vmem:[#allocation2] sm:$0xf] %v662
        %664 = vst.msk [vmem:[#allocation2 + $0x4] sm:$0xf] %vm631, 0
        %v665 = vld [vmem:[#allocation2 + $0x8] sm:$0x1]
        %v666 = vsel %vm460, 0, %v665
        %667 = vst [vmem:[#allocation2 + $0x8] sm:$0x1] %v666
        %v668 = vld [vmem:[#allocation2 + $0xc] sm:$0xf]
        %v669 = vsel %vm627, 0, %v668
        %670 = vst [vmem:[#allocation2 + $0xc] sm:$0xf] %v669
        %671 = vst.msk [vmem:[#allocation2 + $0x10] sm:$0xf] %vm631, 0
        %v672 = vld [vmem:[#allocation2 + $0x14] sm:$0x1]
        %v673 = vsel %vm460, 0, %v672
        %674 = vst [vmem:[#allocation2 + $0x14] sm:$0x1] %v673
      $region52: #{tpu_custom_call.1} parent=47 // pred_fallthru
        _
      %p675 = scmp.gt.s32.totalorder %s23, 0
      // Predicated region
      $region53: #{tpu_custom_call.1} parent=47 // pred_check
        %p676 = pneg %p675
      $region54: #{tpu_custom_call.1} parent=47 // pred_check_branch
        %678 = sbr.rel (%p676) target = $region56
      $region55: #{tpu_custom_call.1} parent=47 // pred_region
        %v679 = vld [vmem:[%s410] sm:$0xff]
        %v680 = vld [vmem:[%s410 + $0x8] sm:$0xff]
        %v681 = vld [vmem:[%s410 + $0x10] sm:$0xff]
        %v682 = vld [vmem:[%s410 + $0x18] sm:$0xff]
        %v683 = vpack.c.bf16 %v680, %v679
        %v684 = vpack.c.bf16 %v682, %v681
        %v687 = vunpack.c.l.b16 %v683
        %v688 = vunpack.c.h.b16 %v683
        %v689 = vunpack.c.l.b16 %v684
        %v690 = vunpack.c.h.b16 %v684
        %v691 = vpack.c.b16 %v687, %v687
        %v692 = vpack.c.b16 %v688, %v688
        %v693 = vpack.c.b16 %v689, %v689
        %v694 = vpack.c.b16 %v690, %v690
        %v696 = vshrl.u32 %v691, 16
        %v698 = vrot.slane %v696, 7
        %v699 = vshll.u32 %v691, 16
        %v701 = vor.u32 %v698, %v699
        %v702 = vrot.slane %v698, 4
        %v704 = vshrl.u32 %v692, 16
        %v706 = vrot.slane %v704, 7
        %v707 = vshll.u32 %v692, 16
        %v709 = vor.u32 %v706, %v707
        %v710 = vsel %vm544, %v702, %v709
        %v711 = vrot.slane %v706, 4
        %v713 = vshrl.u32 %v693, 16
        %v715 = vrot.slane %v713, 7
        %v716 = vshll.u32 %v693, 16
        %v718 = vor.u32 %v715, %v716
        %v719 = vrot.slane %v715, 4
        %v721 = vshrl.u32 %v694, 16
        %v723 = vrot.slane %v721, 7
        %v724 = vshll.u32 %v694, 16
        %v726 = vor.u32 %v723, %v724
        %v727 = vsel %vm544, %v719, %v726
        %v728 = vrot.slane %v723, 4
        %v735 = vld [vmem:[#allocation2] sm:$0xf]
        %v736 = vsel %vm627, %v701, %v735
        %737 = vst [vmem:[#allocation2] sm:$0xf] %v736
        %738 = vst.msk [vmem:[#allocation2 + $0x4] sm:$0xf] %vm631, %v710
        %v739 = vld [vmem:[#allocation2 + $0x8] sm:$0x1]
        %v740 = vsel %vm460, %v711, %v739
        %741 = vst [vmem:[#allocation2 + $0x8] sm:$0x1] %v740
        %v742 = vld [vmem:[#allocation2 + $0xc] sm:$0xf]
        %v743 = vsel %vm627, %v718, %v742
        %744 = vst [vmem:[#allocation2 + $0xc] sm:$0xf] %v743
        %745 = vst.msk [vmem:[#allocation2 + $0x10] sm:$0xf] %vm631, %v727
        %v746 = vld [vmem:[#allocation2 + $0x14] sm:$0x1]
        %v747 = vsel %vm460, %v728, %v746
        %748 = vst [vmem:[#allocation2 + $0x14] sm:$0x1] %v747
      $region56: #{tpu_custom_call.1} parent=47 // pred_fallthru
        _
      %p749 = scmp.eq.s32.totalorder %s23, 3
      // Predicated region
      $region57: #{tpu_custom_call.1} parent=47 // pred_check
        %p750 = pneg %p749
      $region58: #{tpu_custom_call.1} parent=47 // pred_check_branch
        %752 = sbr.rel (%p750) target = $region60
      $region59: #{tpu_custom_call.1} parent=47 // pred_region
        %s753 = scalar_lea.vmem [#allocation2], 72
        %v754 = vld [vmem:[%s753] sm:$0xf]
        %v755 = vsel %vm627, 0, %v754
        %756 = vst [vmem:[%s753] sm:$0xf] %v755
        %757 = vst.msk [vmem:[%s753 + $0x4] sm:$0xf] %vm631, 0
        %v758 = vld [vmem:[%s753 + $0x8] sm:$0x1]
        %v759 = vsel %vm460, 0, %v758
        %760 = vst [vmem:[%s753 + $0x8] sm:$0x1] %v759
        %v761 = vld [vmem:[%s753 + $0xc] sm:$0xf]
        %v762 = vsel %vm627, 0, %v761
        %763 = vst [vmem:[%s753 + $0xc] sm:$0xf] %v762
        %764 = vst.msk [vmem:[%s753 + $0x10] sm:$0xf] %vm631, 0
        %v765 = vld [vmem:[%s753 + $0x14] sm:$0x1]
        %v766 = vsel %vm460, 0, %v765
        %767 = vst [vmem:[%s753 + $0x14] sm:$0x1] %v766
      $region60: #{tpu_custom_call.1} parent=47 // pred_fallthru
        _
      %p768 = scmp.lt.s32.totalorder %s23, 3
      // Predicated region
      $region61: #{tpu_custom_call.1} parent=47 // pred_check
        %p769 = pneg %p768
      $region62: #{tpu_custom_call.1} parent=47 // pred_check_branch
        %771 = sbr.rel (%p769) target = $region64
      $region63: #{tpu_custom_call.1} parent=47 // pred_region
        %v772 = vld [vmem:[%s440] sm:$0xff]
        %v773 = vld [vmem:[%s440 + $0x8] sm:$0xff]
        %v774 = vld [vmem:[%s440 + $0x10] sm:$0xff]
        %v775 = vld [vmem:[%s440 + $0x18] sm:$0xff]
        %v776 = vpack.c.bf16 %v773, %v772
        %v777 = vpack.c.bf16 %v775, %v774
        %v780 = vunpack.c.l.b16 %v776
        %v781 = vunpack.c.h.b16 %v776
        %v782 = vunpack.c.l.b16 %v777
        %v783 = vunpack.c.h.b16 %v777
        %v784 = vpack.c.b16 %v780, %v780
        %v785 = vpack.c.b16 %v781, %v781
        %v786 = vpack.c.b16 %v782, %v782
        %v787 = vpack.c.b16 %v783, %v783
        %v789 = vshrl.u32 %v784, 16
        %v791 = vrot.slane %v789, 7
        %v792 = vshll.u32 %v784, 16
        %v794 = vor.u32 %v791, %v792
        %v795 = vrot.slane %v791, 4
        %v797 = vshrl.u32 %v785, 16
        %v799 = vrot.slane %v797, 7
        %v800 = vshll.u32 %v785, 16
        %v802 = vor.u32 %v799, %v800
        %v803 = vsel %vm544, %v795, %v802
        %v804 = vrot.slane %v799, 4
        %v806 = vshrl.u32 %v786, 16
        %v808 = vrot.slane %v806, 7
        %v809 = vshll.u32 %v786, 16
        %v811 = vor.u32 %v808, %v809
        %v812 = vrot.slane %v808, 4
        %v814 = vshrl.u32 %v787, 16
        %v816 = vrot.slane %v814, 7
        %v817 = vshll.u32 %v787, 16
        %v819 = vor.u32 %v816, %v817
        %v820 = vsel %vm544, %v812, %v819
        %v821 = vrot.slane %v816, 4
        %s828 = scalar_lea.vmem [#allocation2], 72
        %v829 = vld [vmem:[%s828] sm:$0xf]
        %v830 = vsel %vm627, %v794, %v829
        %831 = vst [vmem:[%s828] sm:$0xf] %v830
        %832 = vst.msk [vmem:[%s828 + $0x4] sm:$0xf] %vm631, %v803
        %v833 = vld [vmem:[%s828 + $0x8] sm:$0x1]
        %v834 = vsel %vm460, %v804, %v833
        %835 = vst [vmem:[%s828 + $0x8] sm:$0x1] %v834
        %v836 = vld [vmem:[%s828 + $0xc] sm:$0xf]
        %v837 = vsel %vm627, %v811, %v836
        %838 = vst [vmem:[%s828 + $0xc] sm:$0xf] %v837
        %839 = vst.msk [vmem:[%s828 + $0x10] sm:$0xf] %vm631, %v820
        %v840 = vld [vmem:[%s828 + $0x14] sm:$0x1]
        %v841 = vsel %vm460, %v821, %v840
        %842 = vst [vmem:[%s828 + $0x14] sm:$0x1] %v841
      $region64: #{tpu_custom_call.1} parent=47 // pred_fallthru
        _
      %v843 = vld [vmem:[#allocation2] sm:$0xf]
      %v844 = vld [vmem:[#allocation2 + $0x4] sm:$0xf]
      %v845 = vld [vmem:[#allocation2 + $0xc] sm:$0xf]
      %v846 = vld [vmem:[#allocation2 + $0x10] sm:$0xf]
      %v847 = vld [vmem:[#allocation2 + $0x18] sm:$0xf]
      %v848 = vld [vmem:[#allocation2 + $0x1c] sm:$0xf]
      %v849 = vld [vmem:[#allocation2 + $0x24] sm:$0xf]
      %v850 = vld [vmem:[#allocation2 + $0x28] sm:$0xf]
      %v851 = vld [vmem:[#allocation2 + $0x30] sm:$0xf]
      %v852 = vld [vmem:[#allocation2 + $0x34] sm:$0xf]
      %v853 = vld [vmem:[#allocation2 + $0x3c] sm:$0xf]
      %v854 = vld [vmem:[#allocation2 + $0x40] sm:$0xf]
      %v855 = vld [vmem:[#allocation2 + $0x48] sm:$0xf]
      %v856 = vld [vmem:[#allocation2 + $0x4c] sm:$0xf]
      %v857 = vld [vmem:[#allocation2 + $0x54] sm:$0xf]
      %v858 = vld [vmem:[#allocation2 + $0x58] sm:$0xf]
      %v875 = vunpack.c.l.b16 %v843
      %v876 = vunpack.c.l.b16 %v844
      %v877 = vunpack.c.l.b16 %v845
      %v878 = vunpack.c.l.b16 %v846
      %v879 = vunpack.c.l.b16 %v847
      %v880 = vunpack.c.l.b16 %v848
      %v881 = vunpack.c.l.b16 %v849
      %v882 = vunpack.c.l.b16 %v850
      %v883 = vunpack.c.l.b16 %v851
      %v884 = vunpack.c.l.b16 %v852
      %v885 = vunpack.c.l.b16 %v853
      %v886 = vunpack.c.l.b16 %v854
      %v887 = vunpack.c.l.b16 %v855
      %v888 = vunpack.c.l.b16 %v856
      %v889 = vunpack.c.l.b16 %v857
      %v890 = vunpack.c.l.b16 %v858
      %v891 = vpack.c.b16 %v876, %v875
      %v892 = vpack.c.b16 %v878, %v877
      %v893 = vpack.c.b16 %v880, %v879
      %v894 = vpack.c.b16 %v882, %v881
      %v895 = vpack.c.b16 %v884, %v883
      %v896 = vpack.c.b16 %v886, %v885
      %v897 = vpack.c.b16 %v888, %v887
      %v898 = vpack.c.b16 %v890, %v889
      %vm907 = vcmask 31744
      %908 = vst.msk [vmem:[#allocation3] sm:$0xff] %vm907, %v891
      %909 = vst.msk [vmem:[#allocation3 + $0x8] sm:$0xff] %vm907, %v892
      %910 = vst.msk [vmem:[#allocation3 + $0x10] sm:$0xff] %vm907, %v893
      %911 = vst.msk [vmem:[#allocation3 + $0x18] sm:$0xff] %vm907, %v894
      %912 = vst.msk [vmem:[#allocation3 + $0x20] sm:$0xff] %vm907, %v895
      %913 = vst.msk [vmem:[#allocation3 + $0x28] sm:$0xff] %vm907, %v896
      %914 = vst.msk [vmem:[#allocation3 + $0x30] sm:$0xff] %vm907, %v897
      %915 = vst.msk [vmem:[#allocation3 + $0x38] sm:$0xff] %vm907, %v898
      %v916 = vld [vmem:[#allocation2] sm:$0xf]
      %v917 = vld [vmem:[#allocation2 + $0x4] sm:$0xf]
      %v918 = vld [vmem:[#allocation2 + $0x8] sm:$0x1]
      %v919 = vld [vmem:[#allocation2 + $0xc] sm:$0xf]
      %v920 = vld [vmem:[#allocation2 + $0x10] sm:$0xf]
      %v921 = vld [vmem:[#allocation2 + $0x14] sm:$0x1]
      %v922 = vld [vmem:[#allocation2 + $0x18] sm:$0xf]
      %v923 = vld [vmem:[#allocation2 + $0x1c] sm:$0xf]
      %v924 = vld [vmem:[#allocation2 + $0x20] sm:$0x1]
      %v925 = vld [vmem:[#allocation2 + $0x24] sm:$0xf]
      %v926 = vld [vmem:[#allocation2 + $0x28] sm:$0xf]
      %v927 = vld [vmem:[#allocation2 + $0x2c] sm:$0x1]
      %v928 = vld [vmem:[#allocation2 + $0x30] sm:$0xf]
      %v929 = vld [vmem:[#allocation2 + $0x34] sm:$0xf]
      %v930 = vld [vmem:[#allocation2 + $0x38] sm:$0x1]
      %v931 = vld [vmem:[#allocation2 + $0x3c] sm:$0xf]
      %v932 = vld [vmem:[#allocation2 + $0x40] sm:$0xf]
      %v933 = vld [vmem:[#allocation2 + $0x44] sm:$0x1]
      %v934 = vld [vmem:[#allocation2 + $0x48] sm:$0xf]
      %v935 = vld [vmem:[#allocation2 + $0x4c] sm:$0xf]
      %v936 = vld [vmem:[#allocation2 + $0x50] sm:$0x1]
      %v937 = vld [vmem:[#allocation2 + $0x54] sm:$0xf]
      %v938 = vld [vmem:[#allocation2 + $0x58] sm:$0xf]
      %v939 = vld [vmem:[#allocation2 + $0x5c] sm:$0x1]
      %v964 = vunpack.c.l.b16 %v916
      %v965 = vunpack.c.l.b16 %v917
      %v966 = vunpack.c.l.b16 %v918
      %v967 = vunpack.c.l.b16 %v919
      %v968 = vunpack.c.l.b16 %v920
      %v969 = vunpack.c.l.b16 %v921
      %v970 = vunpack.c.l.b16 %v922
      %v971 = vunpack.c.l.b16 %v923
      %v972 = vunpack.c.l.b16 %v924
      %v973 = vunpack.c.l.b16 %v925
      %v974 = vunpack.c.l.b16 %v926
      %v975 = vunpack.c.l.b16 %v927
      %v976 = vunpack.c.l.b16 %v928
      %v977 = vunpack.c.l.b16 %v929
      %v978 = vunpack.c.l.b16 %v930
      %v979 = vunpack.c.l.b16 %v931
      %v980 = vunpack.c.l.b16 %v932
      %v981 = vunpack.c.l.b16 %v933
      %v982 = vunpack.c.l.b16 %v934
      %v983 = vunpack.c.l.b16 %v935
      %v984 = vunpack.c.l.b16 %v936
      %v985 = vunpack.c.l.b16 %v937
      %v986 = vunpack.c.l.b16 %v938
      %v987 = vunpack.c.l.b16 %v939
      %v988 = vpack.c.b16 %v965, %v964
      %v989 = vpack.c.b16 %v966, %v966
      %v990 = vpack.c.b16 %v968, %v967
      %v991 = vpack.c.b16 %v969, %v969
      %v992 = vpack.c.b16 %v971, %v970
      %v993 = vpack.c.b16 %v972, %v972
      %v994 = vpack.c.b16 %v974, %v973
      %v995 = vpack.c.b16 %v975, %v975
      %v996 = vpack.c.b16 %v977, %v976
      %v997 = vpack.c.b16 %v978, %v978
      %v998 = vpack.c.b16 %v980, %v979
      %v999 = vpack.c.b16 %v981, %v981
      %v1000 = vpack.c.b16 %v983, %v982
      %v1001 = vpack.c.b16 %v984, %v984
      %v1002 = vpack.c.b16 %v986, %v985
      %v1003 = vpack.c.b16 %v987, %v987
      %vm1004 = vsmask.f32 7424
      %v1006 = vshrl.u32 %v988, 16
      %v1008 = vshll.u32 %v988, 16
      %v1010 = vrot.slane %v1008, 1
      %v1011 = vor.u32 %v1006, %v1010
      %v1013 = vshll.u32 %v989, 16
      %v1015 = vrot.slane %v1013, 1
      %v1016 = vsel %vm1004, %v1011, %v1015
      %v1018 = vshrl.u32 %v990, 16
      %v1020 = vshll.u32 %v990, 16
      %v1022 = vrot.slane %v1020, 1
      %v1023 = vor.u32 %v1018, %v1022
      %v1025 = vshll.u32 %v991, 16
      %v1027 = vrot.slane %v1025, 1
      %v1028 = vsel %vm1004, %v1023, %v1027
      %v1030 = vshrl.u32 %v992, 16
      %v1032 = vshll.u32 %v992, 16
      %v1034 = vrot.slane %v1032, 1
      %v1035 = vor.u32 %v1030, %v1034
      %v1037 = vshll.u32 %v993, 16
      %v1039 = vrot.slane %v1037, 1
      %v1040 = vsel %vm1004, %v1035, %v1039
      %v1042 = vshrl.u32 %v994, 16
      %v1044 = vshll.u32 %v994, 16
      %v1046 = vrot.slane %v1044, 1
      %v1047 = vor.u32 %v1042, %v1046
      %v1049 = vshll.u32 %v995, 16
      %v1051 = vrot.slane %v1049, 1
      %v1052 = vsel %vm1004, %v1047, %v1051
      %v1054 = vshrl.u32 %v996, 16
      %v1056 = vshll.u32 %v996, 16
      %v1058 = vrot.slane %v1056, 1
      %v1059 = vor.u32 %v1054, %v1058
      %v1061 = vshll.u32 %v997, 16
      %v1063 = vrot.slane %v1061, 1
      %v1064 = vsel %vm1004, %v1059, %v1063
      %v1066 = vshrl.u32 %v998, 16
      %v1068 = vshll.u32 %v998, 16
      %v1070 = vrot.slane %v1068, 1
      %v1071 = vor.u32 %v1066, %v1070
      %v1073 = vshll.u32 %v999, 16
      %v1075 = vrot.slane %v1073, 1
      %v1076 = vsel %vm1004, %v1071, %v1075
      %v1078 = vshrl.u32 %v1000, 16
      %v1080 = vshll.u32 %v1000, 16
      %v1082 = vrot.slane %v1080, 1
      %v1083 = vor.u32 %v1078, %v1082
      %v1085 = vshll.u32 %v1001, 16
      %v1087 = vrot.slane %v1085, 1
      %v1088 = vsel %vm1004, %v1083, %v1087
      %v1090 = vshrl.u32 %v1002, 16
      %v1092 = vshll.u32 %v1002, 16
      %v1094 = vrot.slane %v1092, 1
      %v1095 = vor.u32 %v1090, %v1094
      %v1097 = vshll.u32 %v1003, 16
      %v1099 = vrot.slane %v1097, 1
      %v1100 = vsel %vm1004, %v1095, %v1099
      %1101 = vrot.lane.b32.xlu0 %v1016, 4
      %v1102 = vpop.permute.xlu0 %1101
      %1103 = vrot.lane.b32.xlu0 %v1028, 4
      %v1104 = vpop.permute.xlu0 %1103
      %1105 = vrot.lane.b32.xlu0 %v1040, 4
      %v1106 = vpop.permute.xlu0 %1105
      %1107 = vrot.lane.b32.xlu0 %v1052, 4
      %v1108 = vpop.permute.xlu0 %1107
      %1109 = vrot.lane.b32.xlu0 %v1064, 4
      %v1110 = vpop.permute.xlu0 %1109
      %1111 = vrot.lane.b32.xlu0 %v1076, 4
      %v1112 = vpop.permute.xlu0 %1111
      %1113 = vrot.lane.b32.xlu0 %v1088, 4
      %v1114 = vpop.permute.xlu0 %1113
      %1115 = vrot.lane.b32.xlu0 %v1100, 4
      %v1116 = vpop.permute.xlu0 %1115
      %vm1125 = vcmask 64544
      %1126 = vst.msk [vmem:[#allocation3] sm:$0xff] %vm1125, %v1102
      %1127 = vst.msk [vmem:[#allocation3 + $0x8] sm:$0xff] %vm1125, %v1104
      %1128 = vst.msk [vmem:[#allocation3 + $0x10] sm:$0xff] %vm1125, %v1106
      %1129 = vst.msk [vmem:[#allocation3 + $0x18] sm:$0xff] %vm1125, %v1108
      %1130 = vst.msk [vmem:[#allocation3 + $0x20] sm:$0xff] %vm1125, %v1110
      %1131 = vst.msk [vmem:[#allocation3 + $0x28] sm:$0xff] %vm1125, %v1112
      %1132 = vst.msk [vmem:[#allocation3 + $0x30] sm:$0xff] %vm1125, %v1114
      %1133 = vst.msk [vmem:[#allocation3 + $0x38] sm:$0xff] %vm1125, %v1116
      %v1134 = vld [vmem:[#allocation2] sm:$0xe]
      %v1135 = vld [vmem:[#allocation2 + $0x4] sm:$0xf]
      %v1136 = vld [vmem:[#allocation2 + $0x8] sm:$0x1]
      %v1137 = vld [vmem:[#allocation2 + $0xc] sm:$0xe]
      %v1138 = vld [vmem:[#allocation2 + $0x10] sm:$0xf]
      %v1139 = vld [vmem:[#allocation2 + $0x14] sm:$0x1]
      %v1140 = vld [vmem:[#allocation2 + $0x18] sm:$0xe]
      %v1141 = vld [vmem:[#allocation2 + $0x1c] sm:$0xf]
      %v1142 = vld [vmem:[#allocation2 + $0x20] sm:$0x1]
      %v1143 = vld [vmem:[#allocation2 + $0x24] sm:$0xe]
      %v1144 = vld [vmem:[#allocation2 + $0x28] sm:$0xf]
      %v1145 = vld [vmem:[#allocation2 + $0x2c] sm:$0x1]
      %v1146 = vld [vmem:[#allocation2 + $0x30] sm:$0xe]
      %v1147 = vld [vmem:[#allocation2 + $0x34] sm:$0xf]
      %v1148 = vld [vmem:[#allocation2 + $0x38] sm:$0x1]
      %v1149 = vld [vmem:[#allocation2 + $0x3c] sm:$0xe]
      %v1150 = vld [vmem:[#allocation2 + $0x40] sm:$0xf]
      %v1151 = vld [vmem:[#allocation2 + $0x44] sm:$0x1]
      %v1152 = vld [vmem:[#allocation2 + $0x48] sm:$0xe]
      %v1153 = vld [vmem:[#allocation2 + $0x4c] sm:$0xf]
      %v1154 = vld [vmem:[#allocation2 + $0x50] sm:$0x1]
      %v1155 = vld [vmem:[#allocation2 + $0x54] sm:$0xe]
      %v1156 = vld [vmem:[#allocation2 + $0x58] sm:$0xf]
      %v1157 = vld [vmem:[#allocation2 + $0x5c] sm:$0x1]
      %v1182 = vunpack.c.l.b16 %v1134
      %v1183 = vunpack.c.l.b16 %v1135
      %v1184 = vunpack.c.l.b16 %v1136
      %v1185 = vunpack.c.l.b16 %v1137
      %v1186 = vunpack.c.l.b16 %v1138
      %v1187 = vunpack.c.l.b16 %v1139
      %v1188 = vunpack.c.l.b16 %v1140
      %v1189 = vunpack.c.l.b16 %v1141
      %v1190 = vunpack.c.l.b16 %v1142
      %v1191 = vunpack.c.l.b16 %v1143
      %v1192 = vunpack.c.l.b16 %v1144
      %v1193 = vunpack.c.l.b16 %v1145
      %v1194 = vunpack.c.l.b16 %v1146
      %v1195 = vunpack.c.l.b16 %v1147
      %v1196 = vunpack.c.l.b16 %v1148
      %v1197 = vunpack.c.l.b16 %v1149
      %v1198 = vunpack.c.l.b16 %v1150
      %v1199 = vunpack.c.l.b16 %v1151
      %v1200 = vunpack.c.l.b16 %v1152
      %v1201 = vunpack.c.l.b16 %v1153
      %v1202 = vunpack.c.l.b16 %v1154
      %v1203 = vunpack.c.l.b16 %v1155
      %v1204 = vunpack.c.l.b16 %v1156
      %v1205 = vunpack.c.l.b16 %v1157
      %v1206 = vpack.c.b16 %v1183, %v1182
      %v1207 = vpack.c.b16 %v1184, %v1184
      %v1208 = vpack.c.b16 %v1186, %v1185
      %v1209 = vpack.c.b16 %v1187, %v1187
      %v1210 = vpack.c.b16 %v1189, %v1188
      %v1211 = vpack.c.b16 %v1190, %v1190
      %v1212 = vpack.c.b16 %v1192, %v1191
      %v1213 = vpack.c.b16 %v1193, %v1193
      %v1214 = vpack.c.b16 %v1195, %v1194
      %v1215 = vpack.c.b16 %v1196, %v1196
      %v1216 = vpack.c.b16 %v1198, %v1197
      %v1217 = vpack.c.b16 %v1199, %v1199
      %v1218 = vpack.c.b16 %v1201, %v1200
      %v1219 = vpack.c.b16 %v1202, %v1202
      %v1220 = vpack.c.b16 %v1204, %v1203
      %v1221 = vpack.c.b16 %v1205, %v1205
      %vm1222 = vcmask 1046528
      %v1223 = vrot.slane %v1206, 1
      %v1224 = vrot.slane %v1207, 1
      %v1225 = vsel %vm1222, %v1223, %v1224
      %v1226 = vrot.slane %v1208, 1
      %v1227 = vrot.slane %v1209, 1
      %v1228 = vsel %vm1222, %v1226, %v1227
      %v1229 = vrot.slane %v1210, 1
      %v1230 = vrot.slane %v1211, 1
      %v1231 = vsel %vm1222, %v1229, %v1230
      %v1232 = vrot.slane %v1212, 1
      %v1233 = vrot.slane %v1213, 1
      %v1234 = vsel %vm1222, %v1232, %v1233
      %v1235 = vrot.slane %v1214, 1
      %v1236 = vrot.slane %v1215, 1
      %v1237 = vsel %vm1222, %v1235, %v1236
      %v1238 = vrot.slane %v1216, 1
      %v1239 = vrot.slane %v1217, 1
      %v1240 = vsel %vm1222, %v1238, %v1239
      %v1241 = vrot.slane %v1218, 1
      %v1242 = vrot.slane %v1219, 1
      %v1243 = vsel %vm1222, %v1241, %v1242
      %v1244 = vrot.slane %v1220, 1
      %v1245 = vrot.slane %v1221, 1
      %v1246 = vsel %vm1222, %v1244, %v1245
      %1247 = vrot.lane.b32.xlu0 %v1225, 8
      %v1248 = vpop.permute.xlu0 %1247
      %1249 = vrot.lane.b32.xlu0 %v1228, 8
      %v1250 = vpop.permute.xlu0 %1249
      %1251 = vrot.lane.b32.xlu0 %v1231, 8
      %v1252 = vpop.permute.xlu0 %1251
      %1253 = vrot.lane.b32.xlu0 %v1234, 8
      %v1254 = vpop.permute.xlu0 %1253
      %1255 = vrot.lane.b32.xlu0 %v1237, 8
      %v1256 = vpop.permute.xlu0 %1255
      %1257 = vrot.lane.b32.xlu0 %v1240, 8
      %v1258 = vpop.permute.xlu0 %1257
      %1259 = vrot.lane.b32.xlu0 %v1243, 8
      %v1260 = vpop.permute.xlu0 %1259
      %1261 = vrot.lane.b32.xlu0 %v1246, 8
      %v1262 = vpop.permute.xlu0 %1261
      %vm1271 = vcmask 97344
      %1272 = vst.msk [vmem:[#allocation3] sm:$0xff] %vm1271, %v1248
      %1273 = vst.msk [vmem:[#allocation3 + $0x8] sm:$0xff] %vm1271, %v1250
      %1274 = vst.msk [vmem:[#allocation3 + $0x10] sm:$0xff] %vm1271, %v1252
      %1275 = vst.msk [vmem:[#allocation3 + $0x18] sm:$0xff] %vm1271, %v1254
      %1276 = vst.msk [vmem:[#allocation3 + $0x20] sm:$0xff] %vm1271, %v1256
      %1277 = vst.msk [vmem:[#allocation3 + $0x28] sm:$0xff] %vm1271, %v1258
      %1278 = vst.msk [vmem:[#allocation3 + $0x30] sm:$0xff] %vm1271, %v1260
      %1279 = vst.msk [vmem:[#allocation3 + $0x38] sm:$0xff] %vm1271, %v1262
      %v1280 = vld [vmem:[#allocation3] sm:$0xff]
      %v1281 = vld [vmem:[#allocation3 + $0x8] sm:$0xff]
      %v1282 = vld [vmem:[#allocation3 + $0x10] sm:$0xff]
      %v1283 = vld [vmem:[#allocation3 + $0x18] sm:$0xff]
      %v1284 = vld [vmem:[#allocation3 + $0x20] sm:$0xff]
      %v1285 = vld [vmem:[#allocation3 + $0x28] sm:$0xff]
      %v1286 = vld [vmem:[%s3] sm:$0xf]
      %v1287 = vld [vmem:[%s3 + $0x4] sm:$0x3]
      %s1288 = scalar_lea.vmem [#allocation3], 8
      %v1289 = vld [vmem:[%s1288] sm:$0xff]
      %v1290 = vld [vmem:[%s1288 + $0x8] sm:$0xff]
      %v1291 = vld [vmem:[%s1288 + $0x10] sm:$0xff]
      %v1292 = vld [vmem:[%s1288 + $0x18] sm:$0xff]
      %v1293 = vld [vmem:[%s1288 + $0x20] sm:$0xff]
      %v1294 = vld [vmem:[%s1288 + $0x28] sm:$0xff]
      %s1295 = scalar_lea.vmem %s3, 8
      %v1296 = vld [vmem:[%s1295] sm:$0xf]
      %v1297 = vld [vmem:[%s1295 + $0x4] sm:$0x3]
      %v1300 = vunpack.c.l.b16 %v1296
      %v1301 = vunpack.c.l.b16 %v1297
      %v1302 = vpack.c.b16 %v1301, %v1300
      %vm1303 = vcmask 97280
      %v1305 = vsel %vm1303, %v1289, 0
      %v1308 = vsel %vm1303, %v1290, 0
      %v1311 = vsel %vm1303, %v1291, 0
      %v1314 = vsel %vm1303, %v1292, 0
      %v1317 = vsel %vm1303, %v1293, 0
      %v1320 = vsel %vm1303, %v1294, 0
      %vm1322 = vcmask 1045504
      %v1324 = vsel %vm1322, %v1302, 0
      %1326 = vmatprep.subr.bf16.mxu0 0
      %1327 = vmatpush1.bf16.msra.mxu0 %v1324
      %1328 = vmatprep.subr.bf16.mxu0 0
      %1329 = vmatpush1.bf16.msra.mxu0 0
      %1330 = vmatprep.subr.bf16.mxu0 0
      %1331 = vmatpush1.bf16.msra.mxu0 0
      %1332 = vmatprep.subr.bf16.mxu0 0
      %1333 = vmatpush1.bf16.msra.mxu0 0
      %1334 = vmatprep.subr.bf16.mxu0 0
      %1335 = vmatpush1.bf16.msra.mxu0 0
      %1336 = vmatprep.subr.bf16.mxu0 0
      %1337 = vmatpush1.bf16.msra.mxu0 0
      %1338 = vmatprep.subr.bf16.mxu0 0
      %1339 = vmatpush1.bf16.msra.mxu0 0
      %1340 = vmatprep.subr.bf16.mxu0 0
      %1341 = vmatpush1.bf16.msra.mxu0 0
      %1342 = vmatprep.subr.bf16.mxu0 0
      %1343 = vmatpush1.bf16.msra.mxu0 0
      %1344 = vmatprep.subr.bf16.mxu0 0
      %1345 = vmatpush1.bf16.msra.mxu0 0
      %1346 = vmatprep.subr.bf16.mxu0 0
      %1347 = vmatpush1.bf16.msra.mxu0 0
      %1348 = vmatprep.subr.bf16.mxu0 0
      %1349 = vmatpush1.bf16.msra.mxu0 0
      %1350 = vmatprep.subr.bf16.mxu0 0
      %1351 = vmatpush1.bf16.msra.mxu0 0
      %1352 = vmatprep.subr.bf16.mxu0 0
      %1353 = vmatpush1.bf16.msra.mxu0 0
      %1354 = vmatprep.subr.bf16.mxu0 0
      %1355 = vmatpush1.bf16.msra.mxu0 0
      %1356 = vmatprep.subr.bf16.mxu0 0
      %1357 = vmatpush1.bf16.msra.mxu0 0
      %1358 = vmatprep.mubr.bf16.mxu0 0
      %1359 = vmatmul.mubr.bf16.gmra.mrb[0].mxu0 %v1305
      %v1360 = vpop.f32.mrb[0].mxu0
      %v1361 = vadd.f32 0.0, %v1360
      %v1362 = vpop.f32.mrb[0].mxu0
      %v1363 = vpop.f32.mrb[0].mxu0
      %v1364 = vadd.f32 0.0, %v1363
      %v1365 = vpop.f32.mrb[0].mxu0
      %1366 = vmatprep.mubr.bf16.mxu0 0
      %1367 = vmatmul.mubr.bf16.gmra.mrb[0].mxu0 %v1308
      %v1368 = vpop.f32.mrb[0].mxu0
      %v1369 = vadd.f32 0.0, %v1368
      %v1370 = vpop.f32.mrb[0].mxu0
      %v1371 = vpop.f32.mrb[0].mxu0
      %v1372 = vadd.f32 0.0, %v1371
      %v1373 = vpop.f32.mrb[0].mxu0
      %1374 = vmatprep.mubr.bf16.mxu0 0
      %1375 = vmatmul.mubr.bf16.gmra.mrb[0].mxu0 %v1311
      %v1376 = vpop.f32.mrb[0].mxu0
      %v1377 = vadd.f32 0.0, %v1376
      %v1378 = vpop.f32.mrb[0].mxu0
      %v1379 = vpop.f32.mrb[0].mxu0
      %v1380 = vadd.f32 0.0, %v1379
      %v1381 = vpop.f32.mrb[0].mxu0
      %1382 = vmatprep.mubr.bf16.mxu0 0
      %1383 = vmatmul.mubr.bf16.gmra.mrb[0].mxu0 %v1314
      %v1384 = vpop.f32.mrb[0].mxu0
      %v1385 = vadd.f32 0.0, %v1384
      %v1386 = vpop.f32.mrb[0].mxu0
      %v1387 = vpop.f32.mrb[0].mxu0
      %v1388 = vadd.f32 0.0, %v1387
      %v1389 = vpop.f32.mrb[0].mxu0
      %1390 = vmatprep.mubr.bf16.mxu0 0
      %1391 = vmatmul.mubr.bf16.gmra.mrb[0].mxu0 %v1317
      %v1392 = vpop.f32.mrb[0].mxu0
      %v1393 = vadd.f32 0.0, %v1392
      %v1394 = vpop.f32.mrb[0].mxu0
      %v1395 = vpop.f32.mrb[0].mxu0
      %v1396 = vadd.f32 0.0, %v1395
      %v1397 = vpop.f32.mrb[0].mxu0
      %1398 = vmatprep.mubr.bf16.mxu0 0
      %1399 = vmatmul.mubr.bf16.gmra.mrb[0].mxu0 %v1320
      %v1400 = vpop.f32.mrb[0].mxu0
      %v1401 = vadd.f32 0.0, %v1400
      %v1402 = vpop.f32.mrb[0].mxu0
      %v1403 = vpop.f32.mrb[0].mxu0
      %v1404 = vadd.f32 0.0, %v1403
      %v1405 = vpop.f32.mrb[0].mxu0
      %1406 = vdwg.mxu0
      %v1409 = vunpack.c.l.b16 %v1286
      %v1410 = vunpack.c.l.b16 %v1287
      %v1411 = vpack.c.b16 %v1410, %v1409
      %v1413 = vsel %vm1303, %v1280, 0
      %v1416 = vsel %vm1303, %v1281, 0
      %v1419 = vsel %vm1303, %v1282, 0
      %v1422 = vsel %vm1303, %v1283, 0
      %v1425 = vsel %vm1303, %v1284, 0
      %v1428 = vsel %vm1303, %v1285, 0
      %v1431 = vsel %vm1322, %v1411, 0
      %1433 = vmatprep.subr.bf16.mxu0 0
      %1434 = vmatpush1.bf16.msra.mxu0 %v1431
      %1435 = vmatprep.subr.bf16.mxu0 0
      %1436 = vmatpush1.bf16.msra.mxu0 0
      %1437 = vmatprep.subr.bf16.mxu0 0
      %1438 = vmatpush1.bf16.msra.mxu0 0
      %1439 = vmatprep.subr.bf16.mxu0 0
      %1440 = vmatpush1.bf16.msra.mxu0 0
      %1441 = vmatprep.subr.bf16.mxu0 0
      %1442 = vmatpush1.bf16.msra.mxu0 0
      %1443 = vmatprep.subr.bf16.mxu0 0
      %1444 = vmatpush1.bf16.msra.mxu0 0
      %1445 = vmatprep.subr.bf16.mxu0 0
      %1446 = vmatpush1.bf16.msra.mxu0 0
      %1447 = vmatprep.subr.bf16.mxu0 0
      %1448 = vmatpush1.bf16.msra.mxu0 0
      %1449 = vmatprep.subr.bf16.mxu0 0
      %1450 = vmatpush1.bf16.msra.mxu0 0
      %1451 = vmatprep.subr.bf16.mxu0 0
      %1452 = vmatpush1.bf16.msra.mxu0 0
      %1453 = vmatprep.subr.bf16.mxu0 0
      %1454 = vmatpush1.bf16.msra.mxu0 0
      %1455 = vmatprep.subr.bf16.mxu0 0
      %1456 = vmatpush1.bf16.msra.mxu0 0
      %1457 = vmatprep.subr.bf16.mxu0 0
      %1458 = vmatpush1.bf16.msra.mxu0 0
      %1459 = vmatprep.subr.bf16.mxu0 0
      %1460 = vmatpush1.bf16.msra.mxu0 0
      %1461 = vmatprep.subr.bf16.mxu0 0
      %1462 = vmatpush1.bf16.msra.mxu0 0
      %1463 = vmatprep.subr.bf16.mxu0 0
      %1464 = vmatpush1.bf16.msra.mxu0 0
      %1465 = vmatprep.mubr.bf16.mxu0 0
      %1466 = vmatmul.mubr.bf16.gmra.mrb[0].mxu0 %v1413
      %v1467 = vpop.f32.mrb[0].mxu0
      %v1468 = vadd.f32 %v1361, %v1467
      %v1469 = vpop.f32.mrb[0].mxu0
      %v1470 = vpop.f32.mrb[0].mxu0
      %v1471 = vadd.f32 %v1364, %v1470
      %v1472 = vpop.f32.mrb[0].mxu0
      %1473 = vmatprep.mubr.bf16.mxu0 0
      %1474 = vmatmul.mubr.bf16.gmra.mrb[0].mxu0 %v1416
      %v1475 = vpop.f32.mrb[0].mxu0
      %v1476 = vadd.f32 %v1369, %v1475
      %v1477 = vpop.f32.mrb[0].mxu0
      %v1478 = vpop.f32.mrb[0].mxu0
      %v1479 = vadd.f32 %v1372, %v1478
      %v1480 = vpop.f32.mrb[0].mxu0
      %1481 = vmatprep.mubr.bf16.mxu0 0
      %1482 = vmatmul.mubr.bf16.gmra.mrb[0].mxu0 %v1419
      %v1483 = vpop.f32.mrb[0].mxu0
      %v1484 = vadd.f32 %v1377, %v1483
      %v1485 = vpop.f32.mrb[0].mxu0
      %v1486 = vpop.f32.mrb[0].mxu0
      %v1487 = vadd.f32 %v1380, %v1486
      %v1488 = vpop.f32.mrb[0].mxu0
      %1489 = vmatprep.mubr.bf16.mxu0 0
      %1490 = vmatmul.mubr.bf16.gmra.mrb[0].mxu0 %v1422
      %v1491 = vpop.f32.mrb[0].mxu0
      %v1492 = vadd.f32 %v1385, %v1491
      %v1493 = vpop.f32.mrb[0].mxu0
      %v1494 = vpop.f32.mrb[0].mxu0
      %v1495 = vadd.f32 %v1388, %v1494
      %v1496 = vpop.f32.mrb[0].mxu0
      %1497 = vmatprep.mubr.bf16.mxu0 0
      %1498 = vmatmul.mubr.bf16.gmra.mrb[0].mxu0 %v1425
      %v1499 = vpop.f32.mrb[0].mxu0
      %v1500 = vadd.f32 %v1393, %v1499
      %v1501 = vpop.f32.mrb[0].mxu0
      %v1502 = vpop.f32.mrb[0].mxu0
      %v1503 = vadd.f32 %v1396, %v1502
      %v1504 = vpop.f32.mrb[0].mxu0
      %1505 = vmatprep.mubr.bf16.mxu0 0
      %1506 = vmatmul.mubr.bf16.gmra.mrb[0].mxu0 %v1428
      %v1507 = vpop.f32.mrb[0].mxu0
      %v1508 = vadd.f32 %v1401, %v1507
      %v1509 = vpop.f32.mrb[0].mxu0
      %v1510 = vpop.f32.mrb[0].mxu0
      %v1511 = vadd.f32 %v1404, %v1510
      %v1512 = vpop.f32.mrb[0].mxu0
      %1513 = vdwg.mxu0
      %s1514 = scalar_lea.vmem [#allocation3], 16
      %v1515 = vld [vmem:[%s1514] sm:$0xff]
      %v1516 = vld [vmem:[%s1514 + $0x8] sm:$0xff]
      %v1517 = vld [vmem:[%s1514 + $0x10] sm:$0xff]
      %v1518 = vld [vmem:[%s1514 + $0x18] sm:$0xff]
      %v1519 = vld [vmem:[%s1514 + $0x20] sm:$0xff]
      %v1520 = vld [vmem:[%s1514 + $0x28] sm:$0xff]
      %s1521 = scalar_lea.vmem %s3, 16
      %v1522 = vld [vmem:[%s1521] sm:$0xf]
      %v1523 = vld [vmem:[%s1521 + $0x4] sm:$0x3]
      %v1526 = vunpack.c.l.b16 %v1522
      %v1527 = vunpack.c.l.b16 %v1523
      %v1528 = vpack.c.b16 %v1527, %v1526
      %v1530 = vsel %vm1303, %v1515, 0
      %v1533 = vsel %vm1303, %v1516, 0
      %v1536 = vsel %vm1303, %v1517, 0
      %v1539 = vsel %vm1303, %v1518, 0
      %v1542 = vsel %vm1303, %v1519, 0
      %v1545 = vsel %vm1303, %v1520, 0
      %v1548 = vsel %vm1322, %v1528, 0
      %1550 = vmatprep.subr.bf16.mxu0 0
      %1551 = vmatpush1.bf16.msra.mxu0 %v1548
      %1552 = vmatprep.subr.bf16.mxu0 0
      %1553 = vmatpush1.bf16.msra.mxu0 0
      %1554 = vmatprep.subr.bf16.mxu0 0
      %1555 = vmatpush1.bf16.msra.mxu0 0
      %1556 = vmatprep.subr.bf16.mxu0 0
      %1557 = vmatpush1.bf16.msra.mxu0 0
      %1558 = vmatprep.subr.bf16.mxu0 0
      %1559 = vmatpush1.bf16.msra.mxu0 0
      %1560 = vmatprep.subr.bf16.mxu0 0
      %1561 = vmatpush1.bf16.msra.mxu0 0
      %1562 = vmatprep.subr.bf16.mxu0 0
      %1563 = vmatpush1.bf16.msra.mxu0 0
      %1564 = vmatprep.subr.bf16.mxu0 0
      %1565 = vmatpush1.bf16.msra.mxu0 0
      %1566 = vmatprep.subr.bf16.mxu0 0
      %1567 = vmatpush1.bf16.msra.mxu0 0
      %1568 = vmatprep.subr.bf16.mxu0 0
      %1569 = vmatpush1.bf16.msra.mxu0 0
      %1570 = vmatprep.subr.bf16.mxu0 0
      %1571 = vmatpush1.bf16.msra.mxu0 0
      %1572 = vmatprep.subr.bf16.mxu0 0
      %1573 = vmatpush1.bf16.msra.mxu0 0
      %1574 = vmatprep.subr.bf16.mxu0 0
      %1575 = vmatpush1.bf16.msra.mxu0 0
      %1576 = vmatprep.subr.bf16.mxu0 0
      %1577 = vmatpush1.bf16.msra.mxu0 0
      %1578 = vmatprep.subr.bf16.mxu0 0
      %1579 = vmatpush1.bf16.msra.mxu0 0
      %1580 = vmatprep.subr.bf16.mxu0 0
      %1581 = vmatpush1.bf16.msra.mxu0 0
      %1582 = vmatprep.mubr.bf16.mxu0 0
      %1583 = vmatmul.mubr.bf16.gmra.mrb[0].mxu0 %v1530
      %v1584 = vpop.f32.mrb[0].mxu0
      %v1585 = vadd.f32 0.0, %v1584
      %v1586 = vpop.f32.mrb[0].mxu0
      %v1587 = vpop.f32.mrb[0].mxu0
      %v1588 = vadd.f32 0.0, %v1587
      %v1589 = vpop.f32.mrb[0].mxu0
      %1590 = vmatprep.mubr.bf16.mxu0 0
      %1591 = vmatmul.mubr.bf16.gmra.mrb[0].mxu0 %v1533
      %v1592 = vpop.f32.mrb[0].mxu0
      %v1593 = vadd.f32 0.0, %v1592
      %v1594 = vpop.f32.mrb[0].mxu0
      %v1595 = vpop.f32.mrb[0].mxu0
      %v1596 = vadd.f32 0.0, %v1595
      %v1597 = vpop.f32.mrb[0].mxu0
      %1598 = vmatprep.mubr.bf16.mxu0 0
      %1599 = vmatmul.mubr.bf16.gmra.mrb[0].mxu0 %v1536
      %v1600 = vpop.f32.mrb[0].mxu0
      %v1601 = vadd.f32 0.0, %v1600
      %v1602 = vpop.f32.mrb[0].mxu0
      %v1603 = vpop.f32.mrb[0].mxu0
      %v1604 = vadd.f32 0.0, %v1603
      %v1605 = vpop.f32.mrb[0].mxu0
      %1606 = vmatprep.mubr.bf16.mxu0 0
      %1607 = vmatmul.mubr.bf16.gmra.mrb[0].mxu0 %v1539
      %v1608 = vpop.f32.mrb[0].mxu0
      %v1609 = vadd.f32 0.0, %v1608
      %v1610 = vpop.f32.mrb[0].mxu0
      %v1611 = vpop.f32.mrb[0].mxu0
      %v1612 = vadd.f32 0.0, %v1611
      %v1613 = vpop.f32.mrb[0].mxu0
      %1614 = vmatprep.mubr.bf16.mxu0 0
      %1615 = vmatmul.mubr.bf16.gmra.mrb[0].mxu0 %v1542
      %v1616 = vpop.f32.mrb[0].mxu0
      %v1617 = vadd.f32 0.0, %v1616
      %v1618 = vpop.f32.mrb[0].mxu0
      %v1619 = vpop.f32.mrb[0].mxu0
      %v1620 = vadd.f32 0.0, %v1619
      %v1621 = vpop.f32.mrb[0].mxu0
      %1622 = vmatprep.mubr.bf16.mxu0 0
      %1623 = vmatmul.mubr.bf16.gmra.mrb[0].mxu0 %v1545
      %v1624 = vpop.f32.mrb[0].mxu0
      %v1625 = vadd.f32 0.0, %v1624
      %v1626 = vpop.f32.mrb[0].mxu0
      %v1627 = vpop.f32.mrb[0].mxu0
      %v1628 = vadd.f32 0.0, %v1627
      %v1629 = vpop.f32.mrb[0].mxu0
      %1630 = vdwg.mxu0
      %v1631 = vadd.f32 %v1468, %v1585
      %v1632 = vadd.f32 %v1471, %v1588
      %v1633 = vadd.f32 %v1476, %v1593
      %v1634 = vadd.f32 %v1479, %v1596
      %v1635 = vadd.f32 %v1484, %v1601
      %v1636 = vadd.f32 %v1487, %v1604
      %v1637 = vadd.f32 %v1492, %v1609
      %v1638 = vadd.f32 %v1495, %v1612
      %v1639 = vadd.f32 %v1500, %v1617
      %v1640 = vadd.f32 %v1503, %v1620
      %v1641 = vadd.f32 %v1508, %v1625
      %v1642 = vadd.f32 %v1511, %v1628
      %v1643 = vld [vmem:[%s4] sm:$0x1]
      %v1645 = vlaneseq
      %v1646 = vshrl.u32 %v1645, 7
      %v1647 = vsub.s32 0, %v1646
      %v1648 = vrot.slane %v1643, %v1647
      %v1650 = vadd.f32 %v1631, %v1648
      %v1651 = vadd.f32 %v1632, %v1648
      %v1652 = vadd.f32 %v1633, %v1648
      %v1653 = vadd.f32 %v1634, %v1648
      %v1654 = vadd.f32 %v1635, %v1648
      %v1655 = vadd.f32 %v1636, %v1648
      %v1656 = vadd.f32 %v1637, %v1648
      %v1657 = vadd.f32 %v1638, %v1648
      %v1658 = vadd.f32 %v1639, %v1648
      %v1659 = vadd.f32 %v1640, %v1648
      %v1660 = vadd.f32 %v1641, %v1648
      %v1661 = vadd.f32 %v1642, %v1648
      %v1662 = vmax.f32 %v1650, 0.0
      %v1663 = vmax.f32 %v1651, 0.0
      %v1664 = vmax.f32 %v1652, 0.0
      %v1665 = vmax.f32 %v1653, 0.0
      %v1666 = vmax.f32 %v1654, 0.0
      %v1667 = vmax.f32 %v1655, 0.0
      %v1668 = vmax.f32 %v1656, 0.0
      %v1669 = vmax.f32 %v1657, 0.0
      %v1670 = vmax.f32 %v1658, 0.0
      %v1671 = vmax.f32 %v1659, 0.0
      %v1672 = vmax.f32 %v1660, 0.0
      %v1673 = vmax.f32 %v1661, 0.0
      %v1674 = vpack.c.bf16 %v1663, %v1662
      %v1675 = vpack.c.bf16 %v1665, %v1664
      %v1676 = vpack.c.bf16 %v1667, %v1666
      %v1677 = vpack.c.bf16 %v1669, %v1668
      %v1678 = vpack.c.bf16 %v1671, %v1670
      %v1679 = vpack.c.bf16 %v1673, %v1672
      %vm1680 = vcmask 1040384
      %vm1681 = vmand %vm1680, %vm459
      %v1682 = vld [vmem:[#allocation4] sm:$0x1]
      %v1683 = vsel %vm1681, 0, %v1682
      %1684 = vst [vmem:[#allocation4] sm:$0x1] %v1683
      %v1685 = vld [vmem:[#allocation4 + $0xc] sm:$0x1]
      %v1686 = vsel %vm1681, 0, %v1685
      %1687 = vst [vmem:[#allocation4 + $0xc] sm:$0x1] %v1686
      %v1688 = vld [vmem:[#allocation4 + $0x18] sm:$0x1]
      %v1689 = vsel %vm1681, 0, %v1688
      %1690 = vst [vmem:[#allocation4 + $0x18] sm:$0x1] %v1689
      %v1691 = vld [vmem:[#allocation4 + $0x24] sm:$0x1]
      %v1692 = vsel %vm1681, 0, %v1691
      %1693 = vst [vmem:[#allocation4 + $0x24] sm:$0x1] %v1692
      %v1694 = vld [vmem:[#allocation4 + $0x30] sm:$0x1]
      %v1695 = vsel %vm1681, 0, %v1694
      %1696 = vst [vmem:[#allocation4 + $0x30] sm:$0x1] %v1695
      %v1697 = vld [vmem:[#allocation4 + $0x3c] sm:$0x1]
      %v1698 = vsel %vm1681, 0, %v1697
      %1699 = vst [vmem:[#allocation4 + $0x3c] sm:$0x1] %v1698
      %vm1700 = vmand %vm1680, %vm485
      %v1701 = vld [vmem:[#allocation4 + $0x8] sm:$0x1]
      %v1702 = vsel %vm1700, 0, %v1701
      %1703 = vst [vmem:[#allocation4 + $0x8] sm:$0x1] %v1702
      %v1704 = vld [vmem:[#allocation4 + $0x14] sm:$0x1]
      %v1705 = vsel %vm1700, 0, %v1704
      %1706 = vst [vmem:[#allocation4 + $0x14] sm:$0x1] %v1705
      %v1707 = vld [vmem:[#allocation4 + $0x20] sm:$0x1]
      %v1708 = vsel %vm1700, 0, %v1707
      %1709 = vst [vmem:[#allocation4 + $0x20] sm:$0x1] %v1708
      %v1710 = vld [vmem:[#allocation4 + $0x2c] sm:$0x1]
      %v1711 = vsel %vm1700, 0, %v1710
      %1712 = vst [vmem:[#allocation4 + $0x2c] sm:$0x1] %v1711
      %v1713 = vld [vmem:[#allocation4 + $0x38] sm:$0x1]
      %v1714 = vsel %vm1700, 0, %v1713
      %1715 = vst [vmem:[#allocation4 + $0x38] sm:$0x1] %v1714
      %v1716 = vld [vmem:[#allocation4 + $0x44] sm:$0x1]
      %v1717 = vsel %vm1700, 0, %v1716
      %1718 = vst [vmem:[#allocation4 + $0x44] sm:$0x1] %v1717
      %v1725 = vunpack.c.l.b16 %v1674
      %v1726 = vunpack.c.h.b16 %v1674
      %v1727 = vunpack.c.l.b16 %v1675
      %v1728 = vunpack.c.h.b16 %v1675
      %v1729 = vunpack.c.l.b16 %v1676
      %v1730 = vunpack.c.h.b16 %v1676
      %v1731 = vunpack.c.l.b16 %v1677
      %v1732 = vunpack.c.h.b16 %v1677
      %v1733 = vunpack.c.l.b16 %v1678
      %v1734 = vunpack.c.h.b16 %v1678
      %v1735 = vunpack.c.l.b16 %v1679
      %v1736 = vunpack.c.h.b16 %v1679
      %v1737 = vpack.c.b16 %v1725, %v1725
      %v1738 = vpack.c.b16 %v1726, %v1726
      %v1739 = vpack.c.b16 %v1727, %v1727
      %v1740 = vpack.c.b16 %v1728, %v1728
      %v1741 = vpack.c.b16 %v1729, %v1729
      %v1742 = vpack.c.b16 %v1730, %v1730
      %v1743 = vpack.c.b16 %v1731, %v1731
      %v1744 = vpack.c.b16 %v1732, %v1732
      %v1745 = vpack.c.b16 %v1733, %v1733
      %v1746 = vpack.c.b16 %v1734, %v1734
      %v1747 = vpack.c.b16 %v1735, %v1735
      %v1748 = vpack.c.b16 %v1736, %v1736
      %v1750 = vshrl.u32 %v1737, 16
      %v1752 = vrot.slane %v1750, 7
      %v1753 = vshll.u32 %v1737, 16
      %v1755 = vor.u32 %v1752, %v1753
      %v1756 = vrot.slane %v1752, 4
      %v1758 = vshrl.u32 %v1738, 16
      %v1760 = vrot.slane %v1758, 7
      %v1761 = vshll.u32 %v1738, 16
      %v1763 = vor.u32 %v1760, %v1761
      %v1764 = vsel %vm544, %v1756, %v1763
      %v1765 = vrot.slane %v1760, 4
      %v1767 = vshrl.u32 %v1739, 16
      %v1769 = vrot.slane %v1767, 7
      %v1770 = vshll.u32 %v1739, 16
      %v1772 = vor.u32 %v1769, %v1770
      %v1773 = vrot.slane %v1769, 4
      %v1775 = vshrl.u32 %v1740, 16
      %v1777 = vrot.slane %v1775, 7
      %v1778 = vshll.u32 %v1740, 16
      %v1780 = vor.u32 %v1777, %v1778
      %v1781 = vsel %vm544, %v1773, %v1780
      %v1782 = vrot.slane %v1777, 4
      %v1784 = vshrl.u32 %v1741, 16
      %v1786 = vrot.slane %v1784, 7
      %v1787 = vshll.u32 %v1741, 16
      %v1789 = vor.u32 %v1786, %v1787
      %v1790 = vrot.slane %v1786, 4
      %v1792 = vshrl.u32 %v1742, 16
      %v1794 = vrot.slane %v1792, 7
      %v1795 = vshll.u32 %v1742, 16
      %v1797 = vor.u32 %v1794, %v1795
      %v1798 = vsel %vm544, %v1790, %v1797
      %v1799 = vrot.slane %v1794, 4
      %v1801 = vshrl.u32 %v1743, 16
      %v1803 = vrot.slane %v1801, 7
      %v1804 = vshll.u32 %v1743, 16
      %v1806 = vor.u32 %v1803, %v1804
      %v1807 = vrot.slane %v1803, 4
      %v1809 = vshrl.u32 %v1744, 16
      %v1811 = vrot.slane %v1809, 7
      %v1812 = vshll.u32 %v1744, 16
      %v1814 = vor.u32 %v1811, %v1812
      %v1815 = vsel %vm544, %v1807, %v1814
      %v1816 = vrot.slane %v1811, 4
      %v1818 = vshrl.u32 %v1745, 16
      %v1820 = vrot.slane %v1818, 7
      %v1821 = vshll.u32 %v1745, 16
      %v1823 = vor.u32 %v1820, %v1821
      %v1824 = vrot.slane %v1820, 4
      %v1826 = vshrl.u32 %v1746, 16
      %v1828 = vrot.slane %v1826, 7
      %v1829 = vshll.u32 %v1746, 16
      %v1831 = vor.u32 %v1828, %v1829
      %v1832 = vsel %vm544, %v1824, %v1831
      %v1833 = vrot.slane %v1828, 4
      %v1835 = vshrl.u32 %v1747, 16
      %v1837 = vrot.slane %v1835, 7
      %v1838 = vshll.u32 %v1747, 16
      %v1840 = vor.u32 %v1837, %v1838
      %v1841 = vrot.slane %v1837, 4
      %v1843 = vshrl.u32 %v1748, 16
      %v1845 = vrot.slane %v1843, 7
      %v1846 = vshll.u32 %v1748, 16
      %v1848 = vor.u32 %v1845, %v1846
      %v1849 = vsel %vm544, %v1841, %v1848
      %v1850 = vrot.slane %v1845, 4
      %vm1869 = vcmask 1043456
      %vm1870 = vmand %vm1869, %vm485
      %v1871 = vld [vmem:[#allocation4] sm:$0xf]
      %v1872 = vsel %vm1870, %v1755, %v1871
      %1873 = vst [vmem:[#allocation4] sm:$0xf] %v1872
      %1874 = vst [vmem:[#allocation4 + $0x4] sm:$0xf] %v1764
      %v1875 = vld [vmem:[#allocation4 + $0x8] sm:$0x1]
      %v1876 = vsel %vm1681, %v1765, %v1875
      %1877 = vst [vmem:[#allocation4 + $0x8] sm:$0x1] %v1876
      %v1878 = vld [vmem:[#allocation4 + $0xc] sm:$0xf]
      %v1879 = vsel %vm1870, %v1772, %v1878
      %1880 = vst [vmem:[#allocation4 + $0xc] sm:$0xf] %v1879
      %1881 = vst [vmem:[#allocation4 + $0x10] sm:$0xf] %v1781
      %v1882 = vld [vmem:[#allocation4 + $0x14] sm:$0x1]
      %v1883 = vsel %vm1681, %v1782, %v1882
      %1884 = vst [vmem:[#allocation4 + $0x14] sm:$0x1] %v1883
      %v1885 = vld [vmem:[#allocation4 + $0x18] sm:$0xf]
      %v1886 = vsel %vm1870, %v1789, %v1885
      %1887 = vst [vmem:[#allocation4 + $0x18] sm:$0xf] %v1886
      %1888 = vst [vmem:[#allocation4 + $0x1c] sm:$0xf] %v1798
      %v1889 = vld [vmem:[#allocation4 + $0x20] sm:$0x1]
      %v1890 = vsel %vm1681, %v1799, %v1889
      %1891 = vst [vmem:[#allocation4 + $0x20] sm:$0x1] %v1890
      %v1892 = vld [vmem:[#allocation4 + $0x24] sm:$0xf]
      %v1893 = vsel %vm1870, %v1806, %v1892
      %1894 = vst [vmem:[#allocation4 + $0x24] sm:$0xf] %v1893
      %1895 = vst [vmem:[#allocation4 + $0x28] sm:$0xf] %v1815
      %v1896 = vld [vmem:[#allocation4 + $0x2c] sm:$0x1]
      %v1897 = vsel %vm1681, %v1816, %v1896
      %1898 = vst [vmem:[#allocation4 + $0x2c] sm:$0x1] %v1897
      %v1899 = vld [vmem:[#allocation4 + $0x30] sm:$0xf]
      %v1900 = vsel %vm1870, %v1823, %v1899
      %1901 = vst [vmem:[#allocation4 + $0x30] sm:$0xf] %v1900
      %1902 = vst [vmem:[#allocation4 + $0x34] sm:$0xf] %v1832
      %v1903 = vld [vmem:[#allocation4 + $0x38] sm:$0x1]
      %v1904 = vsel %vm1681, %v1833, %v1903
      %1905 = vst [vmem:[#allocation4 + $0x38] sm:$0x1] %v1904
      %v1906 = vld [vmem:[#allocation4 + $0x3c] sm:$0xf]
      %v1907 = vsel %vm1870, %v1840, %v1906
      %1908 = vst [vmem:[#allocation4 + $0x3c] sm:$0xf] %v1907
      %1909 = vst [vmem:[#allocation4 + $0x40] sm:$0xf] %v1849
      %v1910 = vld [vmem:[#allocation4 + $0x44] sm:$0x1]
      %v1911 = vsel %vm1681, %v1850, %v1910
      %1912 = vst [vmem:[#allocation4 + $0x44] sm:$0x1] %v1911
      // Predicated region
      $region65: #{tpu_custom_call.1} parent=47 // pred_check
        %p1913 = pneg %p657
      $region66: #{tpu_custom_call.1} parent=47 // pred_check_branch
        %1915 = sbr.rel (%p1913) target = $region68
      $region67: #{tpu_custom_call.1} parent=47 // pred_region
        %1916 = vst [vmem:[#allocation4] sm:$0xf] 0
        %1917 = vst [vmem:[#allocation4 + $0x4] sm:$0xf] 0
        %1918 = vst [vmem:[#allocation4 + $0x8] sm:$0x1] 0
      $region68: #{tpu_custom_call.1} parent=47 // pred_fallthru
        _
      // Predicated region
      $region69: #{tpu_custom_call.1} parent=47 // pred_check
        %p1919 = pneg %p749
      $region70: #{tpu_custom_call.1} parent=47 // pred_check_branch
        %1921 = sbr.rel (%p1919) target = $region72
      $region71: #{tpu_custom_call.1} parent=47 // pred_region
        %s1922 = scalar_lea.vmem [#allocation4], 60
        %1923 = vst [vmem:[%s1922] sm:$0xf] 0
        %1924 = vst [vmem:[%s1922 + $0x4] sm:$0xf] 0
        %1925 = vst [vmem:[%s1922 + $0x8] sm:$0x1] 0
      $region72: #{tpu_custom_call.1} parent=47 // pred_fallthru
        _
      %v1926 = vld [vmem:[#allocation4] sm:$0xf]
      %v1927 = vld [vmem:[#allocation4 + $0x4] sm:$0xf]
      %v1928 = vld [vmem:[#allocation4 + $0xc] sm:$0xf]
      %v1929 = vld [vmem:[#allocation4 + $0x10] sm:$0xf]
      %v1930 = vld [vmem:[#allocation4 + $0x18] sm:$0xf]
      %v1931 = vld [vmem:[#allocation4 + $0x1c] sm:$0xf]
      %v1932 = vld [vmem:[#allocation4 + $0x24] sm:$0xf]
      %v1933 = vld [vmem:[#allocation4 + $0x28] sm:$0xf]
      %v1934 = vld [vmem:[#allocation4 + $0x30] sm:$0xf]
      %v1935 = vld [vmem:[#allocation4 + $0x34] sm:$0xf]
      %v1936 = vld [vmem:[#allocation4 + $0x3c] sm:$0xf]
      %v1937 = vld [vmem:[#allocation4 + $0x40] sm:$0xf]
      %v1950 = vunpack.c.l.b16 %v1926
      %v1951 = vunpack.c.l.b16 %v1927
      %v1952 = vunpack.c.l.b16 %v1928
      %v1953 = vunpack.c.l.b16 %v1929
      %v1954 = vunpack.c.l.b16 %v1930
      %v1955 = vunpack.c.l.b16 %v1931
      %v1956 = vunpack.c.l.b16 %v1932
      %v1957 = vunpack.c.l.b16 %v1933
      %v1958 = vunpack.c.l.b16 %v1934
      %v1959 = vunpack.c.l.b16 %v1935
      %v1960 = vunpack.c.l.b16 %v1936
      %v1961 = vunpack.c.l.b16 %v1937
      %v1962 = vpack.c.b16 %v1951, %v1950
      %v1963 = vpack.c.b16 %v1953, %v1952
      %v1964 = vpack.c.b16 %v1955, %v1954
      %v1965 = vpack.c.b16 %v1957, %v1956
      %v1966 = vpack.c.b16 %v1959, %v1958
      %v1967 = vpack.c.b16 %v1961, %v1960
      %1974 = vst [vmem:[#allocation5] sm:$0xff] %v1962
      %1975 = vst [vmem:[#allocation5 + $0x18] sm:$0xff] %v1963
      %1976 = vst [vmem:[#allocation5 + $0x30] sm:$0xff] %v1964
      %1977 = vst [vmem:[#allocation5 + $0x48] sm:$0xff] %v1965
      %1978 = vst [vmem:[#allocation5 + $0x60] sm:$0xff] %v1966
      %1979 = vst [vmem:[#allocation5 + $0x78] sm:$0xff] %v1967
      %v1980 = vld [vmem:[#allocation4] sm:$0xf]
      %v1981 = vld [vmem:[#allocation4 + $0x4] sm:$0xf]
      %v1982 = vld [vmem:[#allocation4 + $0x8] sm:$0x1]
      %v1983 = vld [vmem:[#allocation4 + $0xc] sm:$0xf]
      %v1984 = vld [vmem:[#allocation4 + $0x10] sm:$0xf]
      %v1985 = vld [vmem:[#allocation4 + $0x14] sm:$0x1]
      %v1986 = vld [vmem:[#allocation4 + $0x18] sm:$0xf]
      %v1987 = vld [vmem:[#allocation4 + $0x1c] sm:$0xf]
      %v1988 = vld [vmem:[#allocation4 + $0x20] sm:$0x1]
      %v1989 = vld [vmem:[#allocation4 + $0x24] sm:$0xf]
      %v1990 = vld [vmem:[#allocation4 + $0x28] sm:$0xf]
      %v1991 = vld [vmem:[#allocation4 + $0x2c] sm:$0x1]
      %v1992 = vld [vmem:[#allocation4 + $0x30] sm:$0xf]
      %v1993 = vld [vmem:[#allocation4 + $0x34] sm:$0xf]
      %v1994 = vld [vmem:[#allocation4 + $0x38] sm:$0x1]
      %v1995 = vld [vmem:[#allocation4 + $0x3c] sm:$0xf]
      %v1996 = vld [vmem:[#allocation4 + $0x40] sm:$0xf]
      %v1997 = vld [vmem:[#allocation4 + $0x44] sm:$0x1]
      %v2016 = vunpack.c.l.b16 %v1980
      %v2017 = vunpack.c.l.b16 %v1981
      %v2018 = vunpack.c.l.b16 %v1982
      %v2019 = vunpack.c.l.b16 %v1983
      %v2020 = vunpack.c.l.b16 %v1984
      %v2021 = vunpack.c.l.b16 %v1985
      %v2022 = vunpack.c.l.b16 %v1986
      %v2023 = vunpack.c.l.b16 %v1987
      %v2024 = vunpack.c.l.b16 %v1988
      %v2025 = vunpack.c.l.b16 %v1989
      %v2026 = vunpack.c.l.b16 %v1990
      %v2027 = vunpack.c.l.b16 %v1991
      %v2028 = vunpack.c.l.b16 %v1992
      %v2029 = vunpack.c.l.b16 %v1993
      %v2030 = vunpack.c.l.b16 %v1994
      %v2031 = vunpack.c.l.b16 %v1995
      %v2032 = vunpack.c.l.b16 %v1996
      %v2033 = vunpack.c.l.b16 %v1997
      %v2034 = vpack.c.b16 %v2017, %v2016
      %v2035 = vpack.c.b16 %v2018, %v2018
      %v2036 = vpack.c.b16 %v2020, %v2019
      %v2037 = vpack.c.b16 %v2021, %v2021
      %v2038 = vpack.c.b16 %v2023, %v2022
      %v2039 = vpack.c.b16 %v2024, %v2024
      %v2040 = vpack.c.b16 %v2026, %v2025
      %v2041 = vpack.c.b16 %v2027, %v2027
      %v2042 = vpack.c.b16 %v2029, %v2028
      %v2043 = vpack.c.b16 %v2030, %v2030
      %v2044 = vpack.c.b16 %v2032, %v2031
      %v2045 = vpack.c.b16 %v2033, %v2033
      %v2047 = vshrl.u32 %v2034, 16
      %v2049 = vshll.u32 %v2034, 16
      %v2051 = vrot.slane %v2049, 1
      %v2052 = vor.u32 %v2047, %v2051
      %v2054 = vshll.u32 %v2035, 16
      %v2056 = vrot.slane %v2054, 1
      %v2057 = vsel %vm1004, %v2052, %v2056
      %v2059 = vshrl.u32 %v2036, 16
      %v2061 = vshll.u32 %v2036, 16
      %v2063 = vrot.slane %v2061, 1
      %v2064 = vor.u32 %v2059, %v2063
      %v2066 = vshll.u32 %v2037, 16
      %v2068 = vrot.slane %v2066, 1
      %v2069 = vsel %vm1004, %v2064, %v2068
      %v2071 = vshrl.u32 %v2038, 16
      %v2073 = vshll.u32 %v2038, 16
      %v2075 = vrot.slane %v2073, 1
      %v2076 = vor.u32 %v2071, %v2075
      %v2078 = vshll.u32 %v2039, 16
      %v2080 = vrot.slane %v2078, 1
      %v2081 = vsel %vm1004, %v2076, %v2080
      %v2083 = vshrl.u32 %v2040, 16
      %v2085 = vshll.u32 %v2040, 16
      %v2087 = vrot.slane %v2085, 1
      %v2088 = vor.u32 %v2083, %v2087
      %v2090 = vshll.u32 %v2041, 16
      %v2092 = vrot.slane %v2090, 1
      %v2093 = vsel %vm1004, %v2088, %v2092
      %v2095 = vshrl.u32 %v2042, 16
      %v2097 = vshll.u32 %v2042, 16
      %v2099 = vrot.slane %v2097, 1
      %v2100 = vor.u32 %v2095, %v2099
      %v2102 = vshll.u32 %v2043, 16
      %v2104 = vrot.slane %v2102, 1
      %v2105 = vsel %vm1004, %v2100, %v2104
      %v2107 = vshrl.u32 %v2044, 16
      %v2109 = vshll.u32 %v2044, 16
      %v2111 = vrot.slane %v2109, 1
      %v2112 = vor.u32 %v2107, %v2111
      %v2114 = vshll.u32 %v2045, 16
      %v2116 = vrot.slane %v2114, 1
      %v2117 = vsel %vm1004, %v2112, %v2116
      %2124 = vst [vmem:[#allocation5 + $0x8] sm:$0xff] %v2057
      %2125 = vst [vmem:[#allocation5 + $0x20] sm:$0xff] %v2069
      %2126 = vst [vmem:[#allocation5 + $0x38] sm:$0xff] %v2081
      %2127 = vst [vmem:[#allocation5 + $0x50] sm:$0xff] %v2093
      %2128 = vst [vmem:[#allocation5 + $0x68] sm:$0xff] %v2105
      %2129 = vst [vmem:[#allocation5 + $0x80] sm:$0xff] %v2117
      %v2130 = vld [vmem:[#allocation4] sm:$0xe]
      %v2131 = vld [vmem:[#allocation4 + $0x4] sm:$0xf]
      %v2132 = vld [vmem:[#allocation4 + $0x8] sm:$0x1]
      %v2133 = vld [vmem:[#allocation4 + $0xc] sm:$0xe]
      %v2134 = vld [vmem:[#allocation4 + $0x10] sm:$0xf]
      %v2135 = vld [vmem:[#allocation4 + $0x14] sm:$0x1]
      %v2136 = vld [vmem:[#allocation4 + $0x18] sm:$0xe]
      %v2137 = vld [vmem:[#allocation4 + $0x1c] sm:$0xf]
      %v2138 = vld [vmem:[#allocation4 + $0x20] sm:$0x1]
      %v2139 = vld [vmem:[#allocation4 + $0x24] sm:$0xe]
      %v2140 = vld [vmem:[#allocation4 + $0x28] sm:$0xf]
      %v2141 = vld [vmem:[#allocation4 + $0x2c] sm:$0x1]
      %v2142 = vld [vmem:[#allocation4 + $0x30] sm:$0xe]
      %v2143 = vld [vmem:[#allocation4 + $0x34] sm:$0xf]
      %v2144 = vld [vmem:[#allocation4 + $0x38] sm:$0x1]
      %v2145 = vld [vmem:[#allocation4 + $0x3c] sm:$0xe]
      %v2146 = vld [vmem:[#allocation4 + $0x40] sm:$0xf]
      %v2147 = vld [vmem:[#allocation4 + $0x44] sm:$0x1]
      %v2166 = vunpack.c.l.b16 %v2130
      %v2167 = vunpack.c.l.b16 %v2131
      %v2168 = vunpack.c.l.b16 %v2132
      %v2169 = vunpack.c.l.b16 %v2133
      %v2170 = vunpack.c.l.b16 %v2134
      %v2171 = vunpack.c.l.b16 %v2135
      %v2172 = vunpack.c.l.b16 %v2136
      %v2173 = vunpack.c.l.b16 %v2137
      %v2174 = vunpack.c.l.b16 %v2138
      %v2175 = vunpack.c.l.b16 %v2139
      %v2176 = vunpack.c.l.b16 %v2140
      %v2177 = vunpack.c.l.b16 %v2141
      %v2178 = vunpack.c.l.b16 %v2142
      %v2179 = vunpack.c.l.b16 %v2143
      %v2180 = vunpack.c.l.b16 %v2144
      %v2181 = vunpack.c.l.b16 %v2145
      %v2182 = vunpack.c.l.b16 %v2146
      %v2183 = vunpack.c.l.b16 %v2147
      %v2184 = vpack.c.b16 %v2167, %v2166
      %v2185 = vpack.c.b16 %v2168, %v2168
      %v2186 = vpack.c.b16 %v2170, %v2169
      %v2187 = vpack.c.b16 %v2171, %v2171
      %v2188 = vpack.c.b16 %v2173, %v2172
      %v2189 = vpack.c.b16 %v2174, %v2174
      %v2190 = vpack.c.b16 %v2176, %v2175
      %v2191 = vpack.c.b16 %v2177, %v2177
      %v2192 = vpack.c.b16 %v2179, %v2178
      %v2193 = vpack.c.b16 %v2180, %v2180
      %v2194 = vpack.c.b16 %v2182, %v2181
      %v2195 = vpack.c.b16 %v2183, %v2183
      %v2196 = vrot.slane %v2184, 1
      %v2197 = vrot.slane %v2185, 1
      %v2198 = vsel %vm1222, %v2196, %v2197
      %v2199 = vrot.slane %v2186, 1
      %v2200 = vrot.slane %v2187, 1
      %v2201 = vsel %vm1222, %v2199, %v2200
      %v2202 = vrot.slane %v2188, 1
      %v2203 = vrot.slane %v2189, 1
      %v2204 = vsel %vm1222, %v2202, %v2203
      %v2205 = vrot.slane %v2190, 1
      %v2206 = vrot.slane %v2191, 1
      %v2207 = vsel %vm1222, %v2205, %v2206
      %v2208 = vrot.slane %v2192, 1
      %v2209 = vrot.slane %v2193, 1
      %v2210 = vsel %vm1222, %v2208, %v2209
      %v2211 = vrot.slane %v2194, 1
      %v2212 = vrot.slane %v2195, 1
      %v2213 = vsel %vm1222, %v2211, %v2212
      %2220 = vst [vmem:[#allocation5 + $0x10] sm:$0xff] %v2198
      %2221 = vst [vmem:[#allocation5 + $0x28] sm:$0xff] %v2201
      %2222 = vst [vmem:[#allocation5 + $0x40] sm:$0xff] %v2204
      %2223 = vst [vmem:[#allocation5 + $0x58] sm:$0xff] %v2207
      %2224 = vst [vmem:[#allocation5 + $0x70] sm:$0xff] %v2210
      %2225 = vst [vmem:[#allocation5 + $0x88] sm:$0xff] %v2213
      %v2226 = vld [vmem:[#allocation5] sm:$0xff]
      %v2227 = vld [vmem:[#allocation5 + $0x8] sm:$0xff]
      %v2228 = vld [vmem:[#allocation5 + $0x10] sm:$0xff]
      %v2229 = vld [vmem:[#allocation5 + $0x18] sm:$0xff]
      %v2230 = vld [vmem:[#allocation5 + $0x20] sm:$0xff]
      %v2231 = vld [vmem:[#allocation5 + $0x28] sm:$0xff]
      %v2232 = vld [vmem:[#allocation5 + $0x30] sm:$0xff]
      %v2233 = vld [vmem:[#allocation5 + $0x38] sm:$0xff]
      %v2234 = vld [vmem:[#allocation5 + $0x40] sm:$0xff]
      %v2235 = vld [vmem:[#allocation5 + $0x48] sm:$0xff]
      %v2236 = vld [vmem:[#allocation5 + $0x50] sm:$0xff]
      %v2237 = vld [vmem:[#allocation5 + $0x58] sm:$0xff]
      %v2238 = vld [vmem:[%s5] sm:$0xf]
      %v2239 = vld [vmem:[%s5 + $0x4] sm:$0xf]
      %v2240 = vld [vmem:[%s5 + $0x8] sm:$0xf]
      %v2241 = vld [vmem:[%s5 + $0xc] sm:$0xf]
      %v2242 = vld [vmem:[%s5 + $0x10] sm:$0xf]
      %v2243 = vld [vmem:[%s5 + $0x14] sm:$0xf]
      %v2244 = vld [vmem:[%s5 + $0x18] sm:$0xf]
      %v2245 = vld [vmem:[%s5 + $0x1c] sm:$0xf]
      %v2246 = vld [vmem:[%s5 + $0x20] sm:$0xf]
      %v2247 = vld [vmem:[%s5 + $0x24] sm:$0xf]
      %v2248 = vld [vmem:[%s5 + $0x28] sm:$0xf]
      %v2249 = vld [vmem:[%s5 + $0x2c] sm:$0xf]
      %v2250 = vld [vmem:[%s5 + $0x30] sm:$0xf]
      %v2251 = vld [vmem:[%s5 + $0x34] sm:$0xf]
      %v2252 = vld [vmem:[%s5 + $0x38] sm:$0xf]
      %v2253 = vld [vmem:[%s5 + $0x3c] sm:$0xf]
      %v2254 = vld [vmem:[%s5 + $0x40] sm:$0xf]
      %v2255 = vld [vmem:[%s5 + $0x44] sm:$0xf]
      %v2256 = vld [vmem:[%s5 + $0x48] sm:$0xf]
      %v2257 = vld [vmem:[%s5 + $0x4c] sm:$0xf]
      %v2258 = vld [vmem:[%s5 + $0x50] sm:$0xf]
      %v2259 = vld [vmem:[%s5 + $0x54] sm:$0xf]
      %v2260 = vld [vmem:[%s5 + $0x58] sm:$0xf]
      %v2261 = vld [vmem:[%s5 + $0x5c] sm:$0xf]
      %v2262 = vld [vmem:[%s5 + $0x60] sm:$0xf]
      %v2263 = vld [vmem:[%s5 + $0x64] sm:$0xf]
      %v2264 = vld [vmem:[%s5 + $0x68] sm:$0xf]
      %v2265 = vld [vmem:[%s5 + $0x6c] sm:$0xf]
      %v2266 = vld [vmem:[%s5 + $0x70] sm:$0xf]
      %v2267 = vld [vmem:[%s5 + $0x74] sm:$0xf]
      %v2268 = vld [vmem:[%s5 + $0x78] sm:$0xf]
      %v2269 = vld [vmem:[%s5 + $0x7c] sm:$0xf]
      %v2270 = vld [vmem:[%s5 + $0x80] sm:$0xf]
      %v2271 = vld [vmem:[%s5 + $0x84] sm:$0xf]
      %v2272 = vld [vmem:[%s5 + $0x88] sm:$0xf]
      %v2273 = vld [vmem:[%s5 + $0x8c] sm:$0xf]
      %v2274 = vld [vmem:[%s5 + $0x90] sm:$0xf]
      %v2275 = vld [vmem:[%s5 + $0x94] sm:$0xf]
      %v2276 = vld [vmem:[%s5 + $0x98] sm:$0xf]
      %v2277 = vld [vmem:[%s5 + $0x9c] sm:$0xf]
      %v2278 = vld [vmem:[%s5 + $0xa0] sm:$0xf]
      %v2279 = vld [vmem:[%s5 + $0xa4] sm:$0xf]
      %v2280 = vld [vmem:[%s5 + $0xa8] sm:$0xf]
      %v2281 = vld [vmem:[%s5 + $0xac] sm:$0xf]
      %v2282 = vld [vmem:[%s5 + $0xb0] sm:$0xf]
      %v2283 = vld [vmem:[%s5 + $0xb4] sm:$0xf]
      %v2284 = vld [vmem:[%s5 + $0xb8] sm:$0xf]
      %v2285 = vld [vmem:[%s5 + $0xbc] sm:$0xf]
      %s2286 = scalar_lea.vmem [#allocation5], 24
      %v2287 = vld [vmem:[%s2286] sm:$0xff]
      %v2288 = vld [vmem:[%s2286 + $0x8] sm:$0xff]
      %v2289 = vld [vmem:[%s2286 + $0x10] sm:$0xff]
      %v2290 = vld [vmem:[%s2286 + $0x18] sm:$0xff]
      %v2291 = vld [vmem:[%s2286 + $0x20] sm:$0xff]
      %v2292 = vld [vmem:[%s2286 + $0x28] sm:$0xff]
      %v2293 = vld [vmem:[%s2286 + $0x30] sm:$0xff]
      %v2294 = vld [vmem:[%s2286 + $0x38] sm:$0xff]
      %v2295 = vld [vmem:[%s2286 + $0x40] sm:$0xff]
      %v2296 = vld [vmem:[%s2286 + $0x48] sm:$0xff]
      %v2297 = vld [vmem:[%s2286 + $0x50] sm:$0xff]
      %v2298 = vld [vmem:[%s2286 + $0x58] sm:$0xff]
      %s2299 = scalar_lea.vmem %s5, 192
      %v2300 = vld [vmem:[%s2299] sm:$0xf]
      %v2301 = vld [vmem:[%s2299 + $0x4] sm:$0xf]
      %v2302 = vld [vmem:[%s2299 + $0x8] sm:$0xf]
      %v2303 = vld [vmem:[%s2299 + $0xc] sm:$0xf]
      %v2304 = vld [vmem:[%s2299 + $0x10] sm:$0xf]
      %v2305 = vld [vmem:[%s2299 + $0x14] sm:$0xf]
      %v2306 = vld [vmem:[%s2299 + $0x18] sm:$0xf]
      %v2307 = vld [vmem:[%s2299 + $0x1c] sm:$0xf]
      %v2308 = vld [vmem:[%s2299 + $0x20] sm:$0xf]
      %v2309 = vld [vmem:[%s2299 + $0x24] sm:$0xf]
      %v2310 = vld [vmem:[%s2299 + $0x28] sm:$0xf]
      %v2311 = vld [vmem:[%s2299 + $0x2c] sm:$0xf]
      %v2312 = vld [vmem:[%s2299 + $0x30] sm:$0xf]
      %v2313 = vld [vmem:[%s2299 + $0x34] sm:$0xf]
      %v2314 = vld [vmem:[%s2299 + $0x38] sm:$0xf]
      %v2315 = vld [vmem:[%s2299 + $0x3c] sm:$0xf]
      %v2316 = vld [vmem:[%s2299 + $0x40] sm:$0xf]
      %v2317 = vld [vmem:[%s2299 + $0x44] sm:$0xf]
      %v2318 = vld [vmem:[%s2299 + $0x48] sm:$0xf]
      %v2319 = vld [vmem:[%s2299 + $0x4c] sm:$0xf]
      %v2320 = vld [vmem:[%s2299 + $0x50] sm:$0xf]
      %v2321 = vld [vmem:[%s2299 + $0x54] sm:$0xf]
      %v2322 = vld [vmem:[%s2299 + $0x58] sm:$0xf]
      %v2323 = vld [vmem:[%s2299 + $0x5c] sm:$0xf]
      %v2324 = vld [vmem:[%s2299 + $0x60] sm:$0xf]
      %v2325 = vld [vmem:[%s2299 + $0x64] sm:$0xf]
      %v2326 = vld [vmem:[%s2299 + $0x68] sm:$0xf]
      %v2327 = vld [vmem:[%s2299 + $0x6c] sm:$0xf]
      %v2328 = vld [vmem:[%s2299 + $0x70] sm:$0xf]
      %v2329 = vld [vmem:[%s2299 + $0x74] sm:$0xf]
      %v2330 = vld [vmem:[%s2299 + $0x78] sm:$0xf]
      %v2331 = vld [vmem:[%s2299 + $0x7c] sm:$0xf]
      %v2332 = vld [vmem:[%s2299 + $0x80] sm:$0xf]
      %v2333 = vld [vmem:[%s2299 + $0x84] sm:$0xf]
      %v2334 = vld [vmem:[%s2299 + $0x88] sm:$0xf]
      %v2335 = vld [vmem:[%s2299 + $0x8c] sm:$0xf]
      %v2336 = vld [vmem:[%s2299 + $0x90] sm:$0xf]
      %v2337 = vld [vmem:[%s2299 + $0x94] sm:$0xf]
      %v2338 = vld [vmem:[%s2299 + $0x98] sm:$0xf]
      %v2339 = vld [vmem:[%s2299 + $0x9c] sm:$0xf]
      %v2340 = vld [vmem:[%s2299 + $0xa0] sm:$0xf]
      %v2341 = vld [vmem:[%s2299 + $0xa4] sm:$0xf]
      %v2342 = vld [vmem:[%s2299 + $0xa8] sm:$0xf]
      %v2343 = vld [vmem:[%s2299 + $0xac] sm:$0xf]
      %v2344 = vld [vmem:[%s2299 + $0xb0] sm:$0xf]
      %v2345 = vld [vmem:[%s2299 + $0xb4] sm:$0xf]
      %v2346 = vld [vmem:[%s2299 + $0xb8] sm:$0xf]
      %v2347 = vld [vmem:[%s2299 + $0xbc] sm:$0xf]
      %v2396 = vunpack.c.l.b16 %v2300
      %v2397 = vunpack.c.l.b16 %v2301
      %v2398 = vunpack.c.l.b16 %v2302
      %v2399 = vunpack.c.l.b16 %v2303
      %v2400 = vunpack.c.l.b16 %v2304
      %v2401 = vunpack.c.l.b16 %v2305
      %v2402 = vunpack.c.l.b16 %v2306
      %v2403 = vunpack.c.l.b16 %v2307
      %v2404 = vunpack.c.l.b16 %v2308
      %v2405 = vunpack.c.l.b16 %v2309
      %v2406 = vunpack.c.l.b16 %v2310
      %v2407 = vunpack.c.l.b16 %v2311
      %v2408 = vunpack.c.l.b16 %v2312
      %v2409 = vunpack.c.l.b16 %v2313
      %v2410 = vunpack.c.l.b16 %v2314
      %v2411 = vunpack.c.l.b16 %v2315
      %v2412 = vunpack.c.l.b16 %v2316
      %v2413 = vunpack.c.l.b16 %v2317
      %v2414 = vunpack.c.l.b16 %v2318
      %v2415 = vunpack.c.l.b16 %v2319
      %v2416 = vunpack.c.l.b16 %v2320
      %v2417 = vunpack.c.l.b16 %v2321
      %v2418 = vunpack.c.l.b16 %v2322
      %v2419 = vunpack.c.l.b16 %v2323
      %v2420 = vunpack.c.l.b16 %v2324
      %v2421 = vunpack.c.l.b16 %v2325
      %v2422 = vunpack.c.l.b16 %v2326
      %v2423 = vunpack.c.l.b16 %v2327
      %v2424 = vunpack.c.l.b16 %v2328
      %v2425 = vunpack.c.l.b16 %v2329
      %v2426 = vunpack.c.l.b16 %v2330
      %v2427 = vunpack.c.l.b16 %v2331
      %v2428 = vunpack.c.l.b16 %v2332
      %v2429 = vunpack.c.l.b16 %v2333
      %v2430 = vunpack.c.l.b16 %v2334
      %v2431 = vunpack.c.l.b16 %v2335
      %v2432 = vunpack.c.l.b16 %v2336
      %v2433 = vunpack.c.l.b16 %v2337
      %v2434 = vunpack.c.l.b16 %v2338
      %v2435 = vunpack.c.l.b16 %v2339
      %v2436 = vunpack.c.l.b16 %v2340
      %v2437 = vunpack.c.l.b16 %v2341
      %v2438 = vunpack.c.l.b16 %v2342
      %v2439 = vunpack.c.l.b16 %v2343
      %v2440 = vunpack.c.l.b16 %v2344
      %v2441 = vunpack.c.l.b16 %v2345
      %v2442 = vunpack.c.l.b16 %v2346
      %v2443 = vunpack.c.l.b16 %v2347
      %v2444 = vpack.c.b16 %v2397, %v2396
      %v2445 = vpack.c.b16 %v2399, %v2398
      %v2446 = vpack.c.b16 %v2401, %v2400
      %v2447 = vpack.c.b16 %v2403, %v2402
      %v2448 = vpack.c.b16 %v2405, %v2404
      %v2449 = vpack.c.b16 %v2407, %v2406
      %v2450 = vpack.c.b16 %v2409, %v2408
      %v2451 = vpack.c.b16 %v2411, %v2410
      %v2452 = vpack.c.b16 %v2413, %v2412
      %v2453 = vpack.c.b16 %v2415, %v2414
      %v2454 = vpack.c.b16 %v2417, %v2416
      %v2455 = vpack.c.b16 %v2419, %v2418
      %v2456 = vpack.c.b16 %v2421, %v2420
      %v2457 = vpack.c.b16 %v2423, %v2422
      %v2458 = vpack.c.b16 %v2425, %v2424
      %v2459 = vpack.c.b16 %v2427, %v2426
      %v2460 = vpack.c.b16 %v2429, %v2428
      %v2461 = vpack.c.b16 %v2431, %v2430
      %v2462 = vpack.c.b16 %v2433, %v2432
      %v2463 = vpack.c.b16 %v2435, %v2434
      %v2464 = vpack.c.b16 %v2437, %v2436
      %v2465 = vpack.c.b16 %v2439, %v2438
      %v2466 = vpack.c.b16 %v2441, %v2440
      %v2467 = vpack.c.b16 %v2443, %v2442
      %2492 = vmatprep.subr.bf16.mxu0 0
      %2493 = vmatpush1.bf16.msra.mxu0 %v2444
      %2494 = vmatprep.subr.bf16.mxu0 0
      %2495 = vmatpush1.bf16.msra.mxu0 %v2445
      %2496 = vmatprep.subr.bf16.mxu0 0
      %2497 = vmatpush1.bf16.msra.mxu0 %v2446
      %2498 = vmatprep.subr.bf16.mxu0 0
      %2499 = vmatpush1.bf16.msra.mxu0 %v2447
      %2500 = vmatprep.subr.bf16.mxu0 0
      %2501 = vmatpush1.bf16.msra.mxu0 %v2448
      %2502 = vmatprep.subr.bf16.mxu0 0
      %2503 = vmatpush1.bf16.msra.mxu0 %v2449
      %2504 = vmatprep.subr.bf16.mxu0 0
      %2505 = vmatpush1.bf16.msra.mxu0 %v2450
      %2506 = vmatprep.subr.bf16.mxu0 0
      %2507 = vmatpush1.bf16.msra.mxu0 %v2451
      %2508 = vmatprep.subr.bf16.mxu0 0
      %2509 = vmatpush1.bf16.msra.mxu0 %v2452
      %2510 = vmatprep.subr.bf16.mxu0 0
      %2511 = vmatpush1.bf16.msra.mxu0 %v2453
      %2512 = vmatprep.subr.bf16.mxu0 0
      %2513 = vmatpush1.bf16.msra.mxu0 %v2454
      %2514 = vmatprep.subr.bf16.mxu0 0
      %2515 = vmatpush1.bf16.msra.mxu0 %v2455
      %2516 = vmatprep.subr.bf16.mxu0 0
      %2517 = vmatpush1.bf16.msra.mxu0 %v2456
      %2518 = vmatprep.subr.bf16.mxu0 0
      %2519 = vmatpush1.bf16.msra.mxu0 %v2457
      %2520 = vmatprep.subr.bf16.mxu0 0
      %2521 = vmatpush1.bf16.msra.mxu0 %v2458
      %2522 = vmatprep.subr.bf16.mxu0 0
      %2523 = vmatpush1.bf16.msra.mxu0 %v2459
      %2524 = vmatprep.mubr.bf16.mxu0 %v2288
      %2525 = vmatmul.mubr.bf16.gmra.mrb[0].mxu0 %v2287
      %v2526 = vpop.f32.mrb[0].mxu0
      %v2527 = vadd.f32 0.0, %v2526
      %v2528 = vpop.f32.mrb[0].mxu0
      %v2529 = vpop.f32.mrb[0].mxu0
      %v2530 = vadd.f32 0.0, %v2529
      %v2531 = vpop.f32.mrb[0].mxu0
      %2532 = vmatprep.mubr.bf16.mxu0 %v2291
      %2533 = vmatmul.mubr.bf16.gmra.mrb[0].mxu0 %v2290
      %v2534 = vpop.f32.mrb[0].mxu0
      %v2535 = vadd.f32 0.0, %v2534
      %v2536 = vpop.f32.mrb[0].mxu0
      %v2537 = vpop.f32.mrb[0].mxu0
      %v2538 = vadd.f32 0.0, %v2537
      %v2539 = vpop.f32.mrb[0].mxu0
      %2540 = vmatprep.mubr.bf16.mxu0 %v2294
      %2541 = vmatmul.mubr.bf16.gmra.mrb[0].mxu0 %v2293
      %v2542 = vpop.f32.mrb[0].mxu0
      %v2543 = vadd.f32 0.0, %v2542
      %v2544 = vpop.f32.mrb[0].mxu0
      %v2545 = vpop.f32.mrb[0].mxu0
      %v2546 = vadd.f32 0.0, %v2545
      %v2547 = vpop.f32.mrb[0].mxu0
      %2548 = vmatprep.mubr.bf16.mxu0 %v2297
      %2549 = vmatmul.mubr.bf16.gmra.mrb[0].mxu0 %v2296
      %v2550 = vpop.f32.mrb[0].mxu0
      %v2551 = vadd.f32 0.0, %v2550
      %v2552 = vpop.f32.mrb[0].mxu0
      %v2553 = vpop.f32.mrb[0].mxu0
      %v2554 = vadd.f32 0.0, %v2553
      %v2555 = vpop.f32.mrb[0].mxu0
      %2556 = vdwg.mxu0
      %2557 = vmatprep.subr.bf16.mxu0 0
      %2558 = vmatpush1.bf16.msra.mxu0 %v2460
      %2559 = vmatprep.subr.bf16.mxu0 0
      %2560 = vmatpush1.bf16.msra.mxu0 %v2461
      %2561 = vmatprep.subr.bf16.mxu0 0
      %2562 = vmatpush1.bf16.msra.mxu0 %v2462
      %2563 = vmatprep.subr.bf16.mxu0 0
      %2564 = vmatpush1.bf16.msra.mxu0 %v2463
      %2565 = vmatprep.subr.bf16.mxu0 0
      %2566 = vmatpush1.bf16.msra.mxu0 %v2464
      %2567 = vmatprep.subr.bf16.mxu0 0
      %2568 = vmatpush1.bf16.msra.mxu0 %v2465
      %2569 = vmatprep.subr.bf16.mxu0 0
      %2570 = vmatpush1.bf16.msra.mxu0 %v2466
      %2571 = vmatprep.subr.bf16.mxu0 0
      %2572 = vmatpush1.bf16.msra.mxu0 %v2467
      %2573 = vmatprep.subr.bf16.mxu0 0
      %2574 = vmatpush1.bf16.msra.mxu0 0
      %2575 = vmatprep.subr.bf16.mxu0 0
      %2576 = vmatpush1.bf16.msra.mxu0 0
      %2577 = vmatprep.subr.bf16.mxu0 0
      %2578 = vmatpush1.bf16.msra.mxu0 0
      %2579 = vmatprep.subr.bf16.mxu0 0
      %2580 = vmatpush1.bf16.msra.mxu0 0
      %2581 = vmatprep.subr.bf16.mxu0 0
      %2582 = vmatpush1.bf16.msra.mxu0 0
      %2583 = vmatprep.subr.bf16.mxu0 0
      %2584 = vmatpush1.bf16.msra.mxu0 0
      %2585 = vmatprep.subr.bf16.mxu0 0
      %2586 = vmatpush1.bf16.msra.mxu0 0
      %2587 = vmatprep.subr.bf16.mxu0 0
      %2588 = vmatpush1.bf16.msra.mxu0 0
      %2589 = vmatprep.mubr.bf16.mxu0 0
      %2590 = vmatmul.mubr.bf16.gmra.mrb[0].mxu0 %v2289
      %v2591 = vpop.f32.mrb[0].mxu0
      %v2592 = vadd.f32 %v2527, %v2591
      %v2593 = vpop.f32.mrb[0].mxu0
      %v2594 = vpop.f32.mrb[0].mxu0
      %v2595 = vadd.f32 %v2530, %v2594
      %v2596 = vpop.f32.mrb[0].mxu0
      %2597 = vmatprep.mubr.bf16.mxu0 0
      %2598 = vmatmul.mubr.bf16.gmra.mrb[0].mxu0 %v2292
      %v2599 = vpop.f32.mrb[0].mxu0
      %v2600 = vadd.f32 %v2535, %v2599
      %v2601 = vpop.f32.mrb[0].mxu0
      %v2602 = vpop.f32.mrb[0].mxu0
      %v2603 = vadd.f32 %v2538, %v2602
      %v2604 = vpop.f32.mrb[0].mxu0
      %2605 = vmatprep.mubr.bf16.mxu0 0
      %2606 = vmatmul.mubr.bf16.gmra.mrb[0].mxu0 %v2295
      %v2607 = vpop.f32.mrb[0].mxu0
      %v2608 = vadd.f32 %v2543, %v2607
      %v2609 = vpop.f32.mrb[0].mxu0
      %v2610 = vpop.f32.mrb[0].mxu0
      %v2611 = vadd.f32 %v2546, %v2610
      %v2612 = vpop.f32.mrb[0].mxu0
      %2613 = vmatprep.mubr.bf16.mxu0 0
      %2614 = vmatmul.mubr.bf16.gmra.mrb[0].mxu0 %v2298
      %v2615 = vpop.f32.mrb[0].mxu0
      %v2616 = vadd.f32 %v2551, %v2615
      %v2617 = vpop.f32.mrb[0].mxu0
      %v2618 = vpop.f32.mrb[0].mxu0
      %v2619 = vadd.f32 %v2554, %v2618
      %v2620 = vpop.f32.mrb[0].mxu0
      %2621 = vdwg.mxu0
      %v2670 = vunpack.c.l.b16 %v2238
      %v2671 = vunpack.c.l.b16 %v2239
      %v2672 = vunpack.c.l.b16 %v2240
      %v2673 = vunpack.c.l.b16 %v2241
      %v2674 = vunpack.c.l.b16 %v2242
      %v2675 = vunpack.c.l.b16 %v2243
      %v2676 = vunpack.c.l.b16 %v2244
      %v2677 = vunpack.c.l.b16 %v2245
      %v2678 = vunpack.c.l.b16 %v2246
      %v2679 = vunpack.c.l.b16 %v2247
      %v2680 = vunpack.c.l.b16 %v2248
      %v2681 = vunpack.c.l.b16 %v2249
      %v2682 = vunpack.c.l.b16 %v2250
      %v2683 = vunpack.c.l.b16 %v2251
      %v2684 = vunpack.c.l.b16 %v2252
      %v2685 = vunpack.c.l.b16 %v2253
      %v2686 = vunpack.c.l.b16 %v2254
      %v2687 = vunpack.c.l.b16 %v2255
      %v2688 = vunpack.c.l.b16 %v2256
      %v2689 = vunpack.c.l.b16 %v2257
      %v2690 = vunpack.c.l.b16 %v2258
      %v2691 = vunpack.c.l.b16 %v2259
      %v2692 = vunpack.c.l.b16 %v2260
      %v2693 = vunpack.c.l.b16 %v2261
      %v2694 = vunpack.c.l.b16 %v2262
      %v2695 = vunpack.c.l.b16 %v2263
      %v2696 = vunpack.c.l.b16 %v2264
      %v2697 = vunpack.c.l.b16 %v2265
      %v2698 = vunpack.c.l.b16 %v2266
      %v2699 = vunpack.c.l.b16 %v2267
      %v2700 = vunpack.c.l.b16 %v2268
      %v2701 = vunpack.c.l.b16 %v2269
      %v2702 = vunpack.c.l.b16 %v2270
      %v2703 = vunpack.c.l.b16 %v2271
      %v2704 = vunpack.c.l.b16 %v2272
      %v2705 = vunpack.c.l.b16 %v2273
      %v2706 = vunpack.c.l.b16 %v2274
      %v2707 = vunpack.c.l.b16 %v2275
      %v2708 = vunpack.c.l.b16 %v2276
      %v2709 = vunpack.c.l.b16 %v2277
      %v2710 = vunpack.c.l.b16 %v2278
      %v2711 = vunpack.c.l.b16 %v2279
      %v2712 = vunpack.c.l.b16 %v2280
      %v2713 = vunpack.c.l.b16 %v2281
      %v2714 = vunpack.c.l.b16 %v2282
      %v2715 = vunpack.c.l.b16 %v2283
      %v2716 = vunpack.c.l.b16 %v2284
      %v2717 = vunpack.c.l.b16 %v2285
      %v2718 = vpack.c.b16 %v2671, %v2670
      %v2719 = vpack.c.b16 %v2673, %v2672
      %v2720 = vpack.c.b16 %v2675, %v2674
      %v2721 = vpack.c.b16 %v2677, %v2676
      %v2722 = vpack.c.b16 %v2679, %v2678
      %v2723 = vpack.c.b16 %v2681, %v2680
      %v2724 = vpack.c.b16 %v2683, %v2682
      %v2725 = vpack.c.b16 %v2685, %v2684
      %v2726 = vpack.c.b16 %v2687, %v2686
      %v2727 = vpack.c.b16 %v2689, %v2688
      %v2728 = vpack.c.b16 %v2691, %v2690
      %v2729 = vpack.c.b16 %v2693, %v2692
      %v2730 = vpack.c.b16 %v2695, %v2694
      %v2731 = vpack.c.b16 %v2697, %v2696
      %v2732 = vpack.c.b16 %v2699, %v2698
      %v2733 = vpack.c.b16 %v2701, %v2700
      %v2734 = vpack.c.b16 %v2703, %v2702
      %v2735 = vpack.c.b16 %v2705, %v2704
      %v2736 = vpack.c.b16 %v2707, %v2706
      %v2737 = vpack.c.b16 %v2709, %v2708
      %v2738 = vpack.c.b16 %v2711, %v2710
      %v2739 = vpack.c.b16 %v2713, %v2712
      %v2740 = vpack.c.b16 %v2715, %v2714
      %v2741 = vpack.c.b16 %v2717, %v2716
      %2766 = vmatprep.subr.bf16.mxu0 0
      %2767 = vmatpush1.bf16.msra.mxu0 %v2718
      %2768 = vmatprep.subr.bf16.mxu0 0
      %2769 = vmatpush1.bf16.msra.mxu0 %v2719
      %2770 = vmatprep.subr.bf16.mxu0 0
      %2771 = vmatpush1.bf16.msra.mxu0 %v2720
      %2772 = vmatprep.subr.bf16.mxu0 0
      %2773 = vmatpush1.bf16.msra.mxu0 %v2721
      %2774 = vmatprep.subr.bf16.mxu0 0
      %2775 = vmatpush1.bf16.msra.mxu0 %v2722
      %2776 = vmatprep.subr.bf16.mxu0 0
      %2777 = vmatpush1.bf16.msra.mxu0 %v2723
      %2778 = vmatprep.subr.bf16.mxu0 0
      %2779 = vmatpush1.bf16.msra.mxu0 %v2724
      %2780 = vmatprep.subr.bf16.mxu0 0
      %2781 = vmatpush1.bf16.msra.mxu0 %v2725
      %2782 = vmatprep.subr.bf16.mxu0 0
      %2783 = vmatpush1.bf16.msra.mxu0 %v2726
      %2784 = vmatprep.subr.bf16.mxu0 0
      %2785 = vmatpush1.bf16.msra.mxu0 %v2727
      %2786 = vmatprep.subr.bf16.mxu0 0
      %2787 = vmatpush1.bf16.msra.mxu0 %v2728
      %2788 = vmatprep.subr.bf16.mxu0 0
      %2789 = vmatpush1.bf16.msra.mxu0 %v2729
      %2790 = vmatprep.subr.bf16.mxu0 0
      %2791 = vmatpush1.bf16.msra.mxu0 %v2730
      %2792 = vmatprep.subr.bf16.mxu0 0
      %2793 = vmatpush1.bf16.msra.mxu0 %v2731
      %2794 = vmatprep.subr.bf16.mxu0 0
      %2795 = vmatpush1.bf16.msra.mxu0 %v2732
      %2796 = vmatprep.subr.bf16.mxu0 0
      %2797 = vmatpush1.bf16.msra.mxu0 %v2733
      %2798 = vmatprep.mubr.bf16.mxu0 %v2227
      %2799 = vmatmul.mubr.bf16.gmra.mrb[0].mxu0 %v2226
      %v2800 = vpop.f32.mrb[0].mxu0
      %v2801 = vadd.f32 %v2592, %v2800
      %v2802 = vpop.f32.mrb[0].mxu0
      %v2803 = vpop.f32.mrb[0].mxu0
      %v2804 = vadd.f32 %v2595, %v2803
      %v2805 = vpop.f32.mrb[0].mxu0
      %2806 = vmatprep.mubr.bf16.mxu0 %v2230
      %2807 = vmatmul.mubr.bf16.gmra.mrb[0].mxu0 %v2229
      %v2808 = vpop.f32.mrb[0].mxu0
      %v2809 = vadd.f32 %v2600, %v2808
      %v2810 = vpop.f32.mrb[0].mxu0
      %v2811 = vpop.f32.mrb[0].mxu0
      %v2812 = vadd.f32 %v2603, %v2811
      %v2813 = vpop.f32.mrb[0].mxu0
      %2814 = vmatprep.mubr.bf16.mxu0 %v2233
      %2815 = vmatmul.mubr.bf16.gmra.mrb[0].mxu0 %v2232
      %v2816 = vpop.f32.mrb[0].mxu0
      %v2817 = vadd.f32 %v2608, %v2816
      %v2818 = vpop.f32.mrb[0].mxu0
      %v2819 = vpop.f32.mrb[0].mxu0
      %v2820 = vadd.f32 %v2611, %v2819
      %v2821 = vpop.f32.mrb[0].mxu0
      %2822 = vmatprep.mubr.bf16.mxu0 %v2236
      %2823 = vmatmul.mubr.bf16.gmra.mrb[0].mxu0 %v2235
      %v2824 = vpop.f32.mrb[0].mxu0
      %v2825 = vadd.f32 %v2616, %v2824
      %v2826 = vpop.f32.mrb[0].mxu0
      %v2827 = vpop.f32.mrb[0].mxu0
      %v2828 = vadd.f32 %v2619, %v2827
      %v2829 = vpop.f32.mrb[0].mxu0
      %2830 = vdwg.mxu0
      %2831 = vmatprep.subr.bf16.mxu0 0
      %2832 = vmatpush1.bf16.msra.mxu0 %v2734
      %2833 = vmatprep.subr.bf16.mxu0 0
      %2834 = vmatpush1.bf16.msra.mxu0 %v2735
      %2835 = vmatprep.subr.bf16.mxu0 0
      %2836 = vmatpush1.bf16.msra.mxu0 %v2736
      %2837 = vmatprep.subr.bf16.mxu0 0
      %2838 = vmatpush1.bf16.msra.mxu0 %v2737
      %2839 = vmatprep.subr.bf16.mxu0 0
      %2840 = vmatpush1.bf16.msra.mxu0 %v2738
      %2841 = vmatprep.subr.bf16.mxu0 0
      %2842 = vmatpush1.bf16.msra.mxu0 %v2739
      %2843 = vmatprep.subr.bf16.mxu0 0
      %2844 = vmatpush1.bf16.msra.mxu0 %v2740
      %2845 = vmatprep.subr.bf16.mxu0 0
      %2846 = vmatpush1.bf16.msra.mxu0 %v2741
      %2847 = vmatprep.subr.bf16.mxu0 0
      %2848 = vmatpush1.bf16.msra.mxu0 0
      %2849 = vmatprep.subr.bf16.mxu0 0
      %2850 = vmatpush1.bf16.msra.mxu0 0
      %2851 = vmatprep.subr.bf16.mxu0 0
      %2852 = vmatpush1.bf16.msra.mxu0 0
      %2853 = vmatprep.subr.bf16.mxu0 0
      %2854 = vmatpush1.bf16.msra.mxu0 0
      %2855 = vmatprep.subr.bf16.mxu0 0
      %2856 = vmatpush1.bf16.msra.mxu0 0
      %2857 = vmatprep.subr.bf16.mxu0 0
      %2858 = vmatpush1.bf16.msra.mxu0 0
      %2859 = vmatprep.subr.bf16.mxu0 0
      %2860 = vmatpush1.bf16.msra.mxu0 0
      %2861 = vmatprep.subr.bf16.mxu0 0
      %2862 = vmatpush1.bf16.msra.mxu0 0
      %2863 = vmatprep.mubr.bf16.mxu0 0
      %2864 = vmatmul.mubr.bf16.gmra.mrb[0].mxu0 %v2228
      %v2865 = vpop.f32.mrb[0].mxu0
      %v2866 = vadd.f32 %v2801, %v2865
      %v2867 = vpop.f32.mrb[0].mxu0
      %v2868 = vpop.f32.mrb[0].mxu0
      %v2869 = vadd.f32 %v2804, %v2868
      %v2870 = vpop.f32.mrb[0].mxu0
      %2871 = vmatprep.mubr.bf16.mxu0 0
      %2872 = vmatmul.mubr.bf16.gmra.mrb[0].mxu0 %v2231
      %v2873 = vpop.f32.mrb[0].mxu0
      %v2874 = vadd.f32 %v2809, %v2873
      %v2875 = vpop.f32.mrb[0].mxu0
      %v2876 = vpop.f32.mrb[0].mxu0
      %v2877 = vadd.f32 %v2812, %v2876
      %v2878 = vpop.f32.mrb[0].mxu0
      %2879 = vmatprep.mubr.bf16.mxu0 0
      %2880 = vmatmul.mubr.bf16.gmra.mrb[0].mxu0 %v2234
      %v2881 = vpop.f32.mrb[0].mxu0
      %v2882 = vadd.f32 %v2817, %v2881
      %v2883 = vpop.f32.mrb[0].mxu0
      %v2884 = vpop.f32.mrb[0].mxu0
      %v2885 = vadd.f32 %v2820, %v2884
      %v2886 = vpop.f32.mrb[0].mxu0
      %2887 = vmatprep.mubr.bf16.mxu0 0
      %2888 = vmatmul.mubr.bf16.gmra.mrb[0].mxu0 %v2237
      %v2889 = vpop.f32.mrb[0].mxu0
      %v2890 = vadd.f32 %v2825, %v2889
      %v2891 = vpop.f32.mrb[0].mxu0
      %v2892 = vpop.f32.mrb[0].mxu0
      %v2893 = vadd.f32 %v2828, %v2892
      %v2894 = vpop.f32.mrb[0].mxu0
      %2895 = vdwg.mxu0
      %s2896 = scalar_lea.vmem [#allocation5], 48
      %v2897 = vld [vmem:[%s2896] sm:$0xff]
      %v2898 = vld [vmem:[%s2896 + $0x8] sm:$0xff]
      %v2899 = vld [vmem:[%s2896 + $0x10] sm:$0xff]
      %v2900 = vld [vmem:[%s2896 + $0x18] sm:$0xff]
      %v2901 = vld [vmem:[%s2896 + $0x20] sm:$0xff]
      %v2902 = vld [vmem:[%s2896 + $0x28] sm:$0xff]
      %v2903 = vld [vmem:[%s2896 + $0x30] sm:$0xff]
      %v2904 = vld [vmem:[%s2896 + $0x38] sm:$0xff]
      %v2905 = vld [vmem:[%s2896 + $0x40] sm:$0xff]
      %v2906 = vld [vmem:[%s2896 + $0x48] sm:$0xff]
      %v2907 = vld [vmem:[%s2896 + $0x50] sm:$0xff]
      %v2908 = vld [vmem:[%s2896 + $0x58] sm:$0xff]
      %s2909 = scalar_lea.vmem %s5, 384
      %v2910 = vld [vmem:[%s2909] sm:$0xf]
      %v2911 = vld [vmem:[%s2909 + $0x4] sm:$0xf]
      %v2912 = vld [vmem:[%s2909 + $0x8] sm:$0xf]
      %v2913 = vld [vmem:[%s2909 + $0xc] sm:$0xf]
      %v2914 = vld [vmem:[%s2909 + $0x10] sm:$0xf]
      %v2915 = vld [vmem:[%s2909 + $0x14] sm:$0xf]
      %v2916 = vld [vmem:[%s2909 + $0x18] sm:$0xf]
      %v2917 = vld [vmem:[%s2909 + $0x1c] sm:$0xf]
      %v2918 = vld [vmem:[%s2909 + $0x20] sm:$0xf]
      %v2919 = vld [vmem:[%s2909 + $0x24] sm:$0xf]
      %v2920 = vld [vmem:[%s2909 + $0x28] sm:$0xf]
      %v2921 = vld [vmem:[%s2909 + $0x2c] sm:$0xf]
      %v2922 = vld [vmem:[%s2909 + $0x30] sm:$0xf]
      %v2923 = vld [vmem:[%s2909 + $0x34] sm:$0xf]
      %v2924 = vld [vmem:[%s2909 + $0x38] sm:$0xf]
      %v2925 = vld [vmem:[%s2909 + $0x3c] sm:$0xf]
      %v2926 = vld [vmem:[%s2909 + $0x40] sm:$0xf]
      %v2927 = vld [vmem:[%s2909 + $0x44] sm:$0xf]
      %v2928 = vld [vmem:[%s2909 + $0x48] sm:$0xf]
      %v2929 = vld [vmem:[%s2909 + $0x4c] sm:$0xf]
      %v2930 = vld [vmem:[%s2909 + $0x50] sm:$0xf]
      %v2931 = vld [vmem:[%s2909 + $0x54] sm:$0xf]
      %v2932 = vld [vmem:[%s2909 + $0x58] sm:$0xf]
      %v2933 = vld [vmem:[%s2909 + $0x5c] sm:$0xf]
      %v2934 = vld [vmem:[%s2909 + $0x60] sm:$0xf]
      %v2935 = vld [vmem:[%s2909 + $0x64] sm:$0xf]
      %v2936 = vld [vmem:[%s2909 + $0x68] sm:$0xf]
      %v2937 = vld [vmem:[%s2909 + $0x6c] sm:$0xf]
      %v2938 = vld [vmem:[%s2909 + $0x70] sm:$0xf]
      %v2939 = vld [vmem:[%s2909 + $0x74] sm:$0xf]
      %v2940 = vld [vmem:[%s2909 + $0x78] sm:$0xf]
      %v2941 = vld [vmem:[%s2909 + $0x7c] sm:$0xf]
      %v2942 = vld [vmem:[%s2909 + $0x80] sm:$0xf]
      %v2943 = vld [vmem:[%s2909 + $0x84] sm:$0xf]
      %v2944 = vld [vmem:[%s2909 + $0x88] sm:$0xf]
      %v2945 = vld [vmem:[%s2909 + $0x8c] sm:$0xf]
      %v2946 = vld [vmem:[%s2909 + $0x90] sm:$0xf]
      %v2947 = vld [vmem:[%s2909 + $0x94] sm:$0xf]
      %v2948 = vld [vmem:[%s2909 + $0x98] sm:$0xf]
      %v2949 = vld [vmem:[%s2909 + $0x9c] sm:$0xf]
      %v2950 = vld [vmem:[%s2909 + $0xa0] sm:$0xf]
      %v2951 = vld [vmem:[%s2909 + $0xa4] sm:$0xf]
      %v2952 = vld [vmem:[%s2909 + $0xa8] sm:$0xf]
      %v2953 = vld [vmem:[%s2909 + $0xac] sm:$0xf]
      %v2954 = vld [vmem:[%s2909 + $0xb0] sm:$0xf]
      %v2955 = vld [vmem:[%s2909 + $0xb4] sm:$0xf]
      %v2956 = vld [vmem:[%s2909 + $0xb8] sm:$0xf]
      %v2957 = vld [vmem:[%s2909 + $0xbc] sm:$0xf]
      %v3006 = vunpack.c.l.b16 %v2910
      %v3007 = vunpack.c.l.b16 %v2911
      %v3008 = vunpack.c.l.b16 %v2912
      %v3009 = vunpack.c.l.b16 %v2913
      %v3010 = vunpack.c.l.b16 %v2914
      %v3011 = vunpack.c.l.b16 %v2915
      %v3012 = vunpack.c.l.b16 %v2916
      %v3013 = vunpack.c.l.b16 %v2917
      %v3014 = vunpack.c.l.b16 %v2918
      %v3015 = vunpack.c.l.b16 %v2919
      %v3016 = vunpack.c.l.b16 %v2920
      %v3017 = vunpack.c.l.b16 %v2921
      %v3018 = vunpack.c.l.b16 %v2922
      %v3019 = vunpack.c.l.b16 %v2923
      %v3020 = vunpack.c.l.b16 %v2924
      %v3021 = vunpack.c.l.b16 %v2925
      %v3022 = vunpack.c.l.b16 %v2926
      %v3023 = vunpack.c.l.b16 %v2927
      %v3024 = vunpack.c.l.b16 %v2928
      %v3025 = vunpack.c.l.b16 %v2929
      %v3026 = vunpack.c.l.b16 %v2930
      %v3027 = vunpack.c.l.b16 %v2931
      %v3028 = vunpack.c.l.b16 %v2932
      %v3029 = vunpack.c.l.b16 %v2933
      %v3030 = vunpack.c.l.b16 %v2934
      %v3031 = vunpack.c.l.b16 %v2935
      %v3032 = vunpack.c.l.b16 %v2936
      %v3033 = vunpack.c.l.b16 %v2937
      %v3034 = vunpack.c.l.b16 %v2938
      %v3035 = vunpack.c.l.b16 %v2939
      %v3036 = vunpack.c.l.b16 %v2940
      %v3037 = vunpack.c.l.b16 %v2941
      %v3038 = vunpack.c.l.b16 %v2942
      %v3039 = vunpack.c.l.b16 %v2943
      %v3040 = vunpack.c.l.b16 %v2944
      %v3041 = vunpack.c.l.b16 %v2945
      %v3042 = vunpack.c.l.b16 %v2946
      %v3043 = vunpack.c.l.b16 %v2947
      %v3044 = vunpack.c.l.b16 %v2948
      %v3045 = vunpack.c.l.b16 %v2949
      %v3046 = vunpack.c.l.b16 %v2950
      %v3047 = vunpack.c.l.b16 %v2951
      %v3048 = vunpack.c.l.b16 %v2952
      %v3049 = vunpack.c.l.b16 %v2953
      %v3050 = vunpack.c.l.b16 %v2954
      %v3051 = vunpack.c.l.b16 %v2955
      %v3052 = vunpack.c.l.b16 %v2956
      %v3053 = vunpack.c.l.b16 %v2957
      %v3054 = vpack.c.b16 %v3007, %v3006
      %v3055 = vpack.c.b16 %v3009, %v3008
      %v3056 = vpack.c.b16 %v3011, %v3010
      %v3057 = vpack.c.b16 %v3013, %v3012
      %v3058 = vpack.c.b16 %v3015, %v3014
      %v3059 = vpack.c.b16 %v3017, %v3016
      %v3060 = vpack.c.b16 %v3019, %v3018
      %v3061 = vpack.c.b16 %v3021, %v3020
      %v3062 = vpack.c.b16 %v3023, %v3022
      %v3063 = vpack.c.b16 %v3025, %v3024
      %v3064 = vpack.c.b16 %v3027, %v3026
      %v3065 = vpack.c.b16 %v3029, %v3028
      %v3066 = vpack.c.b16 %v3031, %v3030
      %v3067 = vpack.c.b16 %v3033, %v3032
      %v3068 = vpack.c.b16 %v3035, %v3034
      %v3069 = vpack.c.b16 %v3037, %v3036
      %v3070 = vpack.c.b16 %v3039, %v3038
      %v3071 = vpack.c.b16 %v3041, %v3040
      %v3072 = vpack.c.b16 %v3043, %v3042
      %v3073 = vpack.c.b16 %v3045, %v3044
      %v3074 = vpack.c.b16 %v3047, %v3046
      %v3075 = vpack.c.b16 %v3049, %v3048
      %v3076 = vpack.c.b16 %v3051, %v3050
      %v3077 = vpack.c.b16 %v3053, %v3052
      %3102 = vmatprep.subr.bf16.mxu0 0
      %3103 = vmatpush1.bf16.msra.mxu0 %v3054
      %3104 = vmatprep.subr.bf16.mxu0 0
      %3105 = vmatpush1.bf16.msra.mxu0 %v3055
      %3106 = vmatprep.subr.bf16.mxu0 0
      %3107 = vmatpush1.bf16.msra.mxu0 %v3056
      %3108 = vmatprep.subr.bf16.mxu0 0
      %3109 = vmatpush1.bf16.msra.mxu0 %v3057
      %3110 = vmatprep.subr.bf16.mxu0 0
      %3111 = vmatpush1.bf16.msra.mxu0 %v3058
      %3112 = vmatprep.subr.bf16.mxu0 0
      %3113 = vmatpush1.bf16.msra.mxu0 %v3059
      %3114 = vmatprep.subr.bf16.mxu0 0
      %3115 = vmatpush1.bf16.msra.mxu0 %v3060
      %3116 = vmatprep.subr.bf16.mxu0 0
      %3117 = vmatpush1.bf16.msra.mxu0 %v3061
      %3118 = vmatprep.subr.bf16.mxu0 0
      %3119 = vmatpush1.bf16.msra.mxu0 %v3062
      %3120 = vmatprep.subr.bf16.mxu0 0
      %3121 = vmatpush1.bf16.msra.mxu0 %v3063
      %3122 = vmatprep.subr.bf16.mxu0 0
      %3123 = vmatpush1.bf16.msra.mxu0 %v3064
      %3124 = vmatprep.subr.bf16.mxu0 0
      %3125 = vmatpush1.bf16.msra.mxu0 %v3065
      %3126 = vmatprep.subr.bf16.mxu0 0
      %3127 = vmatpush1.bf16.msra.mxu0 %v3066
      %3128 = vmatprep.subr.bf16.mxu0 0
      %3129 = vmatpush1.bf16.msra.mxu0 %v3067
      %3130 = vmatprep.subr.bf16.mxu0 0
      %3131 = vmatpush1.bf16.msra.mxu0 %v3068
      %3132 = vmatprep.subr.bf16.mxu0 0
      %3133 = vmatpush1.bf16.msra.mxu0 %v3069
      %3134 = vmatprep.mubr.bf16.mxu0 %v2898
      %3135 = vmatmul.mubr.bf16.gmra.mrb[0].mxu0 %v2897
      %v3136 = vpop.f32.mrb[0].mxu0
      %v3137 = vadd.f32 0.0, %v3136
      %v3138 = vpop.f32.mrb[0].mxu0
      %v3139 = vpop.f32.mrb[0].mxu0
      %v3140 = vadd.f32 0.0, %v3139
      %v3141 = vpop.f32.mrb[0].mxu0
      %3142 = vmatprep.mubr.bf16.mxu0 %v2901
      %3143 = vmatmul.mubr.bf16.gmra.mrb[0].mxu0 %v2900
      %v3144 = vpop.f32.mrb[0].mxu0
      %v3145 = vadd.f32 0.0, %v3144
      %v3146 = vpop.f32.mrb[0].mxu0
      %v3147 = vpop.f32.mrb[0].mxu0
      %v3148 = vadd.f32 0.0, %v3147
      %v3149 = vpop.f32.mrb[0].mxu0
      %3150 = vmatprep.mubr.bf16.mxu0 %v2904
      %3151 = vmatmul.mubr.bf16.gmra.mrb[0].mxu0 %v2903
      %v3152 = vpop.f32.mrb[0].mxu0
      %v3153 = vadd.f32 0.0, %v3152
      %v3154 = vpop.f32.mrb[0].mxu0
      %v3155 = vpop.f32.mrb[0].mxu0
      %v3156 = vadd.f32 0.0, %v3155
      %v3157 = vpop.f32.mrb[0].mxu0
      %3158 = vmatprep.mubr.bf16.mxu0 %v2907
      %3159 = vmatmul.mubr.bf16.gmra.mrb[0].mxu0 %v2906
      %v3160 = vpop.f32.mrb[0].mxu0
      %v3161 = vadd.f32 0.0, %v3160
      %v3162 = vpop.f32.mrb[0].mxu0
      %v3163 = vpop.f32.mrb[0].mxu0
      %v3164 = vadd.f32 0.0, %v3163
      %v3165 = vpop.f32.mrb[0].mxu0
      %3166 = vdwg.mxu0
      %3167 = vmatprep.subr.bf16.mxu0 0
      %3168 = vmatpush1.bf16.msra.mxu0 %v3070
      %3169 = vmatprep.subr.bf16.mxu0 0
      %3170 = vmatpush1.bf16.msra.mxu0 %v3071
      %3171 = vmatprep.subr.bf16.mxu0 0
      %3172 = vmatpush1.bf16.msra.mxu0 %v3072
      %3173 = vmatprep.subr.bf16.mxu0 0
      %3174 = vmatpush1.bf16.msra.mxu0 %v3073
      %3175 = vmatprep.subr.bf16.mxu0 0
      %3176 = vmatpush1.bf16.msra.mxu0 %v3074
      %3177 = vmatprep.subr.bf16.mxu0 0
      %3178 = vmatpush1.bf16.msra.mxu0 %v3075
      %3179 = vmatprep.subr.bf16.mxu0 0
      %3180 = vmatpush1.bf16.msra.mxu0 %v3076
      %3181 = vmatprep.subr.bf16.mxu0 0
      %3182 = vmatpush1.bf16.msra.mxu0 %v3077
      %3183 = vmatprep.subr.bf16.mxu0 0
      %3184 = vmatpush1.bf16.msra.mxu0 0
      %3185 = vmatprep.subr.bf16.mxu0 0
      %3186 = vmatpush1.bf16.msra.mxu0 0
      %3187 = vmatprep.subr.bf16.mxu0 0
      %3188 = vmatpush1.bf16.msra.mxu0 0
      %3189 = vmatprep.subr.bf16.mxu0 0
      %3190 = vmatpush1.bf16.msra.mxu0 0
      %3191 = vmatprep.subr.bf16.mxu0 0
      %3192 = vmatpush1.bf16.msra.mxu0 0
      %3193 = vmatprep.subr.bf16.mxu0 0
      %3194 = vmatpush1.bf16.msra.mxu0 0
      %3195 = vmatprep.subr.bf16.mxu0 0
      %3196 = vmatpush1.bf16.msra.mxu0 0
      %3197 = vmatprep.subr.bf16.mxu0 0
      %3198 = vmatpush1.bf16.msra.mxu0 0
      %3199 = vmatprep.mubr.bf16.mxu0 0
      %3200 = vmatmul.mubr.bf16.gmra.mrb[0].mxu0 %v2899
      %v3201 = vpop.f32.mrb[0].mxu0
      %v3202 = vadd.f32 %v3137, %v3201
      %v3203 = vpop.f32.mrb[0].mxu0
      %v3204 = vpop.f32.mrb[0].mxu0
      %v3205 = vadd.f32 %v3140, %v3204
      %v3206 = vpop.f32.mrb[0].mxu0
      %3207 = vmatprep.mubr.bf16.mxu0 0
      %3208 = vmatmul.mubr.bf16.gmra.mrb[0].mxu0 %v2902
      %v3209 = vpop.f32.mrb[0].mxu0
      %v3210 = vadd.f32 %v3145, %v3209
      %v3211 = vpop.f32.mrb[0].mxu0
      %v3212 = vpop.f32.mrb[0].mxu0
      %v3213 = vadd.f32 %v3148, %v3212
      %v3214 = vpop.f32.mrb[0].mxu0
      %3215 = vmatprep.mubr.bf16.mxu0 0
      %3216 = vmatmul.mubr.bf16.gmra.mrb[0].mxu0 %v2905
      %v3217 = vpop.f32.mrb[0].mxu0
      %v3218 = vadd.f32 %v3153, %v3217
      %v3219 = vpop.f32.mrb[0].mxu0
      %v3220 = vpop.f32.mrb[0].mxu0
      %v3221 = vadd.f32 %v3156, %v3220
      %v3222 = vpop.f32.mrb[0].mxu0
      %3223 = vmatprep.mubr.bf16.mxu0 0
      %3224 = vmatmul.mubr.bf16.gmra.mrb[0].mxu0 %v2908
      %v3225 = vpop.f32.mrb[0].mxu0
      %v3226 = vadd.f32 %v3161, %v3225
      %v3227 = vpop.f32.mrb[0].mxu0
      %v3228 = vpop.f32.mrb[0].mxu0
      %v3229 = vadd.f32 %v3164, %v3228
      %v3230 = vpop.f32.mrb[0].mxu0
      %3231 = vdwg.mxu0
      %v3232 = vadd.f32 %v2866, %v3202
      %v3233 = vadd.f32 %v2869, %v3205
      %v3234 = vadd.f32 %v2874, %v3210
      %v3235 = vadd.f32 %v2877, %v3213
      %v3236 = vadd.f32 %v2882, %v3218
      %v3237 = vadd.f32 %v2885, %v3221
      %v3238 = vadd.f32 %v2890, %v3226
      %v3239 = vadd.f32 %v2893, %v3229
      %v3240 = vld [vmem:[%s6] sm:$0x1]
      %v3242 = vlaneseq
      %v3243 = vshrl.u32 %v3242, 7
      %v3244 = vsub.s32 0, %v3243
      %v3245 = vrot.slane %v3240, %v3244
      %v3247 = vadd.f32 %v3232, %v3245
      %v3248 = vadd.f32 %v3233, %v3245
      %v3249 = vadd.f32 %v3234, %v3245
      %v3250 = vadd.f32 %v3235, %v3245
      %v3251 = vadd.f32 %v3236, %v3245
      %v3252 = vadd.f32 %v3237, %v3245
      %v3253 = vadd.f32 %v3238, %v3245
      %v3254 = vadd.f32 %v3239, %v3245
      %v3255 = vmax.f32 %v3247, 0.0
      %v3256 = vmax.f32 %v3248, 0.0
      %v3257 = vmax.f32 %v3249, 0.0
      %v3258 = vmax.f32 %v3250, 0.0
      %v3259 = vmax.f32 %v3251, 0.0
      %v3260 = vmax.f32 %v3252, 0.0
      %v3261 = vmax.f32 %v3253, 0.0
      %v3262 = vmax.f32 %v3254, 0.0
      %vm3263 = vcmask 64512
      %3264 = vst.msk [vmem:[%s455] sm:$0xff] %vm3263, %v3255
      %3265 = vst.msk [vmem:[%s455 + $0x8] sm:$0xff] %vm3263, %v3256
      %3266 = vst.msk [vmem:[%s455 + $0x10] sm:$0xff] %vm3263, %v3257
      %3267 = vst.msk [vmem:[%s455 + $0x18] sm:$0xff] %vm3263, %v3258
      %3268 = vst.msk [vmem:[%s455 + $0x20] sm:$0xff] %vm3263, %v3259
      %3269 = vst.msk [vmem:[%s455 + $0x28] sm:$0xff] %vm3263, %v3260
      %3270 = vst.msk [vmem:[%s455 + $0x30] sm:$0xff] %vm3263, %v3261
      %3271 = vst.msk [vmem:[%s455 + $0x38] sm:$0xff] %vm3263, %v3262
      %s3272 = smul.u32 4, %s23
      %p3273 = scmp.lt.s32.totalorder %s22, 1
      %s3274 = scalar_select %p3273, %s22, 1
      %p3275 = scmp.lt.s32.totalorder %s3272, 15
      %s3276 = scalar_select %p3275, %s3272, 15
      %s3277 = smul.addr %s3276, 2
      %s3278 = smul.addr %s3274, 32
      %s3279 = sadd.s32 %s3277, %s3278
      %s3280 = smul.addr %s3279, 8
      %s3281 = scalar_lea.vmem %s7, %s3280
      // Predicated region
      $region73: #{tpu_custom_call.1} parent=47 // pred_check
        %p3282 = pneg %p234
      $region74: #{tpu_custom_call.1} parent=47 // pred_check_branch
        %3284 = sbr.rel (%p3282) target = $region76
      $region75: #{tpu_custom_call.1} parent=47 // pred_region
        %s3285 = smul.u32 4, %s23
      $region76: #{tpu_custom_call.1} parent=47 // pred_fallthru
        _
    $region48: #{tpu_custom_call.1} parent=5 // pred_fallthru
      _
    %p3286 = scmp.le.s32.totalorder 2, %s13
    // Predicated region
    $region77: #{tpu_custom_call.1} parent=5 // pred_check
      %p3287 = pneg %p3286
    $region78: #{tpu_custom_call.1} parent=5 // pred_check_branch
      %3289 = sbr.rel (%p3287) target = $region80
    $region79: #{tpu_custom_call.1} parent=5 // pred_region
      %s3290 = ssub.s32 %s13, 2
      // Predicated region
      $region81: #{tpu_custom_call.1} parent=79 // pred_check
        %p3291 = pneg %p240
      $region82: #{tpu_custom_call.1} parent=79 // pred_check_branch
        %3293 = sbr.rel (%p3291) target = $region84
      $region83: #{tpu_custom_call.1} parent=79 // pred_region
        %s3294 = smul.u32 4, %s25
        %p3295 = scmp.lt.s32.totalorder %s24, 1
        %s3296 = scalar_select %p3295, %s24, 1
        %p3297 = scmp.lt.s32.totalorder %s3294, 15
        %s3298 = scalar_select %p3297, %s3294, 15
        %s3299 = smul.addr %s3298, 2
        %s3300 = smul.addr %s3296, 32
        %s3301 = sadd.s32 %s3299, %s3300
        %s3302 = smul.addr %s3301, 8
        %s3303 = scalar_lea.vmem %s7, %s3302
      $region84: #{tpu_custom_call.1} parent=79 // pred_fallthru
        _
    $region80: #{tpu_custom_call.1} parent=5 // pred_fallthru
      _
  $region6: #{tpu_custom_call.1} parent=0 // loop_footer
    %s17 = sadd.s32 1, %s13
  $region7: #{tpu_custom_call.1} parent=0 // loop_footer_branch
    %12 = sbr.rel target = $region3
  $region8: #{tpu_custom_call.1} parent=0 // loop_exit
    _

// kernel: tpu_custom_call.1
$region0: #{tpu_custom_call.1}
  #allocation0 [shape = 'u32[]', space=smem, size = 0x4, offset = 0x4, fixed_abs, tag = 'smem constant byte address 0x4 - core index']
  #allocation1 [shape = 'u32[144,128]{1,0:T(1,128)}', space=vmem, size = 0x12000, scoped, tag = 'internal scratch']
  #allocation2 [shape = 'bf16[8,18,4]{2,1,0:T(8,128)(2,1)}', space=vmem, size = 0xc000, scoped, tag = 'scratch operand']
  #allocation3 [shape = 'bf16[8,16,12]{2,1,0:T(16,128)(2,1)}', space=vmem, size = 0x8000, scoped, tag = 'scratch operand']
  #allocation4 [shape = 'bf16[6,18,128]{2,1,0:T(8,128)(2,1)}', space=vmem, size = 0x9000, scoped, tag = 'scratch operand']
  #allocation5 [shape = 'bf16[6,16,384]{2,1,0:T(16,128)(2,1)}', space=vmem, size = 0x12000, scoped, tag = 'scratch operand']
  %s0 = inlined_call_operand.vmem [shape: f32[2,16,16,4], index: 0, kind: input, shape index: {}]
  %s1 = inlined_call_operand.vmem [shape: f32[2,16,16,4], index: 1, kind: input, shape index: {}]
  %s2 = inlined_call_operand.vmem [shape: f32[2,16,16,4], index: 2, kind: input, shape index: {}]
  %s3 = inlined_call_operand.vmem [shape: bf16[3,12,128], index: 3, kind: input, shape index: {}]
  %s4 = inlined_call_operand.vmem [shape: f32[1,128], index: 4, kind: input, shape index: {}]
  %s5 = inlined_call_operand.vmem [shape: bf16[3,384,128], index: 5, kind: input, shape index: {}]
  %s6 = inlined_call_operand.vmem [shape: f32[1,128], index: 6, kind: input, shape index: {}]
  %s7 = inlined_call_operand.vmem [shape: f32[2,16,16,8], index: 7, kind: output, shape index: {}]
  %s8 = sld [smem:[#allocation0]]
  $region85: #{tpu_custom_call.1} parent=0
    _
  %s10 = ssub.s32 1, %s8
  %s11 = scalar_select 0, %s10, %s8
  loop: start=0, step=1, limit=10
  $region2: #{tpu_custom_call.1} parent=0 // loop_pre_header
    _
  $region3: #{tpu_custom_call.1} parent=0 // loop_header
    %s13 = sphi 0, %s17
    %p14 = scmp.ge.s32.totalorder %s13, 10
    %s20 = sphi 0, %s32
    %s21 = sphi 0, %s28
    %s22 = sphi 0, %s20
    %s23 = sphi 0, %s21
    %s24 = sphi 0, %s22
    %s25 = sphi 0, %s23
    %s45 = sphi 0, %s47
    %s48 = sphi 0, %s45
    %s49 = sphi 0, %s48
    %s65 = sphi 0, %s49
    %s73 = sphi 0, %s75
    %s76 = sphi 0, %s73
    %s77 = sphi 0, %s76
    %s93 = sphi 0, %s77
    %s109 = sphi 0, %s111
    %s112 = sphi 0, %s109
    %s113 = sphi 0, %s112
    %s129 = sphi 0, %s113
    %s133 = sphi 0, %s133
    %s135 = sphi 0, %s133
    %s136 = sphi 0, %s135
    %s150 = sphi 0, %s136
    %s154 = sphi 0, %s154
    %s156 = sphi 0, %s154
    %s157 = sphi 0, %s156
    %s171 = sphi 0, %s157
    %s175 = sphi 0, %s175
    %s177 = sphi 0, %s175
    %s178 = sphi 0, %s177
    %s192 = sphi 0, %s178
    %s196 = sphi 0, %s196
    %s198 = sphi 0, %s196
    %s199 = sphi 0, %s198
    %s213 = sphi 0, %s199
    %s221 = sphi 0, %s223
    %s224 = sphi 0, %s221
    %s225 = sphi 0, %s224
    %s241 = sphi 0, %s225
  $region4: #{tpu_custom_call.1} parent=0 // loop_header_branch
    %16 = sbr.rel (%p14) target = $region8
  $region5: #{tpu_custom_call.1} parent=0 // loop_body
    %s18 = ssub.s32 %s13, 1
    %s19 = ssub.s32 %s13, 2
    %s26 = sadd.s32 1, %s21
    %p27 = scmp.ge.s32.totalorder %s26, 4
    %s28 = scalar_select %p27, 0, %s26
    %s29 = sadd.s32 1, %s20
    %s30 = scalar_select %p27, %s29, %s20
    %p31 = scmp.ge.s32.totalorder %s30, 2
    %s32 = scalar_select %p31, 0, %s30
    %s33 = smul.u32 %s21, 2
    %s34 = ssub.s32 %s33, 1
    %p35 = scmp.gt.s32.totalorder %s34, 0
    %s36 = scalar_select %p35, %s34, 0
    %s37 = smul.u32 %s28, 2
    %s38 = ssub.s32 %s37, 1
    %p39 = scmp.gt.s32.totalorder %s38, 0
    %s40 = scalar_select %p39, %s38, 0
    %s41 = ssub.s32 %s20, %s32
    %s42 = ssub.s32 %s36, %s40
    %s43 = sor.u32 %s41, %s42
    %p44 = scmp.eq.s32.totalorder %s43, 0
    %s46 = sadd.s32 %s45, 1
    %s47 = scalar_select %p44, %s45, %s46
    %p50 = pneg %p44
    %p51 = scmp.eq.s32.totalorder %s13, 7
    %p52 = por %p50, %p51
    %p53 = scmp.ne.s32.totalorder %s45, %s48
    %p54 = scmp.eq.s32.totalorder %s13, 0
    %p55 = por %p53, %p54
    %p56 = scmp.ne.s32.totalorder %s45, %s48
    %p57 = scmp.eq.s32.totalorder %s18, 7
    %p58 = por %p56, %p57
    %p59 = scmp.ne.s32.totalorder %s48, %s49
    %p60 = scmp.eq.s32.totalorder %s18, 0
    %p61 = por %p59, %p60
    %p62 = scmp.ne.s32.totalorder %s48, %s49
    %p63 = scmp.eq.s32.totalorder %s19, 7
    %p64 = por %p62, %p63
    %p66 = scmp.ne.s32.totalorder %s49, %s65
    %p67 = scmp.eq.s32.totalorder %s19, 0
    %p68 = por %p66, %p67
    %s69 = ssub.s32 %s20, %s32
    %s70 = ssub.s32 %s21, %s28
    %s71 = sor.u32 %s69, %s70
    %p72 = scmp.eq.s32.totalorder %s71, 0
    %s74 = sadd.s32 %s73, 1
    %s75 = scalar_select %p72, %s73, %s74
    %p78 = pneg %p72
    %p79 = scmp.eq.s32.totalorder %s13, 7
    %p80 = por %p78, %p79
    %p81 = scmp.ne.s32.totalorder %s73, %s76
    %p82 = scmp.eq.s32.totalorder %s13, 0
    %p83 = por %p81, %p82
    %p84 = scmp.ne.s32.totalorder %s73, %s76
    %p85 = scmp.eq.s32.totalorder %s18, 7
    %p86 = por %p84, %p85
    %p87 = scmp.ne.s32.totalorder %s76, %s77
    %p88 = scmp.eq.s32.totalorder %s18, 0
    %p89 = por %p87, %p88
    %p90 = scmp.ne.s32.totalorder %s76, %s77
    %p91 = scmp.eq.s32.totalorder %s19, 7
    %p92 = por %p90, %p91
    %p94 = scmp.ne.s32.totalorder %s77, %s93
    %p95 = scmp.eq.s32.totalorder %s19, 0
    %p96 = por %p94, %p95
    %s97 = sadd.s32 %s21, 1
    %s98 = smul.u32 %s97, 2
    %p99 = scmp.lt.s32.totalorder %s98, 7
    %s100 = scalar_select %p99, %s98, 7
    %s101 = sadd.s32 %s28, 1
    %s102 = smul.u32 %s101, 2
    %p103 = scmp.lt.s32.totalorder %s102, 7
    %s104 = scalar_select %p103, %s102, 7
    %s105 = ssub.s32 %s20, %s32
    %s106 = ssub.s32 %s100, %s104
    %s107 = sor.u32 %s105, %s106
    %p108 = scmp.eq.s32.totalorder %s107, 0
    %s110 = sadd.s32 %s109, 1
    %s111 = scalar_select %p108, %s109, %s110
    %p114 = pneg %p108
    %p115 = scmp.eq.s32.totalorder %s13, 7
    %p116 = por %p114, %p115
    %p117 = scmp.ne.s32.totalorder %s109, %s112
    %p118 = scmp.eq.s32.totalorder %s13, 0
    %p119 = por %p117, %p118
    %p120 = scmp.ne.s32.totalorder %s109, %s112
    %p121 = scmp.eq.s32.totalorder %s18, 7
    %p122 = por %p120, %p121
    %p123 = scmp.ne.s32.totalorder %s112, %s113
    %p124 = scmp.eq.s32.totalorder %s18, 0
    %p125 = por %p123, %p124
    %p126 = scmp.ne.s32.totalorder %s112, %s113
    %p127 = scmp.eq.s32.totalorder %s19, 7
    %p128 = por %p126, %p127
    %p130 = scmp.ne.s32.totalorder %s113, %s129
    %p131 = scmp.eq.s32.totalorder %s19, 0
    %p132 = por %p130, %p131
    %s134 = sadd.s32 %s133, 1
    %p137 = scmp.eq.s32.totalorder %s13, 7
    %p138 = scmp.ne.s32.totalorder %s133, %s135
    %p139 = scmp.eq.s32.totalorder %s13, 0
    %p140 = por %p138, %p139
    %p141 = scmp.ne.s32.totalorder %s133, %s135
    %p142 = scmp.eq.s32.totalorder %s18, 7
    %p143 = por %p141, %p142
    %p144 = scmp.ne.s32.totalorder %s135, %s136
    %p145 = scmp.eq.s32.totalorder %s18, 0
    %p146 = por %p144, %p145
    %p147 = scmp.ne.s32.totalorder %s135, %s136
    %p148 = scmp.eq.s32.totalorder %s19, 7
    %p149 = por %p147, %p148
    %p151 = scmp.ne.s32.totalorder %s136, %s150
    %p152 = scmp.eq.s32.totalorder %s19, 0
    %p153 = por %p151, %p152
    %s155 = sadd.s32 %s154, 1
    %p158 = scmp.eq.s32.totalorder %s13, 7
    %p159 = scmp.ne.s32.totalorder %s154, %s156
    %p160 = scmp.eq.s32.totalorder %s13, 0
    %p161 = por %p159, %p160
    %p162 = scmp.ne.s32.totalorder %s154, %s156
    %p163 = scmp.eq.s32.totalorder %s18, 7
    %p164 = por %p162, %p163
    %p165 = scmp.ne.s32.totalorder %s156, %s157
    %p166 = scmp.eq.s32.totalorder %s18, 0
    %p167 = por %p165, %p166
    %p168 = scmp.ne.s32.totalorder %s156, %s157
    %p169 = scmp.eq.s32.totalorder %s19, 7
    %p170 = por %p168, %p169
    %p172 = scmp.ne.s32.totalorder %s157, %s171
    %p173 = scmp.eq.s32.totalorder %s19, 0
    %p174 = por %p172, %p173
    %s176 = sadd.s32 %s175, 1
    %p179 = scmp.eq.s32.totalorder %s13, 7
    %p180 = scmp.ne.s32.totalorder %s175, %s177
    %p181 = scmp.eq.s32.totalorder %s13, 0
    %p182 = por %p180, %p181
    %p183 = scmp.ne.s32.totalorder %s175, %s177
    %p184 = scmp.eq.s32.totalorder %s18, 7
    %p185 = por %p183, %p184
    %p186 = scmp.ne.s32.totalorder %s177, %s178
    %p187 = scmp.eq.s32.totalorder %s18, 0
    %p188 = por %p186, %p187
    %p189 = scmp.ne.s32.totalorder %s177, %s178
    %p190 = scmp.eq.s32.totalorder %s19, 7
    %p191 = por %p189, %p190
    %p193 = scmp.ne.s32.totalorder %s178, %s192
    %p194 = scmp.eq.s32.totalorder %s19, 0
    %p195 = por %p193, %p194
    %s197 = sadd.s32 %s196, 1
    %p200 = scmp.eq.s32.totalorder %s13, 7
    %p201 = scmp.ne.s32.totalorder %s196, %s198
    %p202 = scmp.eq.s32.totalorder %s13, 0
    %p203 = por %p201, %p202
    %p204 = scmp.ne.s32.totalorder %s196, %s198
    %p205 = scmp.eq.s32.totalorder %s18, 7
    %p206 = por %p204, %p205
    %p207 = scmp.ne.s32.totalorder %s198, %s199
    %p208 = scmp.eq.s32.totalorder %s18, 0
    %p209 = por %p207, %p208
    %p210 = scmp.ne.s32.totalorder %s198, %s199
    %p211 = scmp.eq.s32.totalorder %s19, 7
    %p212 = por %p210, %p211
    %p214 = scmp.ne.s32.totalorder %s199, %s213
    %p215 = scmp.eq.s32.totalorder %s19, 0
    %p216 = por %p214, %p215
    %s217 = ssub.s32 %s20, %s32
    %s218 = ssub.s32 %s21, %s28
    %s219 = sor.u32 %s217, %s218
    %p220 = scmp.eq.s32.totalorder %s219, 0
    %s222 = sadd.s32 %s221, 1
    %s223 = scalar_select %p220, %s221, %s222
    %p226 = pneg %p220
    %p227 = scmp.eq.s32.totalorder %s13, 7
    %p228 = por %p226, %p227
    %p229 = scmp.ne.s32.totalorder %s221, %s224
    %p230 = scmp.eq.s32.totalorder %s13, 0
    %p231 = por %p229, %p230
    %p232 = scmp.ne.s32.totalorder %s221, %s224
    %p233 = scmp.eq.s32.totalorder %s18, 7
    %p234 = por %p232, %p233
    %p235 = scmp.ne.s32.totalorder %s224, %s225
    %p236 = scmp.eq.s32.totalorder %s18, 0
    %p237 = por %p235, %p236
    %p238 = scmp.ne.s32.totalorder %s224, %s225
    %p239 = scmp.eq.s32.totalorder %s19, 7
    %p240 = por %p238, %p239
    %p242 = scmp.ne.s32.totalorder %s225, %s241
    %p243 = scmp.eq.s32.totalorder %s19, 0
    %p244 = por %p242, %p243
    %p245 = scmp.le.s32.totalorder 1, %s13
    %p246 = scmp.lt.s32.totalorder %s13, 9
    %p247 = pnand %p245, %p246
    %p248 = pneg %p247
    // Predicated region
    $region9: #{tpu_custom_call.1} parent=5 // pred_check
      _
    $region10: #{tpu_custom_call.1} parent=5 // pred_check_branch
      %250 = sbr.rel (%p247) target = $region12
    $region11: #{tpu_custom_call.1} parent=5 // pred_region
      %s251 = ssub.s32 %s13, 1
      // Predicated region
      $region13: #{tpu_custom_call.1} parent=11 // pred_check
        %p252 = pneg %p146
      $region14: #{tpu_custom_call.1} parent=11 // pred_check_branch
        %254 = sbr.rel (%p252) target = $region16
      $region15: #{tpu_custom_call.1} parent=11 // pred_region
        _
      $region16: #{tpu_custom_call.1} parent=11 // pred_fallthru
        _
      // Predicated region
      $region17: #{tpu_custom_call.1} parent=11 // pred_check
        %p255 = pneg %p167
      $region18: #{tpu_custom_call.1} parent=11 // pred_check_branch
        %257 = sbr.rel (%p255) target = $region20
      $region19: #{tpu_custom_call.1} parent=11 // pred_region
        _
      $region20: #{tpu_custom_call.1} parent=11 // pred_fallthru
        _
      // Predicated region
      $region21: #{tpu_custom_call.1} parent=11 // pred_check
        %p258 = pneg %p188
      $region22: #{tpu_custom_call.1} parent=11 // pred_check_branch
        %260 = sbr.rel (%p258) target = $region24
      $region23: #{tpu_custom_call.1} parent=11 // pred_region
        _
      $region24: #{tpu_custom_call.1} parent=11 // pred_fallthru
        _
      // Predicated region
      $region25: #{tpu_custom_call.1} parent=11 // pred_check
        %p261 = pneg %p209
      $region26: #{tpu_custom_call.1} parent=11 // pred_check_branch
        %263 = sbr.rel (%p261) target = $region28
      $region27: #{tpu_custom_call.1} parent=11 // pred_region
        _
      $region28: #{tpu_custom_call.1} parent=11 // pred_fallthru
        _
    $region12: #{tpu_custom_call.1} parent=5 // pred_fallthru
      _
    %p264 = scmp.lt.s32.totalorder %s13, 8
    // Predicated region
    $region29: #{tpu_custom_call.1} parent=5 // pred_check
      %p265 = pneg %p264
    $region30: #{tpu_custom_call.1} parent=5 // pred_check_branch
      %267 = sbr.rel (%p265) target = $region32
    $region31: #{tpu_custom_call.1} parent=5 // pred_region
      // Predicated region
      $region33: #{tpu_custom_call.1} parent=31 // pred_check
        %p268 = pneg %p55
      $region34: #{tpu_custom_call.1} parent=31 // pred_check_branch
        %270 = sbr.rel (%p268) target = $region36
      $region35: #{tpu_custom_call.1} parent=31 // pred_region
        %s271 = smul.u32 %s21, 2
        %s272 = ssub.s32 %s271, 1
        %p273 = scmp.gt.s32.totalorder %s272, 0
        %s274 = scalar_select %p273, %s272, 0
        %s275 = smul.u32 2, %s274
        %p276 = scmp.lt.s32.totalorder %s20, 1
        %s277 = scalar_select %p276, %s20, 1
        %p278 = scmp.lt.s32.totalorder %s275, 15
        %s279 = scalar_select %p278, %s275, 15
        %s280 = smul.addr %s279, 2
        %s281 = smul.addr %s277, 32
        %s282 = sadd.s32 %s280, %s281
        %s283 = smul.addr %s282, 8
        %s284 = scalar_lea.vmem %s0, %s283
        %s285 = smul.u32 %s21, 2
        %s286 = ssub.s32 %s285, 1
        %p287 = scmp.gt.s32.totalorder %s286, 0
        %s288 = scalar_select %p287, %s286, 0
        %s289 = smul.u32 2, %s288
      $region36: #{tpu_custom_call.1} parent=31 // pred_fallthru
        _
      // Predicated region
      $region37: #{tpu_custom_call.1} parent=31 // pred_check
        %p290 = pneg %p83
      $region38: #{tpu_custom_call.1} parent=31 // pred_check_branch
        %292 = sbr.rel (%p290) target = $region40
      $region39: #{tpu_custom_call.1} parent=31 // pred_region
        %s293 = smul.u32 4, %s21
        %p294 = scmp.lt.s32.totalorder %s20, 1
        %s295 = scalar_select %p294, %s20, 1
        %p296 = scmp.lt.s32.totalorder %s293, 15
        %s297 = scalar_select %p296, %s293, 15
        %s298 = smul.addr %s297, 2
        %s299 = smul.addr %s295, 32
        %s300 = sadd.s32 %s298, %s299
        %s301 = smul.addr %s300, 8
        %s302 = scalar_lea.vmem %s1, %s301
        %s303 = smul.u32 4, %s21
      $region40: #{tpu_custom_call.1} parent=31 // pred_fallthru
        _
      // Predicated region
      $region41: #{tpu_custom_call.1} parent=31 // pred_check
        %p304 = pneg %p119
      $region42: #{tpu_custom_call.1} parent=31 // pred_check_branch
        %306 = sbr.rel (%p304) target = $region44
      $region43: #{tpu_custom_call.1} parent=31 // pred_region
        %s307 = sadd.s32 %s21, 1
        %s308 = smul.u32 %s307, 2
        %p309 = scmp.lt.s32.totalorder %s308, 7
        %s310 = scalar_select %p309, %s308, 7
        %s311 = smul.u32 2, %s310
        %p312 = scmp.lt.s32.totalorder %s20, 1
        %s313 = scalar_select %p312, %s20, 1
        %p314 = scmp.lt.s32.totalorder %s311, 15
        %s315 = scalar_select %p314, %s311, 15
        %s316 = smul.addr %s315, 2
        %s317 = smul.addr %s313, 32
        %s318 = sadd.s32 %s316, %s317
        %s319 = smul.addr %s318, 8
        %s320 = scalar_lea.vmem %s2, %s319
        %s321 = sadd.s32 %s21, 1
        %s322 = smul.u32 %s321, 2
        %p323 = scmp.lt.s32.totalorder %s322, 7
        %s324 = scalar_select %p323, %s322, 7
        %s325 = smul.u32 2, %s324
      $region44: #{tpu_custom_call.1} parent=31 // pred_fallthru
        _
    $region32: #{tpu_custom_call.1} parent=5 // pred_fallthru
      _
    %p326 = scmp.le.s32.totalorder 1, %s13
    %p327 = scmp.lt.s32.totalorder %s13, 9
    %p328 = pnand %p326, %p327
    %p329 = pneg %p328
    // Predicated region
    $region45: #{tpu_custom_call.1} parent=5 // pred_check
      _
    $region46: #{tpu_custom_call.1} parent=5 // pred_check_branch
      %331 = sbr.rel (%p328) target = $region48
    $region47: #{tpu_custom_call.1} parent=5 // pred_region
      %s332 = ssub.s32 %s13, 1
      %s333 = smul.u32 %s23, 2
      %s334 = ssub.s32 %s333, 1
      %p335 = scmp.gt.s32.totalorder %s334, 0
      %s336 = scalar_select %p335, %s334, 0
      %s337 = smul.u32 2, %s336
      %p338 = scmp.lt.s32.totalorder %s22, 1
      %s339 = scalar_select %p338, %s22, 1
      %p340 = scmp.lt.s32.totalorder %s337, 15
      %s341 = scalar_select %p340, %s337, 15
      %s342 = smul.addr %s341, 2
      %s343 = smul.addr %s339, 32
      %s344 = sadd.s32 %s342, %s343
      %s345 = smul.addr %s344, 8
      %s346 = scalar_lea.vmem %s0, %s345
      %p347 = pneg %p61
      %p348 = pneg %p58
      %s349 = smul.u32 4, %s23
      %p350 = scmp.lt.s32.totalorder %s22, 1
      %s351 = scalar_select %p350, %s22, 1
      %p352 = scmp.lt.s32.totalorder %s349, 15
      %s353 = scalar_select %p352, %s349, 15
      %s354 = smul.addr %s353, 2
      %s355 = smul.addr %s351, 32
      %s356 = sadd.s32 %s354, %s355
      %s357 = smul.addr %s356, 8
      %s358 = scalar_lea.vmem %s1, %s357
      %p359 = pneg %p89
      %p360 = pneg %p86
      %s361 = sadd.s32 %s23, 1
      %s362 = smul.u32 %s361, 2
      %p363 = scmp.lt.s32.totalorder %s362, 7
      %s364 = scalar_select %p363, %s362, 7
      %s365 = smul.u32 2, %s364
      %p366 = scmp.lt.s32.totalorder %s22, 1
      %s367 = scalar_select %p366, %s22, 1
      %p368 = scmp.lt.s32.totalorder %s365, 15
      %s369 = scalar_select %p368, %s365, 15
      %s370 = smul.addr %s369, 2
      %s371 = smul.addr %s367, 32
      %s372 = sadd.s32 %s370, %s371
      %s373 = smul.addr %s372, 8
      %s374 = scalar_lea.vmem %s2, %s373
      %p375 = pneg %p125
      %p376 = pneg %p122
      %p377 = pneg %p146
      %p378 = pneg %p143
      %p379 = pneg %p167
      %p380 = pneg %p164
      %p381 = pneg %p188
      %p382 = pneg %p185
      %p383 = pneg %p209
      %p384 = pneg %p206
      %p385 = pneg %p237
      %p386 = pneg %p234
      %s387 = smul.u32 4, %s23
      %p388 = scmp.lt.s32.totalorder %s22, 1
      %s389 = scalar_select %p388, %s22, 1
      %p390 = scmp.lt.s32.totalorder %s387, 15
      %s391 = scalar_select %p390, %s387, 15
      %s392 = smul.addr %s391, 2
      %s393 = smul.addr %s389, 32
      %s394 = sadd.s32 %s392, %s393
      %s395 = smul.addr %s394, 8
      %s396 = scalar_lea.vmem %s7, %s395
      %s397 = smul.u32 %s23, 2
      %s398 = ssub.s32 %s397, 1
      %p399 = scmp.gt.s32.totalorder %s398, 0
      %s400 = scalar_select %p399, %s398, 0
      %s401 = smul.u32 2, %s400
      %p402 = scmp.lt.s32.totalorder %s22, 1
      %s403 = scalar_select %p402, %s22, 1
      %p404 = scmp.lt.s32.totalorder %s401, 15
      %s405 = scalar_select %p404, %s401, 15
      %s406 = smul.addr %s405, 2
      %s407 = smul.addr %s403, 32
      %s408 = sadd.s32 %s406, %s407
      %s409 = smul.addr %s408, 8
      %s410 = scalar_lea.vmem %s0, %s409
      %s411 = smul.u32 %s23, 2
      %s412 = ssub.s32 %s411, 1
      %p413 = scmp.gt.s32.totalorder %s412, 0
      %s414 = scalar_select %p413, %s412, 0
      %s415 = smul.u32 2, %s414
      %s416 = smul.u32 4, %s23
      %p417 = scmp.lt.s32.totalorder %s22, 1
      %s418 = scalar_select %p417, %s22, 1
      %p419 = scmp.lt.s32.totalorder %s416, 15
      %s420 = scalar_select %p419, %s416, 15
      %s421 = smul.addr %s420, 2
      %s422 = smul.addr %s418, 32
      %s423 = sadd.s32 %s421, %s422
      %s424 = smul.addr %s423, 8
      %s425 = scalar_lea.vmem %s1, %s424
      %s426 = smul.u32 4, %s23
      %s427 = sadd.s32 %s23, 1
      %s428 = smul.u32 %s427, 2
      %p429 = scmp.lt.s32.totalorder %s428, 7
      %s430 = scalar_select %p429, %s428, 7
      %s431 = smul.u32 2, %s430
      %p432 = scmp.lt.s32.totalorder %s22, 1
      %s433 = scalar_select %p432, %s22, 1
      %p434 = scmp.lt.s32.totalorder %s431, 15
      %s435 = scalar_select %p434, %s431, 15
      %s436 = smul.addr %s435, 2
      %s437 = smul.addr %s433, 32
      %s438 = sadd.s32 %s436, %s437
      %s439 = smul.addr %s438, 8
      %s440 = scalar_lea.vmem %s2, %s439
      %s441 = sadd.s32 %s23, 1
      %s442 = smul.u32 %s441, 2
      %p443 = scmp.lt.s32.totalorder %s442, 7
      %s444 = scalar_select %p443, %s442, 7
      %s445 = smul.u32 2, %s444
      %s446 = smul.u32 4, %s23
      %p447 = scmp.lt.s32.totalorder %s22, 1
      %s448 = scalar_select %p447, %s22, 1
      %p449 = scmp.lt.s32.totalorder %s446, 15
      %s450 = scalar_select %p449, %s446, 15
      %s451 = smul.addr %s450, 2
      %s452 = smul.addr %s448, 32
      %s453 = sadd.s32 %s451, %s452
      %s454 = smul.addr %s453, 8
      %s455 = scalar_lea.vmem %s7, %s454
      %s456 = smul.u32 4, %s23
      %vm458 = vcmask 24576
      %vm459 = vsmask.f32 256
      %vm460 = vmand %vm458, %vm459
      %v461 = vld [vmem:[#allocation2] sm:$0x1]
      %v462 = vsel %vm460, 0, %v461
      %463 = vst [vmem:[#allocation2] sm:$0x1] %v462
      %v464 = vld [vmem:[#allocation2 + $0xc] sm:$0x1]
      %v465 = vsel %vm460, 0, %v464
      %466 = vst [vmem:[#allocation2 + $0xc] sm:$0x1] %v465
      %v467 = vld [vmem:[#allocation2 + $0x18] sm:$0x1]
      %v468 = vsel %vm460, 0, %v467
      %469 = vst [vmem:[#allocation2 + $0x18] sm:$0x1] %v468
      %v470 = vld [vmem:[#allocation2 + $0x24] sm:$0x1]
      %v471 = vsel %vm460, 0, %v470
      %472 = vst [vmem:[#allocation2 + $0x24] sm:$0x1] %v471
      %v473 = vld [vmem:[#allocation2 + $0x30] sm:$0x1]
      %v474 = vsel %vm460, 0, %v473
      %475 = vst [vmem:[#allocation2 + $0x30] sm:$0x1] %v474
      %v476 = vld [vmem:[#allocation2 + $0x3c] sm:$0x1]
      %v477 = vsel %vm460, 0, %v476
      %478 = vst [vmem:[#allocation2 + $0x3c] sm:$0x1] %v477
      %v479 = vld [vmem:[#allocation2 + $0x48] sm:$0x1]
      %v480 = vsel %vm460, 0, %v479
      %481 = vst [vmem:[#allocation2 + $0x48] sm:$0x1] %v480
      %v482 = vld [vmem:[#allocation2 + $0x54] sm:$0x1]
      %v483 = vsel %vm460, 0, %v482
      %484 = vst [vmem:[#allocation2 + $0x54] sm:$0x1] %v483
      %vm485 = vsmask.f32 7938
      %vm486 = vmand %vm458, %vm485
      %v487 = vld [vmem:[#allocation2 + $0x8] sm:$0x1]
      %v488 = vsel %vm486, 0, %v487
      %489 = vst [vmem:[#allocation2 + $0x8] sm:$0x1] %v488
      %v490 = vld [vmem:[#allocation2 + $0x14] sm:$0x1]
      %v491 = vsel %vm486, 0, %v490
      %492 = vst [vmem:[#allocation2 + $0x14] sm:$0x1] %v491
      %v493 = vld [vmem:[#allocation2 + $0x20] sm:$0x1]
      %v494 = vsel %vm486, 0, %v493
      %495 = vst [vmem:[#allocation2 + $0x20] sm:$0x1] %v494
      %v496 = vld [vmem:[#allocation2 + $0x2c] sm:$0x1]
      %v497 = vsel %vm486, 0, %v496
      %498 = vst [vmem:[#allocation2 + $0x2c] sm:$0x1] %v497
      %v499 = vld [vmem:[#allocation2 + $0x38] sm:$0x1]
      %v500 = vsel %vm486, 0, %v499
      %501 = vst [vmem:[#allocation2 + $0x38] sm:$0x1] %v500
      %v502 = vld [vmem:[#allocation2 + $0x44] sm:$0x1]
      %v503 = vsel %vm486, 0, %v502
      %504 = vst [vmem:[#allocation2 + $0x44] sm:$0x1] %v503
      %v505 = vld [vmem:[#allocation2 + $0x50] sm:$0x1]
      %v506 = vsel %vm486, 0, %v505
      %507 = vst [vmem:[#allocation2 + $0x50] sm:$0x1] %v506
      %v508 = vld [vmem:[#allocation2 + $0x5c] sm:$0x1]
      %v509 = vsel %vm486, 0, %v508
      %510 = vst [vmem:[#allocation2 + $0x5c] sm:$0x1] %v509
      %v511 = vld [vmem:[%s425] sm:$0xff]
      %v512 = vld [vmem:[%s425 + $0x8] sm:$0xff]
      %v513 = vld [vmem:[%s425 + $0x10] sm:$0xff]
      %v514 = vld [vmem:[%s425 + $0x18] sm:$0xff]
      %v515 = vld [vmem:[%s425 + $0x20] sm:$0xff]
      %v516 = vld [vmem:[%s425 + $0x28] sm:$0xff]
      %v517 = vld [vmem:[%s425 + $0x30] sm:$0xff]
      %v518 = vld [vmem:[%s425 + $0x38] sm:$0xff]
      %v519 = vpack.c.bf16 %v512, %v511
      %v520 = vpack.c.bf16 %v514, %v513
      %v521 = vpack.c.bf16 %v516, %v515
      %v522 = vpack.c.bf16 %v518, %v517
      %v527 = vunpack.c.l.b16 %v519
      %v528 = vunpack.c.h.b16 %v519
      %v529 = vunpack.c.l.b16 %v520
      %v530 = vunpack.c.h.b16 %v520
      %v531 = vunpack.c.l.b16 %v521
      %v532 = vunpack.c.h.b16 %v521
      %v533 = vunpack.c.l.b16 %v522
      %v534 = vunpack.c.h.b16 %v522
      %v535 = vpack.c.b16 %v527, %v527
      %v536 = vpack.c.b16 %v528, %v528
      %v537 = vpack.c.b16 %v529, %v529
      %v538 = vpack.c.b16 %v530, %v530
      %v539 = vpack.c.b16 %v531, %v531
      %v540 = vpack.c.b16 %v532, %v532
      %v541 = vpack.c.b16 %v533, %v533
      %v542 = vpack.c.b16 %v534, %v534
      %vm543 = vsmask.f32 4368
      %vm544 = vmor %vm459, %vm543
      %v546 = vshrl.u32 %v535, 16
      %v548 = vrot.slane %v546, 7
      %v549 = vshll.u32 %v535, 16
      %v551 = vor.u32 %v548, %v549
      %v552 = vrot.slane %v548, 4
      %v554 = vshrl.u32 %v536, 16
      %v556 = vrot.slane %v554, 7
      %v557 = vshll.u32 %v536, 16
      %v559 = vor.u32 %v556, %v557
      %v560 = vsel %vm544, %v552, %v559
      %v561 = vrot.slane %v556, 4
      %v563 = vshrl.u32 %v537, 16
      %v565 = vrot.slane %v563, 7
      %v566 = vshll.u32 %v537, 16
      %v568 = vor.u32 %v565, %v566
      %v569 = vrot.slane %v565, 4
      %v571 = vshrl.u32 %v538, 16
      %v573 = vrot.slane %v571, 7
      %v574 = vshll.u32 %v538, 16
      %v576 = vor.u32 %v573, %v574
      %v577 = vsel %vm544, %v569, %v576
      %v578 = vrot.slane %v573, 4
      %v580 = vshrl.u32 %v539, 16
      %v582 = vrot.slane %v580, 7
      %v583 = vshll.u32 %v539, 16
      %v585 = vor.u32 %v582, %v583
      %v586 = vrot.slane %v582, 4
      %v588 = vshrl.u32 %v540, 16
      %v590 = vrot.slane %v588, 7
      %v591 = vshll.u32 %v540, 16
      %v593 = vor.u32 %v590, %v591
      %v594 = vsel %vm544, %v586, %v593
      %v595 = vrot.slane %v590, 4
      %v597 = vshrl.u32 %v541, 16
      %v599 = vrot.slane %v597, 7
      %v600 = vshll.u32 %v541, 16
      %v602 = vor.u32 %v599, %v600
      %v603 = vrot.slane %v599, 4
      %v605 = vshrl.u32 %v542, 16
      %v607 = vrot.slane %v605, 7
      %v608 = vshll.u32 %v542, 16
      %v610 = vor.u32 %v607, %v608
      %v611 = vsel %vm544, %v603, %v610
      %v612 = vrot.slane %v607, 4
      %s625 = scalar_lea.vmem [#allocation2], 24
      %vm626 = vcmask 27648
      %vm627 = vmand %vm626, %vm485
      %v628 = vld [vmem:[%s625] sm:$0xf]
      %v629 = vsel %vm627, %v551, %v628
      %630 = vst [vmem:[%s625] sm:$0xf] %v629
      %vm631 = vcmask 27648
      %632 = vst.msk [vmem:[%s625 + $0x4] sm:$0xf] %vm631, %v560
      %v633 = vld [vmem:[%s625 + $0x8] sm:$0x1]
      %v634 = vsel %vm460, %v561, %v633
      %635 = vst [vmem:[%s625 + $0x8] sm:$0x1] %v634
      %v636 = vld [vmem:[%s625 + $0xc] sm:$0xf]
      %v637 = vsel %vm627, %v568, %v636
      %638 = vst [vmem:[%s625 + $0xc] sm:$0xf] %v637
      %639 = vst.msk [vmem:[%s625 + $0x10] sm:$0xf] %vm631, %v577
      %v640 = vld [vmem:[%s625 + $0x14] sm:$0x1]
      %v641 = vsel %vm460, %v578, %v640
      %642 = vst [vmem:[%s625 + $0x14] sm:$0x1] %v641
      %v643 = vld [vmem:[%s625 + $0x18] sm:$0xf]
      %v644 = vsel %vm627, %v585, %v643
      %645 = vst [vmem:[%s625 + $0x18] sm:$0xf] %v644
      %646 = vst.msk [vmem:[%s625 + $0x1c] sm:$0xf] %vm631, %v594
      %v647 = vld [vmem:[%s625 + $0x20] sm:$0x1]
      %v648 = vsel %vm460, %v595, %v647
      %649 = vst [vmem:[%s625 + $0x20] sm:$0x1] %v648
      %v650 = vld [vmem:[%s625 + $0x24] sm:$0xf]
      %v651 = vsel %vm627, %v602, %v650
      %652 = vst [vmem:[%s625 + $0x24] sm:$0xf] %v651
      %653 = vst.msk [vmem:[%s625 + $0x28] sm:$0xf] %vm631, %v611
      %v654 = vld [vmem:[%s625 + $0x2c] sm:$0x1]
      %v655 = vsel %vm460, %v612, %v654
      %656 = vst [vmem:[%s625 + $0x2c] sm:$0x1] %v655
      %p657 = scmp.eq.s32.totalorder %s23, 0
      // Predicated region
      $region49: #{tpu_custom_call.1} parent=47 // pred_check
        %p658 = pneg %p657
      $region50: #{tpu_custom_call.1} parent=47 // pred_check_branch
        %660 = sbr.rel (%p658) target = $region52
      $region51: #{tpu_custom_call.1} parent=47 // pred_region
        %v661 = vld [vmem:[#allocation2] sm:$0xf]
        %v662 = vsel %vm627, 0, %v661
        %663 = vst [vmem:[#allocation2] sm:$0xf] %v662
        %664 = vst.msk [vmem:[#allocation2 + $0x4] sm:$0xf] %vm631, 0
        %v665 = vld [vmem:[#allocation2 + $0x8] sm:$0x1]
        %v666 = vsel %vm460, 0, %v665
        %667 = vst [vmem:[#allocation2 + $0x8] sm:$0x1] %v666
        %v668 = vld [vmem:[#allocation2 + $0xc] sm:$0xf]
        %v669 = vsel %vm627, 0, %v668
        %670 = vst [vmem:[#allocation2 + $0xc] sm:$0xf] %v669
        %671 = vst.msk [vmem:[#allocation2 + $0x10] sm:$0xf] %vm631, 0
        %v672 = vld [vmem:[#allocation2 + $0x14] sm:$0x1]
        %v673 = vsel %vm460, 0, %v672
        %674 = vst [vmem:[#allocation2 + $0x14] sm:$0x1] %v673
      $region52: #{tpu_custom_call.1} parent=47 // pred_fallthru
        _
      %p675 = scmp.gt.s32.totalorder %s23, 0
      // Predicated region
      $region53: #{tpu_custom_call.1} parent=47 // pred_check
        %p676 = pneg %p675
      $region54: #{tpu_custom_call.1} parent=47 // pred_check_branch
        %678 = sbr.rel (%p676) target = $region56
      $region55: #{tpu_custom_call.1} parent=47 // pred_region
        %v679 = vld [vmem:[%s410] sm:$0xff]
        %v680 = vld [vmem:[%s410 + $0x8] sm:$0xff]
        %v681 = vld [vmem:[%s410 + $0x10] sm:$0xff]
        %v682 = vld [vmem:[%s410 + $0x18] sm:$0xff]
        %v683 = vpack.c.bf16 %v680, %v679
        %v684 = vpack.c.bf16 %v682, %v681
        %v687 = vunpack.c.l.b16 %v683
        %v688 = vunpack.c.h.b16 %v683
        %v689 = vunpack.c.l.b16 %v684
        %v690 = vunpack.c.h.b16 %v684
        %v691 = vpack.c.b16 %v687, %v687
        %v692 = vpack.c.b16 %v688, %v688
        %v693 = vpack.c.b16 %v689, %v689
        %v694 = vpack.c.b16 %v690, %v690
        %v696 = vshrl.u32 %v691, 16
        %v698 = vrot.slane %v696, 7
        %v699 = vshll.u32 %v691, 16
        %v701 = vor.u32 %v698, %v699
        %v702 = vrot.slane %v698, 4
        %v704 = vshrl.u32 %v692, 16
        %v706 = vrot.slane %v704, 7
        %v707 = vshll.u32 %v692, 16
        %v709 = vor.u32 %v706, %v707
        %v710 = vsel %vm544, %v702, %v709
        %v711 = vrot.slane %v706, 4
        %v713 = vshrl.u32 %v693, 16
        %v715 = vrot.slane %v713, 7
        %v716 = vshll.u32 %v693, 16
        %v718 = vor.u32 %v715, %v716
        %v719 = vrot.slane %v715, 4
        %v721 = vshrl.u32 %v694, 16
        %v723 = vrot.slane %v721, 7
        %v724 = vshll.u32 %v694, 16
        %v726 = vor.u32 %v723, %v724
        %v727 = vsel %vm544, %v719, %v726
        %v728 = vrot.slane %v723, 4
        %v735 = vld [vmem:[#allocation2] sm:$0xf]
        %v736 = vsel %vm627, %v701, %v735
        %737 = vst [vmem:[#allocation2] sm:$0xf] %v736
        %738 = vst.msk [vmem:[#allocation2 + $0x4] sm:$0xf] %vm631, %v710
        %v739 = vld [vmem:[#allocation2 + $0x8] sm:$0x1]
        %v740 = vsel %vm460, %v711, %v739
        %741 = vst [vmem:[#allocation2 + $0x8] sm:$0x1] %v740
        %v742 = vld [vmem:[#allocation2 + $0xc] sm:$0xf]
        %v743 = vsel %vm627, %v718, %v742
        %744 = vst [vmem:[#allocation2 + $0xc] sm:$0xf] %v743
        %745 = vst.msk [vmem:[#allocation2 + $0x10] sm:$0xf] %vm631, %v727
        %v746 = vld [vmem:[#allocation2 + $0x14] sm:$0x1]
        %v747 = vsel %vm460, %v728, %v746
        %748 = vst [vmem:[#allocation2 + $0x14] sm:$0x1] %v747
      $region56: #{tpu_custom_call.1} parent=47 // pred_fallthru
        _
      %p749 = scmp.eq.s32.totalorder %s23, 3
      // Predicated region
      $region57: #{tpu_custom_call.1} parent=47 // pred_check
        %p750 = pneg %p749
      $region58: #{tpu_custom_call.1} parent=47 // pred_check_branch
        %752 = sbr.rel (%p750) target = $region60
      $region59: #{tpu_custom_call.1} parent=47 // pred_region
        %s753 = scalar_lea.vmem [#allocation2], 72
        %v754 = vld [vmem:[%s753] sm:$0xf]
        %v755 = vsel %vm627, 0, %v754
        %756 = vst [vmem:[%s753] sm:$0xf] %v755
        %757 = vst.msk [vmem:[%s753 + $0x4] sm:$0xf] %vm631, 0
        %v758 = vld [vmem:[%s753 + $0x8] sm:$0x1]
        %v759 = vsel %vm460, 0, %v758
        %760 = vst [vmem:[%s753 + $0x8] sm:$0x1] %v759
        %v761 = vld [vmem:[%s753 + $0xc] sm:$0xf]
        %v762 = vsel %vm627, 0, %v761
        %763 = vst [vmem:[%s753 + $0xc] sm:$0xf] %v762
        %764 = vst.msk [vmem:[%s753 + $0x10] sm:$0xf] %vm631, 0
        %v765 = vld [vmem:[%s753 + $0x14] sm:$0x1]
        %v766 = vsel %vm460, 0, %v765
        %767 = vst [vmem:[%s753 + $0x14] sm:$0x1] %v766
      $region60: #{tpu_custom_call.1} parent=47 // pred_fallthru
        _
      %p768 = scmp.lt.s32.totalorder %s23, 3
      // Predicated region
      $region61: #{tpu_custom_call.1} parent=47 // pred_check
        %p769 = pneg %p768
      $region62: #{tpu_custom_call.1} parent=47 // pred_check_branch
        %771 = sbr.rel (%p769) target = $region64
      $region63: #{tpu_custom_call.1} parent=47 // pred_region
        %v772 = vld [vmem:[%s440] sm:$0xff]
        %v773 = vld [vmem:[%s440 + $0x8] sm:$0xff]
        %v774 = vld [vmem:[%s440 + $0x10] sm:$0xff]
        %v775 = vld [vmem:[%s440 + $0x18] sm:$0xff]
        %v776 = vpack.c.bf16 %v773, %v772
        %v777 = vpack.c.bf16 %v775, %v774
        %v780 = vunpack.c.l.b16 %v776
        %v781 = vunpack.c.h.b16 %v776
        %v782 = vunpack.c.l.b16 %v777
        %v783 = vunpack.c.h.b16 %v777
        %v784 = vpack.c.b16 %v780, %v780
        %v785 = vpack.c.b16 %v781, %v781
        %v786 = vpack.c.b16 %v782, %v782
        %v787 = vpack.c.b16 %v783, %v783
        %v789 = vshrl.u32 %v784, 16
        %v791 = vrot.slane %v789, 7
        %v792 = vshll.u32 %v784, 16
        %v794 = vor.u32 %v791, %v792
        %v795 = vrot.slane %v791, 4
        %v797 = vshrl.u32 %v785, 16
        %v799 = vrot.slane %v797, 7
        %v800 = vshll.u32 %v785, 16
        %v802 = vor.u32 %v799, %v800
        %v803 = vsel %vm544, %v795, %v802
        %v804 = vrot.slane %v799, 4
        %v806 = vshrl.u32 %v786, 16
        %v808 = vrot.slane %v806, 7
        %v809 = vshll.u32 %v786, 16
        %v811 = vor.u32 %v808, %v809
        %v812 = vrot.slane %v808, 4
        %v814 = vshrl.u32 %v787, 16
        %v816 = vrot.slane %v814, 7
        %v817 = vshll.u32 %v787, 16
        %v819 = vor.u32 %v816, %v817
        %v820 = vsel %vm544, %v812, %v819
        %v821 = vrot.slane %v816, 4
        %s828 = scalar_lea.vmem [#allocation2], 72
        %v829 = vld [vmem:[%s828] sm:$0xf]
        %v830 = vsel %vm627, %v794, %v829
        %831 = vst [vmem:[%s828] sm:$0xf] %v830
        %832 = vst.msk [vmem:[%s828 + $0x4] sm:$0xf] %vm631, %v803
        %v833 = vld [vmem:[%s828 + $0x8] sm:$0x1]
        %v834 = vsel %vm460, %v804, %v833
        %835 = vst [vmem:[%s828 + $0x8] sm:$0x1] %v834
        %v836 = vld [vmem:[%s828 + $0xc] sm:$0xf]
        %v837 = vsel %vm627, %v811, %v836
        %838 = vst [vmem:[%s828 + $0xc] sm:$0xf] %v837
        %839 = vst.msk [vmem:[%s828 + $0x10] sm:$0xf] %vm631, %v820
        %v840 = vld [vmem:[%s828 + $0x14] sm:$0x1]
        %v841 = vsel %vm460, %v821, %v840
        %842 = vst [vmem:[%s828 + $0x14] sm:$0x1] %v841
      $region64: #{tpu_custom_call.1} parent=47 // pred_fallthru
        _
      %v843 = vld [vmem:[#allocation2] sm:$0xf]
      %v844 = vld [vmem:[#allocation2 + $0x4] sm:$0xf]
      %v845 = vld [vmem:[#allocation2 + $0xc] sm:$0xf]
      %v846 = vld [vmem:[#allocation2 + $0x10] sm:$0xf]
      %v847 = vld [vmem:[#allocation2 + $0x18] sm:$0xf]
      %v848 = vld [vmem:[#allocation2 + $0x1c] sm:$0xf]
      %v849 = vld [vmem:[#allocation2 + $0x24] sm:$0xf]
      %v850 = vld [vmem:[#allocation2 + $0x28] sm:$0xf]
      %v851 = vld [vmem:[#allocation2 + $0x30] sm:$0xf]
      %v852 = vld [vmem:[#allocation2 + $0x34] sm:$0xf]
      %v853 = vld [vmem:[#allocation2 + $0x3c] sm:$0xf]
      %v854 = vld [vmem:[#allocation2 + $0x40] sm:$0xf]
      %v855 = vld [vmem:[#allocation2 + $0x48] sm:$0xf]
      %v856 = vld [vmem:[#allocation2 + $0x4c] sm:$0xf]
      %v857 = vld [vmem:[#allocation2 + $0x54] sm:$0xf]
      %v858 = vld [vmem:[#allocation2 + $0x58] sm:$0xf]
      %v875 = vunpack.c.l.b16 %v843
      %v876 = vunpack.c.l.b16 %v844
      %v877 = vunpack.c.l.b16 %v845
      %v878 = vunpack.c.l.b16 %v846
      %v879 = vunpack.c.l.b16 %v847
      %v880 = vunpack.c.l.b16 %v848
      %v881 = vunpack.c.l.b16 %v849
      %v882 = vunpack.c.l.b16 %v850
      %v883 = vunpack.c.l.b16 %v851
      %v884 = vunpack.c.l.b16 %v852
      %v885 = vunpack.c.l.b16 %v853
      %v886 = vunpack.c.l.b16 %v854
      %v887 = vunpack.c.l.b16 %v855
      %v888 = vunpack.c.l.b16 %v856
      %v889 = vunpack.c.l.b16 %v857
      %v890 = vunpack.c.l.b16 %v858
      %v891 = vpack.c.b16 %v876, %v875
      %v892 = vpack.c.b16 %v878, %v877
      %v893 = vpack.c.b16 %v880, %v879
      %v894 = vpack.c.b16 %v882, %v881
      %v895 = vpack.c.b16 %v884, %v883
      %v896 = vpack.c.b16 %v886, %v885
      %v897 = vpack.c.b16 %v888, %v887
      %v898 = vpack.c.b16 %v890, %v889
      %vm907 = vcmask 31744
      %908 = vst.msk [vmem:[#allocation3] sm:$0xff] %vm907, %v891
      %909 = vst.msk [vmem:[#allocation3 + $0x8] sm:$0xff] %vm907, %v892
      %910 = vst.msk [vmem:[#allocation3 + $0x10] sm:$0xff] %vm907, %v893
      %911 = vst.msk [vmem:[#allocation3 + $0x18] sm:$0xff] %vm907, %v894
      %912 = vst.msk [vmem:[#allocation3 + $0x20] sm:$0xff] %vm907, %v895
      %913 = vst.msk [vmem:[#allocation3 + $0x28] sm:$0xff] %vm907, %v896
      %914 = vst.msk [vmem:[#allocation3 + $0x30] sm:$0xff] %vm907, %v897
      %915 = vst.msk [vmem:[#allocation3 + $0x38] sm:$0xff] %vm907, %v898
      %v916 = vld [vmem:[#allocation2] sm:$0xf]
      %v917 = vld [vmem:[#allocation2 + $0x4] sm:$0xf]
      %v918 = vld [vmem:[#allocation2 + $0x8] sm:$0x1]
      %v919 = vld [vmem:[#allocation2 + $0xc] sm:$0xf]
      %v920 = vld [vmem:[#allocation2 + $0x10] sm:$0xf]
      %v921 = vld [vmem:[#allocation2 + $0x14] sm:$0x1]
      %v922 = vld [vmem:[#allocation2 + $0x18] sm:$0xf]
      %v923 = vld [vmem:[#allocation2 + $0x1c] sm:$0xf]
      %v924 = vld [vmem:[#allocation2 + $0x20] sm:$0x1]
      %v925 = vld [vmem:[#allocation2 + $0x24] sm:$0xf]
      %v926 = vld [vmem:[#allocation2 + $0x28] sm:$0xf]
      %v927 = vld [vmem:[#allocation2 + $0x2c] sm:$0x1]
      %v928 = vld [vmem:[#allocation2 + $0x30] sm:$0xf]
      %v929 = vld [vmem:[#allocation2 + $0x34] sm:$0xf]
      %v930 = vld [vmem:[#allocation2 + $0x38] sm:$0x1]
      %v931 = vld [vmem:[#allocation2 + $0x3c] sm:$0xf]
      %v932 = vld [vmem:[#allocation2 + $0x40] sm:$0xf]
      %v933 = vld [vmem:[#allocation2 + $0x44] sm:$0x1]
      %v934 = vld [vmem:[#allocation2 + $0x48] sm:$0xf]
      %v935 = vld [vmem:[#allocation2 + $0x4c] sm:$0xf]
      %v936 = vld [vmem:[#allocation2 + $0x50] sm:$0x1]
      %v937 = vld [vmem:[#allocation2 + $0x54] sm:$0xf]
      %v938 = vld [vmem:[#allocation2 + $0x58] sm:$0xf]
      %v939 = vld [vmem:[#allocation2 + $0x5c] sm:$0x1]
      %v964 = vunpack.c.l.b16 %v916
      %v965 = vunpack.c.l.b16 %v917
      %v966 = vunpack.c.l.b16 %v918
      %v967 = vunpack.c.l.b16 %v919
      %v968 = vunpack.c.l.b16 %v920
      %v969 = vunpack.c.l.b16 %v921
      %v970 = vunpack.c.l.b16 %v922
      %v971 = vunpack.c.l.b16 %v923
      %v972 = vunpack.c.l.b16 %v924
      %v973 = vunpack.c.l.b16 %v925
      %v974 = vunpack.c.l.b16 %v926
      %v975 = vunpack.c.l.b16 %v927
      %v976 = vunpack.c.l.b16 %v928
      %v977 = vunpack.c.l.b16 %v929
      %v978 = vunpack.c.l.b16 %v930
      %v979 = vunpack.c.l.b16 %v931
      %v980 = vunpack.c.l.b16 %v932
      %v981 = vunpack.c.l.b16 %v933
      %v982 = vunpack.c.l.b16 %v934
      %v983 = vunpack.c.l.b16 %v935
      %v984 = vunpack.c.l.b16 %v936
      %v985 = vunpack.c.l.b16 %v937
      %v986 = vunpack.c.l.b16 %v938
      %v987 = vunpack.c.l.b16 %v939
      %v988 = vpack.c.b16 %v965, %v964
      %v989 = vpack.c.b16 %v966, %v966
      %v990 = vpack.c.b16 %v968, %v967
      %v991 = vpack.c.b16 %v969, %v969
      %v992 = vpack.c.b16 %v971, %v970
      %v993 = vpack.c.b16 %v972, %v972
      %v994 = vpack.c.b16 %v974, %v973
      %v995 = vpack.c.b16 %v975, %v975
      %v996 = vpack.c.b16 %v977, %v976
      %v997 = vpack.c.b16 %v978, %v978
      %v998 = vpack.c.b16 %v980, %v979
      %v999 = vpack.c.b16 %v981, %v981
      %v1000 = vpack.c.b16 %v983, %v982
      %v1001 = vpack.c.b16 %v984, %v984
      %v1002 = vpack.c.b16 %v986, %v985
      %v1003 = vpack.c.b16 %v987, %v987
      %vm1004 = vsmask.f32 7424
      %v1006 = vshrl.u32 %v988, 16
      %v1008 = vshll.u32 %v988, 16
      %v1010 = vrot.slane %v1008, 1
      %v1011 = vor.u32 %v1006, %v1010
      %v1013 = vshll.u32 %v989, 16
      %v1015 = vrot.slane %v1013, 1
      %v1016 = vsel %vm1004, %v1011, %v1015
      %v1018 = vshrl.u32 %v990, 16
      %v1020 = vshll.u32 %v990, 16
      %v1022 = vrot.slane %v1020, 1
      %v1023 = vor.u32 %v1018, %v1022
      %v1025 = vshll.u32 %v991, 16
      %v1027 = vrot.slane %v1025, 1
      %v1028 = vsel %vm1004, %v1023, %v1027
      %v1030 = vshrl.u32 %v992, 16
      %v1032 = vshll.u32 %v992, 16
      %v1034 = vrot.slane %v1032, 1
      %v1035 = vor.u32 %v1030, %v1034
      %v1037 = vshll.u32 %v993, 16
      %v1039 = vrot.slane %v1037, 1
      %v1040 = vsel %vm1004, %v1035, %v1039
      %v1042 = vshrl.u32 %v994, 16
      %v1044 = vshll.u32 %v994, 16
      %v1046 = vrot.slane %v1044, 1
      %v1047 = vor.u32 %v1042, %v1046
      %v1049 = vshll.u32 %v995, 16
      %v1051 = vrot.slane %v1049, 1
      %v1052 = vsel %vm1004, %v1047, %v1051
      %v1054 = vshrl.u32 %v996, 16
      %v1056 = vshll.u32 %v996, 16
      %v1058 = vrot.slane %v1056, 1
      %v1059 = vor.u32 %v1054, %v1058
      %v1061 = vshll.u32 %v997, 16
      %v1063 = vrot.slane %v1061, 1
      %v1064 = vsel %vm1004, %v1059, %v1063
      %v1066 = vshrl.u32 %v998, 16
      %v1068 = vshll.u32 %v998, 16
      %v1070 = vrot.slane %v1068, 1
      %v1071 = vor.u32 %v1066, %v1070
      %v1073 = vshll.u32 %v999, 16
      %v1075 = vrot.slane %v1073, 1
      %v1076 = vsel %vm1004, %v1071, %v1075
      %v1078 = vshrl.u32 %v1000, 16
      %v1080 = vshll.u32 %v1000, 16
      %v1082 = vrot.slane %v1080, 1
      %v1083 = vor.u32 %v1078, %v1082
      %v1085 = vshll.u32 %v1001, 16
      %v1087 = vrot.slane %v1085, 1
      %v1088 = vsel %vm1004, %v1083, %v1087
      %v1090 = vshrl.u32 %v1002, 16
      %v1092 = vshll.u32 %v1002, 16
      %v1094 = vrot.slane %v1092, 1
      %v1095 = vor.u32 %v1090, %v1094
      %v1097 = vshll.u32 %v1003, 16
      %v1099 = vrot.slane %v1097, 1
      %v1100 = vsel %vm1004, %v1095, %v1099
      %1101 = vrot.lane.b32.xlu0 %v1016, 4
      %v1102 = vpop.permute.xlu0 %1101
      %1103 = vrot.lane.b32.xlu0 %v1028, 4
      %v1104 = vpop.permute.xlu0 %1103
      %1105 = vrot.lane.b32.xlu0 %v1040, 4
      %v1106 = vpop.permute.xlu0 %1105
      %1107 = vrot.lane.b32.xlu0 %v1052, 4
      %v1108 = vpop.permute.xlu0 %1107
      %1109 = vrot.lane.b32.xlu0 %v1064, 4
      %v1110 = vpop.permute.xlu0 %1109
      %1111 = vrot.lane.b32.xlu0 %v1076, 4
      %v1112 = vpop.permute.xlu0 %1111
      %1113 = vrot.lane.b32.xlu0 %v1088, 4
      %v1114 = vpop.permute.xlu0 %1113
      %1115 = vrot.lane.b32.xlu0 %v1100, 4
      %v1116 = vpop.permute.xlu0 %1115
      %vm1125 = vcmask 64544
      %1126 = vst.msk [vmem:[#allocation3] sm:$0xff] %vm1125, %v1102
      %1127 = vst.msk [vmem:[#allocation3 + $0x8] sm:$0xff] %vm1125, %v1104
      %1128 = vst.msk [vmem:[#allocation3 + $0x10] sm:$0xff] %vm1125, %v1106
      %1129 = vst.msk [vmem:[#allocation3 + $0x18] sm:$0xff] %vm1125, %v1108
      %1130 = vst.msk [vmem:[#allocation3 + $0x20] sm:$0xff] %vm1125, %v1110
      %1131 = vst.msk [vmem:[#allocation3 + $0x28] sm:$0xff] %vm1125, %v1112
      %1132 = vst.msk [vmem:[#allocation3 + $0x30] sm:$0xff] %vm1125, %v1114
      %1133 = vst.msk [vmem:[#allocation3 + $0x38] sm:$0xff] %vm1125, %v1116
      %v1134 = vld [vmem:[#allocation2] sm:$0xe]
      %v1135 = vld [vmem:[#allocation2 + $0x4] sm:$0xf]
      %v1136 = vld [vmem:[#allocation2 + $0x8] sm:$0x1]
      %v1137 = vld [vmem:[#allocation2 + $0xc] sm:$0xe]
      %v1138 = vld [vmem:[#allocation2 + $0x10] sm:$0xf]
      %v1139 = vld [vmem:[#allocation2 + $0x14] sm:$0x1]
      %v1140 = vld [vmem:[#allocation2 + $0x18] sm:$0xe]
      %v1141 = vld [vmem:[#allocation2 + $0x1c] sm:$0xf]
      %v1142 = vld [vmem:[#allocation2 + $0x20] sm:$0x1]
      %v1143 = vld [vmem:[#allocation2 + $0x24] sm:$0xe]
      %v1144 = vld [vmem:[#allocation2 + $0x28] sm:$0xf]
      %v1145 = vld [vmem:[#allocation2 + $0x2c] sm:$0x1]
      %v1146 = vld [vmem:[#allocation2 + $0x30] sm:$0xe]
      %v1147 = vld [vmem:[#allocation2 + $0x34] sm:$0xf]
      %v1148 = vld [vmem:[#allocation2 + $0x38] sm:$0x1]
      %v1149 = vld [vmem:[#allocation2 + $0x3c] sm:$0xe]
      %v1150 = vld [vmem:[#allocation2 + $0x40] sm:$0xf]
      %v1151 = vld [vmem:[#allocation2 + $0x44] sm:$0x1]
      %v1152 = vld [vmem:[#allocation2 + $0x48] sm:$0xe]
      %v1153 = vld [vmem:[#allocation2 + $0x4c] sm:$0xf]
      %v1154 = vld [vmem:[#allocation2 + $0x50] sm:$0x1]
      %v1155 = vld [vmem:[#allocation2 + $0x54] sm:$0xe]
      %v1156 = vld [vmem:[#allocation2 + $0x58] sm:$0xf]
      %v1157 = vld [vmem:[#allocation2 + $0x5c] sm:$0x1]
      %v1182 = vunpack.c.l.b16 %v1134
      %v1183 = vunpack.c.l.b16 %v1135
      %v1184 = vunpack.c.l.b16 %v1136
      %v1185 = vunpack.c.l.b16 %v1137
      %v1186 = vunpack.c.l.b16 %v1138
      %v1187 = vunpack.c.l.b16 %v1139
      %v1188 = vunpack.c.l.b16 %v1140
      %v1189 = vunpack.c.l.b16 %v1141
      %v1190 = vunpack.c.l.b16 %v1142
      %v1191 = vunpack.c.l.b16 %v1143
      %v1192 = vunpack.c.l.b16 %v1144
      %v1193 = vunpack.c.l.b16 %v1145
      %v1194 = vunpack.c.l.b16 %v1146
      %v1195 = vunpack.c.l.b16 %v1147
      %v1196 = vunpack.c.l.b16 %v1148
      %v1197 = vunpack.c.l.b16 %v1149
      %v1198 = vunpack.c.l.b16 %v1150
      %v1199 = vunpack.c.l.b16 %v1151
      %v1200 = vunpack.c.l.b16 %v1152
      %v1201 = vunpack.c.l.b16 %v1153
      %v1202 = vunpack.c.l.b16 %v1154
      %v1203 = vunpack.c.l.b16 %v1155
      %v1204 = vunpack.c.l.b16 %v1156
      %v1205 = vunpack.c.l.b16 %v1157
      %v1206 = vpack.c.b16 %v1183, %v1182
      %v1207 = vpack.c.b16 %v1184, %v1184
      %v1208 = vpack.c.b16 %v1186, %v1185
      %v1209 = vpack.c.b16 %v1187, %v1187
      %v1210 = vpack.c.b16 %v1189, %v1188
      %v1211 = vpack.c.b16 %v1190, %v1190
      %v1212 = vpack.c.b16 %v1192, %v1191
      %v1213 = vpack.c.b16 %v1193, %v1193
      %v1214 = vpack.c.b16 %v1195, %v1194
      %v1215 = vpack.c.b16 %v1196, %v1196
      %v1216 = vpack.c.b16 %v1198, %v1197
      %v1217 = vpack.c.b16 %v1199, %v1199
      %v1218 = vpack.c.b16 %v1201, %v1200
      %v1219 = vpack.c.b16 %v1202, %v1202
      %v1220 = vpack.c.b16 %v1204, %v1203
      %v1221 = vpack.c.b16 %v1205, %v1205
      %vm1222 = vcmask 1046528
      %v1223 = vrot.slane %v1206, 1
      %v1224 = vrot.slane %v1207, 1
      %v1225 = vsel %vm1222, %v1223, %v1224
      %v1226 = vrot.slane %v1208, 1
      %v1227 = vrot.slane %v1209, 1
      %v1228 = vsel %vm1222, %v1226, %v1227
      %v1229 = vrot.slane %v1210, 1
      %v1230 = vrot.slane %v1211, 1
      %v1231 = vsel %vm1222, %v1229, %v1230
      %v1232 = vrot.slane %v1212, 1
      %v1233 = vrot.slane %v1213, 1
      %v1234 = vsel %vm1222, %v1232, %v1233
      %v1235 = vrot.slane %v1214, 1
      %v1236 = vrot.slane %v1215, 1
      %v1237 = vsel %vm1222, %v1235, %v1236
      %v1238 = vrot.slane %v1216, 1
      %v1239 = vrot.slane %v1217, 1
      %v1240 = vsel %vm1222, %v1238, %v1239
      %v1241 = vrot.slane %v1218, 1
      %v1242 = vrot.slane %v1219, 1
      %v1243 = vsel %vm1222, %v1241, %v1242
      %v1244 = vrot.slane %v1220, 1
      %v1245 = vrot.slane %v1221, 1
      %v1246 = vsel %vm1222, %v1244, %v1245
      %1247 = vrot.lane.b32.xlu0 %v1225, 8
      %v1248 = vpop.permute.xlu0 %1247
      %1249 = vrot.lane.b32.xlu0 %v1228, 8
      %v1250 = vpop.permute.xlu0 %1249
      %1251 = vrot.lane.b32.xlu0 %v1231, 8
      %v1252 = vpop.permute.xlu0 %1251
      %1253 = vrot.lane.b32.xlu0 %v1234, 8
      %v1254 = vpop.permute.xlu0 %1253
      %1255 = vrot.lane.b32.xlu0 %v1237, 8
      %v1256 = vpop.permute.xlu0 %1255
      %1257 = vrot.lane.b32.xlu0 %v1240, 8
      %v1258 = vpop.permute.xlu0 %1257
      %1259 = vrot.lane.b32.xlu0 %v1243, 8
      %v1260 = vpop.permute.xlu0 %1259
      %1261 = vrot.lane.b32.xlu0 %v1246, 8
      %v1262 = vpop.permute.xlu0 %1261
      %vm1271 = vcmask 97344
      %1272 = vst.msk [vmem:[#allocation3] sm:$0xff] %vm1271, %v1248
      %1273 = vst.msk [vmem:[#allocation3 + $0x8] sm:$0xff] %vm1271, %v1250
      %1274 = vst.msk [vmem:[#allocation3 + $0x10] sm:$0xff] %vm1271, %v1252
      %1275 = vst.msk [vmem:[#allocation3 + $0x18] sm:$0xff] %vm1271, %v1254
      %1276 = vst.msk [vmem:[#allocation3 + $0x20] sm:$0xff] %vm1271, %v1256
      %1277 = vst.msk [vmem:[#allocation3 + $0x28] sm:$0xff] %vm1271, %v1258
      %1278 = vst.msk [vmem:[#allocation3 + $0x30] sm:$0xff] %vm1271, %v1260
      %1279 = vst.msk [vmem:[#allocation3 + $0x38] sm:$0xff] %vm1271, %v1262
      %v1280 = vld [vmem:[#allocation3] sm:$0xff]
      %v1281 = vld [vmem:[#allocation3 + $0x8] sm:$0xff]
      %v1282 = vld [vmem:[#allocation3 + $0x10] sm:$0xff]
      %v1283 = vld [vmem:[#allocation3 + $0x18] sm:$0xff]
      %v1284 = vld [vmem:[#allocation3 + $0x20] sm:$0xff]
      %v1285 = vld [vmem:[#allocation3 + $0x28] sm:$0xff]
      %v1286 = vld [vmem:[%s3] sm:$0xf]
      %v1287 = vld [vmem:[%s3 + $0x4] sm:$0x3]
      %s1288 = scalar_lea.vmem [#allocation3], 8
      %v1289 = vld [vmem:[%s1288] sm:$0xff]
      %v1290 = vld [vmem:[%s1288 + $0x8] sm:$0xff]
      %v1291 = vld [vmem:[%s1288 + $0x10] sm:$0xff]
      %v1292 = vld [vmem:[%s1288 + $0x18] sm:$0xff]
      %v1293 = vld [vmem:[%s1288 + $0x20] sm:$0xff]
      %v1294 = vld [vmem:[%s1288 + $0x28] sm:$0xff]
      %s1295 = scalar_lea.vmem %s3, 8
      %v1296 = vld [vmem:[%s1295] sm:$0xf]
      %v1297 = vld [vmem:[%s1295 + $0x4] sm:$0x3]
      %v1300 = vunpack.c.l.b16 %v1296
      %v1301 = vunpack.c.l.b16 %v1297
      %v1302 = vpack.c.b16 %v1301, %v1300
      %vm1303 = vcmask 97280
      %v1305 = vsel %vm1303, %v1289, 0
      %v1308 = vsel %vm1303, %v1290, 0
      %v1311 = vsel %vm1303, %v1291, 0
      %v1314 = vsel %vm1303, %v1292, 0
      %v1317 = vsel %vm1303, %v1293, 0
      %v1320 = vsel %vm1303, %v1294, 0
      %vm1322 = vcmask 1045504
      %v1324 = vsel %vm1322, %v1302, 0
      %1326 = vmatprep.subr.bf16.mxu0 0
      %1327 = vmatpush1.bf16.msra.mxu0 %v1324
      %1328 = vmatprep.subr.bf16.mxu0 0
      %1329 = vmatpush1.bf16.msra.mxu0 0
      %1330 = vmatprep.subr.bf16.mxu0 0
      %1331 = vmatpush1.bf16.msra.mxu0 0
      %1332 = vmatprep.subr.bf16.mxu0 0
      %1333 = vmatpush1.bf16.msra.mxu0 0
      %1334 = vmatprep.subr.bf16.mxu0 0
      %1335 = vmatpush1.bf16.msra.mxu0 0
      %1336 = vmatprep.subr.bf16.mxu0 0
      %1337 = vmatpush1.bf16.msra.mxu0 0
      %1338 = vmatprep.subr.bf16.mxu0 0
      %1339 = vmatpush1.bf16.msra.mxu0 0
      %1340 = vmatprep.subr.bf16.mxu0 0
      %1341 = vmatpush1.bf16.msra.mxu0 0
      %1342 = vmatprep.subr.bf16.mxu0 0
      %1343 = vmatpush1.bf16.msra.mxu0 0
      %1344 = vmatprep.subr.bf16.mxu0 0
      %1345 = vmatpush1.bf16.msra.mxu0 0
      %1346 = vmatprep.subr.bf16.mxu0 0
      %1347 = vmatpush1.bf16.msra.mxu0 0
      %1348 = vmatprep.subr.bf16.mxu0 0
      %1349 = vmatpush1.bf16.msra.mxu0 0
      %1350 = vmatprep.subr.bf16.mxu0 0
      %1351 = vmatpush1.bf16.msra.mxu0 0
      %1352 = vmatprep.subr.bf16.mxu0 0
      %1353 = vmatpush1.bf16.msra.mxu0 0
      %1354 = vmatprep.subr.bf16.mxu0 0
      %1355 = vmatpush1.bf16.msra.mxu0 0
      %1356 = vmatprep.subr.bf16.mxu0 0
      %1357 = vmatpush1.bf16.msra.mxu0 0
      %1358 = vmatprep.mubr.bf16.mxu0 0
      %1359 = vmatmul.mubr.bf16.gmra.mrb[0].mxu0 %v1305
      %v1360 = vpop.f32.mrb[0].mxu0
      %v1361 = vadd.f32 0.0, %v1360
      %v1362 = vpop.f32.mrb[0].mxu0
      %v1363 = vpop.f32.mrb[0].mxu0
      %v1364 = vadd.f32 0.0, %v1363
      %v1365 = vpop.f32.mrb[0].mxu0
      %1366 = vmatprep.mubr.bf16.mxu0 0
      %1367 = vmatmul.mubr.bf16.gmra.mrb[0].mxu0 %v1308
      %v1368 = vpop.f32.mrb[0].mxu0
      %v1369 = vadd.f32 0.0, %v1368
      %v1370 = vpop.f32.mrb[0].mxu0
      %v1371 = vpop.f32.mrb[0].mxu0
      %v1372 = vadd.f32 0.0, %v1371
      %v1373 = vpop.f32.mrb[0].mxu0
      %1374 = vmatprep.mubr.bf16.mxu0 0
      %1375 = vmatmul.mubr.bf16.gmra.mrb[0].mxu0 %v1311
      %v1376 = vpop.f32.mrb[0].mxu0
      %v1377 = vadd.f32 0.0, %v1376
      %v1378 = vpop.f32.mrb[0].mxu0
      %v1379 = vpop.f32.mrb[0].mxu0
      %v1380 = vadd.f32 0.0, %v1379
      %v1381 = vpop.f32.mrb[0].mxu0
      %1382 = vmatprep.mubr.bf16.mxu0 0
      %1383 = vmatmul.mubr.bf16.gmra.mrb[0].mxu0 %v1314
      %v1384 = vpop.f32.mrb[0].mxu0
      %v1385 = vadd.f32 0.0, %v1384
      %v1386 = vpop.f32.mrb[0].mxu0
      %v1387 = vpop.f32.mrb[0].mxu0
      %v1388 = vadd.f32 0.0, %v1387
      %v1389 = vpop.f32.mrb[0].mxu0
      %1390 = vmatprep.mubr.bf16.mxu0 0
      %1391 = vmatmul.mubr.bf16.gmra.mrb[0].mxu0 %v1317
      %v1392 = vpop.f32.mrb[0].mxu0
      %v1393 = vadd.f32 0.0, %v1392
      %v1394 = vpop.f32.mrb[0].mxu0
      %v1395 = vpop.f32.mrb[0].mxu0
      %v1396 = vadd.f32 0.0, %v1395
      %v1397 = vpop.f32.mrb[0].mxu0
      %1398 = vmatprep.mubr.bf16.mxu0 0
      %1399 = vmatmul.mubr.bf16.gmra.mrb[0].mxu0 %v1320
      %v1400 = vpop.f32.mrb[0].mxu0
      %v1401 = vadd.f32 0.0, %v1400
      %v1402 = vpop.f32.mrb[0].mxu0
      %v1403 = vpop.f32.mrb[0].mxu0
      %v1404 = vadd.f32 0.0, %v1403
      %v1405 = vpop.f32.mrb[0].mxu0
      %1406 = vdwg.mxu0
      %v1409 = vunpack.c.l.b16 %v1286
      %v1410 = vunpack.c.l.b16 %v1287
      %v1411 = vpack.c.b16 %v1410, %v1409
      %v1413 = vsel %vm1303, %v1280, 0
      %v1416 = vsel %vm1303, %v1281, 0
      %v1419 = vsel %vm1303, %v1282, 0
      %v1422 = vsel %vm1303, %v1283, 0
      %v1425 = vsel %vm1303, %v1284, 0
      %v1428 = vsel %vm1303, %v1285, 0
      %v1431 = vsel %vm1322, %v1411, 0
      %1433 = vmatprep.subr.bf16.mxu0 0
      %1434 = vmatpush1.bf16.msra.mxu0 %v1431
      %1435 = vmatprep.subr.bf16.mxu0 0
      %1436 = vmatpush1.bf16.msra.mxu0 0
      %1437 = vmatprep.subr.bf16.mxu0 0
      %1438 = vmatpush1.bf16.msra.mxu0 0
      %1439 = vmatprep.subr.bf16.mxu0 0
      %1440 = vmatpush1.bf16.msra.mxu0 0
      %1441 = vmatprep.subr.bf16.mxu0 0
      %1442 = vmatpush1.bf16.msra.mxu0 0
      %1443 = vmatprep.subr.bf16.mxu0 0
      %1444 = vmatpush1.bf16.msra.mxu0 0
      %1445 = vmatprep.subr.bf16.mxu0 0
      %1446 = vmatpush1.bf16.msra.mxu0 0
      %1447 = vmatprep.subr.bf16.mxu0 0
      %1448 = vmatpush1.bf16.msra.mxu0 0
      %1449 = vmatprep.subr.bf16.mxu0 0
      %1450 = vmatpush1.bf16.msra.mxu0 0
      %1451 = vmatprep.subr.bf16.mxu0 0
      %1452 = vmatpush1.bf16.msra.mxu0 0
      %1453 = vmatprep.subr.bf16.mxu0 0
      %1454 = vmatpush1.bf16.msra.mxu0 0
      %1455 = vmatprep.subr.bf16.mxu0 0
      %1456 = vmatpush1.bf16.msra.mxu0 0
      %1457 = vmatprep.subr.bf16.mxu0 0
      %1458 = vmatpush1.bf16.msra.mxu0 0
      %1459 = vmatprep.subr.bf16.mxu0 0
      %1460 = vmatpush1.bf16.msra.mxu0 0
      %1461 = vmatprep.subr.bf16.mxu0 0
      %1462 = vmatpush1.bf16.msra.mxu0 0
      %1463 = vmatprep.subr.bf16.mxu0 0
      %1464 = vmatpush1.bf16.msra.mxu0 0
      %1465 = vmatprep.mubr.bf16.mxu0 0
      %1466 = vmatmul.mubr.bf16.gmra.mrb[0].mxu0 %v1413
      %v1467 = vpop.f32.mrb[0].mxu0
      %v1468 = vadd.f32 %v1361, %v1467
      %v1469 = vpop.f32.mrb[0].mxu0
      %v1470 = vpop.f32.mrb[0].mxu0
      %v1471 = vadd.f32 %v1364, %v1470
      %v1472 = vpop.f32.mrb[0].mxu0
      %1473 = vmatprep.mubr.bf16.mxu0 0
      %1474 = vmatmul.mubr.bf16.gmra.mrb[0].mxu0 %v1416
      %v1475 = vpop.f32.mrb[0].mxu0
      %v1476 = vadd.f32 %v1369, %v1475
      %v1477 = vpop.f32.mrb[0].mxu0
      %v1478 = vpop.f32.mrb[0].mxu0
      %v1479 = vadd.f32 %v1372, %v1478
      %v1480 = vpop.f32.mrb[0].mxu0
      %1481 = vmatprep.mubr.bf16.mxu0 0
      %1482 = vmatmul.mubr.bf16.gmra.mrb[0].mxu0 %v1419
      %v1483 = vpop.f32.mrb[0].mxu0
      %v1484 = vadd.f32 %v1377, %v1483
      %v1485 = vpop.f32.mrb[0].mxu0
      %v1486 = vpop.f32.mrb[0].mxu0
      %v1487 = vadd.f32 %v1380, %v1486
      %v1488 = vpop.f32.mrb[0].mxu0
      %1489 = vmatprep.mubr.bf16.mxu0 0
      %1490 = vmatmul.mubr.bf16.gmra.mrb[0].mxu0 %v1422
      %v1491 = vpop.f32.mrb[0].mxu0
      %v1492 = vadd.f32 %v1385, %v1491
      %v1493 = vpop.f32.mrb[0].mxu0
      %v1494 = vpop.f32.mrb[0].mxu0
      %v1495 = vadd.f32 %v1388, %v1494
      %v1496 = vpop.f32.mrb[0].mxu0
      %1497 = vmatprep.mubr.bf16.mxu0 0
      %1498 = vmatmul.mubr.bf16.gmra.mrb[0].mxu0 %v1425
      %v1499 = vpop.f32.mrb[0].mxu0
      %v1500 = vadd.f32 %v1393, %v1499
      %v1501 = vpop.f32.mrb[0].mxu0
      %v1502 = vpop.f32.mrb[0].mxu0
      %v1503 = vadd.f32 %v1396, %v1502
      %v1504 = vpop.f32.mrb[0].mxu0
      %1505 = vmatprep.mubr.bf16.mxu0 0
      %1506 = vmatmul.mubr.bf16.gmra.mrb[0].mxu0 %v1428
      %v1507 = vpop.f32.mrb[0].mxu0
      %v1508 = vadd.f32 %v1401, %v1507
      %v1509 = vpop.f32.mrb[0].mxu0
      %v1510 = vpop.f32.mrb[0].mxu0
      %v1511 = vadd.f32 %v1404, %v1510
      %v1512 = vpop.f32.mrb[0].mxu0
      %1513 = vdwg.mxu0
      %s1514 = scalar_lea.vmem [#allocation3], 16
      %v1515 = vld [vmem:[%s1514] sm:$0xff]
      %v1516 = vld [vmem:[%s1514 + $0x8] sm:$0xff]
      %v1517 = vld [vmem:[%s1514 + $0x10] sm:$0xff]
      %v1518 = vld [vmem:[%s1514 + $0x18] sm:$0xff]
      %v1519 = vld [vmem:[%s1514 + $0x20] sm:$0xff]
      %v1520 = vld [vmem:[%s1514 + $0x28] sm:$0xff]
      %s1521 = scalar_lea.vmem %s3, 16
      %v1522 = vld [vmem:[%s1521] sm:$0xf]
      %v1523 = vld [vmem:[%s1521 + $0x4] sm:$0x3]
      %v1526 = vunpack.c.l.b16 %v1522
      %v1527 = vunpack.c.l.b16 %v1523
      %v1528 = vpack.c.b16 %v1527, %v1526
      %v1530 = vsel %vm1303, %v1515, 0
      %v1533 = vsel %vm1303, %v1516, 0
      %v1536 = vsel %vm1303, %v1517, 0
      %v1539 = vsel %vm1303, %v1518, 0
      %v1542 = vsel %vm1303, %v1519, 0
      %v1545 = vsel %vm1303, %v1520, 0
      %v1548 = vsel %vm1322, %v1528, 0
      %1550 = vmatprep.subr.bf16.mxu0 0
      %1551 = vmatpush1.bf16.msra.mxu0 %v1548
      %1552 = vmatprep.subr.bf16.mxu0 0
      %1553 = vmatpush1.bf16.msra.mxu0 0
      %1554 = vmatprep.subr.bf16.mxu0 0
      %1555 = vmatpush1.bf16.msra.mxu0 0
      %1556 = vmatprep.subr.bf16.mxu0 0
      %1557 = vmatpush1.bf16.msra.mxu0 0
      %1558 = vmatprep.subr.bf16.mxu0 0
      %1559 = vmatpush1.bf16.msra.mxu0 0
      %1560 = vmatprep.subr.bf16.mxu0 0
      %1561 = vmatpush1.bf16.msra.mxu0 0
      %1562 = vmatprep.subr.bf16.mxu0 0
      %1563 = vmatpush1.bf16.msra.mxu0 0
      %1564 = vmatprep.subr.bf16.mxu0 0
      %1565 = vmatpush1.bf16.msra.mxu0 0
      %1566 = vmatprep.subr.bf16.mxu0 0
      %1567 = vmatpush1.bf16.msra.mxu0 0
      %1568 = vmatprep.subr.bf16.mxu0 0
      %1569 = vmatpush1.bf16.msra.mxu0 0
      %1570 = vmatprep.subr.bf16.mxu0 0
      %1571 = vmatpush1.bf16.msra.mxu0 0
      %1572 = vmatprep.subr.bf16.mxu0 0
      %1573 = vmatpush1.bf16.msra.mxu0 0
      %1574 = vmatprep.subr.bf16.mxu0 0
      %1575 = vmatpush1.bf16.msra.mxu0 0
      %1576 = vmatprep.subr.bf16.mxu0 0
      %1577 = vmatpush1.bf16.msra.mxu0 0
      %1578 = vmatprep.subr.bf16.mxu0 0
      %1579 = vmatpush1.bf16.msra.mxu0 0
      %1580 = vmatprep.subr.bf16.mxu0 0
      %1581 = vmatpush1.bf16.msra.mxu0 0
      %1582 = vmatprep.mubr.bf16.mxu0 0
      %1583 = vmatmul.mubr.bf16.gmra.mrb[0].mxu0 %v1530
      %v1584 = vpop.f32.mrb[0].mxu0
      %v1585 = vadd.f32 0.0, %v1584
      %v1586 = vpop.f32.mrb[0].mxu0
      %v1587 = vpop.f32.mrb[0].mxu0
      %v1588 = vadd.f32 0.0, %v1587
      %v1589 = vpop.f32.mrb[0].mxu0
      %1590 = vmatprep.mubr.bf16.mxu0 0
      %1591 = vmatmul.mubr.bf16.gmra.mrb[0].mxu0 %v1533
      %v1592 = vpop.f32.mrb[0].mxu0
      %v1593 = vadd.f32 0.0, %v1592
      %v1594 = vpop.f32.mrb[0].mxu0
      %v1595 = vpop.f32.mrb[0].mxu0
      %v1596 = vadd.f32 0.0, %v1595
      %v1597 = vpop.f32.mrb[0].mxu0
      %1598 = vmatprep.mubr.bf16.mxu0 0
      %1599 = vmatmul.mubr.bf16.gmra.mrb[0].mxu0 %v1536
      %v1600 = vpop.f32.mrb[0].mxu0
      %v1601 = vadd.f32 0.0, %v1600
      %v1602 = vpop.f32.mrb[0].mxu0
      %v1603 = vpop.f32.mrb[0].mxu0
      %v1604 = vadd.f32 0.0, %v1603
      %v1605 = vpop.f32.mrb[0].mxu0
      %1606 = vmatprep.mubr.bf16.mxu0 0
      %1607 = vmatmul.mubr.bf16.gmra.mrb[0].mxu0 %v1539
      %v1608 = vpop.f32.mrb[0].mxu0
      %v1609 = vadd.f32 0.0, %v1608
      %v1610 = vpop.f32.mrb[0].mxu0
      %v1611 = vpop.f32.mrb[0].mxu0
      %v1612 = vadd.f32 0.0, %v1611
      %v1613 = vpop.f32.mrb[0].mxu0
      %1614 = vmatprep.mubr.bf16.mxu0 0
      %1615 = vmatmul.mubr.bf16.gmra.mrb[0].mxu0 %v1542
      %v1616 = vpop.f32.mrb[0].mxu0
      %v1617 = vadd.f32 0.0, %v1616
      %v1618 = vpop.f32.mrb[0].mxu0
      %v1619 = vpop.f32.mrb[0].mxu0
      %v1620 = vadd.f32 0.0, %v1619
      %v1621 = vpop.f32.mrb[0].mxu0
      %1622 = vmatprep.mubr.bf16.mxu0 0
      %1623 = vmatmul.mubr.bf16.gmra.mrb[0].mxu0 %v1545
      %v1624 = vpop.f32.mrb[0].mxu0
      %v1625 = vadd.f32 0.0, %v1624
      %v1626 = vpop.f32.mrb[0].mxu0
      %v1627 = vpop.f32.mrb[0].mxu0
      %v1628 = vadd.f32 0.0, %v1627
      %v1629 = vpop.f32.mrb[0].mxu0
      %1630 = vdwg.mxu0
      %v1631 = vadd.f32 %v1468, %v1585
      %v1632 = vadd.f32 %v1471, %v1588
      %v1633 = vadd.f32 %v1476, %v1593
      %v1634 = vadd.f32 %v1479, %v1596
      %v1635 = vadd.f32 %v1484, %v1601
      %v1636 = vadd.f32 %v1487, %v1604
      %v1637 = vadd.f32 %v1492, %v1609
      %v1638 = vadd.f32 %v1495, %v1612
      %v1639 = vadd.f32 %v1500, %v1617
      %v1640 = vadd.f32 %v1503, %v1620
      %v1641 = vadd.f32 %v1508, %v1625
      %v1642 = vadd.f32 %v1511, %v1628
      %v1643 = vld [vmem:[%s4] sm:$0x1]
      %v1645 = vlaneseq
      %v1646 = vshrl.u32 %v1645, 7
      %v1647 = vsub.s32 0, %v1646
      %v1648 = vrot.slane %v1643, %v1647
      %v1650 = vadd.f32 %v1631, %v1648
      %v1651 = vadd.f32 %v1632, %v1648
      %v1652 = vadd.f32 %v1633, %v1648
      %v1653 = vadd.f32 %v1634, %v1648
      %v1654 = vadd.f32 %v1635, %v1648
      %v1655 = vadd.f32 %v1636, %v1648
      %v1656 = vadd.f32 %v1637, %v1648
      %v1657 = vadd.f32 %v1638, %v1648
      %v1658 = vadd.f32 %v1639, %v1648
      %v1659 = vadd.f32 %v1640, %v1648
      %v1660 = vadd.f32 %v1641, %v1648
      %v1661 = vadd.f32 %v1642, %v1648
      %v1662 = vmax.f32 %v1650, 0.0
      %v1663 = vmax.f32 %v1651, 0.0
      %v1664 = vmax.f32 %v1652, 0.0
      %v1665 = vmax.f32 %v1653, 0.0
      %v1666 = vmax.f32 %v1654, 0.0
      %v1667 = vmax.f32 %v1655, 0.0
      %v1668 = vmax.f32 %v1656, 0.0
      %v1669 = vmax.f32 %v1657, 0.0
      %v1670 = vmax.f32 %v1658, 0.0
      %v1671 = vmax.f32 %v1659, 0.0
      %v1672 = vmax.f32 %v1660, 0.0
      %v1673 = vmax.f32 %v1661, 0.0
      %v1674 = vpack.c.bf16 %v1663, %v1662
      %v1675 = vpack.c.bf16 %v1665, %v1664
      %v1676 = vpack.c.bf16 %v1667, %v1666
      %v1677 = vpack.c.bf16 %v1669, %v1668
      %v1678 = vpack.c.bf16 %v1671, %v1670
      %v1679 = vpack.c.bf16 %v1673, %v1672
      %vm1680 = vcmask 1040384
      %vm1681 = vmand %vm1680, %vm459
      %v1682 = vld [vmem:[#allocation4] sm:$0x1]
      %v1683 = vsel %vm1681, 0, %v1682
      %1684 = vst [vmem:[#allocation4] sm:$0x1] %v1683
      %v1685 = vld [vmem:[#allocation4 + $0xc] sm:$0x1]
      %v1686 = vsel %vm1681, 0, %v1685
      %1687 = vst [vmem:[#allocation4 + $0xc] sm:$0x1] %v1686
      %v1688 = vld [vmem:[#allocation4 + $0x18] sm:$0x1]
      %v1689 = vsel %vm1681, 0, %v1688
      %1690 = vst [vmem:[#allocation4 + $0x18] sm:$0x1] %v1689
      %v1691 = vld [vmem:[#allocation4 + $0x24] sm:$0x1]
      %v1692 = vsel %vm1681, 0, %v1691
      %1693 = vst [vmem:[#allocation4 + $0x24] sm:$0x1] %v1692
      %v1694 = vld [vmem:[#allocation4 + $0x30] sm:$0x1]
      %v1695 = vsel %vm1681, 0, %v1694
      %1696 = vst [vmem:[#allocation4 + $0x30] sm:$0x1] %v1695
      %v1697 = vld [vmem:[#allocation4 + $0x3c] sm:$0x1]
      %v1698 = vsel %vm1681, 0, %v1697
      %1699 = vst [vmem:[#allocation4 + $0x3c] sm:$0x1] %v1698
      %vm1700 = vmand %vm1680, %vm485
      %v1701 = vld [vmem:[#allocation4 + $0x8] sm:$0x1]
      %v1702 = vsel %vm1700, 0, %v1701
      %1703 = vst [vmem:[#allocation4 + $0x8] sm:$0x1] %v1702
      %v1704 = vld [vmem:[#allocation4 + $0x14] sm:$0x1]
      %v1705 = vsel %vm1700, 0, %v1704
      %1706 = vst [vmem:[#allocation4 + $0x14] sm:$0x1] %v1705
      %v1707 = vld [vmem:[#allocation4 + $0x20] sm:$0x1]
      %v1708 = vsel %vm1700, 0, %v1707
      %1709 = vst [vmem:[#allocation4 + $0x20] sm:$0x1] %v1708
      %v1710 = vld [vmem:[#allocation4 + $0x2c] sm:$0x1]
      %v1711 = vsel %vm1700, 0, %v1710
      %1712 = vst [vmem:[#allocation4 + $0x2c] sm:$0x1] %v1711
      %v1713 = vld [vmem:[#allocation4 + $0x38] sm:$0x1]
      %v1714 = vsel %vm1700, 0, %v1713
      %1715 = vst [vmem:[#allocation4 + $0x38] sm:$0x1] %v1714
      %v1716 = vld [vmem:[#allocation4 + $0x44] sm:$0x1]
      %v1717 = vsel %vm1700, 0, %v1716
      %1718 = vst [vmem:[#allocation4 + $0x44] sm:$0x1] %v1717
      %v1725 = vunpack.c.l.b16 %v1674
      %v1726 = vunpack.c.h.b16 %v1674
      %v1727 = vunpack.c.l.b16 %v1675
      %v1728 = vunpack.c.h.b16 %v1675
      %v1729 = vunpack.c.l.b16 %v1676
      %v1730 = vunpack.c.h.b16 %v1676
      %v1731 = vunpack.c.l.b16 %v1677
      %v1732 = vunpack.c.h.b16 %v1677
      %v1733 = vunpack.c.l.b16 %v1678
      %v1734 = vunpack.c.h.b16 %v1678
      %v1735 = vunpack.c.l.b16 %v1679
      %v1736 = vunpack.c.h.b16 %v1679
      %v1737 = vpack.c.b16 %v1725, %v1725
      %v1738 = vpack.c.b16 %v1726, %v1726
      %v1739 = vpack.c.b16 %v1727, %v1727
      %v1740 = vpack.c.b16 %v1728, %v1728
      %v1741 = vpack.c.b16 %v1729, %v1729
      %v1742 = vpack.c.b16 %v1730, %v1730
      %v1743 = vpack.c.b16 %v1731, %v1731
      %v1744 = vpack.c.b16 %v1732, %v1732
      %v1745 = vpack.c.b16 %v1733, %v1733
      %v1746 = vpack.c.b16 %v1734, %v1734
      %v1747 = vpack.c.b16 %v1735, %v1735
      %v1748 = vpack.c.b16 %v1736, %v1736
      %v1750 = vshrl.u32 %v1737, 16
      %v1752 = vrot.slane %v1750, 7
      %v1753 = vshll.u32 %v1737, 16
      %v1755 = vor.u32 %v1752, %v1753
      %v1756 = vrot.slane %v1752, 4
      %v1758 = vshrl.u32 %v1738, 16
      %v1760 = vrot.slane %v1758, 7
      %v1761 = vshll.u32 %v1738, 16
      %v1763 = vor.u32 %v1760, %v1761
      %v1764 = vsel %vm544, %v1756, %v1763
      %v1765 = vrot.slane %v1760, 4
      %v1767 = vshrl.u32 %v1739, 16
      %v1769 = vrot.slane %v1767, 7
      %v1770 = vshll.u32 %v1739, 16
      %v1772 = vor.u32 %v1769, %v1770
      %v1773 = vrot.slane %v1769, 4
      %v1775 = vshrl.u32 %v1740, 16
      %v1777 = vrot.slane %v1775, 7
      %v1778 = vshll.u32 %v1740, 16
      %v1780 = vor.u32 %v1777, %v1778
      %v1781 = vsel %vm544, %v1773, %v1780
      %v1782 = vrot.slane %v1777, 4
      %v1784 = vshrl.u32 %v1741, 16
      %v1786 = vrot.slane %v1784, 7
      %v1787 = vshll.u32 %v1741, 16
      %v1789 = vor.u32 %v1786, %v1787
      %v1790 = vrot.slane %v1786, 4
      %v1792 = vshrl.u32 %v1742, 16
      %v1794 = vrot.slane %v1792, 7
      %v1795 = vshll.u32 %v1742, 16
      %v1797 = vor.u32 %v1794, %v1795
      %v1798 = vsel %vm544, %v1790, %v1797
      %v1799 = vrot.slane %v1794, 4
      %v1801 = vshrl.u32 %v1743, 16
      %v1803 = vrot.slane %v1801, 7
      %v1804 = vshll.u32 %v1743, 16
      %v1806 = vor.u32 %v1803, %v1804
      %v1807 = vrot.slane %v1803, 4
      %v1809 = vshrl.u32 %v1744, 16
      %v1811 = vrot.slane %v1809, 7
      %v1812 = vshll.u32 %v1744, 16
      %v1814 = vor.u32 %v1811, %v1812
      %v1815 = vsel %vm544, %v1807, %v1814
      %v1816 = vrot.slane %v1811, 4
      %v1818 = vshrl.u32 %v1745, 16
      %v1820 = vrot.slane %v1818, 7
      %v1821 = vshll.u32 %v1745, 16
      %v1823 = vor.u32 %v1820, %v1821
      %v1824 = vrot.slane %v1820, 4
      %v1826 = vshrl.u32 %v1746, 16
      %v1828 = vrot.slane %v1826, 7
      %v1829 = vshll.u32 %v1746, 16
      %v1831 = vor.u32 %v1828, %v1829
      %v1832 = vsel %vm544, %v1824, %v1831
      %v1833 = vrot.slane %v1828, 4
      %v1835 = vshrl.u32 %v1747, 16
      %v1837 = vrot.slane %v1835, 7
      %v1838 = vshll.u32 %v1747, 16
      %v1840 = vor.u32 %v1837, %v1838
      %v1841 = vrot.slane %v1837, 4
      %v1843 = vshrl.u32 %v1748, 16
      %v1845 = vrot.slane %v1843, 7
      %v1846 = vshll.u32 %v1748, 16
      %v1848 = vor.u32 %v1845, %v1846
      %v1849 = vsel %vm544, %v1841, %v1848
      %v1850 = vrot.slane %v1845, 4
      %vm1869 = vcmask 1043456
      %vm1870 = vmand %vm1869, %vm485
      %v1871 = vld [vmem:[#allocation4] sm:$0xf]
      %v1872 = vsel %vm1870, %v1755, %v1871
      %1873 = vst [vmem:[#allocation4] sm:$0xf] %v1872
      %1874 = vst [vmem:[#allocation4 + $0x4] sm:$0xf] %v1764
      %v1875 = vld [vmem:[#allocation4 + $0x8] sm:$0x1]
      %v1876 = vsel %vm1681, %v1765, %v1875
      %1877 = vst [vmem:[#allocation4 + $0x8] sm:$0x1] %v1876
      %v1878 = vld [vmem:[#allocation4 + $0xc] sm:$0xf]
      %v1879 = vsel %vm1870, %v1772, %v1878
      %1880 = vst [vmem:[#allocation4 + $0xc] sm:$0xf] %v1879
      %1881 = vst [vmem:[#allocation4 + $0x10] sm:$0xf] %v1781
      %v1882 = vld [vmem:[#allocation4 + $0x14] sm:$0x1]
      %v1883 = vsel %vm1681, %v1782, %v1882
      %1884 = vst [vmem:[#allocation4 + $0x14] sm:$0x1] %v1883
      %v1885 = vld [vmem:[#allocation4 + $0x18] sm:$0xf]
      %v1886 = vsel %vm1870, %v1789, %v1885
      %1887 = vst [vmem:[#allocation4 + $0x18] sm:$0xf] %v1886
      %1888 = vst [vmem:[#allocation4 + $0x1c] sm:$0xf] %v1798
      %v1889 = vld [vmem:[#allocation4 + $0x20] sm:$0x1]
      %v1890 = vsel %vm1681, %v1799, %v1889
      %1891 = vst [vmem:[#allocation4 + $0x20] sm:$0x1] %v1890
      %v1892 = vld [vmem:[#allocation4 + $0x24] sm:$0xf]
      %v1893 = vsel %vm1870, %v1806, %v1892
      %1894 = vst [vmem:[#allocation4 + $0x24] sm:$0xf] %v1893
      %1895 = vst [vmem:[#allocation4 + $0x28] sm:$0xf] %v1815
      %v1896 = vld [vmem:[#allocation4 + $0x2c] sm:$0x1]
      %v1897 = vsel %vm1681, %v1816, %v1896
      %1898 = vst [vmem:[#allocation4 + $0x2c] sm:$0x1] %v1897
      %v1899 = vld [vmem:[#allocation4 + $0x30] sm:$0xf]
      %v1900 = vsel %vm1870, %v1823, %v1899
      %1901 = vst [vmem:[#allocation4 + $0x30] sm:$0xf] %v1900
      %1902 = vst [vmem:[#allocation4 + $0x34] sm:$0xf] %v1832
      %v1903 = vld [vmem:[#allocation4 + $0x38] sm:$0x1]
      %v1904 = vsel %vm1681, %v1833, %v1903
      %1905 = vst [vmem:[#allocation4 + $0x38] sm:$0x1] %v1904
      %v1906 = vld [vmem:[#allocation4 + $0x3c] sm:$0xf]
      %v1907 = vsel %vm1870, %v1840, %v1906
      %1908 = vst [vmem:[#allocation4 + $0x3c] sm:$0xf] %v1907
      %1909 = vst [vmem:[#allocation4 + $0x40] sm:$0xf] %v1849
      %v1910 = vld [vmem:[#allocation4 + $0x44] sm:$0x1]
      %v1911 = vsel %vm1681, %v1850, %v1910
      %1912 = vst [vmem:[#allocation4 + $0x44] sm:$0x1] %v1911
      // Predicated region
      $region65: #{tpu_custom_call.1} parent=47 // pred_check
        %p1913 = pneg %p657
      $region66: #{tpu_custom_call.1} parent=47 // pred_check_branch
        %1915 = sbr.rel (%p1913) target = $region68
      $region67: #{tpu_custom_call.1} parent=47 // pred_region
        %1916 = vst [vmem:[#allocation4] sm:$0xf] 0
        %1917 = vst [vmem:[#allocation4 + $0x4] sm:$0xf] 0
        %1918 = vst [vmem:[#allocation4 + $0x8] sm:$0x1] 0
      $region68: #{tpu_custom_call.1} parent=47 // pred_fallthru
        _
      // Predicated region
      $region69: #{tpu_custom_call.1} parent=47 // pred_check
        %p1919 = pneg %p749
      $region70: #{tpu_custom_call.1} parent=47 // pred_check_branch
        %1921 = sbr.rel (%p1919) target = $region72
      $region71: #{tpu_custom_call.1} parent=47 // pred_region
        %s1922 = scalar_lea.vmem [#allocation4], 60
        %1923 = vst [vmem:[%s1922] sm:$0xf] 0
        %1924 = vst [vmem:[%s1922 + $0x4] sm:$0xf] 0
        %1925 = vst [vmem:[%s1922 + $0x8] sm:$0x1] 0
      $region72: #{tpu_custom_call.1} parent=47 // pred_fallthru
        _
      %v1926 = vld [vmem:[#allocation4] sm:$0xf]
      %v1927 = vld [vmem:[#allocation4 + $0x4] sm:$0xf]
      %v1928 = vld [vmem:[#allocation4 + $0xc] sm:$0xf]
      %v1929 = vld [vmem:[#allocation4 + $0x10] sm:$0xf]
      %v1930 = vld [vmem:[#allocation4 + $0x18] sm:$0xf]
      %v1931 = vld [vmem:[#allocation4 + $0x1c] sm:$0xf]
      %v1932 = vld [vmem:[#allocation4 + $0x24] sm:$0xf]
      %v1933 = vld [vmem:[#allocation4 + $0x28] sm:$0xf]
      %v1934 = vld [vmem:[#allocation4 + $0x30] sm:$0xf]
      %v1935 = vld [vmem:[#allocation4 + $0x34] sm:$0xf]
      %v1936 = vld [vmem:[#allocation4 + $0x3c] sm:$0xf]
      %v1937 = vld [vmem:[#allocation4 + $0x40] sm:$0xf]
      %v1950 = vunpack.c.l.b16 %v1926
      %v1951 = vunpack.c.l.b16 %v1927
      %v1952 = vunpack.c.l.b16 %v1928
      %v1953 = vunpack.c.l.b16 %v1929
      %v1954 = vunpack.c.l.b16 %v1930
      %v1955 = vunpack.c.l.b16 %v1931
      %v1956 = vunpack.c.l.b16 %v1932
      %v1957 = vunpack.c.l.b16 %v1933
      %v1958 = vunpack.c.l.b16 %v1934
      %v1959 = vunpack.c.l.b16 %v1935
      %v1960 = vunpack.c.l.b16 %v1936
      %v1961 = vunpack.c.l.b16 %v1937
      %v1962 = vpack.c.b16 %v1951, %v1950
      %v1963 = vpack.c.b16 %v1953, %v1952
      %v1964 = vpack.c.b16 %v1955, %v1954
      %v1965 = vpack.c.b16 %v1957, %v1956
      %v1966 = vpack.c.b16 %v1959, %v1958
      %v1967 = vpack.c.b16 %v1961, %v1960
      %1974 = vst [vmem:[#allocation5] sm:$0xff] %v1962
      %1975 = vst [vmem:[#allocation5 + $0x18] sm:$0xff] %v1963
      %1976 = vst [vmem:[#allocation5 + $0x30] sm:$0xff] %v1964
      %1977 = vst [vmem:[#allocation5 + $0x48] sm:$0xff] %v1965
      %1978 = vst [vmem:[#allocation5 + $0x60] sm:$0xff] %v1966
      %1979 = vst [vmem:[#allocation5 + $0x78] sm:$0xff] %v1967
      %v1980 = vld [vmem:[#allocation4] sm:$0xf]
      %v1981 = vld [vmem:[#allocation4 + $0x4] sm:$0xf]
      %v1982 = vld [vmem:[#allocation4 + $0x8] sm:$0x1]
      %v1983 = vld [vmem:[#allocation4 + $0xc] sm:$0xf]
      %v1984 = vld [vmem:[#allocation4 + $0x10] sm:$0xf]
      %v1985 = vld [vmem:[#allocation4 + $0x14] sm:$0x1]
      %v1986 = vld [vmem:[#allocation4 + $0x18] sm:$0xf]
      %v1987 = vld [vmem:[#allocation4 + $0x1c] sm:$0xf]
      %v1988 = vld [vmem:[#allocation4 + $0x20] sm:$0x1]
      %v1989 = vld [vmem:[#allocation4 + $0x24] sm:$0xf]
      %v1990 = vld [vmem:[#allocation4 + $0x28] sm:$0xf]
      %v1991 = vld [vmem:[#allocation4 + $0x2c] sm:$0x1]
      %v1992 = vld [vmem:[#allocation4 + $0x30] sm:$0xf]
      %v1993 = vld [vmem:[#allocation4 + $0x34] sm:$0xf]
      %v1994 = vld [vmem:[#allocation4 + $0x38] sm:$0x1]
      %v1995 = vld [vmem:[#allocation4 + $0x3c] sm:$0xf]
      %v1996 = vld [vmem:[#allocation4 + $0x40] sm:$0xf]
      %v1997 = vld [vmem:[#allocation4 + $0x44] sm:$0x1]
      %v2016 = vunpack.c.l.b16 %v1980
      %v2017 = vunpack.c.l.b16 %v1981
      %v2018 = vunpack.c.l.b16 %v1982
      %v2019 = vunpack.c.l.b16 %v1983
      %v2020 = vunpack.c.l.b16 %v1984
      %v2021 = vunpack.c.l.b16 %v1985
      %v2022 = vunpack.c.l.b16 %v1986
      %v2023 = vunpack.c.l.b16 %v1987
      %v2024 = vunpack.c.l.b16 %v1988
      %v2025 = vunpack.c.l.b16 %v1989
      %v2026 = vunpack.c.l.b16 %v1990
      %v2027 = vunpack.c.l.b16 %v1991
      %v2028 = vunpack.c.l.b16 %v1992
      %v2029 = vunpack.c.l.b16 %v1993
      %v2030 = vunpack.c.l.b16 %v1994
      %v2031 = vunpack.c.l.b16 %v1995
      %v2032 = vunpack.c.l.b16 %v1996
      %v2033 = vunpack.c.l.b16 %v1997
      %v2034 = vpack.c.b16 %v2017, %v2016
      %v2035 = vpack.c.b16 %v2018, %v2018
      %v2036 = vpack.c.b16 %v2020, %v2019
      %v2037 = vpack.c.b16 %v2021, %v2021
      %v2038 = vpack.c.b16 %v2023, %v2022
      %v2039 = vpack.c.b16 %v2024, %v2024
      %v2040 = vpack.c.b16 %v2026, %v2025
      %v2041 = vpack.c.b16 %v2027, %v2027
      %v2042 = vpack.c.b16 %v2029, %v2028
      %v2043 = vpack.c.b16 %v2030, %v2030
      %v2044 = vpack.c.b16 %v2032, %v2031
      %v2045 = vpack.c.b16 %v2033, %v2033
      %v2047 = vshrl.u32 %v2034, 16
      %v2049 = vshll.u32 %v2034, 16
      %v2051 = vrot.slane %v2049, 1
      %v2052 = vor.u32 %v2047, %v2051
      %v2054 = vshll.u32 %v2035, 16
      %v2056 = vrot.slane %v2054, 1
      %v2057 = vsel %vm1004, %v2052, %v2056
      %v2059 = vshrl.u32 %v2036, 16
      %v2061 = vshll.u32 %v2036, 16
      %v2063 = vrot.slane %v2061, 1
      %v2064 = vor.u32 %v2059, %v2063
      %v2066 = vshll.u32 %v2037, 16
      %v2068 = vrot.slane %v2066, 1
      %v2069 = vsel %vm1004, %v2064, %v2068
      %v2071 = vshrl.u32 %v2038, 16
      %v2073 = vshll.u32 %v2038, 16
      %v2075 = vrot.slane %v2073, 1
      %v2076 = vor.u32 %v2071, %v2075
      %v2078 = vshll.u32 %v2039, 16
      %v2080 = vrot.slane %v2078, 1
      %v2081 = vsel %vm1004, %v2076, %v2080
      %v2083 = vshrl.u32 %v2040, 16
      %v2085 = vshll.u32 %v2040, 16
      %v2087 = vrot.slane %v2085, 1
      %v2088 = vor.u32 %v2083, %v2087
      %v2090 = vshll.u32 %v2041, 16
      %v2092 = vrot.slane %v2090, 1
      %v2093 = vsel %vm1004, %v2088, %v2092
      %v2095 = vshrl.u32 %v2042, 16
      %v2097 = vshll.u32 %v2042, 16
      %v2099 = vrot.slane %v2097, 1
      %v2100 = vor.u32 %v2095, %v2099
      %v2102 = vshll.u32 %v2043, 16
      %v2104 = vrot.slane %v2102, 1
      %v2105 = vsel %vm1004, %v2100, %v2104
      %v2107 = vshrl.u32 %v2044, 16
      %v2109 = vshll.u32 %v2044, 16
      %v2111 = vrot.slane %v2109, 1
      %v2112 = vor.u32 %v2107, %v2111
      %v2114 = vshll.u32 %v2045, 16
      %v2116 = vrot.slane %v2114, 1
      %v2117 = vsel %vm1004, %v2112, %v2116
      %2124 = vst [vmem:[#allocation5 + $0x8] sm:$0xff] %v2057
      %2125 = vst [vmem:[#allocation5 + $0x20] sm:$0xff] %v2069
      %2126 = vst [vmem:[#allocation5 + $0x38] sm:$0xff] %v2081
      %2127 = vst [vmem:[#allocation5 + $0x50] sm:$0xff] %v2093
      %2128 = vst [vmem:[#allocation5 + $0x68] sm:$0xff] %v2105
      %2129 = vst [vmem:[#allocation5 + $0x80] sm:$0xff] %v2117
      %v2130 = vld [vmem:[#allocation4] sm:$0xe]
      %v2131 = vld [vmem:[#allocation4 + $0x4] sm:$0xf]
      %v2132 = vld [vmem:[#allocation4 + $0x8] sm:$0x1]
      %v2133 = vld [vmem:[#allocation4 + $0xc] sm:$0xe]
      %v2134 = vld [vmem:[#allocation4 + $0x10] sm:$0xf]
      %v2135 = vld [vmem:[#allocation4 + $0x14] sm:$0x1]
      %v2136 = vld [vmem:[#allocation4 + $0x18] sm:$0xe]
      %v2137 = vld [vmem:[#allocation4 + $0x1c] sm:$0xf]
      %v2138 = vld [vmem:[#allocation4 + $0x20] sm:$0x1]
      %v2139 = vld [vmem:[#allocation4 + $0x24] sm:$0xe]
      %v2140 = vld [vmem:[#allocation4 + $0x28] sm:$0xf]
      %v2141 = vld [vmem:[#allocation4 + $0x2c] sm:$0x1]
      %v2142 = vld [vmem:[#allocation4 + $0x30] sm:$0xe]
      %v2143 = vld [vmem:[#allocation4 + $0x34] sm:$0xf]
      %v2144 = vld [vmem:[#allocation4 + $0x38] sm:$0x1]
      %v2145 = vld [vmem:[#allocation4 + $0x3c] sm:$0xe]
      %v2146 = vld [vmem:[#allocation4 + $0x40] sm:$0xf]
      %v2147 = vld [vmem:[#allocation4 + $0x44] sm:$0x1]
      %v2166 = vunpack.c.l.b16 %v2130
      %v2167 = vunpack.c.l.b16 %v2131
      %v2168 = vunpack.c.l.b16 %v2132
      %v2169 = vunpack.c.l.b16 %v2133
      %v2170 = vunpack.c.l.b16 %v2134
      %v2171 = vunpack.c.l.b16 %v2135
      %v2172 = vunpack.c.l.b16 %v2136
      %v2173 = vunpack.c.l.b16 %v2137
      %v2174 = vunpack.c.l.b16 %v2138
      %v2175 = vunpack.c.l.b16 %v2139
      %v2176 = vunpack.c.l.b16 %v2140
      %v2177 = vunpack.c.l.b16 %v2141
      %v2178 = vunpack.c.l.b16 %v2142
      %v2179 = vunpack.c.l.b16 %v2143
      %v2180 = vunpack.c.l.b16 %v2144
      %v2181 = vunpack.c.l.b16 %v2145
      %v2182 = vunpack.c.l.b16 %v2146
      %v2183 = vunpack.c.l.b16 %v2147
      %v2184 = vpack.c.b16 %v2167, %v2166
      %v2185 = vpack.c.b16 %v2168, %v2168
      %v2186 = vpack.c.b16 %v2170, %v2169
      %v2187 = vpack.c.b16 %v2171, %v2171
      %v2188 = vpack.c.b16 %v2173, %v2172
      %v2189 = vpack.c.b16 %v2174, %v2174
      %v2190 = vpack.c.b16 %v2176, %v2175
      %v2191 = vpack.c.b16 %v2177, %v2177
      %v2192 = vpack.c.b16 %v2179, %v2178
      %v2193 = vpack.c.b16 %v2180, %v2180
      %v2194 = vpack.c.b16 %v2182, %v2181
      %v2195 = vpack.c.b16 %v2183, %v2183
      %v2196 = vrot.slane %v2184, 1
      %v2197 = vrot.slane %v2185, 1
      %v2198 = vsel %vm1222, %v2196, %v2197
      %v2199 = vrot.slane %v2186, 1
      %v2200 = vrot.slane %v2187, 1
      %v2201 = vsel %vm1222, %v2199, %v2200
      %v2202 = vrot.slane %v2188, 1
      %v2203 = vrot.slane %v2189, 1
      %v2204 = vsel %vm1222, %v2202, %v2203
      %v2205 = vrot.slane %v2190, 1
      %v2206 = vrot.slane %v2191, 1
      %v2207 = vsel %vm1222, %v2205, %v2206
      %v2208 = vrot.slane %v2192, 1
      %v2209 = vrot.slane %v2193, 1
      %v2210 = vsel %vm1222, %v2208, %v2209
      %v2211 = vrot.slane %v2194, 1
      %v2212 = vrot.slane %v2195, 1
      %v2213 = vsel %vm1222, %v2211, %v2212
      %2220 = vst [vmem:[#allocation5 + $0x10] sm:$0xff] %v2198
      %2221 = vst [vmem:[#allocation5 + $0x28] sm:$0xff] %v2201
      %2222 = vst [vmem:[#allocation5 + $0x40] sm:$0xff] %v2204
      %2223 = vst [vmem:[#allocation5 + $0x58] sm:$0xff] %v2207
      %2224 = vst [vmem:[#allocation5 + $0x70] sm:$0xff] %v2210
      %2225 = vst [vmem:[#allocation5 + $0x88] sm:$0xff] %v2213
      %v2226 = vld [vmem:[#allocation5] sm:$0xff]
      %v2227 = vld [vmem:[#allocation5 + $0x8] sm:$0xff]
      %v2228 = vld [vmem:[#allocation5 + $0x10] sm:$0xff]
      %v2229 = vld [vmem:[#allocation5 + $0x18] sm:$0xff]
      %v2230 = vld [vmem:[#allocation5 + $0x20] sm:$0xff]
      %v2231 = vld [vmem:[#allocation5 + $0x28] sm:$0xff]
      %v2232 = vld [vmem:[#allocation5 + $0x30] sm:$0xff]
      %v2233 = vld [vmem:[#allocation5 + $0x38] sm:$0xff]
      %v2234 = vld [vmem:[#allocation5 + $0x40] sm:$0xff]
      %v2235 = vld [vmem:[#allocation5 + $0x48] sm:$0xff]
      %v2236 = vld [vmem:[#allocation5 + $0x50] sm:$0xff]
      %v2237 = vld [vmem:[#allocation5 + $0x58] sm:$0xff]
      %v2238 = vld [vmem:[%s5] sm:$0xf]
      %v2239 = vld [vmem:[%s5 + $0x4] sm:$0xf]
      %v2240 = vld [vmem:[%s5 + $0x8] sm:$0xf]
      %v2241 = vld [vmem:[%s5 + $0xc] sm:$0xf]
      %v2242 = vld [vmem:[%s5 + $0x10] sm:$0xf]
      %v2243 = vld [vmem:[%s5 + $0x14] sm:$0xf]
      %v2244 = vld [vmem:[%s5 + $0x18] sm:$0xf]
      %v2245 = vld [vmem:[%s5 + $0x1c] sm:$0xf]
      %v2246 = vld [vmem:[%s5 + $0x20] sm:$0xf]
      %v2247 = vld [vmem:[%s5 + $0x24] sm:$0xf]
      %v2248 = vld [vmem:[%s5 + $0x28] sm:$0xf]
      %v2249 = vld [vmem:[%s5 + $0x2c] sm:$0xf]
      %v2250 = vld [vmem:[%s5 + $0x30] sm:$0xf]
      %v2251 = vld [vmem:[%s5 + $0x34] sm:$0xf]
      %v2252 = vld [vmem:[%s5 + $0x38] sm:$0xf]
      %v2253 = vld [vmem:[%s5 + $0x3c] sm:$0xf]
      %v2254 = vld [vmem:[%s5 + $0x40] sm:$0xf]
      %v2255 = vld [vmem:[%s5 + $0x44] sm:$0xf]
      %v2256 = vld [vmem:[%s5 + $0x48] sm:$0xf]
      %v2257 = vld [vmem:[%s5 + $0x4c] sm:$0xf]
      %v2258 = vld [vmem:[%s5 + $0x50] sm:$0xf]
      %v2259 = vld [vmem:[%s5 + $0x54] sm:$0xf]
      %v2260 = vld [vmem:[%s5 + $0x58] sm:$0xf]
      %v2261 = vld [vmem:[%s5 + $0x5c] sm:$0xf]
      %v2262 = vld [vmem:[%s5 + $0x60] sm:$0xf]
      %v2263 = vld [vmem:[%s5 + $0x64] sm:$0xf]
      %v2264 = vld [vmem:[%s5 + $0x68] sm:$0xf]
      %v2265 = vld [vmem:[%s5 + $0x6c] sm:$0xf]
      %v2266 = vld [vmem:[%s5 + $0x70] sm:$0xf]
      %v2267 = vld [vmem:[%s5 + $0x74] sm:$0xf]
      %v2268 = vld [vmem:[%s5 + $0x78] sm:$0xf]
      %v2269 = vld [vmem:[%s5 + $0x7c] sm:$0xf]
      %v2270 = vld [vmem:[%s5 + $0x80] sm:$0xf]
      %v2271 = vld [vmem:[%s5 + $0x84] sm:$0xf]
      %v2272 = vld [vmem:[%s5 + $0x88] sm:$0xf]
      %v2273 = vld [vmem:[%s5 + $0x8c] sm:$0xf]
      %v2274 = vld [vmem:[%s5 + $0x90] sm:$0xf]
      %v2275 = vld [vmem:[%s5 + $0x94] sm:$0xf]
      %v2276 = vld [vmem:[%s5 + $0x98] sm:$0xf]
      %v2277 = vld [vmem:[%s5 + $0x9c] sm:$0xf]
      %v2278 = vld [vmem:[%s5 + $0xa0] sm:$0xf]
      %v2279 = vld [vmem:[%s5 + $0xa4] sm:$0xf]
      %v2280 = vld [vmem:[%s5 + $0xa8] sm:$0xf]
      %v2281 = vld [vmem:[%s5 + $0xac] sm:$0xf]
      %v2282 = vld [vmem:[%s5 + $0xb0] sm:$0xf]
      %v2283 = vld [vmem:[%s5 + $0xb4] sm:$0xf]
      %v2284 = vld [vmem:[%s5 + $0xb8] sm:$0xf]
      %v2285 = vld [vmem:[%s5 + $0xbc] sm:$0xf]
      %s2286 = scalar_lea.vmem [#allocation5], 24
      %v2287 = vld [vmem:[%s2286] sm:$0xff]
      %v2288 = vld [vmem:[%s2286 + $0x8] sm:$0xff]
      %v2289 = vld [vmem:[%s2286 + $0x10] sm:$0xff]
      %v2290 = vld [vmem:[%s2286 + $0x18] sm:$0xff]
      %v2291 = vld [vmem:[%s2286 + $0x20] sm:$0xff]
      %v2292 = vld [vmem:[%s2286 + $0x28] sm:$0xff]
      %v2293 = vld [vmem:[%s2286 + $0x30] sm:$0xff]
      %v2294 = vld [vmem:[%s2286 + $0x38] sm:$0xff]
      %v2295 = vld [vmem:[%s2286 + $0x40] sm:$0xff]
      %v2296 = vld [vmem:[%s2286 + $0x48] sm:$0xff]
      %v2297 = vld [vmem:[%s2286 + $0x50] sm:$0xff]
      %v2298 = vld [vmem:[%s2286 + $0x58] sm:$0xff]
      %s2299 = scalar_lea.vmem %s5, 192
      %v2300 = vld [vmem:[%s2299] sm:$0xf]
      %v2301 = vld [vmem:[%s2299 + $0x4] sm:$0xf]
      %v2302 = vld [vmem:[%s2299 + $0x8] sm:$0xf]
      %v2303 = vld [vmem:[%s2299 + $0xc] sm:$0xf]
      %v2304 = vld [vmem:[%s2299 + $0x10] sm:$0xf]
      %v2305 = vld [vmem:[%s2299 + $0x14] sm:$0xf]
      %v2306 = vld [vmem:[%s2299 + $0x18] sm:$0xf]
      %v2307 = vld [vmem:[%s2299 + $0x1c] sm:$0xf]
      %v2308 = vld [vmem:[%s2299 + $0x20] sm:$0xf]
      %v2309 = vld [vmem:[%s2299 + $0x24] sm:$0xf]
      %v2310 = vld [vmem:[%s2299 + $0x28] sm:$0xf]
      %v2311 = vld [vmem:[%s2299 + $0x2c] sm:$0xf]
      %v2312 = vld [vmem:[%s2299 + $0x30] sm:$0xf]
      %v2313 = vld [vmem:[%s2299 + $0x34] sm:$0xf]
      %v2314 = vld [vmem:[%s2299 + $0x38] sm:$0xf]
      %v2315 = vld [vmem:[%s2299 + $0x3c] sm:$0xf]
      %v2316 = vld [vmem:[%s2299 + $0x40] sm:$0xf]
      %v2317 = vld [vmem:[%s2299 + $0x44] sm:$0xf]
      %v2318 = vld [vmem:[%s2299 + $0x48] sm:$0xf]
      %v2319 = vld [vmem:[%s2299 + $0x4c] sm:$0xf]
      %v2320 = vld [vmem:[%s2299 + $0x50] sm:$0xf]
      %v2321 = vld [vmem:[%s2299 + $0x54] sm:$0xf]
      %v2322 = vld [vmem:[%s2299 + $0x58] sm:$0xf]
      %v2323 = vld [vmem:[%s2299 + $0x5c] sm:$0xf]
      %v2324 = vld [vmem:[%s2299 + $0x60] sm:$0xf]
      %v2325 = vld [vmem:[%s2299 + $0x64] sm:$0xf]
      %v2326 = vld [vmem:[%s2299 + $0x68] sm:$0xf]
      %v2327 = vld [vmem:[%s2299 + $0x6c] sm:$0xf]
      %v2328 = vld [vmem:[%s2299 + $0x70] sm:$0xf]
      %v2329 = vld [vmem:[%s2299 + $0x74] sm:$0xf]
      %v2330 = vld [vmem:[%s2299 + $0x78] sm:$0xf]
      %v2331 = vld [vmem:[%s2299 + $0x7c] sm:$0xf]
      %v2332 = vld [vmem:[%s2299 + $0x80] sm:$0xf]
      %v2333 = vld [vmem:[%s2299 + $0x84] sm:$0xf]
      %v2334 = vld [vmem:[%s2299 + $0x88] sm:$0xf]
      %v2335 = vld [vmem:[%s2299 + $0x8c] sm:$0xf]
      %v2336 = vld [vmem:[%s2299 + $0x90] sm:$0xf]
      %v2337 = vld [vmem:[%s2299 + $0x94] sm:$0xf]
      %v2338 = vld [vmem:[%s2299 + $0x98] sm:$0xf]
      %v2339 = vld [vmem:[%s2299 + $0x9c] sm:$0xf]
      %v2340 = vld [vmem:[%s2299 + $0xa0] sm:$0xf]
      %v2341 = vld [vmem:[%s2299 + $0xa4] sm:$0xf]
      %v2342 = vld [vmem:[%s2299 + $0xa8] sm:$0xf]
      %v2343 = vld [vmem:[%s2299 + $0xac] sm:$0xf]
      %v2344 = vld [vmem:[%s2299 + $0xb0] sm:$0xf]
      %v2345 = vld [vmem:[%s2299 + $0xb4] sm:$0xf]
      %v2346 = vld [vmem:[%s2299 + $0xb8] sm:$0xf]
      %v2347 = vld [vmem:[%s2299 + $0xbc] sm:$0xf]
      %v2396 = vunpack.c.l.b16 %v2300
      %v2397 = vunpack.c.l.b16 %v2301
      %v2398 = vunpack.c.l.b16 %v2302
      %v2399 = vunpack.c.l.b16 %v2303
      %v2400 = vunpack.c.l.b16 %v2304
      %v2401 = vunpack.c.l.b16 %v2305
      %v2402 = vunpack.c.l.b16 %v2306
      %v2403 = vunpack.c.l.b16 %v2307
      %v2404 = vunpack.c.l.b16 %v2308
      %v2405 = vunpack.c.l.b16 %v2309
      %v2406 = vunpack.c.l.b16 %v2310
      %v2407 = vunpack.c.l.b16 %v2311
      %v2408 = vunpack.c.l.b16 %v2312
      %v2409 = vunpack.c.l.b16 %v2313
      %v2410 = vunpack.c.l.b16 %v2314
      %v2411 = vunpack.c.l.b16 %v2315
      %v2412 = vunpack.c.l.b16 %v2316
      %v2413 = vunpack.c.l.b16 %v2317
      %v2414 = vunpack.c.l.b16 %v2318
      %v2415 = vunpack.c.l.b16 %v2319
      %v2416 = vunpack.c.l.b16 %v2320
      %v2417 = vunpack.c.l.b16 %v2321
      %v2418 = vunpack.c.l.b16 %v2322
      %v2419 = vunpack.c.l.b16 %v2323
      %v2420 = vunpack.c.l.b16 %v2324
      %v2421 = vunpack.c.l.b16 %v2325
      %v2422 = vunpack.c.l.b16 %v2326
      %v2423 = vunpack.c.l.b16 %v2327
      %v2424 = vunpack.c.l.b16 %v2328
      %v2425 = vunpack.c.l.b16 %v2329
      %v2426 = vunpack.c.l.b16 %v2330
      %v2427 = vunpack.c.l.b16 %v2331
      %v2428 = vunpack.c.l.b16 %v2332
      %v2429 = vunpack.c.l.b16 %v2333
      %v2430 = vunpack.c.l.b16 %v2334
      %v2431 = vunpack.c.l.b16 %v2335
      %v2432 = vunpack.c.l.b16 %v2336
      %v2433 = vunpack.c.l.b16 %v2337
      %v2434 = vunpack.c.l.b16 %v2338
      %v2435 = vunpack.c.l.b16 %v2339
      %v2436 = vunpack.c.l.b16 %v2340
      %v2437 = vunpack.c.l.b16 %v2341
      %v2438 = vunpack.c.l.b16 %v2342
      %v2439 = vunpack.c.l.b16 %v2343
      %v2440 = vunpack.c.l.b16 %v2344
      %v2441 = vunpack.c.l.b16 %v2345
      %v2442 = vunpack.c.l.b16 %v2346
      %v2443 = vunpack.c.l.b16 %v2347
      %v2444 = vpack.c.b16 %v2397, %v2396
      %v2445 = vpack.c.b16 %v2399, %v2398
      %v2446 = vpack.c.b16 %v2401, %v2400
      %v2447 = vpack.c.b16 %v2403, %v2402
      %v2448 = vpack.c.b16 %v2405, %v2404
      %v2449 = vpack.c.b16 %v2407, %v2406
      %v2450 = vpack.c.b16 %v2409, %v2408
      %v2451 = vpack.c.b16 %v2411, %v2410
      %v2452 = vpack.c.b16 %v2413, %v2412
      %v2453 = vpack.c.b16 %v2415, %v2414
      %v2454 = vpack.c.b16 %v2417, %v2416
      %v2455 = vpack.c.b16 %v2419, %v2418
      %v2456 = vpack.c.b16 %v2421, %v2420
      %v2457 = vpack.c.b16 %v2423, %v2422
      %v2458 = vpack.c.b16 %v2425, %v2424
      %v2459 = vpack.c.b16 %v2427, %v2426
      %v2460 = vpack.c.b16 %v2429, %v2428
      %v2461 = vpack.c.b16 %v2431, %v2430
      %v2462 = vpack.c.b16 %v2433, %v2432
      %v2463 = vpack.c.b16 %v2435, %v2434
      %v2464 = vpack.c.b16 %v2437, %v2436
      %v2465 = vpack.c.b16 %v2439, %v2438
      %v2466 = vpack.c.b16 %v2441, %v2440
      %v2467 = vpack.c.b16 %v2443, %v2442
      %2492 = vmatprep.subr.bf16.mxu0 0
      %2493 = vmatpush1.bf16.msra.mxu0 %v2444
      %2494 = vmatprep.subr.bf16.mxu0 0
      %2495 = vmatpush1.bf16.msra.mxu0 %v2445
      %2496 = vmatprep.subr.bf16.mxu0 0
      %2497 = vmatpush1.bf16.msra.mxu0 %v2446
      %2498 = vmatprep.subr.bf16.mxu0 0
      %2499 = vmatpush1.bf16.msra.mxu0 %v2447
      %2500 = vmatprep.subr.bf16.mxu0 0
      %2501 = vmatpush1.bf16.msra.mxu0 %v2448
      %2502 = vmatprep.subr.bf16.mxu0 0
      %2503 = vmatpush1.bf16.msra.mxu0 %v2449
      %2504 = vmatprep.subr.bf16.mxu0 0
      %2505 = vmatpush1.bf16.msra.mxu0 %v2450
      %2506 = vmatprep.subr.bf16.mxu0 0
      %2507 = vmatpush1.bf16.msra.mxu0 %v2451
      %2508 = vmatprep.subr.bf16.mxu0 0
      %2509 = vmatpush1.bf16.msra.mxu0 %v2452
      %2510 = vmatprep.subr.bf16.mxu0 0
      %2511 = vmatpush1.bf16.msra.mxu0 %v2453
      %2512 = vmatprep.subr.bf16.mxu0 0
      %2513 = vmatpush1.bf16.msra.mxu0 %v2454
      %2514 = vmatprep.subr.bf16.mxu0 0
      %2515 = vmatpush1.bf16.msra.mxu0 %v2455
      %2516 = vmatprep.subr.bf16.mxu0 0
      %2517 = vmatpush1.bf16.msra.mxu0 %v2456
      %2518 = vmatprep.subr.bf16.mxu0 0
      %2519 = vmatpush1.bf16.msra.mxu0 %v2457
      %2520 = vmatprep.subr.bf16.mxu0 0
      %2521 = vmatpush1.bf16.msra.mxu0 %v2458
      %2522 = vmatprep.subr.bf16.mxu0 0
      %2523 = vmatpush1.bf16.msra.mxu0 %v2459
      %2524 = vmatprep.mubr.bf16.mxu0 %v2288
      %2525 = vmatmul.mubr.bf16.gmra.mrb[0].mxu0 %v2287
      %v2526 = vpop.f32.mrb[0].mxu0
      %v2527 = vadd.f32 0.0, %v2526
      %v2528 = vpop.f32.mrb[0].mxu0
      %v2529 = vpop.f32.mrb[0].mxu0
      %v2530 = vadd.f32 0.0, %v2529
      %v2531 = vpop.f32.mrb[0].mxu0
      %2532 = vmatprep.mubr.bf16.mxu0 %v2291
      %2533 = vmatmul.mubr.bf16.gmra.mrb[0].mxu0 %v2290
      %v2534 = vpop.f32.mrb[0].mxu0
      %v2535 = vadd.f32 0.0, %v2534
      %v2536 = vpop.f32.mrb[0].mxu0
      %v2537 = vpop.f32.mrb[0].mxu0
      %v2538 = vadd.f32 0.0, %v2537
      %v2539 = vpop.f32.mrb[0].mxu0
      %2540 = vmatprep.mubr.bf16.mxu0 %v2294
      %2541 = vmatmul.mubr.bf16.gmra.mrb[0].mxu0 %v2293
      %v2542 = vpop.f32.mrb[0].mxu0
      %v2543 = vadd.f32 0.0, %v2542
      %v2544 = vpop.f32.mrb[0].mxu0
      %v2545 = vpop.f32.mrb[0].mxu0
      %v2546 = vadd.f32 0.0, %v2545
      %v2547 = vpop.f32.mrb[0].mxu0
      %2548 = vmatprep.mubr.bf16.mxu0 %v2297
      %2549 = vmatmul.mubr.bf16.gmra.mrb[0].mxu0 %v2296
      %v2550 = vpop.f32.mrb[0].mxu0
      %v2551 = vadd.f32 0.0, %v2550
      %v2552 = vpop.f32.mrb[0].mxu0
      %v2553 = vpop.f32.mrb[0].mxu0
      %v2554 = vadd.f32 0.0, %v2553
      %v2555 = vpop.f32.mrb[0].mxu0
      %2556 = vdwg.mxu0
      %2557 = vmatprep.subr.bf16.mxu0 0
      %2558 = vmatpush1.bf16.msra.mxu0 %v2460
      %2559 = vmatprep.subr.bf16.mxu0 0
      %2560 = vmatpush1.bf16.msra.mxu0 %v2461
      %2561 = vmatprep.subr.bf16.mxu0 0
      %2562 = vmatpush1.bf16.msra.mxu0 %v2462
      %2563 = vmatprep.subr.bf16.mxu0 0
      %2564 = vmatpush1.bf16.msra.mxu0 %v2463
      %2565 = vmatprep.subr.bf16.mxu0 0
      %2566 = vmatpush1.bf16.msra.mxu0 %v2464
      %2567 = vmatprep.subr.bf16.mxu0 0
      %2568 = vmatpush1.bf16.msra.mxu0 %v2465
      %2569 = vmatprep.subr.bf16.mxu0 0
      %2570 = vmatpush1.bf16.msra.mxu0 %v2466
      %2571 = vmatprep.subr.bf16.mxu0 0
      %2572 = vmatpush1.bf16.msra.mxu0 %v2467
      %2573 = vmatprep.subr.bf16.mxu0 0
      %2574 = vmatpush1.bf16.msra.mxu0 0
      %2575 = vmatprep.subr.bf16.mxu0 0
      %2576 = vmatpush1.bf16.msra.mxu0 0
      %2577 = vmatprep.subr.bf16.mxu0 0
      %2578 = vmatpush1.bf16.msra.mxu0 0
      %2579 = vmatprep.subr.bf16.mxu0 0
      %2580 = vmatpush1.bf16.msra.mxu0 0
      %2581 = vmatprep.subr.bf16.mxu0 0
      %2582 = vmatpush1.bf16.msra.mxu0 0
      %2583 = vmatprep.subr.bf16.mxu0 0
      %2584 = vmatpush1.bf16.msra.mxu0 0
      %2585 = vmatprep.subr.bf16.mxu0 0
      %2586 = vmatpush1.bf16.msra.mxu0 0
      %2587 = vmatprep.subr.bf16.mxu0 0
      %2588 = vmatpush1.bf16.msra.mxu0 0
      %2589 = vmatprep.mubr.bf16.mxu0 0
      %2590 = vmatmul.mubr.bf16.gmra.mrb[0].mxu0 %v2289
      %v2591 = vpop.f32.mrb[0].mxu0
      %v2592 = vadd.f32 %v2527, %v2591
      %v2593 = vpop.f32.mrb[0].mxu0
      %v2594 = vpop.f32.mrb[0].mxu0
      %v2595 = vadd.f32 %v2530, %v2594
      %v2596 = vpop.f32.mrb[0].mxu0
      %2597 = vmatprep.mubr.bf16.mxu0 0
      %2598 = vmatmul.mubr.bf16.gmra.mrb[0].mxu0 %v2292
      %v2599 = vpop.f32.mrb[0].mxu0
      %v2600 = vadd.f32 %v2535, %v2599
      %v2601 = vpop.f32.mrb[0].mxu0
      %v2602 = vpop.f32.mrb[0].mxu0
      %v2603 = vadd.f32 %v2538, %v2602
      %v2604 = vpop.f32.mrb[0].mxu0
      %2605 = vmatprep.mubr.bf16.mxu0 0
      %2606 = vmatmul.mubr.bf16.gmra.mrb[0].mxu0 %v2295
      %v2607 = vpop.f32.mrb[0].mxu0
      %v2608 = vadd.f32 %v2543, %v2607
      %v2609 = vpop.f32.mrb[0].mxu0
      %v2610 = vpop.f32.mrb[0].mxu0
      %v2611 = vadd.f32 %v2546, %v2610
      %v2612 = vpop.f32.mrb[0].mxu0
      %2613 = vmatprep.mubr.bf16.mxu0 0
      %2614 = vmatmul.mubr.bf16.gmra.mrb[0].mxu0 %v2298
      %v2615 = vpop.f32.mrb[0].mxu0
      %v2616 = vadd.f32 %v2551, %v2615
      %v2617 = vpop.f32.mrb[0].mxu0
      %v2618 = vpop.f32.mrb[0].mxu0
      %v2619 = vadd.f32 %v2554, %v2618
      %v2620 = vpop.f32.mrb[0].mxu0
      %2621 = vdwg.mxu0
      %v2670 = vunpack.c.l.b16 %v2238
      %v2671 = vunpack.c.l.b16 %v2239
      %v2672 = vunpack.c.l.b16 %v2240
      %v2673 = vunpack.c.l.b16 %v2241
      %v2674 = vunpack.c.l.b16 %v2242
      %v2675 = vunpack.c.l.b16 %v2243
      %v2676 = vunpack.c.l.b16 %v2244
      %v2677 = vunpack.c.l.b16 %v2245
      %v2678 = vunpack.c.l.b16 %v2246
      %v2679 = vunpack.c.l.b16 %v2247
      %v2680 = vunpack.c.l.b16 %v2248
      %v2681 = vunpack.c.l.b16 %v2249
      %v2682 = vunpack.c.l.b16 %v2250
      %v2683 = vunpack.c.l.b16 %v2251
      %v2684 = vunpack.c.l.b16 %v2252
      %v2685 = vunpack.c.l.b16 %v2253
      %v2686 = vunpack.c.l.b16 %v2254
      %v2687 = vunpack.c.l.b16 %v2255
      %v2688 = vunpack.c.l.b16 %v2256
      %v2689 = vunpack.c.l.b16 %v2257
      %v2690 = vunpack.c.l.b16 %v2258
      %v2691 = vunpack.c.l.b16 %v2259
      %v2692 = vunpack.c.l.b16 %v2260
      %v2693 = vunpack.c.l.b16 %v2261
      %v2694 = vunpack.c.l.b16 %v2262
      %v2695 = vunpack.c.l.b16 %v2263
      %v2696 = vunpack.c.l.b16 %v2264
      %v2697 = vunpack.c.l.b16 %v2265
      %v2698 = vunpack.c.l.b16 %v2266
      %v2699 = vunpack.c.l.b16 %v2267
      %v2700 = vunpack.c.l.b16 %v2268
      %v2701 = vunpack.c.l.b16 %v2269
      %v2702 = vunpack.c.l.b16 %v2270
      %v2703 = vunpack.c.l.b16 %v2271
      %v2704 = vunpack.c.l.b16 %v2272
      %v2705 = vunpack.c.l.b16 %v2273
      %v2706 = vunpack.c.l.b16 %v2274
      %v2707 = vunpack.c.l.b16 %v2275
      %v2708 = vunpack.c.l.b16 %v2276
      %v2709 = vunpack.c.l.b16 %v2277
      %v2710 = vunpack.c.l.b16 %v2278
      %v2711 = vunpack.c.l.b16 %v2279
      %v2712 = vunpack.c.l.b16 %v2280
      %v2713 = vunpack.c.l.b16 %v2281
      %v2714 = vunpack.c.l.b16 %v2282
      %v2715 = vunpack.c.l.b16 %v2283
      %v2716 = vunpack.c.l.b16 %v2284
      %v2717 = vunpack.c.l.b16 %v2285
      %v2718 = vpack.c.b16 %v2671, %v2670
      %v2719 = vpack.c.b16 %v2673, %v2672
      %v2720 = vpack.c.b16 %v2675, %v2674
      %v2721 = vpack.c.b16 %v2677, %v2676
      %v2722 = vpack.c.b16 %v2679, %v2678
      %v2723 = vpack.c.b16 %v2681, %v2680
      %v2724 = vpack.c.b16 %v2683, %v2682
      %v2725 = vpack.c.b16 %v2685, %v2684
      %v2726 = vpack.c.b16 %v2687, %v2686
      %v2727 = vpack.c.b16 %v2689, %v2688
      %v2728 = vpack.c.b16 %v2691, %v2690
      %v2729 = vpack.c.b16 %v2693, %v2692
      %v2730 = vpack.c.b16 %v2695, %v2694
      %v2731 = vpack.c.b16 %v2697, %v2696
      %v2732 = vpack.c.b16 %v2699, %v2698
      %v2733 = vpack.c.b16 %v2701, %v2700
      %v2734 = vpack.c.b16 %v2703, %v2702
      %v2735 = vpack.c.b16 %v2705, %v2704
      %v2736 = vpack.c.b16 %v2707, %v2706
      %v2737 = vpack.c.b16 %v2709, %v2708
      %v2738 = vpack.c.b16 %v2711, %v2710
      %v2739 = vpack.c.b16 %v2713, %v2712
      %v2740 = vpack.c.b16 %v2715, %v2714
      %v2741 = vpack.c.b16 %v2717, %v2716
      %2766 = vmatprep.subr.bf16.mxu0 0
      %2767 = vmatpush1.bf16.msra.mxu0 %v2718
      %2768 = vmatprep.subr.bf16.mxu0 0
      %2769 = vmatpush1.bf16.msra.mxu0 %v2719
      %2770 = vmatprep.subr.bf16.mxu0 0
      %2771 = vmatpush1.bf16.msra.mxu0 %v2720
      %2772 = vmatprep.subr.bf16.mxu0 0
      %2773 = vmatpush1.bf16.msra.mxu0 %v2721
      %2774 = vmatprep.subr.bf16.mxu0 0
      %2775 = vmatpush1.bf16.msra.mxu0 %v2722
      %2776 = vmatprep.subr.bf16.mxu0 0
      %2777 = vmatpush1.bf16.msra.mxu0 %v2723
      %2778 = vmatprep.subr.bf16.mxu0 0
      %2779 = vmatpush1.bf16.msra.mxu0 %v2724
      %2780 = vmatprep.subr.bf16.mxu0 0
      %2781 = vmatpush1.bf16.msra.mxu0 %v2725
      %2782 = vmatprep.subr.bf16.mxu0 0
      %2783 = vmatpush1.bf16.msra.mxu0 %v2726
      %2784 = vmatprep.subr.bf16.mxu0 0
      %2785 = vmatpush1.bf16.msra.mxu0 %v2727
      %2786 = vmatprep.subr.bf16.mxu0 0
      %2787 = vmatpush1.bf16.msra.mxu0 %v2728
      %2788 = vmatprep.subr.bf16.mxu0 0
      %2789 = vmatpush1.bf16.msra.mxu0 %v2729
      %2790 = vmatprep.subr.bf16.mxu0 0
      %2791 = vmatpush1.bf16.msra.mxu0 %v2730
      %2792 = vmatprep.subr.bf16.mxu0 0
      %2793 = vmatpush1.bf16.msra.mxu0 %v2731
      %2794 = vmatprep.subr.bf16.mxu0 0
      %2795 = vmatpush1.bf16.msra.mxu0 %v2732
      %2796 = vmatprep.subr.bf16.mxu0 0
      %2797 = vmatpush1.bf16.msra.mxu0 %v2733
      %2798 = vmatprep.mubr.bf16.mxu0 %v2227
      %2799 = vmatmul.mubr.bf16.gmra.mrb[0].mxu0 %v2226
      %v2800 = vpop.f32.mrb[0].mxu0
      %v2801 = vadd.f32 %v2592, %v2800
      %v2802 = vpop.f32.mrb[0].mxu0
      %v2803 = vpop.f32.mrb[0].mxu0
      %v2804 = vadd.f32 %v2595, %v2803
      %v2805 = vpop.f32.mrb[0].mxu0
      %2806 = vmatprep.mubr.bf16.mxu0 %v2230
      %2807 = vmatmul.mubr.bf16.gmra.mrb[0].mxu0 %v2229
      %v2808 = vpop.f32.mrb[0].mxu0
      %v2809 = vadd.f32 %v2600, %v2808
      %v2810 = vpop.f32.mrb[0].mxu0
      %v2811 = vpop.f32.mrb[0].mxu0
      %v2812 = vadd.f32 %v2603, %v2811
      %v2813 = vpop.f32.mrb[0].mxu0
      %2814 = vmatprep.mubr.bf16.mxu0 %v2233
      %2815 = vmatmul.mubr.bf16.gmra.mrb[0].mxu0 %v2232
      %v2816 = vpop.f32.mrb[0].mxu0
      %v2817 = vadd.f32 %v2608, %v2816
      %v2818 = vpop.f32.mrb[0].mxu0
      %v2819 = vpop.f32.mrb[0].mxu0
      %v2820 = vadd.f32 %v2611, %v2819
      %v2821 = vpop.f32.mrb[0].mxu0
      %2822 = vmatprep.mubr.bf16.mxu0 %v2236
      %2823 = vmatmul.mubr.bf16.gmra.mrb[0].mxu0 %v2235
      %v2824 = vpop.f32.mrb[0].mxu0
      %v2825 = vadd.f32 %v2616, %v2824
      %v2826 = vpop.f32.mrb[0].mxu0
      %v2827 = vpop.f32.mrb[0].mxu0
      %v2828 = vadd.f32 %v2619, %v2827
      %v2829 = vpop.f32.mrb[0].mxu0
      %2830 = vdwg.mxu0
      %2831 = vmatprep.subr.bf16.mxu0 0
      %2832 = vmatpush1.bf16.msra.mxu0 %v2734
      %2833 = vmatprep.subr.bf16.mxu0 0
      %2834 = vmatpush1.bf16.msra.mxu0 %v2735
      %2835 = vmatprep.subr.bf16.mxu0 0
      %2836 = vmatpush1.bf16.msra.mxu0 %v2736
      %2837 = vmatprep.subr.bf16.mxu0 0
      %2838 = vmatpush1.bf16.msra.mxu0 %v2737
      %2839 = vmatprep.subr.bf16.mxu0 0
      %2840 = vmatpush1.bf16.msra.mxu0 %v2738
      %2841 = vmatprep.subr.bf16.mxu0 0
      %2842 = vmatpush1.bf16.msra.mxu0 %v2739
      %2843 = vmatprep.subr.bf16.mxu0 0
      %2844 = vmatpush1.bf16.msra.mxu0 %v2740
      %2845 = vmatprep.subr.bf16.mxu0 0
      %2846 = vmatpush1.bf16.msra.mxu0 %v2741
      %2847 = vmatprep.subr.bf16.mxu0 0
      %2848 = vmatpush1.bf16.msra.mxu0 0
      %2849 = vmatprep.subr.bf16.mxu0 0
      %2850 = vmatpush1.bf16.msra.mxu0 0
      %2851 = vmatprep.subr.bf16.mxu0 0
      %2852 = vmatpush1.bf16.msra.mxu0 0
      %2853 = vmatprep.subr.bf16.mxu0 0
      %2854 = vmatpush1.bf16.msra.mxu0 0
      %2855 = vmatprep.subr.bf16.mxu0 0
      %2856 = vmatpush1.bf16.msra.mxu0 0
      %2857 = vmatprep.subr.bf16.mxu0 0
      %2858 = vmatpush1.bf16.msra.mxu0 0
      %2859 = vmatprep.subr.bf16.mxu0 0
      %2860 = vmatpush1.bf16.msra.mxu0 0
      %2861 = vmatprep.subr.bf16.mxu0 0
      %2862 = vmatpush1.bf16.msra.mxu0 0
      %2863 = vmatprep.mubr.bf16.mxu0 0
      %2864 = vmatmul.mubr.bf16.gmra.mrb[0].mxu0 %v2228
      %v2865 = vpop.f32.mrb[0].mxu0
      %v2866 = vadd.f32 %v2801, %v2865
      %v2867 = vpop.f32.mrb[0].mxu0
      %v2868 = vpop.f32.mrb[0].mxu0
      %v2869 = vadd.f32 %v2804, %v2868
      %v2870 = vpop.f32.mrb[0].mxu0
      %2871 = vmatprep.mubr.bf16.mxu0 0
      %2872 = vmatmul.mubr.bf16.gmra.mrb[0].mxu0 %v2231
      %v2873 = vpop.f32.mrb[0].mxu0
      %v2874 = vadd.f32 %v2809, %v2873
      %v2875 = vpop.f32.mrb[0].mxu0
      %v2876 = vpop.f32.mrb[0].mxu0
      %v2877 = vadd.f32 %v2812, %v2876
      %v2878 = vpop.f32.mrb[0].mxu0
      %2879 = vmatprep.mubr.bf16.mxu0 0
      %2880 = vmatmul.mubr.bf16.gmra.mrb[0].mxu0 %v2234
      %v2881 = vpop.f32.mrb[0].mxu0
      %v2882 = vadd.f32 %v2817, %v2881
      %v2883 = vpop.f32.mrb[0].mxu0
      %v2884 = vpop.f32.mrb[0].mxu0
      %v2885 = vadd.f32 %v2820, %v2884
      %v2886 = vpop.f32.mrb[0].mxu0
      %2887 = vmatprep.mubr.bf16.mxu0 0
      %2888 = vmatmul.mubr.bf16.gmra.mrb[0].mxu0 %v2237
      %v2889 = vpop.f32.mrb[0].mxu0
      %v2890 = vadd.f32 %v2825, %v2889
      %v2891 = vpop.f32.mrb[0].mxu0
      %v2892 = vpop.f32.mrb[0].mxu0
      %v2893 = vadd.f32 %v2828, %v2892
      %v2894 = vpop.f32.mrb[0].mxu0
      %2895 = vdwg.mxu0
      %s2896 = scalar_lea.vmem [#allocation5], 48
      %v2897 = vld [vmem:[%s2896] sm:$0xff]
      %v2898 = vld [vmem:[%s2896 + $0x8] sm:$0xff]
      %v2899 = vld [vmem:[%s2896 + $0x10] sm:$0xff]
      %v2900 = vld [vmem:[%s2896 + $0x18] sm:$0xff]
      %v2901 = vld [vmem:[%s2896 + $0x20] sm:$0xff]
      %v2902 = vld [vmem:[%s2896 + $0x28] sm:$0xff]
      %v2903 = vld [vmem:[%s2896 + $0x30] sm:$0xff]
      %v2904 = vld [vmem:[%s2896 + $0x38] sm:$0xff]
      %v2905 = vld [vmem:[%s2896 + $0x40] sm:$0xff]
      %v2906 = vld [vmem:[%s2896 + $0x48] sm:$0xff]
      %v2907 = vld [vmem:[%s2896 + $0x50] sm:$0xff]
      %v2908 = vld [vmem:[%s2896 + $0x58] sm:$0xff]
      %s2909 = scalar_lea.vmem %s5, 384
      %v2910 = vld [vmem:[%s2909] sm:$0xf]
      %v2911 = vld [vmem:[%s2909 + $0x4] sm:$0xf]
      %v2912 = vld [vmem:[%s2909 + $0x8] sm:$0xf]
      %v2913 = vld [vmem:[%s2909 + $0xc] sm:$0xf]
      %v2914 = vld [vmem:[%s2909 + $0x10] sm:$0xf]
      %v2915 = vld [vmem:[%s2909 + $0x14] sm:$0xf]
      %v2916 = vld [vmem:[%s2909 + $0x18] sm:$0xf]
      %v2917 = vld [vmem:[%s2909 + $0x1c] sm:$0xf]
      %v2918 = vld [vmem:[%s2909 + $0x20] sm:$0xf]
      %v2919 = vld [vmem:[%s2909 + $0x24] sm:$0xf]
      %v2920 = vld [vmem:[%s2909 + $0x28] sm:$0xf]
      %v2921 = vld [vmem:[%s2909 + $0x2c] sm:$0xf]
      %v2922 = vld [vmem:[%s2909 + $0x30] sm:$0xf]
      %v2923 = vld [vmem:[%s2909 + $0x34] sm:$0xf]
      %v2924 = vld [vmem:[%s2909 + $0x38] sm:$0xf]
      %v2925 = vld [vmem:[%s2909 + $0x3c] sm:$0xf]
      %v2926 = vld [vmem:[%s2909 + $0x40] sm:$0xf]
      %v2927 = vld [vmem:[%s2909 + $0x44] sm:$0xf]
      %v2928 = vld [vmem:[%s2909 + $0x48] sm:$0xf]
      %v2929 = vld [vmem:[%s2909 + $0x4c] sm:$0xf]
      %v2930 = vld [vmem:[%s2909 + $0x50] sm:$0xf]
      %v2931 = vld [vmem:[%s2909 + $0x54] sm:$0xf]
      %v2932 = vld [vmem:[%s2909 + $0x58] sm:$0xf]
      %v2933 = vld [vmem:[%s2909 + $0x5c] sm:$0xf]
      %v2934 = vld [vmem:[%s2909 + $0x60] sm:$0xf]
      %v2935 = vld [vmem:[%s2909 + $0x64] sm:$0xf]
      %v2936 = vld [vmem:[%s2909 + $0x68] sm:$0xf]
      %v2937 = vld [vmem:[%s2909 + $0x6c] sm:$0xf]
      %v2938 = vld [vmem:[%s2909 + $0x70] sm:$0xf]
      %v2939 = vld [vmem:[%s2909 + $0x74] sm:$0xf]
      %v2940 = vld [vmem:[%s2909 + $0x78] sm:$0xf]
      %v2941 = vld [vmem:[%s2909 + $0x7c] sm:$0xf]
      %v2942 = vld [vmem:[%s2909 + $0x80] sm:$0xf]
      %v2943 = vld [vmem:[%s2909 + $0x84] sm:$0xf]
      %v2944 = vld [vmem:[%s2909 + $0x88] sm:$0xf]
      %v2945 = vld [vmem:[%s2909 + $0x8c] sm:$0xf]
      %v2946 = vld [vmem:[%s2909 + $0x90] sm:$0xf]
      %v2947 = vld [vmem:[%s2909 + $0x94] sm:$0xf]
      %v2948 = vld [vmem:[%s2909 + $0x98] sm:$0xf]
      %v2949 = vld [vmem:[%s2909 + $0x9c] sm:$0xf]
      %v2950 = vld [vmem:[%s2909 + $0xa0] sm:$0xf]
      %v2951 = vld [vmem:[%s2909 + $0xa4] sm:$0xf]
      %v2952 = vld [vmem:[%s2909 + $0xa8] sm:$0xf]
      %v2953 = vld [vmem:[%s2909 + $0xac] sm:$0xf]
      %v2954 = vld [vmem:[%s2909 + $0xb0] sm:$0xf]
      %v2955 = vld [vmem:[%s2909 + $0xb4] sm:$0xf]
      %v2956 = vld [vmem:[%s2909 + $0xb8] sm:$0xf]
      %v2957 = vld [vmem:[%s2909 + $0xbc] sm:$0xf]
      %v3006 = vunpack.c.l.b16 %v2910
      %v3007 = vunpack.c.l.b16 %v2911
      %v3008 = vunpack.c.l.b16 %v2912
      %v3009 = vunpack.c.l.b16 %v2913
      %v3010 = vunpack.c.l.b16 %v2914
      %v3011 = vunpack.c.l.b16 %v2915
      %v3012 = vunpack.c.l.b16 %v2916
      %v3013 = vunpack.c.l.b16 %v2917
      %v3014 = vunpack.c.l.b16 %v2918
      %v3015 = vunpack.c.l.b16 %v2919
      %v3016 = vunpack.c.l.b16 %v2920
      %v3017 = vunpack.c.l.b16 %v2921
      %v3018 = vunpack.c.l.b16 %v2922
      %v3019 = vunpack.c.l.b16 %v2923
      %v3020 = vunpack.c.l.b16 %v2924
      %v3021 = vunpack.c.l.b16 %v2925
      %v3022 = vunpack.c.l.b16 %v2926
      %v3023 = vunpack.c.l.b16 %v2927
      %v3024 = vunpack.c.l.b16 %v2928
      %v3025 = vunpack.c.l.b16 %v2929
      %v3026 = vunpack.c.l.b16 %v2930
      %v3027 = vunpack.c.l.b16 %v2931
      %v3028 = vunpack.c.l.b16 %v2932
      %v3029 = vunpack.c.l.b16 %v2933
      %v3030 = vunpack.c.l.b16 %v2934
      %v3031 = vunpack.c.l.b16 %v2935
      %v3032 = vunpack.c.l.b16 %v2936
      %v3033 = vunpack.c.l.b16 %v2937
      %v3034 = vunpack.c.l.b16 %v2938
      %v3035 = vunpack.c.l.b16 %v2939
      %v3036 = vunpack.c.l.b16 %v2940
      %v3037 = vunpack.c.l.b16 %v2941
      %v3038 = vunpack.c.l.b16 %v2942
      %v3039 = vunpack.c.l.b16 %v2943
      %v3040 = vunpack.c.l.b16 %v2944
      %v3041 = vunpack.c.l.b16 %v2945
      %v3042 = vunpack.c.l.b16 %v2946
      %v3043 = vunpack.c.l.b16 %v2947
      %v3044 = vunpack.c.l.b16 %v2948
      %v3045 = vunpack.c.l.b16 %v2949
      %v3046 = vunpack.c.l.b16 %v2950
      %v3047 = vunpack.c.l.b16 %v2951
      %v3048 = vunpack.c.l.b16 %v2952
      %v3049 = vunpack.c.l.b16 %v2953
      %v3050 = vunpack.c.l.b16 %v2954
      %v3051 = vunpack.c.l.b16 %v2955
      %v3052 = vunpack.c.l.b16 %v2956
      %v3053 = vunpack.c.l.b16 %v2957
      %v3054 = vpack.c.b16 %v3007, %v3006
      %v3055 = vpack.c.b16 %v3009, %v3008
      %v3056 = vpack.c.b16 %v3011, %v3010
      %v3057 = vpack.c.b16 %v3013, %v3012
      %v3058 = vpack.c.b16 %v3015, %v3014
      %v3059 = vpack.c.b16 %v3017, %v3016
      %v3060 = vpack.c.b16 %v3019, %v3018
      %v3061 = vpack.c.b16 %v3021, %v3020
      %v3062 = vpack.c.b16 %v3023, %v3022
      %v3063 = vpack.c.b16 %v3025, %v3024
      %v3064 = vpack.c.b16 %v3027, %v3026
      %v3065 = vpack.c.b16 %v3029, %v3028
      %v3066 = vpack.c.b16 %v3031, %v3030
      %v3067 = vpack.c.b16 %v3033, %v3032
      %v3068 = vpack.c.b16 %v3035, %v3034
      %v3069 = vpack.c.b16 %v3037, %v3036
      %v3070 = vpack.c.b16 %v3039, %v3038
      %v3071 = vpack.c.b16 %v3041, %v3040
      %v3072 = vpack.c.b16 %v3043, %v3042
      %v3073 = vpack.c.b16 %v3045, %v3044
      %v3074 = vpack.c.b16 %v3047, %v3046
      %v3075 = vpack.c.b16 %v3049, %v3048
      %v3076 = vpack.c.b16 %v3051, %v3050
      %v3077 = vpack.c.b16 %v3053, %v3052
      %3102 = vmatprep.subr.bf16.mxu0 0
      %3103 = vmatpush1.bf16.msra.mxu0 %v3054
      %3104 = vmatprep.subr.bf16.mxu0 0
      %3105 = vmatpush1.bf16.msra.mxu0 %v3055
      %3106 = vmatprep.subr.bf16.mxu0 0
      %3107 = vmatpush1.bf16.msra.mxu0 %v3056
      %3108 = vmatprep.subr.bf16.mxu0 0
      %3109 = vmatpush1.bf16.msra.mxu0 %v3057
      %3110 = vmatprep.subr.bf16.mxu0 0
      %3111 = vmatpush1.bf16.msra.mxu0 %v3058
      %3112 = vmatprep.subr.bf16.mxu0 0
      %3113 = vmatpush1.bf16.msra.mxu0 %v3059
      %3114 = vmatprep.subr.bf16.mxu0 0
      %3115 = vmatpush1.bf16.msra.mxu0 %v3060
      %3116 = vmatprep.subr.bf16.mxu0 0
      %3117 = vmatpush1.bf16.msra.mxu0 %v3061
      %3118 = vmatprep.subr.bf16.mxu0 0
      %3119 = vmatpush1.bf16.msra.mxu0 %v3062
      %3120 = vmatprep.subr.bf16.mxu0 0
      %3121 = vmatpush1.bf16.msra.mxu0 %v3063
      %3122 = vmatprep.subr.bf16.mxu0 0
      %3123 = vmatpush1.bf16.msra.mxu0 %v3064
      %3124 = vmatprep.subr.bf16.mxu0 0
      %3125 = vmatpush1.bf16.msra.mxu0 %v3065
      %3126 = vmatprep.subr.bf16.mxu0 0
      %3127 = vmatpush1.bf16.msra.mxu0 %v3066
      %3128 = vmatprep.subr.bf16.mxu0 0
      %3129 = vmatpush1.bf16.msra.mxu0 %v3067
      %3130 = vmatprep.subr.bf16.mxu0 0
      %3131 = vmatpush1.bf16.msra.mxu0 %v3068
      %3132 = vmatprep.subr.bf16.mxu0 0
      %3133 = vmatpush1.bf16.msra.mxu0 %v3069
      %3134 = vmatprep.mubr.bf16.mxu0 %v2898
      %3135 = vmatmul.mubr.bf16.gmra.mrb[0].mxu0 %v2897
      %v3136 = vpop.f32.mrb[0].mxu0
      %v3137 = vadd.f32 0.0, %v3136
      %v3138 = vpop.f32.mrb[0].mxu0
      %v3139 = vpop.f32.mrb[0].mxu0
      %v3140 = vadd.f32 0.0, %v3139
      %v3141 = vpop.f32.mrb[0].mxu0
      %3142 = vmatprep.mubr.bf16.mxu0 %v2901
      %3143 = vmatmul.mubr.bf16.gmra.mrb[0].mxu0 %v2900
      %v3144 = vpop.f32.mrb[0].mxu0
      %v3145 = vadd.f32 0.0, %v3144
      %v3146 = vpop.f32.mrb[0].mxu0
      %v3147 = vpop.f32.mrb[0].mxu0
      %v3148 = vadd.f32 0.0, %v3147
      %v3149 = vpop.f32.mrb[0].mxu0
      %3150 = vmatprep.mubr.bf16.mxu0 %v2904
      %3151 = vmatmul.mubr.bf16.gmra.mrb[0].mxu0 %v2903
      %v3152 = vpop.f32.mrb[0].mxu0
      %v3153 = vadd.f32 0.0, %v3152
      %v3154 = vpop.f32.mrb[0].mxu0
      %v3155 = vpop.f32.mrb[0].mxu0
      %v3156 = vadd.f32 0.0, %v3155
      %v3157 = vpop.f32.mrb[0].mxu0
      %3158 = vmatprep.mubr.bf16.mxu0 %v2907
      %3159 = vmatmul.mubr.bf16.gmra.mrb[0].mxu0 %v2906
      %v3160 = vpop.f32.mrb[0].mxu0
      %v3161 = vadd.f32 0.0, %v3160
      %v3162 = vpop.f32.mrb[0].mxu0
      %v3163 = vpop.f32.mrb[0].mxu0
      %v3164 = vadd.f32 0.0, %v3163
      %v3165 = vpop.f32.mrb[0].mxu0
      %3166 = vdwg.mxu0
      %3167 = vmatprep.subr.bf16.mxu0 0
      %3168 = vmatpush1.bf16.msra.mxu0 %v3070
      %3169 = vmatprep.subr.bf16.mxu0 0
      %3170 = vmatpush1.bf16.msra.mxu0 %v3071
      %3171 = vmatprep.subr.bf16.mxu0 0
      %3172 = vmatpush1.bf16.msra.mxu0 %v3072
      %3173 = vmatprep.subr.bf16.mxu0 0
      %3174 = vmatpush1.bf16.msra.mxu0 %v3073
      %3175 = vmatprep.subr.bf16.mxu0 0
      %3176 = vmatpush1.bf16.msra.mxu0 %v3074
      %3177 = vmatprep.subr.bf16.mxu0 0
      %3178 = vmatpush1.bf16.msra.mxu0 %v3075
      %3179 = vmatprep.subr.bf16.mxu0 0
      %3180 = vmatpush1.bf16.msra.mxu0 %v3076
      %3181 = vmatprep.subr.bf16.mxu0 0
      %3182 = vmatpush1.bf16.msra.mxu0 %v3077
      %3183 = vmatprep.subr.bf16.mxu0 0
      %3184 = vmatpush1.bf16.msra.mxu0 0
      %3185 = vmatprep.subr.bf16.mxu0 0
      %3186 = vmatpush1.bf16.msra.mxu0 0
      %3187 = vmatprep.subr.bf16.mxu0 0
      %3188 = vmatpush1.bf16.msra.mxu0 0
      %3189 = vmatprep.subr.bf16.mxu0 0
      %3190 = vmatpush1.bf16.msra.mxu0 0
      %3191 = vmatprep.subr.bf16.mxu0 0
      %3192 = vmatpush1.bf16.msra.mxu0 0
      %3193 = vmatprep.subr.bf16.mxu0 0
      %3194 = vmatpush1.bf16.msra.mxu0 0
      %3195 = vmatprep.subr.bf16.mxu0 0
      %3196 = vmatpush1.bf16.msra.mxu0 0
      %3197 = vmatprep.subr.bf16.mxu0 0
      %3198 = vmatpush1.bf16.msra.mxu0 0
      %3199 = vmatprep.mubr.bf16.mxu0 0
      %3200 = vmatmul.mubr.bf16.gmra.mrb[0].mxu0 %v2899
      %v3201 = vpop.f32.mrb[0].mxu0
      %v3202 = vadd.f32 %v3137, %v3201
      %v3203 = vpop.f32.mrb[0].mxu0
      %v3204 = vpop.f32.mrb[0].mxu0
      %v3205 = vadd.f32 %v3140, %v3204
      %v3206 = vpop.f32.mrb[0].mxu0
      %3207 = vmatprep.mubr.bf16.mxu0 0
      %3208 = vmatmul.mubr.bf16.gmra.mrb[0].mxu0 %v2902
      %v3209 = vpop.f32.mrb[0].mxu0
      %v3210 = vadd.f32 %v3145, %v3209
      %v3211 = vpop.f32.mrb[0].mxu0
      %v3212 = vpop.f32.mrb[0].mxu0
      %v3213 = vadd.f32 %v3148, %v3212
      %v3214 = vpop.f32.mrb[0].mxu0
      %3215 = vmatprep.mubr.bf16.mxu0 0
      %3216 = vmatmul.mubr.bf16.gmra.mrb[0].mxu0 %v2905
      %v3217 = vpop.f32.mrb[0].mxu0
      %v3218 = vadd.f32 %v3153, %v3217
      %v3219 = vpop.f32.mrb[0].mxu0
      %v3220 = vpop.f32.mrb[0].mxu0
      %v3221 = vadd.f32 %v3156, %v3220
      %v3222 = vpop.f32.mrb[0].mxu0
      %3223 = vmatprep.mubr.bf16.mxu0 0
      %3224 = vmatmul.mubr.bf16.gmra.mrb[0].mxu0 %v2908
      %v3225 = vpop.f32.mrb[0].mxu0
      %v3226 = vadd.f32 %v3161, %v3225
      %v3227 = vpop.f32.mrb[0].mxu0
      %v3228 = vpop.f32.mrb[0].mxu0
      %v3229 = vadd.f32 %v3164, %v3228
      %v3230 = vpop.f32.mrb[0].mxu0
      %3231 = vdwg.mxu0
      %v3232 = vadd.f32 %v2866, %v3202
      %v3233 = vadd.f32 %v2869, %v3205
      %v3234 = vadd.f32 %v2874, %v3210
      %v3235 = vadd.f32 %v2877, %v3213
      %v3236 = vadd.f32 %v2882, %v3218
      %v3237 = vadd.f32 %v2885, %v3221
      %v3238 = vadd.f32 %v2890, %v3226
      %v3239 = vadd.f32 %v2893, %v3229
      %v3240 = vld [vmem:[%s6] sm:$0x1]
      %v3242 = vlaneseq
      %v3243 = vshrl.u32 %v3242, 7
      %v3244 = vsub.s32 0, %v3243
      %v3245 = vrot.slane %v3240, %v3244
      %v3247 = vadd.f32 %v3232, %v3245
      %v3248 = vadd.f32 %v3233, %v3245
      %v3249 = vadd.f32 %v3234, %v3245
      %v3250 = vadd.f32 %v3235, %v3245
      %v3251 = vadd.f32 %v3236, %v3245
      %v3252 = vadd.f32 %v3237, %v3245
      %v3253 = vadd.f32 %v3238, %v3245
      %v3254 = vadd.f32 %v3239, %v3245
      %v3255 = vmax.f32 %v3247, 0.0
      %v3256 = vmax.f32 %v3248, 0.0
      %v3257 = vmax.f32 %v3249, 0.0
      %v3258 = vmax.f32 %v3250, 0.0
      %v3259 = vmax.f32 %v3251, 0.0
      %v3260 = vmax.f32 %v3252, 0.0
      %v3261 = vmax.f32 %v3253, 0.0
      %v3262 = vmax.f32 %v3254, 0.0
      %vm3263 = vcmask 64512
      %3264 = vst.msk [vmem:[%s455] sm:$0xff] %vm3263, %v3255
      %3265 = vst.msk [vmem:[%s455 + $0x8] sm:$0xff] %vm3263, %v3256
      %3266 = vst.msk [vmem:[%s455 + $0x10] sm:$0xff] %vm3263, %v3257
      %3267 = vst.msk [vmem:[%s455 + $0x18] sm:$0xff] %vm3263, %v3258
      %3268 = vst.msk [vmem:[%s455 + $0x20] sm:$0xff] %vm3263, %v3259
      %3269 = vst.msk [vmem:[%s455 + $0x28] sm:$0xff] %vm3263, %v3260
      %3270 = vst.msk [vmem:[%s455 + $0x30] sm:$0xff] %vm3263, %v3261
      %3271 = vst.msk [vmem:[%s455 + $0x38] sm:$0xff] %vm3263, %v3262
      %s3272 = smul.u32 4, %s23
      %p3273 = scmp.lt.s32.totalorder %s22, 1
      %s3274 = scalar_select %p3273, %s22, 1
      %p3275 = scmp.lt.s32.totalorder %s3272, 15
      %s3276 = scalar_select %p3275, %s3272, 15
      %s3277 = smul.addr %s3276, 2
      %s3278 = smul.addr %s3274, 32
      %s3279 = sadd.s32 %s3277, %s3278
      %s3280 = smul.addr %s3279, 8
      %s3281 = scalar_lea.vmem %s7, %s3280
      // Predicated region
      $region73: #{tpu_custom_call.1} parent=47 // pred_check
        %p3282 = pneg %p234
      $region74: #{tpu_custom_call.1} parent=47 // pred_check_branch
        %3284 = sbr.rel (%p3282) target = $region76
      $region75: #{tpu_custom_call.1} parent=47 // pred_region
        %s3285 = smul.u32 4, %s23
      $region76: #{tpu_custom_call.1} parent=47 // pred_fallthru
        _
    $region48: #{tpu_custom_call.1} parent=5 // pred_fallthru
      _
    %p3286 = scmp.le.s32.totalorder 2, %s13
    // Predicated region
    $region77: #{tpu_custom_call.1} parent=5 // pred_check
      %p3287 = pneg %p3286
    $region78: #{tpu_custom_call.1} parent=5 // pred_check_branch
      %3289 = sbr.rel (%p3287) target = $region80
    $region79: #{tpu_custom_call.1} parent=5 // pred_region
      %s3290 = ssub.s32 %s13, 2
      // Predicated region
      $region81: #{tpu_custom_call.1} parent=79 // pred_check
        %p3291 = pneg %p240
      $region82: #{tpu_custom_call.1} parent=79 // pred_check_branch
        %3293 = sbr.rel (%p3291) target = $region84
      $region83: #{tpu_custom_call.1} parent=79 // pred_region
        %s3294 = smul.u32 4, %s25
        %p3295 = scmp.lt.s32.totalorder %s24, 1
        %s3296 = scalar_select %p3295, %s24, 1
        %p3297 = scmp.lt.s32.totalorder %s3294, 15
        %s3298 = scalar_select %p3297, %s3294, 15
        %s3299 = smul.addr %s3298, 2
        %s3300 = smul.addr %s3296, 32
        %s3301 = sadd.s32 %s3299, %s3300
        %s3302 = smul.addr %s3301, 8
        %s3303 = scalar_lea.vmem %s7, %s3302
      $region84: #{tpu_custom_call.1} parent=79 // pred_fallthru
        _
    $region80: #{tpu_custom_call.1} parent=5 // pred_fallthru
      _
  $region6: #{tpu_custom_call.1} parent=0 // loop_footer
    %s17 = sadd.s32 1, %s13
  $region7: #{tpu_custom_call.1} parent=0 // loop_footer_branch
    %12 = sbr.rel target = $region3
  $region8: #{tpu_custom_call.1} parent=0 // loop_exit
    _

</llo_original>
